<compile_context>
chip_gen: v5e
topology: v5e:2x2
jax: 0.10.0
libtpu: 0.0.40
codegen_flags: <defaults>
</compile_context>

<pallas_src>
import math

import jax
import jax.numpy as jnp
from jax.experimental import pallas as pl
from jax.experimental.pallas import tpu as pltpu


# ---------------------------------------------------------------------------
# Fused kernel: all LSTM layers + generator in one pallas_call
# ---------------------------------------------------------------------------

def make_fused_kernel(n_layers, T, TK, Bb, H):
    """Fused kernel for fixed (n_layers, T, TK, Bb, H).

    Ref layout (per grid step = one batch block of Bb rows):
      refs[0]                       x block  (T*Bb, D) bf16, time-major rows
      refs[1+3l..3+3l], l<n_layers  w_ih_l (d_in,4H) bf16, w_hh_l (H,4H) bf16,
                                    b_l (1,4H) f32
      refs[1+3L], refs[2+3L]        w_gen (H, Cp) bf16, b_gen (1, Cp) f32
      refs[3+3L]                    y block  (Bb, Cp) f32 (log-probs)
      refs[4+3L:]                   scratch: h (Bb,H) f32, c (Bb,H) f32,
                                    gx (TK*Bb,4H) f32, hstage (TK*Bb,H) f32,
                                    seq (T*Bb,H) bf16
    Gate order along the 4H axis is [i, f, o, g].
    """
    chunk_starts = list(range(0, T, TK))

    def kernel(*refs):
        x_ref = refs[0]
        wgen_ref = refs[1 + 3 * n_layers]
        bgen_ref = refs[2 + 3 * n_layers]
        y_ref = refs[3 + 3 * n_layers]
        h_scr, c_scr, gx_scr, hstage_scr, seq_scr = refs[4 + 3 * n_layers:]

        bf16 = jnp.bfloat16

        for l in range(n_layers):
            w_ih = refs[1 + 3 * l][...]          # (d_in, 4H) bf16
            w_hh = refs[2 + 3 * l][...]          # (H, 4H)    bf16
            b = refs[3 + 3 * l][...]             # (1, 4H)    f32

            h_scr[...] = jnp.zeros_like(h_scr)
            c_scr[...] = jnp.zeros_like(c_scr)

            write_seq = l < n_layers - 1          # last layer: only h_T needed

            for cs in chunk_starts:
                tk = min(TK, T - cs)              # static chunk length
                r0 = cs * Bb                      # static, Bb-aligned row offset
                rows = tk * Bb

                # Input projection for the whole chunk: ONE bf16 MXU matmul
                # with f32 accumulation.  Read-before-overwrite: seq_scr rows
                # [r0, r0+rows) are consumed here before this layer rewrites
                # them at the end of the chunk.
                xin = (x_ref[r0:r0 + rows, :] if l == 0
                       else seq_scr[r0:r0 + rows, :])
                gx_scr[0:rows, :] = (
                    jnp.dot(xin, w_ih, preferred_element_type=jnp.float32) + b)

                def step(t, carry, w_hh=w_hh, write_seq=write_seq):
                    loc = pl.multiple_of(t * Bb, Bb)
                    # Only ONE small matmul on the serial critical path.
                    gates = gx_scr[pl.ds(loc, Bb), :] + jnp.dot(
                        h_scr[...].astype(bf16), w_hh,
                        preferred_element_type=jnp.float32)
                    # Gate order [i, f, o, g]: one contiguous 3H sigmoid slab
                    # + one H tanh slab.  (With production H >= 128 these
                    # slices land on vreg boundaries.)
                    sig = jax.nn.sigmoid(gates[:, : 3 * H])
                    i_g = sig[:, :H]
                    f_g = sig[:, H:2 * H]
                    o_g = sig[:, 2 * H:]
                    g_g = jnp.tanh(gates[:, 3 * H:])
                    c_new = f_g * c_scr[...] + i_g * g_g
                    h_new = o_g * jnp.tanh(c_new)
                    c_scr[...] = c_new
                    h_scr[...] = h_new
                    if write_seq:
                        hstage_scr[pl.ds(loc, Bb), :] = h_new   # f32 staging
                    return carry

                # Bounded unroll keeps LLO visibility without vreg pressure.
                jax.lax.fori_loop(0, tk, step, 0, unroll=min(tk, 4))

                if write_seq:
                    # Bulk, tile-aligned bf16 store of the chunk's h outputs
                    # (the next layer's matmul input).
                    seq_scr[r0:r0 + rows, :] = (
                        hstage_scr[0:rows, :].astype(bf16))

        # Generator: Linear(H -> Cp) + LogSoftmax on the last timestep's h.
        # Padded classes carry bias -1e30 -> exp() == 0, so the log-softmax
        # over the real classes is unaffected.
        logits = (
            jnp.dot(h_scr[...].astype(bf16), wgen_ref[...],
                    preferred_element_type=jnp.float32) + bgen_ref[...])
        m = jnp.max(logits, axis=-1, keepdims=True)
        z = logits - m
        lse = jnp.log(jnp.sum(jnp.exp(z), axis=-1, keepdims=True))
        y_ref[...] = (z - lse).astype(y_ref.dtype)

    return kernel


def fused_forward(x_blocks, params, *, T, NB, Bb, TK):
    """x_blocks: (NB, T*Bb, D) bf16, time-major rows per batch block.
       Returns (NB*Bb, Cp) f32 log-probs (lane-padded classes)."""
    layers = params["lstm_layers"]
    n_layers = len(layers)
    H = layers[0]["w_hh"].shape[0]
    Cp = params["w_gen"].shape[1]
    D = x_blocks.shape[-1]

    inputs = [x_blocks]
    in_specs = [pl.BlockSpec((None, T * Bb, D), lambda b: (b, 0, 0))]
    for layer in layers:
        for name in ("w_ih", "w_hh", "b"):
            a = layer[name]
            inputs.append(a)
            in_specs.append(pl.BlockSpec(a.shape, lambda b: (0, 0)))
    for name in ("w_gen", "b_gen"):
        a = params[name]
        inputs.append(a)
        in_specs.append(pl.BlockSpec(a.shape, lambda b: (0, 0)))

    scratch_shapes = [
        pltpu.VMEM((Bb, H), jnp.float32),             # h state
        pltpu.VMEM((Bb, H), jnp.float32),             # c state
        pltpu.VMEM((TK * Bb, 4 * H), jnp.float32),    # chunk input projection
        pltpu.VMEM((TK * Bb, H), jnp.float32),        # chunk h staging (f32)
        pltpu.VMEM((T * Bb, H), jnp.bfloat16),        # inter-layer sequence
    ]

    # Scoped-VMEM budget sized to the actual resident set (default scoped
    # limits -- 16 MiB v5e / 32 MiB v6e,v7x -- are easy to exceed at scale).
    resident = 2 * (T * Bb * D) * x_blocks.dtype.itemsize          # x block
    for a in inputs[1:]:
        resident += 2 * a.size * a.dtype.itemsize                  # weights
    resident += 2 * Bb * Cp * 4                                    # out block
    resident += (2 * Bb * H + TK * Bb * 4 * H + TK * Bb * H) * 4   # f32 scratch
    resident += T * Bb * H * 2                                     # bf16 seq
    vmem_limit = min(int(resident * 1.25) + (2 << 20), 64 << 20)

    kernel = make_fused_kernel(n_layers=n_layers, T=T, TK=TK, Bb=Bb, H=H)

    return pl.pallas_call(
        kernel,
        out_shape=jax.ShapeDtypeStruct((NB * Bb, Cp), jnp.float32),
        grid_spec=pltpu.PrefetchScalarGridSpec(
            num_scalar_prefetch=0,
            grid=(NB,),
            in_specs=in_specs,
            out_specs=pl.BlockSpec((Bb, Cp), lambda b: (b, 0)),
            scratch_shapes=scratch_shapes,
        ),
        compiler_params=pltpu.CompilerParams(
            dimension_semantics=("parallel",),     # batch blocks -> v7x 2 TCs
            vmem_limit_bytes=vmem_limit,
        ),
    )(*inputs)


def lstm_classifier_forward(tokens, params, *, batch_block=16, time_chunk=32):
    """Forward matching LSTM.forward(x):
       emb -> n_layers LSTM -> last timestep -> Linear -> LogSoftmax."""
    B, T = tokens.shape
    C = params["n_classes"]
    emb = params["embedding"][tokens]              # (B, T, D) gather, plain JAX
    D = emb.shape[-1]

    Bb = batch_block                               # multiple of 16 (bf16 tiles)
    # At least two batch blocks so the "parallel" grid axis can occupy both
    # v7x TensorCores (padded rows are dropped after the call).
    NB = max(2, -(-B // Bb))
    Bp = NB * Bb

    x = emb.astype(jnp.bfloat16)                   # bf16 MXU inputs
    if Bp != B:
        x = jnp.pad(x, ((0, Bp - B), (0, 0), (0, 0)))
    # Per batch-block, time-major layout: row t*Bb + j == (batch j, time t).
    x_blocks = x.reshape(NB, Bb, T, D).transpose(0, 2, 1, 3).reshape(NB, T * Bb, D)

    TK = max(1, min(time_chunk, T))
    y = fused_forward(x_blocks, params, T=T, NB=NB, Bb=Bb, TK=TK)  # (Bp, Cp)
    return y[:B, :C]                               # drop padded rows / classes


# ---------------------------------------------------------------------------
# Deterministic parameter initialization (PyTorch-style default inits)
# ---------------------------------------------------------------------------

def init_params(key, input_size, word_vec_size, hidden_size, n_classes, n_layers):
    keys = jax.random.split(key, 1 + 4 * n_layers + 2)
    ki = iter(keys)
    H = hidden_size
    Cp = ((n_classes + 127) // 128) * 128          # lane-padded generator width

    params = {"n_classes": n_classes}
    # nn.Embedding default: N(0, 1)
    params["embedding"] = jax.random.normal(
        next(ki), (input_size, word_vec_size), dtype=jnp.float32)

    def reorder_gates(w4h):
        # PyTorch gate order along the 4H axis is [i, f, g, o]; the kernel
        # uses [i, f, o, g] so the three sigmoids act on one contiguous slab.
        i, f, g, o = jnp.split(w4h, 4, axis=0)
        return jnp.concatenate([i, f, o, g], axis=0)

    # nn.LSTM default: U(-1/sqrt(H), 1/sqrt(H)) for all weights/biases.
    k_lstm = 1.0 / math.sqrt(hidden_size)
    layers = []
    for l in range(n_layers):
        d_in = word_vec_size if l == 0 else hidden_size
        w_ih = jax.random.uniform(next(ki), (4 * H, d_in),
                                  minval=-k_lstm, maxval=k_lstm, dtype=jnp.float32)
        w_hh = jax.random.uniform(next(ki), (4 * H, H),
                                  minval=-k_lstm, maxval=k_lstm, dtype=jnp.float32)
        b_ih = jax.random.uniform(next(ki), (4 * H,),
                                  minval=-k_lstm, maxval=k_lstm, dtype=jnp.float32)
        b_hh = jax.random.uniform(next(ki), (4 * H,),
                                  minval=-k_lstm, maxval=k_lstm, dtype=jnp.float32)
        layers.append({
            "w_ih": reorder_gates(w_ih).T.astype(jnp.bfloat16),    # (d_in, 4H)
            "w_hh": reorder_gates(w_hh).T.astype(jnp.bfloat16),    # (H, 4H)
            "b": reorder_gates((b_ih + b_hh)[:, None]).T,          # (1, 4H) f32
        })
    params["lstm_layers"] = layers

    # nn.Linear default: U(-1/sqrt(in_features), 1/sqrt(in_features))
    k_gen = 1.0 / math.sqrt(hidden_size)
    w_gen = jax.random.uniform(next(ki), (n_classes, hidden_size),
                               minval=-k_gen, maxval=k_gen, dtype=jnp.float32)
    b_gen = jax.random.uniform(next(ki), (n_classes,),
                               minval=-k_gen, maxval=k_gen, dtype=jnp.float32)
    # Lane-padded generator: padded weight columns are zero; padded bias
    # entries are -1e30 so padded classes vanish from the log-softmax.
    params["w_gen"] = (jnp.zeros((H, Cp), jnp.bfloat16)
                       .at[:, :n_classes].set(w_gen.T.astype(jnp.bfloat16)))
    params["b_gen"] = (jnp.full((1, Cp), -1e30, jnp.float32)
                       .at[0, :n_classes].set(b_gen))
    return params


# ---------------------------------------------------------------------------
# Pure-JAX reference (same bf16-matmul / f32-gate math, no Pallas)
# ---------------------------------------------------------------------------

def reference_forward(tokens, params):
    bf16 = jnp.bfloat16
    C = params["n_classes"]
    x = params["embedding"][tokens].astype(bf16)   # (B, T, D)
    B, T, _ = x.shape
    H = params["lstm_layers"][0]["w_hh"].shape[0]
    h = None
    for layer in params["lstm_layers"]:
        w_ih, w_hh, b = layer["w_ih"], layer["w_hh"], layer["b"]
        h = jnp.zeros((B, H), jnp.float32)
        c = jnp.zeros((B, H), jnp.float32)
        outs = []
        for t in range(T):
            gates = (jnp.dot(x[:, t], w_ih, preferred_element_type=jnp.float32)
                     + jnp.dot(h.astype(bf16), w_hh,
                               preferred_element_type=jnp.float32) + b)
            i_g = jax.nn.sigmoid(gates[:, :H])
            f_g = jax.nn.sigmoid(gates[:, H:2 * H])
            o_g = jax.nn.sigmoid(gates[:, 2 * H:3 * H])
            g_g = jnp.tanh(gates[:, 3 * H:])
            c = f_g * c + i_g * g_g
            h = o_g * jnp.tanh(c)
            outs.append(h)
        x = jnp.stack(outs, axis=1).astype(bf16)
    logits = (jnp.dot(h.astype(bf16), params["w_gen"][:, :C],
                      preferred_element_type=jnp.float32)
              + params["b_gen"][:, :C])
    return jax.nn.log_softmax(logits, axis=-1)


# ---------------------------------------------------------------------------
# Demo
# ---------------------------------------------------------------------------

if __name__ == "__main__":
    input_size = 100      # vocabulary size
    word_vec_size = 16
    hidden_size = 32
    n_classes = 5
    n_layers = 4
    B, T = 2, 8

    key = jax.random.PRNGKey(0)
    k_params, k_tokens = jax.random.split(key)

    params = init_params(k_params, input_size, word_vec_size,
                         hidden_size, n_classes, n_layers)
    tokens = jax.random.randint(k_tokens, (B, T), 0, input_size, dtype=jnp.int32)

    # time_chunk=3 exercises both full and remainder time-chunks at T=8.
    y = lstm_classifier_forward(tokens, params, batch_block=16, time_chunk=3)
    jax.block_until_ready(y)

    assert y.shape == (B, n_classes)
    assert bool(jnp.all(jnp.isfinite(y)))
    # rows of exp(log-softmax) must sum to ~1
    assert jnp.allclose(jnp.sum(jnp.exp(y), axis=-1), 1.0, atol=1e-3)
    # numerical check against a pure-JAX reference with matching quantization
    y_ref = reference_forward(tokens, params)
    max_err = jnp.max(jnp.abs(y - y_ref))
    assert jnp.allclose(y, y_ref, atol=2e-2, rtol=2e-2), (
        f"mismatch: max abs err {max_err}")
    print("KERNEL_OK")
</pallas_src>

<mosaic_0001>
module attributes {stable_mosaic.version = 11 : i64} {
  func.func @kernel(%arg0: i32, %arg1: memref<1x128x16xbf16, #tpu.memory_space<vmem>>, %arg2: memref<16x128xbf16, #tpu.memory_space<vmem>>, %arg3: memref<32x128xbf16, #tpu.memory_space<vmem>>, %arg4: memref<1x128xf32, #tpu.memory_space<vmem>>, %arg5: memref<32x128xbf16, #tpu.memory_space<vmem>>, %arg6: memref<32x128xbf16, #tpu.memory_space<vmem>>, %arg7: memref<1x128xf32, #tpu.memory_space<vmem>>, %arg8: memref<32x128xbf16, #tpu.memory_space<vmem>>, %arg9: memref<32x128xbf16, #tpu.memory_space<vmem>>, %arg10: memref<1x128xf32, #tpu.memory_space<vmem>>, %arg11: memref<32x128xbf16, #tpu.memory_space<vmem>>, %arg12: memref<32x128xbf16, #tpu.memory_space<vmem>>, %arg13: memref<1x128xf32, #tpu.memory_space<vmem>>, %arg14: memref<32x128xbf16, #tpu.memory_space<vmem>>, %arg15: memref<1x128xf32, #tpu.memory_space<vmem>>, %arg16: memref<16x128xf32, #tpu.memory_space<vmem>>, %arg17: memref<16x32xf32, #tpu.memory_space<vmem>>, %arg18: memref<16x32xf32, #tpu.memory_space<vmem>>, %arg19: memref<48x128xf32, #tpu.memory_space<vmem>>, %arg20: memref<48x32xf32, #tpu.memory_space<vmem>>, %arg21: memref<128x32xbf16, #tpu.memory_space<vmem>>) attributes {dimension_semantics = [#tpu.dimension_semantics<parallel>], iteration_bounds = array<i64: 2>, scalar_prefetch = 0 : i64, scratch_operands = 5 : i64, tpu.core_type = #tpu.core_type<tc>, window_params = [{transform_indices = @transform_0, window_bounds = array<i64: 1, 128, 16>}, {pipeline_mode = #tpu.pipeline_mode<synchronous>, transform_indices = @transform_1, window_bounds = array<i64: 16, 128>}, {pipeline_mode = #tpu.pipeline_mode<synchronous>, transform_indices = @transform_2, window_bounds = array<i64: 32, 128>}, {pipeline_mode = #tpu.pipeline_mode<synchronous>, transform_indices = @transform_3, window_bounds = array<i64: 1, 128>}, {pipeline_mode = #tpu.pipeline_mode<synchronous>, transform_indices = @transform_4, window_bounds = array<i64: 32, 128>}, {pipeline_mode = #tpu.pipeline_mode<synchronous>, transform_indices = @transform_5, window_bounds = array<i64: 32, 128>}, {pipeline_mode = #tpu.pipeline_mode<synchronous>, transform_indices = @transform_6, window_bounds = array<i64: 1, 128>}, {pipeline_mode = #tpu.pipeline_mode<synchronous>, transform_indices = @transform_7, window_bounds = array<i64: 32, 128>}, {pipeline_mode = #tpu.pipeline_mode<synchronous>, transform_indices = @transform_8, window_bounds = array<i64: 32, 128>}, {pipeline_mode = #tpu.pipeline_mode<synchronous>, transform_indices = @transform_9, window_bounds = array<i64: 1, 128>}, {pipeline_mode = #tpu.pipeline_mode<synchronous>, transform_indices = @transform_10, window_bounds = array<i64: 32, 128>}, {pipeline_mode = #tpu.pipeline_mode<synchronous>, transform_indices = @transform_11, window_bounds = array<i64: 32, 128>}, {pipeline_mode = #tpu.pipeline_mode<synchronous>, transform_indices = @transform_12, window_bounds = array<i64: 1, 128>}, {pipeline_mode = #tpu.pipeline_mode<synchronous>, transform_indices = @transform_13, window_bounds = array<i64: 32, 128>}, {pipeline_mode = #tpu.pipeline_mode<synchronous>, transform_indices = @transform_14, window_bounds = array<i64: 1, 128>}, {transform_indices = @transform_15, window_bounds = array<i64: 16, 128>}]} {
    %c0 = arith.constant 0 : index
    %c0_0 = arith.constant 0 : index
    %0 = vector.load %arg2[%c0, %c0_0] : memref<16x128xbf16, #tpu.memory_space<vmem>>, vector<16x128xbf16>
    %c0_1 = arith.constant 0 : index
    %c0_2 = arith.constant 0 : index
    %1 = vector.load %arg3[%c0_1, %c0_2] : memref<32x128xbf16, #tpu.memory_space<vmem>>, vector<32x128xbf16>
    %c0_3 = arith.constant 0 : index
    %c0_4 = arith.constant 0 : index
    %2 = vector.load %arg4[%c0_3, %c0_4] : memref<1x128xf32, #tpu.memory_space<vmem>>, vector<1x128xf32>
    %cst = arith.constant 0.000000e+00 : f32
    %3 = vector.broadcast %cst : f32 to vector<16x32xf32>
    %c0_5 = arith.constant 0 : index
    %c0_6 = arith.constant 0 : index
    %4 = vector.load %arg17[%c0_5, %c0_6] : memref<16x32xf32, #tpu.memory_space<vmem>>, vector<16x32xf32>
    tpu.vector_store %arg17[%c0_5, %c0_6], %3 {strides = array<i32>} : memref<16x32xf32, #tpu.memory_space<vmem>>, vector<16x32xf32>,
    %cst_7 = arith.constant 0.000000e+00 : f32
    %5 = vector.broadcast %cst_7 : f32 to vector<16x32xf32>
    %c0_8 = arith.constant 0 : index
    %c0_9 = arith.constant 0 : index
    %6 = vector.load %arg18[%c0_8, %c0_9] : memref<16x32xf32, #tpu.memory_space<vmem>>, vector<16x32xf32>
    tpu.vector_store %arg18[%c0_8, %c0_9], %5 {strides = array<i32>} : memref<16x32xf32, #tpu.memory_space<vmem>>, vector<16x32xf32>,
    %c0_10 = arith.constant 0 : index
    %c0_11 = arith.constant 0 : index
    %c0_12 = arith.constant 0 : index
    %7 = vector.load %arg1[%c0_10, %c0_11, %c0_12] : memref<1x128x16xbf16, #tpu.memory_space<vmem>>, vector<1x48x16xbf16>
    %8 = vector.shape_cast %7 : vector<1x48x16xbf16> to vector<48x16xbf16>
    %cst_13 = arith.constant dense<0.000000e+00> : vector<48x128xf32>
    %9 = tpu.matmul %8, %0, %cst_13 {dimension_numbers = #tpu.dot_dimension_numbers<[1], [0], [0], [1], [0, 0, 1, 1], [], []>} : vector<48x16xbf16>, vector<16x128xbf16>, vector<48x128xf32> -> vector<48x128xf32>
    %10 = vector.broadcast %2 : vector<1x128xf32> to vector<48x128xf32>
    %11 = arith.addf %9, %10 : vector<48x128xf32>
    %c0_14 = arith.constant 0 : index
    %c0_15 = arith.constant 0 : index
    %12 = vector.load %arg19[%c0_14, %c0_15] : memref<48x128xf32, #tpu.memory_space<vmem>>, vector<48x128xf32>
    tpu.vector_store %arg19[%c0_14, %c0_15], %11 {strides = array<i32>} : memref<48x128xf32, #tpu.memory_space<vmem>>, vector<48x128xf32>,
    %c0_i32 = arith.constant 0 : i32
    %c16_i32 = arith.constant 16 : i32
    %13 = arith.muli %c0_i32, %c16_i32 : i32
    %14 = tpu.assume_multiple %13, 16 : i32
    %15 = arith.index_cast %14 : i32 to index
    %c0_16 = arith.constant 0 : index
    %16 = vector.load %arg19[%15, %c0_16] : memref<48x128xf32, #tpu.memory_space<vmem>>, vector<16x128xf32>
    %c0_17 = arith.constant 0 : index
    %c0_18 = arith.constant 0 : index
    %17 = vector.load %arg17[%c0_17, %c0_18] : memref<16x32xf32, #tpu.memory_space<vmem>>, vector<16x32xf32>
    %18 = arith.truncf %17 : vector<16x32xf32> to vector<16x32xbf16>
    %cst_19 = arith.constant dense<0.000000e+00> : vector<16x128xf32>
    %19 = tpu.matmul %18, %1, %cst_19 {dimension_numbers = #tpu.dot_dimension_numbers<[1], [0], [0], [1], [0, 0, 1, 1], [], []>} : vector<16x32xbf16>, vector<32x128xbf16>, vector<16x128xf32> -> vector<16x128xf32>
    %20 = arith.addf %16, %19 : vector<16x128xf32>
    %21 = vector.extract_strided_slice %20 {offsets = [0, 0], sizes = [16, 96], strides = [1, 1]} : vector<16x128xf32> to vector<16x96xf32>
    %22 = arith.negf %21 : vector<16x96xf32>
    %23 = math.exp %22 : vector<16x96xf32>
    %cst_20 = arith.constant 1.000000e+00 : f32
    %24 = vector.broadcast %cst_20 : f32 to vector<16x96xf32>
    %25 = arith.addf %24, %23 : vector<16x96xf32>
    %26 = arith.divf %24, %25 : vector<16x96xf32>
    %27 = vector.extract_strided_slice %26 {offsets = [0, 0], sizes = [16, 32], strides = [1, 1]} : vector<16x96xf32> to vector<16x32xf32>
    %28 = vector.extract_strided_slice %26 {offsets = [0, 32], sizes = [16, 32], strides = [1, 1]} : vector<16x96xf32> to vector<16x32xf32>
    %29 = vector.extract_strided_slice %26 {offsets = [0, 64], sizes = [16, 32], strides = [1, 1]} : vector<16x96xf32> to vector<16x32xf32>
    %30 = vector.extract_strided_slice %20 {offsets = [0, 96], sizes = [16, 32], strides = [1, 1]} : vector<16x128xf32> to vector<16x32xf32>
    %31 = math.tanh %30 : vector<16x32xf32>
    %c0_21 = arith.constant 0 : index
    %c0_22 = arith.constant 0 : index
    %32 = vector.load %arg18[%c0_21, %c0_22] : memref<16x32xf32, #tpu.memory_space<vmem>>, vector<16x32xf32>
    %33 = arith.mulf %28, %32 : vector<16x32xf32>
    %34 = arith.mulf %27, %31 : vector<16x32xf32>
    %35 = arith.addf %33, %34 : vector<16x32xf32>
    %36 = math.tanh %35 : vector<16x32xf32>
    %37 = arith.mulf %29, %36 : vector<16x32xf32>
    %c0_23 = arith.constant 0 : index
    %c0_24 = arith.constant 0 : index
    %38 = vector.load %arg18[%c0_23, %c0_24] : memref<16x32xf32, #tpu.memory_space<vmem>>, vector<16x32xf32>
    tpu.vector_store %arg18[%c0_23, %c0_24], %35 {strides = array<i32>} : memref<16x32xf32, #tpu.memory_space<vmem>>, vector<16x32xf32>,
    %c0_25 = arith.constant 0 : index
    %c0_26 = arith.constant 0 : index
    %39 = vector.load %arg17[%c0_25, %c0_26] : memref<16x32xf32, #tpu.memory_space<vmem>>, vector<16x32xf32>
    tpu.vector_store %arg17[%c0_25, %c0_26], %37 {strides = array<i32>} : memref<16x32xf32, #tpu.memory_space<vmem>>, vector<16x32xf32>,
    %40 = arith.index_cast %14 : i32 to index
    %c0_27 = arith.constant 0 : index
    %41 = vector.load %arg20[%40, %c0_27] : memref<48x32xf32, #tpu.memory_space<vmem>>, vector<16x32xf32>
    tpu.vector_store %arg20[%40, %c0_27], %37 {strides = array<i32>} : memref<48x32xf32, #tpu.memory_space<vmem>>, vector<16x32xf32>,
    %c1_i32 = arith.constant 1 : i32
    %c16_i32_28 = arith.constant 16 : i32
    %42 = arith.muli %c1_i32, %c16_i32_28 : i32
    %43 = tpu.assume_multiple %42, 16 : i32
    %44 = arith.index_cast %43 : i32 to index
    %c0_29 = arith.constant 0 : index
    %45 = vector.load %arg19[%44, %c0_29] : memref<48x128xf32, #tpu.memory_space<vmem>>, vector<16x128xf32>
    %c0_30 = arith.constant 0 : index
    %c0_31 = arith.constant 0 : index
    %46 = vector.load %arg17[%c0_30, %c0_31] : memref<16x32xf32, #tpu.memory_space<vmem>>, vector<16x32xf32>
    %47 = arith.truncf %46 : vector<16x32xf32> to vector<16x32xbf16>
    %cst_32 = arith.constant dense<0.000000e+00> : vector<16x128xf32>
    %48 = tpu.matmul %47, %1, %cst_32 {dimension_numbers = #tpu.dot_dimension_numbers<[1], [0], [0], [1], [0, 0, 1, 1], [], []>} : vector<16x32xbf16>, vector<32x128xbf16>, vector<16x128xf32> -> vector<16x128xf32>
    %49 = arith.addf %45, %48 : vector<16x128xf32>
    %50 = vector.extract_strided_slice %49 {offsets = [0, 0], sizes = [16, 96], strides = [1, 1]} : vector<16x128xf32> to vector<16x96xf32>
    %51 = arith.negf %50 : vector<16x96xf32>
    %52 = math.exp %51 : vector<16x96xf32>
    %cst_33 = arith.constant 1.000000e+00 : f32
    %53 = vector.broadcast %cst_33 : f32 to vector<16x96xf32>
    %54 = arith.addf %53, %52 : vector<16x96xf32>
    %55 = arith.divf %53, %54 : vector<16x96xf32>
    %56 = vector.extract_strided_slice %55 {offsets = [0, 0], sizes = [16, 32], strides = [1, 1]} : vector<16x96xf32> to vector<16x32xf32>
    %57 = vector.extract_strided_slice %55 {offsets = [0, 32], sizes = [16, 32], strides = [1, 1]} : vector<16x96xf32> to vector<16x32xf32>
    %58 = vector.extract_strided_slice %55 {offsets = [0, 64], sizes = [16, 32], strides = [1, 1]} : vector<16x96xf32> to vector<16x32xf32>
    %59 = vector.extract_strided_slice %49 {offsets = [0, 96], sizes = [16, 32], strides = [1, 1]} : vector<16x128xf32> to vector<16x32xf32>
    %60 = math.tanh %59 : vector<16x32xf32>
    %c0_34 = arith.constant 0 : index
    %c0_35 = arith.constant 0 : index
    %61 = vector.load %arg18[%c0_34, %c0_35] : memref<16x32xf32, #tpu.memory_space<vmem>>, vector<16x32xf32>
    %62 = arith.mulf %57, %61 : vector<16x32xf32>
    %63 = arith.mulf %56, %60 : vector<16x32xf32>
    %64 = arith.addf %62, %63 : vector<16x32xf32>
    %65 = math.tanh %64 : vector<16x32xf32>
    %66 = arith.mulf %58, %65 : vector<16x32xf32>
    %c0_36 = arith.constant 0 : index
    %c0_37 = arith.constant 0 : index
    %67 = vector.load %arg18[%c0_36, %c0_37] : memref<16x32xf32, #tpu.memory_space<vmem>>, vector<16x32xf32>
    tpu.vector_store %arg18[%c0_36, %c0_37], %64 {strides = array<i32>} : memref<16x32xf32, #tpu.memory_space<vmem>>, vector<16x32xf32>,
    %c0_38 = arith.constant 0 : index
    %c0_39 = arith.constant 0 : index
    %68 = vector.load %arg17[%c0_38, %c0_39] : memref<16x32xf32, #tpu.memory_space<vmem>>, vector<16x32xf32>
    tpu.vector_store %arg17[%c0_38, %c0_39], %66 {strides = array<i32>} : memref<16x32xf32, #tpu.memory_space<vmem>>, vector<16x32xf32>,
    %69 = arith.index_cast %43 : i32 to index
    %c0_40 = arith.constant 0 : index
    %70 = vector.load %arg20[%69, %c0_40] : memref<48x32xf32, #tpu.memory_space<vmem>>, vector<16x32xf32>
    tpu.vector_store %arg20[%69, %c0_40], %66 {strides = array<i32>} : memref<48x32xf32, #tpu.memory_space<vmem>>, vector<16x32xf32>,
    %c2_i32 = arith.constant 2 : i32
    %c16_i32_41 = arith.constant 16 : i32
    %71 = arith.muli %c2_i32, %c16_i32_41 : i32
    %72 = tpu.assume_multiple %71, 16 : i32
    %73 = arith.index_cast %72 : i32 to index
    %c0_42 = arith.constant 0 : index
    %74 = vector.load %arg19[%73, %c0_42] : memref<48x128xf32, #tpu.memory_space<vmem>>, vector<16x128xf32>
    %c0_43 = arith.constant 0 : index
    %c0_44 = arith.constant 0 : index
    %75 = vector.load %arg17[%c0_43, %c0_44] : memref<16x32xf32, #tpu.memory_space<vmem>>, vector<16x32xf32>
    %76 = arith.truncf %75 : vector<16x32xf32> to vector<16x32xbf16>
    %cst_45 = arith.constant dense<0.000000e+00> : vector<16x128xf32>
    %77 = tpu.matmul %76, %1, %cst_45 {dimension_numbers = #tpu.dot_dimension_numbers<[1], [0], [0], [1], [0, 0, 1, 1], [], []>} : vector<16x32xbf16>, vector<32x128xbf16>, vector<16x128xf32> -> vector<16x128xf32>
    %78 = arith.addf %74, %77 : vector<16x128xf32>
    %79 = vector.extract_strided_slice %78 {offsets = [0, 0], sizes = [16, 96], strides = [1, 1]} : vector<16x128xf32> to vector<16x96xf32>
    %80 = arith.negf %79 : vector<16x96xf32>
    %81 = math.exp %80 : vector<16x96xf32>
    %cst_46 = arith.constant 1.000000e+00 : f32
    %82 = vector.broadcast %cst_46 : f32 to vector<16x96xf32>
    %83 = arith.addf %82, %81 : vector<16x96xf32>
    %84 = arith.divf %82, %83 : vector<16x96xf32>
    %85 = vector.extract_strided_slice %84 {offsets = [0, 0], sizes = [16, 32], strides = [1, 1]} : vector<16x96xf32> to vector<16x32xf32>
    %86 = vector.extract_strided_slice %84 {offsets = [0, 32], sizes = [16, 32], strides = [1, 1]} : vector<16x96xf32> to vector<16x32xf32>
    %87 = vector.extract_strided_slice %84 {offsets = [0, 64], sizes = [16, 32], strides = [1, 1]} : vector<16x96xf32> to vector<16x32xf32>
    %88 = vector.extract_strided_slice %78 {offsets = [0, 96], sizes = [16, 32], strides = [1, 1]} : vector<16x128xf32> to vector<16x32xf32>
    %89 = math.tanh %88 : vector<16x32xf32>
    %c0_47 = arith.constant 0 : index
    %c0_48 = arith.constant 0 : index
    %90 = vector.load %arg18[%c0_47, %c0_48] : memref<16x32xf32, #tpu.memory_space<vmem>>, vector<16x32xf32>
    %91 = arith.mulf %86, %90 : vector<16x32xf32>
    %92 = arith.mulf %85, %89 : vector<16x32xf32>
    %93 = arith.addf %91, %92 : vector<16x32xf32>
    %94 = math.tanh %93 : vector<16x32xf32>
    %95 = arith.mulf %87, %94 : vector<16x32xf32>
    %c0_49 = arith.constant 0 : index
    %c0_50 = arith.constant 0 : index
    %96 = vector.load %arg18[%c0_49, %c0_50] : memref<16x32xf32, #tpu.memory_space<vmem>>, vector<16x32xf32>
    tpu.vector_store %arg18[%c0_49, %c0_50], %93 {strides = array<i32>} : memref<16x32xf32, #tpu.memory_space<vmem>>, vector<16x32xf32>,
    %c0_51 = arith.constant 0 : index
    %c0_52 = arith.constant 0 : index
    %97 = vector.load %arg17[%c0_51, %c0_52] : memref<16x32xf32, #tpu.memory_space<vmem>>, vector<16x32xf32>
    tpu.vector_store %arg17[%c0_51, %c0_52], %95 {strides = array<i32>} : memref<16x32xf32, #tpu.memory_space<vmem>>, vector<16x32xf32>,
    %98 = arith.index_cast %72 : i32 to index
    %c0_53 = arith.constant 0 : index
    %99 = vector.load %arg20[%98, %c0_53] : memref<48x32xf32, #tpu.memory_space<vmem>>, vector<16x32xf32>
    tpu.vector_store %arg20[%98, %c0_53], %95 {strides = array<i32>} : memref<48x32xf32, #tpu.memory_space<vmem>>, vector<16x32xf32>,
    %c3_i32 = arith.constant 3 : i32
    %c0_54 = arith.constant 0 : index
    %c0_55 = arith.constant 0 : index
    %100 = vector.load %arg20[%c0_54, %c0_55] : memref<48x32xf32, #tpu.memory_space<vmem>>, vector<48x32xf32>
    %101 = arith.truncf %100 : vector<48x32xf32> to vector<48x32xbf16>
    %c0_56 = arith.constant 0 : index
    %c0_57 = arith.constant 0 : index
    %102 = vector.load %arg21[%c0_56, %c0_57] : memref<128x32xbf16, #tpu.memory_space<vmem>>, vector<48x32xbf16>
    tpu.vector_store %arg21[%c0_56, %c0_57], %101 {strides = array<i32>} : memref<128x32xbf16, #tpu.memory_space<vmem>>, vector<48x32xbf16>,
    %c0_58 = arith.constant 0 : index
    %c48 = arith.constant 48 : index
    %c0_59 = arith.constant 0 : index
    %103 = vector.load %arg1[%c0_58, %c48, %c0_59] : memref<1x128x16xbf16, #tpu.memory_space<vmem>>, vector<1x48x16xbf16>
    %104 = vector.shape_cast %103 : vector<1x48x16xbf16> to vector<48x16xbf16>
    %cst_60 = arith.constant dense<0.000000e+00> : vector<48x128xf32>
    %105 = tpu.matmul %104, %0, %cst_60 {dimension_numbers = #tpu.dot_dimension_numbers<[1], [0], [0], [1], [0, 0, 1, 1], [], []>} : vector<48x16xbf16>, vector<16x128xbf16>, vector<48x128xf32> -> vector<48x128xf32>
    %106 = vector.broadcast %2 : vector<1x128xf32> to vector<48x128xf32>
    %107 = arith.addf %105, %106 : vector<48x128xf32>
    %c0_61 = arith.constant 0 : index
    %c0_62 = arith.constant 0 : index
    %108 = vector.load %arg19[%c0_61, %c0_62] : memref<48x128xf32, #tpu.memory_space<vmem>>, vector<48x128xf32>
    tpu.vector_store %arg19[%c0_61, %c0_62], %107 {strides = array<i32>} : memref<48x128xf32, #tpu.memory_space<vmem>>, vector<48x128xf32>,
    %c0_i32_63 = arith.constant 0 : i32
    %c16_i32_64 = arith.constant 16 : i32
    %109 = arith.muli %c0_i32_63, %c16_i32_64 : i32
    %110 = tpu.assume_multiple %109, 16 : i32
    %111 = arith.index_cast %110 : i32 to index
    %c0_65 = arith.constant 0 : index
    %112 = vector.load %arg19[%111, %c0_65] : memref<48x128xf32, #tpu.memory_space<vmem>>, vector<16x128xf32>
    %c0_66 = arith.constant 0 : index
    %c0_67 = arith.constant 0 : index
    %113 = vector.load %arg17[%c0_66, %c0_67] : memref<16x32xf32, #tpu.memory_space<vmem>>, vector<16x32xf32>
    %114 = arith.truncf %113 : vector<16x32xf32> to vector<16x32xbf16>
    %cst_68 = arith.constant dense<0.000000e+00> : vector<16x128xf32>
    %115 = tpu.matmul %114, %1, %cst_68 {dimension_numbers = #tpu.dot_dimension_numbers<[1], [0], [0], [1], [0, 0, 1, 1], [], []>} : vector<16x32xbf16>, vector<32x128xbf16>, vector<16x128xf32> -> vector<16x128xf32>
    %116 = arith.addf %112, %115 : vector<16x128xf32>
    %117 = vector.extract_strided_slice %116 {offsets = [0, 0], sizes = [16, 96], strides = [1, 1]} : vector<16x128xf32> to vector<16x96xf32>
    %118 = arith.negf %117 : vector<16x96xf32>
    %119 = math.exp %118 : vector<16x96xf32>
    %cst_69 = arith.constant 1.000000e+00 : f32
    %120 = vector.broadcast %cst_69 : f32 to vector<16x96xf32>
    %121 = arith.addf %120, %119 : vector<16x96xf32>
    %122 = arith.divf %120, %121 : vector<16x96xf32>
    %123 = vector.extract_strided_slice %122 {offsets = [0, 0], sizes = [16, 32], strides = [1, 1]} : vector<16x96xf32> to vector<16x32xf32>
    %124 = vector.extract_strided_slice %122 {offsets = [0, 32], sizes = [16, 32], strides = [1, 1]} : vector<16x96xf32> to vector<16x32xf32>
    %125 = vector.extract_strided_slice %122 {offsets = [0, 64], sizes = [16, 32], strides = [1, 1]} : vector<16x96xf32> to vector<16x32xf32>
    %126 = vector.extract_strided_slice %116 {offsets = [0, 96], sizes = [16, 32], strides = [1, 1]} : vector<16x128xf32> to vector<16x32xf32>
    %127 = math.tanh %126 : vector<16x32xf32>
    %c0_70 = arith.constant 0 : index
    %c0_71 = arith.constant 0 : index
    %128 = vector.load %arg18[%c0_70, %c0_71] : memref<16x32xf32, #tpu.memory_space<vmem>>, vector<16x32xf32>
    %129 = arith.mulf %124, %128 : vector<16x32xf32>
    %130 = arith.mulf %123, %127 : vector<16x32xf32>
    %131 = arith.addf %129, %130 : vector<16x32xf32>
    %132 = math.tanh %131 : vector<16x32xf32>
    %133 = arith.mulf %125, %132 : vector<16x32xf32>
    %c0_72 = arith.constant 0 : index
    %c0_73 = arith.constant 0 : index
    %134 = vector.load %arg18[%c0_72, %c0_73] : memref<16x32xf32, #tpu.memory_space<vmem>>, vector<16x32xf32>
    tpu.vector_store %arg18[%c0_72, %c0_73], %131 {strides = array<i32>} : memref<16x32xf32, #tpu.memory_space<vmem>>, vector<16x32xf32>,
    %c0_74 = arith.constant 0 : index
    %c0_75 = arith.constant 0 : index
    %135 = vector.load %arg17[%c0_74, %c0_75] : memref<16x32xf32, #tpu.memory_space<vmem>>, vector<16x32xf32>
    tpu.vector_store %arg17[%c0_74, %c0_75], %133 {strides = array<i32>} : memref<16x32xf32, #tpu.memory_space<vmem>>, vector<16x32xf32>,
    %136 = arith.index_cast %110 : i32 to index
    %c0_76 = arith.constant 0 : index
    %137 = vector.load %arg20[%136, %c0_76] : memref<48x32xf32, #tpu.memory_space<vmem>>, vector<16x32xf32>
    tpu.vector_store %arg20[%136, %c0_76], %133 {strides = array<i32>} : memref<48x32xf32, #tpu.memory_space<vmem>>, vector<16x32xf32>,
    %c1_i32_77 = arith.constant 1 : i32
    %c16_i32_78 = arith.constant 16 : i32
    %138 = arith.muli %c1_i32_77, %c16_i32_78 : i32
    %139 = tpu.assume_multiple %138, 16 : i32
    %140 = arith.index_cast %139 : i32 to index
    %c0_79 = arith.constant 0 : index
    %141 = vector.load %arg19[%140, %c0_79] : memref<48x128xf32, #tpu.memory_space<vmem>>, vector<16x128xf32>
    %c0_80 = arith.constant 0 : index
    %c0_81 = arith.constant 0 : index
    %142 = vector.load %arg17[%c0_80, %c0_81] : memref<16x32xf32, #tpu.memory_space<vmem>>, vector<16x32xf32>
    %143 = arith.truncf %142 : vector<16x32xf32> to vector<16x32xbf16>
    %cst_82 = arith.constant dense<0.000000e+00> : vector<16x128xf32>
    %144 = tpu.matmul %143, %1, %cst_82 {dimension_numbers = #tpu.dot_dimension_numbers<[1], [0], [0], [1], [0, 0, 1, 1], [], []>} : vector<16x32xbf16>, vector<32x128xbf16>, vector<16x128xf32> -> vector<16x128xf32>
    %145 = arith.addf %141, %144 : vector<16x128xf32>
    %146 = vector.extract_strided_slice %145 {offsets = [0, 0], sizes = [16, 96], strides = [1, 1]} : vector<16x128xf32> to vector<16x96xf32>
    %147 = arith.negf %146 : vector<16x96xf32>
    %148 = math.exp %147 : vector<16x96xf32>
    %cst_83 = arith.constant 1.000000e+00 : f32
    %149 = vector.broadcast %cst_83 : f32 to vector<16x96xf32>
    %150 = arith.addf %149, %148 : vector<16x96xf32>
    %151 = arith.divf %149, %150 : vector<16x96xf32>
    %152 = vector.extract_strided_slice %151 {offsets = [0, 0], sizes = [16, 32], strides = [1, 1]} : vector<16x96xf32> to vector<16x32xf32>
    %153 = vector.extract_strided_slice %151 {offsets = [0, 32], sizes = [16, 32], strides = [1, 1]} : vector<16x96xf32> to vector<16x32xf32>
    %154 = vector.extract_strided_slice %151 {offsets = [0, 64], sizes = [16, 32], strides = [1, 1]} : vector<16x96xf32> to vector<16x32xf32>
    %155 = vector.extract_strided_slice %145 {offsets = [0, 96], sizes = [16, 32], strides = [1, 1]} : vector<16x128xf32> to vector<16x32xf32>
    %156 = math.tanh %155 : vector<16x32xf32>
    %c0_84 = arith.constant 0 : index
    %c0_85 = arith.constant 0 : index
    %157 = vector.load %arg18[%c0_84, %c0_85] : memref<16x32xf32, #tpu.memory_space<vmem>>, vector<16x32xf32>
    %158 = arith.mulf %153, %157 : vector<16x32xf32>
    %159 = arith.mulf %152, %156 : vector<16x32xf32>
    %160 = arith.addf %158, %159 : vector<16x32xf32>
    %161 = math.tanh %160 : vector<16x32xf32>
    %162 = arith.mulf %154, %161 : vector<16x32xf32>
    %c0_86 = arith.constant 0 : index
    %c0_87 = arith.constant 0 : index
    %163 = vector.load %arg18[%c0_86, %c0_87] : memref<16x32xf32, #tpu.memory_space<vmem>>, vector<16x32xf32>
    tpu.vector_store %arg18[%c0_86, %c0_87], %160 {strides = array<i32>} : memref<16x32xf32, #tpu.memory_space<vmem>>, vector<16x32xf32>,
    %c0_88 = arith.constant 0 : index
    %c0_89 = arith.constant 0 : index
    %164 = vector.load %arg17[%c0_88, %c0_89] : memref<16x32xf32, #tpu.memory_space<vmem>>, vector<16x32xf32>
    tpu.vector_store %arg17[%c0_88, %c0_89], %162 {strides = array<i32>} : memref<16x32xf32, #tpu.memory_space<vmem>>, vector<16x32xf32>,
    %165 = arith.index_cast %139 : i32 to index
    %c0_90 = arith.constant 0 : index
    %166 = vector.load %arg20[%165, %c0_90] : memref<48x32xf32, #tpu.memory_space<vmem>>, vector<16x32xf32>
    tpu.vector_store %arg20[%165, %c0_90], %162 {strides = array<i32>} : memref<48x32xf32, #tpu.memory_space<vmem>>, vector<16x32xf32>,
    %c2_i32_91 = arith.constant 2 : i32
    %c16_i32_92 = arith.constant 16 : i32
    %167 = arith.muli %c2_i32_91, %c16_i32_92 : i32
    %168 = tpu.assume_multiple %167, 16 : i32
    %169 = arith.index_cast %168 : i32 to index
    %c0_93 = arith.constant 0 : index
    %170 = vector.load %arg19[%169, %c0_93] : memref<48x128xf32, #tpu.memory_space<vmem>>, vector<16x128xf32>
    %c0_94 = arith.constant 0 : index
    %c0_95 = arith.constant 0 : index
    %171 = vector.load %arg17[%c0_94, %c0_95] : memref<16x32xf32, #tpu.memory_space<vmem>>, vector<16x32xf32>
    %172 = arith.truncf %171 : vector<16x32xf32> to vector<16x32xbf16>
    %cst_96 = arith.constant dense<0.000000e+00> : vector<16x128xf32>
    %173 = tpu.matmul %172, %1, %cst_96 {dimension_numbers = #tpu.dot_dimension_numbers<[1], [0], [0], [1], [0, 0, 1, 1], [], []>} : vector<16x32xbf16>, vector<32x128xbf16>, vector<16x128xf32> -> vector<16x128xf32>
    %174 = arith.addf %170, %173 : vector<16x128xf32>
    %175 = vector.extract_strided_slice %174 {offsets = [0, 0], sizes = [16, 96], strides = [1, 1]} : vector<16x128xf32> to vector<16x96xf32>
    %176 = arith.negf %175 : vector<16x96xf32>
    %177 = math.exp %176 : vector<16x96xf32>
    %cst_97 = arith.constant 1.000000e+00 : f32
    %178 = vector.broadcast %cst_97 : f32 to vector<16x96xf32>
    %179 = arith.addf %178, %177 : vector<16x96xf32>
    %180 = arith.divf %178, %179 : vector<16x96xf32>
    %181 = vector.extract_strided_slice %180 {offsets = [0, 0], sizes = [16, 32], strides = [1, 1]} : vector<16x96xf32> to vector<16x32xf32>
    %182 = vector.extract_strided_slice %180 {offsets = [0, 32], sizes = [16, 32], strides = [1, 1]} : vector<16x96xf32> to vector<16x32xf32>
    %183 = vector.extract_strided_slice %180 {offsets = [0, 64], sizes = [16, 32], strides = [1, 1]} : vector<16x96xf32> to vector<16x32xf32>
    %184 = vector.extract_strided_slice %174 {offsets = [0, 96], sizes = [16, 32], strides = [1, 1]} : vector<16x128xf32> to vector<16x32xf32>
    %185 = math.tanh %184 : vector<16x32xf32>
    %c0_98 = arith.constant 0 : index
    %c0_99 = arith.constant 0 : index
    %186 = vector.load %arg18[%c0_98, %c0_99] : memref<16x32xf32, #tpu.memory_space<vmem>>, vector<16x32xf32>
    %187 = arith.mulf %182, %186 : vector<16x32xf32>
    %188 = arith.mulf %181, %185 : vector<16x32xf32>
    %189 = arith.addf %187, %188 : vector<16x32xf32>
    %190 = math.tanh %189 : vector<16x32xf32>
    %191 = arith.mulf %183, %190 : vector<16x32xf32>
    %c0_100 = arith.constant 0 : index
    %c0_101 = arith.constant 0 : index
    %192 = vector.load %arg18[%c0_100, %c0_101] : memref<16x32xf32, #tpu.memory_space<vmem>>, vector<16x32xf32>
    tpu.vector_store %arg18[%c0_100, %c0_101], %189 {strides = array<i32>} : memref<16x32xf32, #tpu.memory_space<vmem>>, vector<16x32xf32>,
    %c0_102 = arith.constant 0 : index
    %c0_103 = arith.constant 0 : index
    %193 = vector.load %arg17[%c0_102, %c0_103] : memref<16x32xf32, #tpu.memory_space<vmem>>, vector<16x32xf32>
    tpu.vector_store %arg17[%c0_102, %c0_103], %191 {strides = array<i32>} : memref<16x32xf32, #tpu.memory_space<vmem>>, vector<16x32xf32>,
    %194 = arith.index_cast %168 : i32 to index
    %c0_104 = arith.constant 0 : index
    %195 = vector.load %arg20[%194, %c0_104] : memref<48x32xf32, #tpu.memory_space<vmem>>, vector<16x32xf32>
    tpu.vector_store %arg20[%194, %c0_104], %191 {strides = array<i32>} : memref<48x32xf32, #tpu.memory_space<vmem>>, vector<16x32xf32>,
    %c3_i32_105 = arith.constant 3 : i32
    %c0_106 = arith.constant 0 : index
    %c0_107 = arith.constant 0 : index
    %196 = vector.load %arg20[%c0_106, %c0_107] : memref<48x32xf32, #tpu.memory_space<vmem>>, vector<48x32xf32>
    %197 = arith.truncf %196 : vector<48x32xf32> to vector<48x32xbf16>
    %c48_108 = arith.constant 48 : index
    %c0_109 = arith.constant 0 : index
    %198 = vector.load %arg21[%c48_108, %c0_109] : memref<128x32xbf16, #tpu.memory_space<vmem>>, vector<48x32xbf16>
    tpu.vector_store %arg21[%c48_108, %c0_109], %197 {strides = array<i32>} : memref<128x32xbf16, #tpu.memory_space<vmem>>, vector<48x32xbf16>,
    %c0_110 = arith.constant 0 : index
    %c96 = arith.constant 96 : index
    %c0_111 = arith.constant 0 : index
    %199 = vector.load %arg1[%c0_110, %c96, %c0_111] : memref<1x128x16xbf16, #tpu.memory_space<vmem>>, vector<1x32x16xbf16>
    %200 = vector.shape_cast %199 : vector<1x32x16xbf16> to vector<32x16xbf16>
    %cst_112 = arith.constant dense<0.000000e+00> : vector<32x128xf32>
    %201 = tpu.matmul %200, %0, %cst_112 {dimension_numbers = #tpu.dot_dimension_numbers<[1], [0], [0], [1], [0, 0, 1, 1], [], []>} : vector<32x16xbf16>, vector<16x128xbf16>, vector<32x128xf32> -> vector<32x128xf32>
    %202 = vector.broadcast %2 : vector<1x128xf32> to vector<32x128xf32>
    %203 = arith.addf %201, %202 : vector<32x128xf32>
    %c0_113 = arith.constant 0 : index
    %c0_114 = arith.constant 0 : index
    %204 = vector.load %arg19[%c0_113, %c0_114] : memref<48x128xf32, #tpu.memory_space<vmem>>, vector<32x128xf32>
    tpu.vector_store %arg19[%c0_113, %c0_114], %203 {strides = array<i32>} : memref<48x128xf32, #tpu.memory_space<vmem>>, vector<32x128xf32>,
    %c0_i32_115 = arith.constant 0 : i32
    %c16_i32_116 = arith.constant 16 : i32
    %205 = arith.muli %c0_i32_115, %c16_i32_116 : i32
    %206 = tpu.assume_multiple %205, 16 : i32
    %207 = arith.index_cast %206 : i32 to index
    %c0_117 = arith.constant 0 : index
    %208 = vector.load %arg19[%207, %c0_117] : memref<48x128xf32, #tpu.memory_space<vmem>>, vector<16x128xf32>
    %c0_118 = arith.constant 0 : index
    %c0_119 = arith.constant 0 : index
    %209 = vector.load %arg17[%c0_118, %c0_119] : memref<16x32xf32, #tpu.memory_space<vmem>>, vector<16x32xf32>
    %210 = arith.truncf %209 : vector<16x32xf32> to vector<16x32xbf16>
    %cst_120 = arith.constant dense<0.000000e+00> : vector<16x128xf32>
    %211 = tpu.matmul %210, %1, %cst_120 {dimension_numbers = #tpu.dot_dimension_numbers<[1], [0], [0], [1], [0, 0, 1, 1], [], []>} : vector<16x32xbf16>, vector<32x128xbf16>, vector<16x128xf32> -> vector<16x128xf32>
    %212 = arith.addf %208, %211 : vector<16x128xf32>
    %213 = vector.extract_strided_slice %212 {offsets = [0, 0], sizes = [16, 96], strides = [1, 1]} : vector<16x128xf32> to vector<16x96xf32>
    %214 = arith.negf %213 : vector<16x96xf32>
    %215 = math.exp %214 : vector<16x96xf32>
    %cst_121 = arith.constant 1.000000e+00 : f32
    %216 = vector.broadcast %cst_121 : f32 to vector<16x96xf32>
    %217 = arith.addf %216, %215 : vector<16x96xf32>
    %218 = arith.divf %216, %217 : vector<16x96xf32>
    %219 = vector.extract_strided_slice %218 {offsets = [0, 0], sizes = [16, 32], strides = [1, 1]} : vector<16x96xf32> to vector<16x32xf32>
    %220 = vector.extract_strided_slice %218 {offsets = [0, 32], sizes = [16, 32], strides = [1, 1]} : vector<16x96xf32> to vector<16x32xf32>
    %221 = vector.extract_strided_slice %218 {offsets = [0, 64], sizes = [16, 32], strides = [1, 1]} : vector<16x96xf32> to vector<16x32xf32>
    %222 = vector.extract_strided_slice %212 {offsets = [0, 96], sizes = [16, 32], strides = [1, 1]} : vector<16x128xf32> to vector<16x32xf32>
    %223 = math.tanh %222 : vector<16x32xf32>
    %c0_122 = arith.constant 0 : index
    %c0_123 = arith.constant 0 : index
    %224 = vector.load %arg18[%c0_122, %c0_123] : memref<16x32xf32, #tpu.memory_space<vmem>>, vector<16x32xf32>
    %225 = arith.mulf %220, %224 : vector<16x32xf32>
    %226 = arith.mulf %219, %223 : vector<16x32xf32>
    %227 = arith.addf %225, %226 : vector<16x32xf32>
    %228 = math.tanh %227 : vector<16x32xf32>
    %229 = arith.mulf %221, %228 : vector<16x32xf32>
    %c0_124 = arith.constant 0 : index
    %c0_125 = arith.constant 0 : index
    %230 = vector.load %arg18[%c0_124, %c0_125] : memref<16x32xf32, #tpu.memory_space<vmem>>, vector<16x32xf32>
    tpu.vector_store %arg18[%c0_124, %c0_125], %227 {strides = array<i32>} : memref<16x32xf32, #tpu.memory_space<vmem>>, vector<16x32xf32>,
    %c0_126 = arith.constant 0 : index
    %c0_127 = arith.constant 0 : index
    %231 = vector.load %arg17[%c0_126, %c0_127] : memref<16x32xf32, #tpu.memory_space<vmem>>, vector<16x32xf32>
    tpu.vector_store %arg17[%c0_126, %c0_127], %229 {strides = array<i32>} : memref<16x32xf32, #tpu.memory_space<vmem>>, vector<16x32xf32>,
    %232 = arith.index_cast %206 : i32 to index
    %c0_128 = arith.constant 0 : index
    %233 = vector.load %arg20[%232, %c0_128] : memref<48x32xf32, #tpu.memory_space<vmem>>, vector<16x32xf32>
    tpu.vector_store %arg20[%232, %c0_128], %229 {strides = array<i32>} : memref<48x32xf32, #tpu.memory_space<vmem>>, vector<16x32xf32>,
    %c1_i32_129 = arith.constant 1 : i32
    %c16_i32_130 = arith.constant 16 : i32
    %234 = arith.muli %c1_i32_129, %c16_i32_130 : i32
    %235 = tpu.assume_multiple %234, 16 : i32
    %236 = arith.index_cast %235 : i32 to index
    %c0_131 = arith.constant 0 : index
    %237 = vector.load %arg19[%236, %c0_131] : memref<48x128xf32, #tpu.memory_space<vmem>>, vector<16x128xf32>
    %c0_132 = arith.constant 0 : index
    %c0_133 = arith.constant 0 : index
    %238 = vector.load %arg17[%c0_132, %c0_133] : memref<16x32xf32, #tpu.memory_space<vmem>>, vector<16x32xf32>
    %239 = arith.truncf %238 : vector<16x32xf32> to vector<16x32xbf16>
    %cst_134 = arith.constant dense<0.000000e+00> : vector<16x128xf32>
    %240 = tpu.matmul %239, %1, %cst_134 {dimension_numbers = #tpu.dot_dimension_numbers<[1], [0], [0], [1], [0, 0, 1, 1], [], []>} : vector<16x32xbf16>, vector<32x128xbf16>, vector<16x128xf32> -> vector<16x128xf32>
    %241 = arith.addf %237, %240 : vector<16x128xf32>
    %242 = vector.extract_strided_slice %241 {offsets = [0, 0], sizes = [16, 96], strides = [1, 1]} : vector<16x128xf32> to vector<16x96xf32>
    %243 = arith.negf %242 : vector<16x96xf32>
    %244 = math.exp %243 : vector<16x96xf32>
    %cst_135 = arith.constant 1.000000e+00 : f32
    %245 = vector.broadcast %cst_135 : f32 to vector<16x96xf32>
    %246 = arith.addf %245, %244 : vector<16x96xf32>
    %247 = arith.divf %245, %246 : vector<16x96xf32>
    %248 = vector.extract_strided_slice %247 {offsets = [0, 0], sizes = [16, 32], strides = [1, 1]} : vector<16x96xf32> to vector<16x32xf32>
    %249 = vector.extract_strided_slice %247 {offsets = [0, 32], sizes = [16, 32], strides = [1, 1]} : vector<16x96xf32> to vector<16x32xf32>
    %250 = vector.extract_strided_slice %247 {offsets = [0, 64], sizes = [16, 32], strides = [1, 1]} : vector<16x96xf32> to vector<16x32xf32>
    %251 = vector.extract_strided_slice %241 {offsets = [0, 96], sizes = [16, 32], strides = [1, 1]} : vector<16x128xf32> to vector<16x32xf32>
    %252 = math.tanh %251 : vector<16x32xf32>
    %c0_136 = arith.constant 0 : index
    %c0_137 = arith.constant 0 : index
    %253 = vector.load %arg18[%c0_136, %c0_137] : memref<16x32xf32, #tpu.memory_space<vmem>>, vector<16x32xf32>
    %254 = arith.mulf %249, %253 : vector<16x32xf32>
    %255 = arith.mulf %248, %252 : vector<16x32xf32>
    %256 = arith.addf %254, %255 : vector<16x32xf32>
    %257 = math.tanh %256 : vector<16x32xf32>
    %258 = arith.mulf %250, %257 : vector<16x32xf32>
    %c0_138 = arith.constant 0 : index
    %c0_139 = arith.constant 0 : index
    %259 = vector.load %arg18[%c0_138, %c0_139] : memref<16x32xf32, #tpu.memory_space<vmem>>, vector<16x32xf32>
    tpu.vector_store %arg18[%c0_138, %c0_139], %256 {strides = array<i32>} : memref<16x32xf32, #tpu.memory_space<vmem>>, vector<16x32xf32>,
    %c0_140 = arith.constant 0 : index
    %c0_141 = arith.constant 0 : index
    %260 = vector.load %arg17[%c0_140, %c0_141] : memref<16x32xf32, #tpu.memory_space<vmem>>, vector<16x32xf32>
    tpu.vector_store %arg17[%c0_140, %c0_141], %258 {strides = array<i32>} : memref<16x32xf32, #tpu.memory_space<vmem>>, vector<16x32xf32>,
    %261 = arith.index_cast %235 : i32 to index
    %c0_142 = arith.constant 0 : index
    %262 = vector.load %arg20[%261, %c0_142] : memref<48x32xf32, #tpu.memory_space<vmem>>, vector<16x32xf32>
    tpu.vector_store %arg20[%261, %c0_142], %258 {strides = array<i32>} : memref<48x32xf32, #tpu.memory_space<vmem>>, vector<16x32xf32>,
    %c2_i32_143 = arith.constant 2 : i32
    %c0_144 = arith.constant 0 : index
    %c0_145 = arith.constant 0 : index
    %263 = vector.load %arg20[%c0_144, %c0_145] : memref<48x32xf32, #tpu.memory_space<vmem>>, vector<32x32xf32>
    %264 = arith.truncf %263 : vector<32x32xf32> to vector<32x32xbf16>
    %c96_146 = arith.constant 96 : index
    %c0_147 = arith.constant 0 : index
    %265 = vector.load %arg21[%c96_146, %c0_147] : memref<128x32xbf16, #tpu.memory_space<vmem>>, vector<32x32xbf16>
    tpu.vector_store %arg21[%c96_146, %c0_147], %264 {strides = array<i32>} : memref<128x32xbf16, #tpu.memory_space<vmem>>, vector<32x32xbf16>,
    %c0_148 = arith.constant 0 : index
    %c0_149 = arith.constant 0 : index
    %266 = vector.load %arg5[%c0_148, %c0_149] : memref<32x128xbf16, #tpu.memory_space<vmem>>, vector<32x128xbf16>
    %c0_150 = arith.constant 0 : index
    %c0_151 = arith.constant 0 : index
    %267 = vector.load %arg6[%c0_150, %c0_151] : memref<32x128xbf16, #tpu.memory_space<vmem>>, vector<32x128xbf16>
    %c0_152 = arith.constant 0 : index
    %c0_153 = arith.constant 0 : index
    %268 = vector.load %arg7[%c0_152, %c0_153] : memref<1x128xf32, #tpu.memory_space<vmem>>, vector<1x128xf32>
    %cst_154 = arith.constant 0.000000e+00 : f32
    %269 = vector.broadcast %cst_154 : f32 to vector<16x32xf32>
    %c0_155 = arith.constant 0 : index
    %c0_156 = arith.constant 0 : index
    %270 = vector.load %arg17[%c0_155, %c0_156] : memref<16x32xf32, #tpu.memory_space<vmem>>, vector<16x32xf32>
    tpu.vector_store %arg17[%c0_155, %c0_156], %269 {strides = array<i32>} : memref<16x32xf32, #tpu.memory_space<vmem>>, vector<16x32xf32>,
    %cst_157 = arith.constant 0.000000e+00 : f32
    %271 = vector.broadcast %cst_157 : f32 to vector<16x32xf32>
    %c0_158 = arith.constant 0 : index
    %c0_159 = arith.constant 0 : index
    %272 = vector.load %arg18[%c0_158, %c0_159] : memref<16x32xf32, #tpu.memory_space<vmem>>, vector<16x32xf32>
    tpu.vector_store %arg18[%c0_158, %c0_159], %271 {strides = array<i32>} : memref<16x32xf32, #tpu.memory_space<vmem>>, vector<16x32xf32>,
    %c0_160 = arith.constant 0 : index
    %c0_161 = arith.constant 0 : index
    %273 = vector.load %arg21[%c0_160, %c0_161] : memref<128x32xbf16, #tpu.memory_space<vmem>>, vector<48x32xbf16>
    %cst_162 = arith.constant dense<0.000000e+00> : vector<48x128xf32>
    %274 = tpu.matmul %273, %266, %cst_162 {dimension_numbers = #tpu.dot_dimension_numbers<[1], [0], [0], [1], [0, 0, 1, 1], [], []>} : vector<48x32xbf16>, vector<32x128xbf16>, vector<48x128xf32> -> vector<48x128xf32>
    %275 = vector.broadcast %268 : vector<1x128xf32> to vector<48x128xf32>
    %276 = arith.addf %274, %275 : vector<48x128xf32>
    %c0_163 = arith.constant 0 : index
    %c0_164 = arith.constant 0 : index
    %277 = vector.load %arg19[%c0_163, %c0_164] : memref<48x128xf32, #tpu.memory_space<vmem>>, vector<48x128xf32>
    tpu.vector_store %arg19[%c0_163, %c0_164], %276 {strides = array<i32>} : memref<48x128xf32, #tpu.memory_space<vmem>>, vector<48x128xf32>,
    %c0_i32_165 = arith.constant 0 : i32
    %c16_i32_166 = arith.constant 16 : i32
    %278 = arith.muli %c0_i32_165, %c16_i32_166 : i32
    %279 = tpu.assume_multiple %278, 16 : i32
    %280 = arith.index_cast %279 : i32 to index
    %c0_167 = arith.constant 0 : index
    %281 = vector.load %arg19[%280, %c0_167] : memref<48x128xf32, #tpu.memory_space<vmem>>, vector<16x128xf32>
    %c0_168 = arith.constant 0 : index
    %c0_169 = arith.constant 0 : index
    %282 = vector.load %arg17[%c0_168, %c0_169] : memref<16x32xf32, #tpu.memory_space<vmem>>, vector<16x32xf32>
    %283 = arith.truncf %282 : vector<16x32xf32> to vector<16x32xbf16>
    %cst_170 = arith.constant dense<0.000000e+00> : vector<16x128xf32>
    %284 = tpu.matmul %283, %267, %cst_170 {dimension_numbers = #tpu.dot_dimension_numbers<[1], [0], [0], [1], [0, 0, 1, 1], [], []>} : vector<16x32xbf16>, vector<32x128xbf16>, vector<16x128xf32> -> vector<16x128xf32>
    %285 = arith.addf %281, %284 : vector<16x128xf32>
    %286 = vector.extract_strided_slice %285 {offsets = [0, 0], sizes = [16, 96], strides = [1, 1]} : vector<16x128xf32> to vector<16x96xf32>
    %287 = arith.negf %286 : vector<16x96xf32>
    %288 = math.exp %287 : vector<16x96xf32>
    %cst_171 = arith.constant 1.000000e+00 : f32
    %289 = vector.broadcast %cst_171 : f32 to vector<16x96xf32>
    %290 = arith.addf %289, %288 : vector<16x96xf32>
    %291 = arith.divf %289, %290 : vector<16x96xf32>
    %292 = vector.extract_strided_slice %291 {offsets = [0, 0], sizes = [16, 32], strides = [1, 1]} : vector<16x96xf32> to vector<16x32xf32>
    %293 = vector.extract_strided_slice %291 {offsets = [0, 32], sizes = [16, 32], strides = [1, 1]} : vector<16x96xf32> to vector<16x32xf32>
    %294 = vector.extract_strided_slice %291 {offsets = [0, 64], sizes = [16, 32], strides = [1, 1]} : vector<16x96xf32> to vector<16x32xf32>
    %295 = vector.extract_strided_slice %285 {offsets = [0, 96], sizes = [16, 32], strides = [1, 1]} : vector<16x128xf32> to vector<16x32xf32>
    %296 = math.tanh %295 : vector<16x32xf32>
    %c0_172 = arith.constant 0 : index
    %c0_173 = arith.constant 0 : index
    %297 = vector.load %arg18[%c0_172, %c0_173] : memref<16x32xf32, #tpu.memory_space<vmem>>, vector<16x32xf32>
    %298 = arith.mulf %293, %297 : vector<16x32xf32>
    %299 = arith.mulf %292, %296 : vector<16x32xf32>
    %300 = arith.addf %298, %299 : vector<16x32xf32>
    %301 = math.tanh %300 : vector<16x32xf32>
    %302 = arith.mulf %294, %301 : vector<16x32xf32>
    %c0_174 = arith.constant 0 : index
    %c0_175 = arith.constant 0 : index
    %303 = vector.load %arg18[%c0_174, %c0_175] : memref<16x32xf32, #tpu.memory_space<vmem>>, vector<16x32xf32>
    tpu.vector_store %arg18[%c0_174, %c0_175], %300 {strides = array<i32>} : memref<16x32xf32, #tpu.memory_space<vmem>>, vector<16x32xf32>,
    %c0_176 = arith.constant 0 : index
    %c0_177 = arith.constant 0 : index
    %304 = vector.load %arg17[%c0_176, %c0_177] : memref<16x32xf32, #tpu.memory_space<vmem>>, vector<16x32xf32>
    tpu.vector_store %arg17[%c0_176, %c0_177], %302 {strides = array<i32>} : memref<16x32xf32, #tpu.memory_space<vmem>>, vector<16x32xf32>,
    %305 = arith.index_cast %279 : i32 to index
    %c0_178 = arith.constant 0 : index
    %306 = vector.load %arg20[%305, %c0_178] : memref<48x32xf32, #tpu.memory_space<vmem>>, vector<16x32xf32>
    tpu.vector_store %arg20[%305, %c0_178], %302 {strides = array<i32>} : memref<48x32xf32, #tpu.memory_space<vmem>>, vector<16x32xf32>,
    %c1_i32_179 = arith.constant 1 : i32
    %c16_i32_180 = arith.constant 16 : i32
    %307 = arith.muli %c1_i32_179, %c16_i32_180 : i32
    %308 = tpu.assume_multiple %307, 16 : i32
    %309 = arith.index_cast %308 : i32 to index
    %c0_181 = arith.constant 0 : index
    %310 = vector.load %arg19[%309, %c0_181] : memref<48x128xf32, #tpu.memory_space<vmem>>, vector<16x128xf32>
    %c0_182 = arith.constant 0 : index
    %c0_183 = arith.constant 0 : index
    %311 = vector.load %arg17[%c0_182, %c0_183] : memref<16x32xf32, #tpu.memory_space<vmem>>, vector<16x32xf32>
    %312 = arith.truncf %311 : vector<16x32xf32> to vector<16x32xbf16>
    %cst_184 = arith.constant dense<0.000000e+00> : vector<16x128xf32>
    %313 = tpu.matmul %312, %267, %cst_184 {dimension_numbers = #tpu.dot_dimension_numbers<[1], [0], [0], [1], [0, 0, 1, 1], [], []>} : vector<16x32xbf16>, vector<32x128xbf16>, vector<16x128xf32> -> vector<16x128xf32>
    %314 = arith.addf %310, %313 : vector<16x128xf32>
    %315 = vector.extract_strided_slice %314 {offsets = [0, 0], sizes = [16, 96], strides = [1, 1]} : vector<16x128xf32> to vector<16x96xf32>
    %316 = arith.negf %315 : vector<16x96xf32>
    %317 = math.exp %316 : vector<16x96xf32>
    %cst_185 = arith.constant 1.000000e+00 : f32
    %318 = vector.broadcast %cst_185 : f32 to vector<16x96xf32>
    %319 = arith.addf %318, %317 : vector<16x96xf32>
    %320 = arith.divf %318, %319 : vector<16x96xf32>
    %321 = vector.extract_strided_slice %320 {offsets = [0, 0], sizes = [16, 32], strides = [1, 1]} : vector<16x96xf32> to vector<16x32xf32>
    %322 = vector.extract_strided_slice %320 {offsets = [0, 32], sizes = [16, 32], strides = [1, 1]} : vector<16x96xf32> to vector<16x32xf32>
    %323 = vector.extract_strided_slice %320 {offsets = [0, 64], sizes = [16, 32], strides = [1, 1]} : vector<16x96xf32> to vector<16x32xf32>
    %324 = vector.extract_strided_slice %314 {offsets = [0, 96], sizes = [16, 32], strides = [1, 1]} : vector<16x128xf32> to vector<16x32xf32>
    %325 = math.tanh %324 : vector<16x32xf32>
    %c0_186 = arith.constant 0 : index
    %c0_187 = arith.constant 0 : index
    %326 = vector.load %arg18[%c0_186, %c0_187] : memref<16x32xf32, #tpu.memory_space<vmem>>, vector<16x32xf32>
    %327 = arith.mulf %322, %326 : vector<16x32xf32>
    %328 = arith.mulf %321, %325 : vector<16x32xf32>
    %329 = arith.addf %327, %328 : vector<16x32xf32>
    %330 = math.tanh %329 : vector<16x32xf32>
    %331 = arith.mulf %323, %330 : vector<16x32xf32>
    %c0_188 = arith.constant 0 : index
    %c0_189 = arith.constant 0 : index
    %332 = vector.load %arg18[%c0_188, %c0_189] : memref<16x32xf32, #tpu.memory_space<vmem>>, vector<16x32xf32>
    tpu.vector_store %arg18[%c0_188, %c0_189], %329 {strides = array<i32>} : memref<16x32xf32, #tpu.memory_space<vmem>>, vector<16x32xf32>,
    %c0_190 = arith.constant 0 : index
    %c0_191 = arith.constant 0 : index
    %333 = vector.load %arg17[%c0_190, %c0_191] : memref<16x32xf32, #tpu.memory_space<vmem>>, vector<16x32xf32>
    tpu.vector_store %arg17[%c0_190, %c0_191], %331 {strides = array<i32>} : memref<16x32xf32, #tpu.memory_space<vmem>>, vector<16x32xf32>,
    %334 = arith.index_cast %308 : i32 to index
    %c0_192 = arith.constant 0 : index
    %335 = vector.load %arg20[%334, %c0_192] : memref<48x32xf32, #tpu.memory_space<vmem>>, vector<16x32xf32>
    tpu.vector_store %arg20[%334, %c0_192], %331 {strides = array<i32>} : memref<48x32xf32, #tpu.memory_space<vmem>>, vector<16x32xf32>,
    %c2_i32_193 = arith.constant 2 : i32
    %c16_i32_194 = arith.constant 16 : i32
    %336 = arith.muli %c2_i32_193, %c16_i32_194 : i32
    %337 = tpu.assume_multiple %336, 16 : i32
    %338 = arith.index_cast %337 : i32 to index
    %c0_195 = arith.constant 0 : index
    %339 = vector.load %arg19[%338, %c0_195] : memref<48x128xf32, #tpu.memory_space<vmem>>, vector<16x128xf32>
    %c0_196 = arith.constant 0 : index
    %c0_197 = arith.constant 0 : index
    %340 = vector.load %arg17[%c0_196, %c0_197] : memref<16x32xf32, #tpu.memory_space<vmem>>, vector<16x32xf32>
    %341 = arith.truncf %340 : vector<16x32xf32> to vector<16x32xbf16>
    %cst_198 = arith.constant dense<0.000000e+00> : vector<16x128xf32>
    %342 = tpu.matmul %341, %267, %cst_198 {dimension_numbers = #tpu.dot_dimension_numbers<[1], [0], [0], [1], [0, 0, 1, 1], [], []>} : vector<16x32xbf16>, vector<32x128xbf16>, vector<16x128xf32> -> vector<16x128xf32>
    %343 = arith.addf %339, %342 : vector<16x128xf32>
    %344 = vector.extract_strided_slice %343 {offsets = [0, 0], sizes = [16, 96], strides = [1, 1]} : vector<16x128xf32> to vector<16x96xf32>
    %345 = arith.negf %344 : vector<16x96xf32>
    %346 = math.exp %345 : vector<16x96xf32>
    %cst_199 = arith.constant 1.000000e+00 : f32
    %347 = vector.broadcast %cst_199 : f32 to vector<16x96xf32>
    %348 = arith.addf %347, %346 : vector<16x96xf32>
    %349 = arith.divf %347, %348 : vector<16x96xf32>
    %350 = vector.extract_strided_slice %349 {offsets = [0, 0], sizes = [16, 32], strides = [1, 1]} : vector<16x96xf32> to vector<16x32xf32>
    %351 = vector.extract_strided_slice %349 {offsets = [0, 32], sizes = [16, 32], strides = [1, 1]} : vector<16x96xf32> to vector<16x32xf32>
    %352 = vector.extract_strided_slice %349 {offsets = [0, 64], sizes = [16, 32], strides = [1, 1]} : vector<16x96xf32> to vector<16x32xf32>
    %353 = vector.extract_strided_slice %343 {offsets = [0, 96], sizes = [16, 32], strides = [1, 1]} : vector<16x128xf32> to vector<16x32xf32>
    %354 = math.tanh %353 : vector<16x32xf32>
    %c0_200 = arith.constant 0 : index
    %c0_201 = arith.constant 0 : index
    %355 = vector.load %arg18[%c0_200, %c0_201] : memref<16x32xf32, #tpu.memory_space<vmem>>, vector<16x32xf32>
    %356 = arith.mulf %351, %355 : vector<16x32xf32>
    %357 = arith.mulf %350, %354 : vector<16x32xf32>
    %358 = arith.addf %356, %357 : vector<16x32xf32>
    %359 = math.tanh %358 : vector<16x32xf32>
    %360 = arith.mulf %352, %359 : vector<16x32xf32>
    %c0_202 = arith.constant 0 : index
    %c0_203 = arith.constant 0 : index
    %361 = vector.load %arg18[%c0_202, %c0_203] : memref<16x32xf32, #tpu.memory_space<vmem>>, vector<16x32xf32>
    tpu.vector_store %arg18[%c0_202, %c0_203], %358 {strides = array<i32>} : memref<16x32xf32, #tpu.memory_space<vmem>>, vector<16x32xf32>,
    %c0_204 = arith.constant 0 : index
    %c0_205 = arith.constant 0 : index
    %362 = vector.load %arg17[%c0_204, %c0_205] : memref<16x32xf32, #tpu.memory_space<vmem>>, vector<16x32xf32>
    tpu.vector_store %arg17[%c0_204, %c0_205], %360 {strides = array<i32>} : memref<16x32xf32, #tpu.memory_space<vmem>>, vector<16x32xf32>,
    %363 = arith.index_cast %337 : i32 to index
    %c0_206 = arith.constant 0 : index
    %364 = vector.load %arg20[%363, %c0_206] : memref<48x32xf32, #tpu.memory_space<vmem>>, vector<16x32xf32>
    tpu.vector_store %arg20[%363, %c0_206], %360 {strides = array<i32>} : memref<48x32xf32, #tpu.memory_space<vmem>>, vector<16x32xf32>,
    %c3_i32_207 = arith.constant 3 : i32
    %c0_208 = arith.constant 0 : index
    %c0_209 = arith.constant 0 : index
    %365 = vector.load %arg20[%c0_208, %c0_209] : memref<48x32xf32, #tpu.memory_space<vmem>>, vector<48x32xf32>
    %366 = arith.truncf %365 : vector<48x32xf32> to vector<48x32xbf16>
    %c0_210 = arith.constant 0 : index
    %c0_211 = arith.constant 0 : index
    %367 = vector.load %arg21[%c0_210, %c0_211] : memref<128x32xbf16, #tpu.memory_space<vmem>>, vector<48x32xbf16>
    tpu.vector_store %arg21[%c0_210, %c0_211], %366 {strides = array<i32>} : memref<128x32xbf16, #tpu.memory_space<vmem>>, vector<48x32xbf16>,
    %c48_212 = arith.constant 48 : index
    %c0_213 = arith.constant 0 : index
    %368 = vector.load %arg21[%c48_212, %c0_213] : memref<128x32xbf16, #tpu.memory_space<vmem>>, vector<48x32xbf16>
    %cst_214 = arith.constant dense<0.000000e+00> : vector<48x128xf32>
    %369 = tpu.matmul %368, %266, %cst_214 {dimension_numbers = #tpu.dot_dimension_numbers<[1], [0], [0], [1], [0, 0, 1, 1], [], []>} : vector<48x32xbf16>, vector<32x128xbf16>, vector<48x128xf32> -> vector<48x128xf32>
    %370 = vector.broadcast %268 : vector<1x128xf32> to vector<48x128xf32>
    %371 = arith.addf %369, %370 : vector<48x128xf32>
    %c0_215 = arith.constant 0 : index
    %c0_216 = arith.constant 0 : index
    %372 = vector.load %arg19[%c0_215, %c0_216] : memref<48x128xf32, #tpu.memory_space<vmem>>, vector<48x128xf32>
    tpu.vector_store %arg19[%c0_215, %c0_216], %371 {strides = array<i32>} : memref<48x128xf32, #tpu.memory_space<vmem>>, vector<48x128xf32>,
    %c0_i32_217 = arith.constant 0 : i32
    %c16_i32_218 = arith.constant 16 : i32
    %373 = arith.muli %c0_i32_217, %c16_i32_218 : i32
    %374 = tpu.assume_multiple %373, 16 : i32
    %375 = arith.index_cast %374 : i32 to index
    %c0_219 = arith.constant 0 : index
    %376 = vector.load %arg19[%375, %c0_219] : memref<48x128xf32, #tpu.memory_space<vmem>>, vector<16x128xf32>
    %c0_220 = arith.constant 0 : index
    %c0_221 = arith.constant 0 : index
    %377 = vector.load %arg17[%c0_220, %c0_221] : memref<16x32xf32, #tpu.memory_space<vmem>>, vector<16x32xf32>
    %378 = arith.truncf %377 : vector<16x32xf32> to vector<16x32xbf16>
    %cst_222 = arith.constant dense<0.000000e+00> : vector<16x128xf32>
    %379 = tpu.matmul %378, %267, %cst_222 {dimension_numbers = #tpu.dot_dimension_numbers<[1], [0], [0], [1], [0, 0, 1, 1], [], []>} : vector<16x32xbf16>, vector<32x128xbf16>, vector<16x128xf32> -> vector<16x128xf32>
    %380 = arith.addf %376, %379 : vector<16x128xf32>
    %381 = vector.extract_strided_slice %380 {offsets = [0, 0], sizes = [16, 96], strides = [1, 1]} : vector<16x128xf32> to vector<16x96xf32>
    %382 = arith.negf %381 : vector<16x96xf32>
    %383 = math.exp %382 : vector<16x96xf32>
    %cst_223 = arith.constant 1.000000e+00 : f32
    %384 = vector.broadcast %cst_223 : f32 to vector<16x96xf32>
    %385 = arith.addf %384, %383 : vector<16x96xf32>
    %386 = arith.divf %384, %385 : vector<16x96xf32>
    %387 = vector.extract_strided_slice %386 {offsets = [0, 0], sizes = [16, 32], strides = [1, 1]} : vector<16x96xf32> to vector<16x32xf32>
    %388 = vector.extract_strided_slice %386 {offsets = [0, 32], sizes = [16, 32], strides = [1, 1]} : vector<16x96xf32> to vector<16x32xf32>
    %389 = vector.extract_strided_slice %386 {offsets = [0, 64], sizes = [16, 32], strides = [1, 1]} : vector<16x96xf32> to vector<16x32xf32>
    %390 = vector.extract_strided_slice %380 {offsets = [0, 96], sizes = [16, 32], strides = [1, 1]} : vector<16x128xf32> to vector<16x32xf32>
    %391 = math.tanh %390 : vector<16x32xf32>
    %c0_224 = arith.constant 0 : index
    %c0_225 = arith.constant 0 : index
    %392 = vector.load %arg18[%c0_224, %c0_225] : memref<16x32xf32, #tpu.memory_space<vmem>>, vector<16x32xf32>
    %393 = arith.mulf %388, %392 : vector<16x32xf32>
    %394 = arith.mulf %387, %391 : vector<16x32xf32>
    %395 = arith.addf %393, %394 : vector<16x32xf32>
    %396 = math.tanh %395 : vector<16x32xf32>
    %397 = arith.mulf %389, %396 : vector<16x32xf32>
    %c0_226 = arith.constant 0 : index
    %c0_227 = arith.constant 0 : index
    %398 = vector.load %arg18[%c0_226, %c0_227] : memref<16x32xf32, #tpu.memory_space<vmem>>, vector<16x32xf32>
    tpu.vector_store %arg18[%c0_226, %c0_227], %395 {strides = array<i32>} : memref<16x32xf32, #tpu.memory_space<vmem>>, vector<16x32xf32>,
    %c0_228 = arith.constant 0 : index
    %c0_229 = arith.constant 0 : index
    %399 = vector.load %arg17[%c0_228, %c0_229] : memref<16x32xf32, #tpu.memory_space<vmem>>, vector<16x32xf32>
    tpu.vector_store %arg17[%c0_228, %c0_229], %397 {strides = array<i32>} : memref<16x32xf32, #tpu.memory_space<vmem>>, vector<16x32xf32>,
    %400 = arith.index_cast %374 : i32 to index
    %c0_230 = arith.constant 0 : index
    %401 = vector.load %arg20[%400, %c0_230] : memref<48x32xf32, #tpu.memory_space<vmem>>, vector<16x32xf32>
    tpu.vector_store %arg20[%400, %c0_230], %397 {strides = array<i32>} : memref<48x32xf32, #tpu.memory_space<vmem>>, vector<16x32xf32>,
    %c1_i32_231 = arith.constant 1 : i32
    %c16_i32_232 = arith.constant 16 : i32
    %402 = arith.muli %c1_i32_231, %c16_i32_232 : i32
    %403 = tpu.assume_multiple %402, 16 : i32
    %404 = arith.index_cast %403 : i32 to index
    %c0_233 = arith.constant 0 : index
    %405 = vector.load %arg19[%404, %c0_233] : memref<48x128xf32, #tpu.memory_space<vmem>>, vector<16x128xf32>
    %c0_234 = arith.constant 0 : index
    %c0_235 = arith.constant 0 : index
    %406 = vector.load %arg17[%c0_234, %c0_235] : memref<16x32xf32, #tpu.memory_space<vmem>>, vector<16x32xf32>
    %407 = arith.truncf %406 : vector<16x32xf32> to vector<16x32xbf16>
    %cst_236 = arith.constant dense<0.000000e+00> : vector<16x128xf32>
    %408 = tpu.matmul %407, %267, %cst_236 {dimension_numbers = #tpu.dot_dimension_numbers<[1], [0], [0], [1], [0, 0, 1, 1], [], []>} : vector<16x32xbf16>, vector<32x128xbf16>, vector<16x128xf32> -> vector<16x128xf32>
    %409 = arith.addf %405, %408 : vector<16x128xf32>
    %410 = vector.extract_strided_slice %409 {offsets = [0, 0], sizes = [16, 96], strides = [1, 1]} : vector<16x128xf32> to vector<16x96xf32>
    %411 = arith.negf %410 : vector<16x96xf32>
    %412 = math.exp %411 : vector<16x96xf32>
    %cst_237 = arith.constant 1.000000e+00 : f32
    %413 = vector.broadcast %cst_237 : f32 to vector<16x96xf32>
    %414 = arith.addf %413, %412 : vector<16x96xf32>
    %415 = arith.divf %413, %414 : vector<16x96xf32>
    %416 = vector.extract_strided_slice %415 {offsets = [0, 0], sizes = [16, 32], strides = [1, 1]} : vector<16x96xf32> to vector<16x32xf32>
    %417 = vector.extract_strided_slice %415 {offsets = [0, 32], sizes = [16, 32], strides = [1, 1]} : vector<16x96xf32> to vector<16x32xf32>
    %418 = vector.extract_strided_slice %415 {offsets = [0, 64], sizes = [16, 32], strides = [1, 1]} : vector<16x96xf32> to vector<16x32xf32>
    %419 = vector.extract_strided_slice %409 {offsets = [0, 96], sizes = [16, 32], strides = [1, 1]} : vector<16x128xf32> to vector<16x32xf32>
    %420 = math.tanh %419 : vector<16x32xf32>
    %c0_238 = arith.constant 0 : index
    %c0_239 = arith.constant 0 : index
    %421 = vector.load %arg18[%c0_238, %c0_239] : memref<16x32xf32, #tpu.memory_space<vmem>>, vector<16x32xf32>
    %422 = arith.mulf %417, %421 : vector<16x32xf32>
    %423 = arith.mulf %416, %420 : vector<16x32xf32>
    %424 = arith.addf %422, %423 : vector<16x32xf32>
    %425 = math.tanh %424 : vector<16x32xf32>
    %426 = arith.mulf %418, %425 : vector<16x32xf32>
    %c0_240 = arith.constant 0 : index
    %c0_241 = arith.constant 0 : index
    %427 = vector.load %arg18[%c0_240, %c0_241] : memref<16x32xf32, #tpu.memory_space<vmem>>, vector<16x32xf32>
    tpu.vector_store %arg18[%c0_240, %c0_241], %424 {strides = array<i32>} : memref<16x32xf32, #tpu.memory_space<vmem>>, vector<16x32xf32>,
    %c0_242 = arith.constant 0 : index
    %c0_243 = arith.constant 0 : index
    %428 = vector.load %arg17[%c0_242, %c0_243] : memref<16x32xf32, #tpu.memory_space<vmem>>, vector<16x32xf32>
    tpu.vector_store %arg17[%c0_242, %c0_243], %426 {strides = array<i32>} : memref<16x32xf32, #tpu.memory_space<vmem>>, vector<16x32xf32>,
    %429 = arith.index_cast %403 : i32 to index
    %c0_244 = arith.constant 0 : index
    %430 = vector.load %arg20[%429, %c0_244] : memref<48x32xf32, #tpu.memory_space<vmem>>, vector<16x32xf32>
    tpu.vector_store %arg20[%429, %c0_244], %426 {strides = array<i32>} : memref<48x32xf32, #tpu.memory_space<vmem>>, vector<16x32xf32>,
    %c2_i32_245 = arith.constant 2 : i32
    %c16_i32_246 = arith.constant 16 : i32
    %431 = arith.muli %c2_i32_245, %c16_i32_246 : i32
    %432 = tpu.assume_multiple %431, 16 : i32
    %433 = arith.index_cast %432 : i32 to index
    %c0_247 = arith.constant 0 : index
    %434 = vector.load %arg19[%433, %c0_247] : memref<48x128xf32, #tpu.memory_space<vmem>>, vector<16x128xf32>
    %c0_248 = arith.constant 0 : index
    %c0_249 = arith.constant 0 : index
    %435 = vector.load %arg17[%c0_248, %c0_249] : memref<16x32xf32, #tpu.memory_space<vmem>>, vector<16x32xf32>
    %436 = arith.truncf %435 : vector<16x32xf32> to vector<16x32xbf16>
    %cst_250 = arith.constant dense<0.000000e+00> : vector<16x128xf32>
    %437 = tpu.matmul %436, %267, %cst_250 {dimension_numbers = #tpu.dot_dimension_numbers<[1], [0], [0], [1], [0, 0, 1, 1], [], []>} : vector<16x32xbf16>, vector<32x128xbf16>, vector<16x128xf32> -> vector<16x128xf32>
    %438 = arith.addf %434, %437 : vector<16x128xf32>
    %439 = vector.extract_strided_slice %438 {offsets = [0, 0], sizes = [16, 96], strides = [1, 1]} : vector<16x128xf32> to vector<16x96xf32>
    %440 = arith.negf %439 : vector<16x96xf32>
    %441 = math.exp %440 : vector<16x96xf32>
    %cst_251 = arith.constant 1.000000e+00 : f32
    %442 = vector.broadcast %cst_251 : f32 to vector<16x96xf32>
    %443 = arith.addf %442, %441 : vector<16x96xf32>
    %444 = arith.divf %442, %443 : vector<16x96xf32>
    %445 = vector.extract_strided_slice %444 {offsets = [0, 0], sizes = [16, 32], strides = [1, 1]} : vector<16x96xf32> to vector<16x32xf32>
    %446 = vector.extract_strided_slice %444 {offsets = [0, 32], sizes = [16, 32], strides = [1, 1]} : vector<16x96xf32> to vector<16x32xf32>
    %447 = vector.extract_strided_slice %444 {offsets = [0, 64], sizes = [16, 32], strides = [1, 1]} : vector<16x96xf32> to vector<16x32xf32>
    %448 = vector.extract_strided_slice %438 {offsets = [0, 96], sizes = [16, 32], strides = [1, 1]} : vector<16x128xf32> to vector<16x32xf32>
    %449 = math.tanh %448 : vector<16x32xf32>
    %c0_252 = arith.constant 0 : index
    %c0_253 = arith.constant 0 : index
    %450 = vector.load %arg18[%c0_252, %c0_253] : memref<16x32xf32, #tpu.memory_space<vmem>>, vector<16x32xf32>
    %451 = arith.mulf %446, %450 : vector<16x32xf32>
    %452 = arith.mulf %445, %449 : vector<16x32xf32>
    %453 = arith.addf %451, %452 : vector<16x32xf32>
    %454 = math.tanh %453 : vector<16x32xf32>
    %455 = arith.mulf %447, %454 : vector<16x32xf32>
    %c0_254 = arith.constant 0 : index
    %c0_255 = arith.constant 0 : index
    %456 = vector.load %arg18[%c0_254, %c0_255] : memref<16x32xf32, #tpu.memory_space<vmem>>, vector<16x32xf32>
    tpu.vector_store %arg18[%c0_254, %c0_255], %453 {strides = array<i32>} : memref<16x32xf32, #tpu.memory_space<vmem>>, vector<16x32xf32>,
    %c0_256 = arith.constant 0 : index
    %c0_257 = arith.constant 0 : index
    %457 = vector.load %arg17[%c0_256, %c0_257] : memref<16x32xf32, #tpu.memory_space<vmem>>, vector<16x32xf32>
    tpu.vector_store %arg17[%c0_256, %c0_257], %455 {strides = array<i32>} : memref<16x32xf32, #tpu.memory_space<vmem>>, vector<16x32xf32>,
    %458 = arith.index_cast %432 : i32 to index
    %c0_258 = arith.constant 0 : index
    %459 = vector.load %arg20[%458, %c0_258] : memref<48x32xf32, #tpu.memory_space<vmem>>, vector<16x32xf32>
    tpu.vector_store %arg20[%458, %c0_258], %455 {strides = array<i32>} : memref<48x32xf32, #tpu.memory_space<vmem>>, vector<16x32xf32>,
    %c3_i32_259 = arith.constant 3 : i32
    %c0_260 = arith.constant 0 : index
    %c0_261 = arith.constant 0 : index
    %460 = vector.load %arg20[%c0_260, %c0_261] : memref<48x32xf32, #tpu.memory_space<vmem>>, vector<48x32xf32>
    %461 = arith.truncf %460 : vector<48x32xf32> to vector<48x32xbf16>
    %c48_262 = arith.constant 48 : index
    %c0_263 = arith.constant 0 : index
    %462 = vector.load %arg21[%c48_262, %c0_263] : memref<128x32xbf16, #tpu.memory_space<vmem>>, vector<48x32xbf16>
    tpu.vector_store %arg21[%c48_262, %c0_263], %461 {strides = array<i32>} : memref<128x32xbf16, #tpu.memory_space<vmem>>, vector<48x32xbf16>,
    %c96_264 = arith.constant 96 : index
    %c0_265 = arith.constant 0 : index
    %463 = vector.load %arg21[%c96_264, %c0_265] : memref<128x32xbf16, #tpu.memory_space<vmem>>, vector<32x32xbf16>
    %cst_266 = arith.constant dense<0.000000e+00> : vector<32x128xf32>
    %464 = tpu.matmul %463, %266, %cst_266 {dimension_numbers = #tpu.dot_dimension_numbers<[1], [0], [0], [1], [0, 0, 1, 1], [], []>} : vector<32x32xbf16>, vector<32x128xbf16>, vector<32x128xf32> -> vector<32x128xf32>
    %465 = vector.broadcast %268 : vector<1x128xf32> to vector<32x128xf32>
    %466 = arith.addf %464, %465 : vector<32x128xf32>
    %c0_267 = arith.constant 0 : index
    %c0_268 = arith.constant 0 : index
    %467 = vector.load %arg19[%c0_267, %c0_268] : memref<48x128xf32, #tpu.memory_space<vmem>>, vector<32x128xf32>
    tpu.vector_store %arg19[%c0_267, %c0_268], %466 {strides = array<i32>} : memref<48x128xf32, #tpu.memory_space<vmem>>, vector<32x128xf32>,
    %c0_i32_269 = arith.constant 0 : i32
    %c16_i32_270 = arith.constant 16 : i32
    %468 = arith.muli %c0_i32_269, %c16_i32_270 : i32
    %469 = tpu.assume_multiple %468, 16 : i32
    %470 = arith.index_cast %469 : i32 to index
    %c0_271 = arith.constant 0 : index
    %471 = vector.load %arg19[%470, %c0_271] : memref<48x128xf32, #tpu.memory_space<vmem>>, vector<16x128xf32>
    %c0_272 = arith.constant 0 : index
    %c0_273 = arith.constant 0 : index
    %472 = vector.load %arg17[%c0_272, %c0_273] : memref<16x32xf32, #tpu.memory_space<vmem>>, vector<16x32xf32>
    %473 = arith.truncf %472 : vector<16x32xf32> to vector<16x32xbf16>
    %cst_274 = arith.constant dense<0.000000e+00> : vector<16x128xf32>
    %474 = tpu.matmul %473, %267, %cst_274 {dimension_numbers = #tpu.dot_dimension_numbers<[1], [0], [0], [1], [0, 0, 1, 1], [], []>} : vector<16x32xbf16>, vector<32x128xbf16>, vector<16x128xf32> -> vector<16x128xf32>
    %475 = arith.addf %471, %474 : vector<16x128xf32>
    %476 = vector.extract_strided_slice %475 {offsets = [0, 0], sizes = [16, 96], strides = [1, 1]} : vector<16x128xf32> to vector<16x96xf32>
    %477 = arith.negf %476 : vector<16x96xf32>
    %478 = math.exp %477 : vector<16x96xf32>
    %cst_275 = arith.constant 1.000000e+00 : f32
    %479 = vector.broadcast %cst_275 : f32 to vector<16x96xf32>
    %480 = arith.addf %479, %478 : vector<16x96xf32>
    %481 = arith.divf %479, %480 : vector<16x96xf32>
    %482 = vector.extract_strided_slice %481 {offsets = [0, 0], sizes = [16, 32], strides = [1, 1]} : vector<16x96xf32> to vector<16x32xf32>
    %483 = vector.extract_strided_slice %481 {offsets = [0, 32], sizes = [16, 32], strides = [1, 1]} : vector<16x96xf32> to vector<16x32xf32>
    %484 = vector.extract_strided_slice %481 {offsets = [0, 64], sizes = [16, 32], strides = [1, 1]} : vector<16x96xf32> to vector<16x32xf32>
    %485 = vector.extract_strided_slice %475 {offsets = [0, 96], sizes = [16, 32], strides = [1, 1]} : vector<16x128xf32> to vector<16x32xf32>
    %486 = math.tanh %485 : vector<16x32xf32>
    %c0_276 = arith.constant 0 : index
    %c0_277 = arith.constant 0 : index
    %487 = vector.load %arg18[%c0_276, %c0_277] : memref<16x32xf32, #tpu.memory_space<vmem>>, vector<16x32xf32>
    %488 = arith.mulf %483, %487 : vector<16x32xf32>
    %489 = arith.mulf %482, %486 : vector<16x32xf32>
    %490 = arith.addf %488, %489 : vector<16x32xf32>
    %491 = math.tanh %490 : vector<16x32xf32>
    %492 = arith.mulf %484, %491 : vector<16x32xf32>
    %c0_278 = arith.constant 0 : index
    %c0_279 = arith.constant 0 : index
    %493 = vector.load %arg18[%c0_278, %c0_279] : memref<16x32xf32, #tpu.memory_space<vmem>>, vector<16x32xf32>
    tpu.vector_store %arg18[%c0_278, %c0_279], %490 {strides = array<i32>} : memref<16x32xf32, #tpu.memory_space<vmem>>, vector<16x32xf32>,
    %c0_280 = arith.constant 0 : index
    %c0_281 = arith.constant 0 : index
    %494 = vector.load %arg17[%c0_280, %c0_281] : memref<16x32xf32, #tpu.memory_space<vmem>>, vector<16x32xf32>
    tpu.vector_store %arg17[%c0_280, %c0_281], %492 {strides = array<i32>} : memref<16x32xf32, #tpu.memory_space<vmem>>, vector<16x32xf32>,
    %495 = arith.index_cast %469 : i32 to index
    %c0_282 = arith.constant 0 : index
    %496 = vector.load %arg20[%495, %c0_282] : memref<48x32xf32, #tpu.memory_space<vmem>>, vector<16x32xf32>
    tpu.vector_store %arg20[%495, %c0_282], %492 {strides = array<i32>} : memref<48x32xf32, #tpu.memory_space<vmem>>, vector<16x32xf32>,
    %c1_i32_283 = arith.constant 1 : i32
    %c16_i32_284 = arith.constant 16 : i32
    %497 = arith.muli %c1_i32_283, %c16_i32_284 : i32
    %498 = tpu.assume_multiple %497, 16 : i32
    %499 = arith.index_cast %498 : i32 to index
    %c0_285 = arith.constant 0 : index
    %500 = vector.load %arg19[%499, %c0_285] : memref<48x128xf32, #tpu.memory_space<vmem>>, vector<16x128xf32>
    %c0_286 = arith.constant 0 : index
    %c0_287 = arith.constant 0 : index
    %501 = vector.load %arg17[%c0_286, %c0_287] : memref<16x32xf32, #tpu.memory_space<vmem>>, vector<16x32xf32>
    %502 = arith.truncf %501 : vector<16x32xf32> to vector<16x32xbf16>
    %cst_288 = arith.constant dense<0.000000e+00> : vector<16x128xf32>
    %503 = tpu.matmul %502, %267, %cst_288 {dimension_numbers = #tpu.dot_dimension_numbers<[1], [0], [0], [1], [0, 0, 1, 1], [], []>} : vector<16x32xbf16>, vector<32x128xbf16>, vector<16x128xf32> -> vector<16x128xf32>
    %504 = arith.addf %500, %503 : vector<16x128xf32>
    %505 = vector.extract_strided_slice %504 {offsets = [0, 0], sizes = [16, 96], strides = [1, 1]} : vector<16x128xf32> to vector<16x96xf32>
    %506 = arith.negf %505 : vector<16x96xf32>
    %507 = math.exp %506 : vector<16x96xf32>
    %cst_289 = arith.constant 1.000000e+00 : f32
    %508 = vector.broadcast %cst_289 : f32 to vector<16x96xf32>
    %509 = arith.addf %508, %507 : vector<16x96xf32>
    %510 = arith.divf %508, %509 : vector<16x96xf32>
    %511 = vector.extract_strided_slice %510 {offsets = [0, 0], sizes = [16, 32], strides = [1, 1]} : vector<16x96xf32> to vector<16x32xf32>
    %512 = vector.extract_strided_slice %510 {offsets = [0, 32], sizes = [16, 32], strides = [1, 1]} : vector<16x96xf32> to vector<16x32xf32>
    %513 = vector.extract_strided_slice %510 {offsets = [0, 64], sizes = [16, 32], strides = [1, 1]} : vector<16x96xf32> to vector<16x32xf32>
    %514 = vector.extract_strided_slice %504 {offsets = [0, 96], sizes = [16, 32], strides = [1, 1]} : vector<16x128xf32> to vector<16x32xf32>
    %515 = math.tanh %514 : vector<16x32xf32>
    %c0_290 = arith.constant 0 : index
    %c0_291 = arith.constant 0 : index
    %516 = vector.load %arg18[%c0_290, %c0_291] : memref<16x32xf32, #tpu.memory_space<vmem>>, vector<16x32xf32>
    %517 = arith.mulf %512, %516 : vector<16x32xf32>
    %518 = arith.mulf %511, %515 : vector<16x32xf32>
    %519 = arith.addf %517, %518 : vector<16x32xf32>
    %520 = math.tanh %519 : vector<16x32xf32>
    %521 = arith.mulf %513, %520 : vector<16x32xf32>
    %c0_292 = arith.constant 0 : index
    %c0_293 = arith.constant 0 : index
    %522 = vector.load %arg18[%c0_292, %c0_293] : memref<16x32xf32, #tpu.memory_space<vmem>>, vector<16x32xf32>
    tpu.vector_store %arg18[%c0_292, %c0_293], %519 {strides = array<i32>} : memref<16x32xf32, #tpu.memory_space<vmem>>, vector<16x32xf32>,
    %c0_294 = arith.constant 0 : index
    %c0_295 = arith.constant 0 : index
    %523 = vector.load %arg17[%c0_294, %c0_295] : memref<16x32xf32, #tpu.memory_space<vmem>>, vector<16x32xf32>
    tpu.vector_store %arg17[%c0_294, %c0_295], %521 {strides = array<i32>} : memref<16x32xf32, #tpu.memory_space<vmem>>, vector<16x32xf32>,
    %524 = arith.index_cast %498 : i32 to index
    %c0_296 = arith.constant 0 : index
    %525 = vector.load %arg20[%524, %c0_296] : memref<48x32xf32, #tpu.memory_space<vmem>>, vector<16x32xf32>
    tpu.vector_store %arg20[%524, %c0_296], %521 {strides = array<i32>} : memref<48x32xf32, #tpu.memory_space<vmem>>, vector<16x32xf32>,
    %c2_i32_297 = arith.constant 2 : i32
    %c0_298 = arith.constant 0 : index
    %c0_299 = arith.constant 0 : index
    %526 = vector.load %arg20[%c0_298, %c0_299] : memref<48x32xf32, #tpu.memory_space<vmem>>, vector<32x32xf32>
    %527 = arith.truncf %526 : vector<32x32xf32> to vector<32x32xbf16>
    %c96_300 = arith.constant 96 : index
    %c0_301 = arith.constant 0 : index
    %528 = vector.load %arg21[%c96_300, %c0_301] : memref<128x32xbf16, #tpu.memory_space<vmem>>, vector<32x32xbf16>
    tpu.vector_store %arg21[%c96_300, %c0_301], %527 {strides = array<i32>} : memref<128x32xbf16, #tpu.memory_space<vmem>>, vector<32x32xbf16>,
    %c0_302 = arith.constant 0 : index
    %c0_303 = arith.constant 0 : index
    %529 = vector.load %arg8[%c0_302, %c0_303] : memref<32x128xbf16, #tpu.memory_space<vmem>>, vector<32x128xbf16>
    %c0_304 = arith.constant 0 : index
    %c0_305 = arith.constant 0 : index
    %530 = vector.load %arg9[%c0_304, %c0_305] : memref<32x128xbf16, #tpu.memory_space<vmem>>, vector<32x128xbf16>
    %c0_306 = arith.constant 0 : index
    %c0_307 = arith.constant 0 : index
    %531 = vector.load %arg10[%c0_306, %c0_307] : memref<1x128xf32, #tpu.memory_space<vmem>>, vector<1x128xf32>
    %cst_308 = arith.constant 0.000000e+00 : f32
    %532 = vector.broadcast %cst_308 : f32 to vector<16x32xf32>
    %c0_309 = arith.constant 0 : index
    %c0_310 = arith.constant 0 : index
    %533 = vector.load %arg17[%c0_309, %c0_310] : memref<16x32xf32, #tpu.memory_space<vmem>>, vector<16x32xf32>
    tpu.vector_store %arg17[%c0_309, %c0_310], %532 {strides = array<i32>} : memref<16x32xf32, #tpu.memory_space<vmem>>, vector<16x32xf32>,
    %cst_311 = arith.constant 0.000000e+00 : f32
    %534 = vector.broadcast %cst_311 : f32 to vector<16x32xf32>
    %c0_312 = arith.constant 0 : index
    %c0_313 = arith.constant 0 : index
    %535 = vector.load %arg18[%c0_312, %c0_313] : memref<16x32xf32, #tpu.memory_space<vmem>>, vector<16x32xf32>
    tpu.vector_store %arg18[%c0_312, %c0_313], %534 {strides = array<i32>} : memref<16x32xf32, #tpu.memory_space<vmem>>, vector<16x32xf32>,
    %c0_314 = arith.constant 0 : index
    %c0_315 = arith.constant 0 : index
    %536 = vector.load %arg21[%c0_314, %c0_315] : memref<128x32xbf16, #tpu.memory_space<vmem>>, vector<48x32xbf16>
    %cst_316 = arith.constant dense<0.000000e+00> : vector<48x128xf32>
    %537 = tpu.matmul %536, %529, %cst_316 {dimension_numbers = #tpu.dot_dimension_numbers<[1], [0], [0], [1], [0, 0, 1, 1], [], []>} : vector<48x32xbf16>, vector<32x128xbf16>, vector<48x128xf32> -> vector<48x128xf32>
    %538 = vector.broadcast %531 : vector<1x128xf32> to vector<48x128xf32>
    %539 = arith.addf %537, %538 : vector<48x128xf32>
    %c0_317 = arith.constant 0 : index
    %c0_318 = arith.constant 0 : index
    %540 = vector.load %arg19[%c0_317, %c0_318] : memref<48x128xf32, #tpu.memory_space<vmem>>, vector<48x128xf32>
    tpu.vector_store %arg19[%c0_317, %c0_318], %539 {strides = array<i32>} : memref<48x128xf32, #tpu.memory_space<vmem>>, vector<48x128xf32>,
    %c0_i32_319 = arith.constant 0 : i32
    %c16_i32_320 = arith.constant 16 : i32
    %541 = arith.muli %c0_i32_319, %c16_i32_320 : i32
    %542 = tpu.assume_multiple %541, 16 : i32
    %543 = arith.index_cast %542 : i32 to index
    %c0_321 = arith.constant 0 : index
    %544 = vector.load %arg19[%543, %c0_321] : memref<48x128xf32, #tpu.memory_space<vmem>>, vector<16x128xf32>
    %c0_322 = arith.constant 0 : index
    %c0_323 = arith.constant 0 : index
    %545 = vector.load %arg17[%c0_322, %c0_323] : memref<16x32xf32, #tpu.memory_space<vmem>>, vector<16x32xf32>
    %546 = arith.truncf %545 : vector<16x32xf32> to vector<16x32xbf16>
    %cst_324 = arith.constant dense<0.000000e+00> : vector<16x128xf32>
    %547 = tpu.matmul %546, %530, %cst_324 {dimension_numbers = #tpu.dot_dimension_numbers<[1], [0], [0], [1], [0, 0, 1, 1], [], []>} : vector<16x32xbf16>, vector<32x128xbf16>, vector<16x128xf32> -> vector<16x128xf32>
    %548 = arith.addf %544, %547 : vector<16x128xf32>
    %549 = vector.extract_strided_slice %548 {offsets = [0, 0], sizes = [16, 96], strides = [1, 1]} : vector<16x128xf32> to vector<16x96xf32>
    %550 = arith.negf %549 : vector<16x96xf32>
    %551 = math.exp %550 : vector<16x96xf32>
    %cst_325 = arith.constant 1.000000e+00 : f32
    %552 = vector.broadcast %cst_325 : f32 to vector<16x96xf32>
    %553 = arith.addf %552, %551 : vector<16x96xf32>
    %554 = arith.divf %552, %553 : vector<16x96xf32>
    %555 = vector.extract_strided_slice %554 {offsets = [0, 0], sizes = [16, 32], strides = [1, 1]} : vector<16x96xf32> to vector<16x32xf32>
    %556 = vector.extract_strided_slice %554 {offsets = [0, 32], sizes = [16, 32], strides = [1, 1]} : vector<16x96xf32> to vector<16x32xf32>
    %557 = vector.extract_strided_slice %554 {offsets = [0, 64], sizes = [16, 32], strides = [1, 1]} : vector<16x96xf32> to vector<16x32xf32>
    %558 = vector.extract_strided_slice %548 {offsets = [0, 96], sizes = [16, 32], strides = [1, 1]} : vector<16x128xf32> to vector<16x32xf32>
    %559 = math.tanh %558 : vector<16x32xf32>
    %c0_326 = arith.constant 0 : index
    %c0_327 = arith.constant 0 : index
    %560 = vector.load %arg18[%c0_326, %c0_327] : memref<16x32xf32, #tpu.memory_space<vmem>>, vector<16x32xf32>
    %561 = arith.mulf %556, %560 : vector<16x32xf32>
    %562 = arith.mulf %555, %559 : vector<16x32xf32>
    %563 = arith.addf %561, %562 : vector<16x32xf32>
    %564 = math.tanh %563 : vector<16x32xf32>
    %565 = arith.mulf %557, %564 : vector<16x32xf32>
    %c0_328 = arith.constant 0 : index
    %c0_329 = arith.constant 0 : index
    %566 = vector.load %arg18[%c0_328, %c0_329] : memref<16x32xf32, #tpu.memory_space<vmem>>, vector<16x32xf32>
    tpu.vector_store %arg18[%c0_328, %c0_329], %563 {strides = array<i32>} : memref<16x32xf32, #tpu.memory_space<vmem>>, vector<16x32xf32>,
    %c0_330 = arith.constant 0 : index
    %c0_331 = arith.constant 0 : index
    %567 = vector.load %arg17[%c0_330, %c0_331] : memref<16x32xf32, #tpu.memory_space<vmem>>, vector<16x32xf32>
    tpu.vector_store %arg17[%c0_330, %c0_331], %565 {strides = array<i32>} : memref<16x32xf32, #tpu.memory_space<vmem>>, vector<16x32xf32>,
    %568 = arith.index_cast %542 : i32 to index
    %c0_332 = arith.constant 0 : index
    %569 = vector.load %arg20[%568, %c0_332] : memref<48x32xf32, #tpu.memory_space<vmem>>, vector<16x32xf32>
    tpu.vector_store %arg20[%568, %c0_332], %565 {strides = array<i32>} : memref<48x32xf32, #tpu.memory_space<vmem>>, vector<16x32xf32>,
    %c1_i32_333 = arith.constant 1 : i32
    %c16_i32_334 = arith.constant 16 : i32
    %570 = arith.muli %c1_i32_333, %c16_i32_334 : i32
    %571 = tpu.assume_multiple %570, 16 : i32
    %572 = arith.index_cast %571 : i32 to index
    %c0_335 = arith.constant 0 : index
    %573 = vector.load %arg19[%572, %c0_335] : memref<48x128xf32, #tpu.memory_space<vmem>>, vector<16x128xf32>
    %c0_336 = arith.constant 0 : index
    %c0_337 = arith.constant 0 : index
    %574 = vector.load %arg17[%c0_336, %c0_337] : memref<16x32xf32, #tpu.memory_space<vmem>>, vector<16x32xf32>
    %575 = arith.truncf %574 : vector<16x32xf32> to vector<16x32xbf16>
    %cst_338 = arith.constant dense<0.000000e+00> : vector<16x128xf32>
    %576 = tpu.matmul %575, %530, %cst_338 {dimension_numbers = #tpu.dot_dimension_numbers<[1], [0], [0], [1], [0, 0, 1, 1], [], []>} : vector<16x32xbf16>, vector<32x128xbf16>, vector<16x128xf32> -> vector<16x128xf32>
    %577 = arith.addf %573, %576 : vector<16x128xf32>
    %578 = vector.extract_strided_slice %577 {offsets = [0, 0], sizes = [16, 96], strides = [1, 1]} : vector<16x128xf32> to vector<16x96xf32>
    %579 = arith.negf %578 : vector<16x96xf32>
    %580 = math.exp %579 : vector<16x96xf32>
    %cst_339 = arith.constant 1.000000e+00 : f32
    %581 = vector.broadcast %cst_339 : f32 to vector<16x96xf32>
    %582 = arith.addf %581, %580 : vector<16x96xf32>
    %583 = arith.divf %581, %582 : vector<16x96xf32>
    %584 = vector.extract_strided_slice %583 {offsets = [0, 0], sizes = [16, 32], strides = [1, 1]} : vector<16x96xf32> to vector<16x32xf32>
    %585 = vector.extract_strided_slice %583 {offsets = [0, 32], sizes = [16, 32], strides = [1, 1]} : vector<16x96xf32> to vector<16x32xf32>
    %586 = vector.extract_strided_slice %583 {offsets = [0, 64], sizes = [16, 32], strides = [1, 1]} : vector<16x96xf32> to vector<16x32xf32>
    %587 = vector.extract_strided_slice %577 {offsets = [0, 96], sizes = [16, 32], strides = [1, 1]} : vector<16x128xf32> to vector<16x32xf32>
    %588 = math.tanh %587 : vector<16x32xf32>
    %c0_340 = arith.constant 0 : index
    %c0_341 = arith.constant 0 : index
    %589 = vector.load %arg18[%c0_340, %c0_341] : memref<16x32xf32, #tpu.memory_space<vmem>>, vector<16x32xf32>
    %590 = arith.mulf %585, %589 : vector<16x32xf32>
    %591 = arith.mulf %584, %588 : vector<16x32xf32>
    %592 = arith.addf %590, %591 : vector<16x32xf32>
    %593 = math.tanh %592 : vector<16x32xf32>
    %594 = arith.mulf %586, %593 : vector<16x32xf32>
    %c0_342 = arith.constant 0 : index
    %c0_343 = arith.constant 0 : index
    %595 = vector.load %arg18[%c0_342, %c0_343] : memref<16x32xf32, #tpu.memory_space<vmem>>, vector<16x32xf32>
    tpu.vector_store %arg18[%c0_342, %c0_343], %592 {strides = array<i32>} : memref<16x32xf32, #tpu.memory_space<vmem>>, vector<16x32xf32>,
    %c0_344 = arith.constant 0 : index
    %c0_345 = arith.constant 0 : index
    %596 = vector.load %arg17[%c0_344, %c0_345] : memref<16x32xf32, #tpu.memory_space<vmem>>, vector<16x32xf32>
    tpu.vector_store %arg17[%c0_344, %c0_345], %594 {strides = array<i32>} : memref<16x32xf32, #tpu.memory_space<vmem>>, vector<16x32xf32>,
    %597 = arith.index_cast %571 : i32 to index
    %c0_346 = arith.constant 0 : index
    %598 = vector.load %arg20[%597, %c0_346] : memref<48x32xf32, #tpu.memory_space<vmem>>, vector<16x32xf32>
    tpu.vector_store %arg20[%597, %c0_346], %594 {strides = array<i32>} : memref<48x32xf32, #tpu.memory_space<vmem>>, vector<16x32xf32>,
    %c2_i32_347 = arith.constant 2 : i32
    %c16_i32_348 = arith.constant 16 : i32
    %599 = arith.muli %c2_i32_347, %c16_i32_348 : i32
    %600 = tpu.assume_multiple %599, 16 : i32
    %601 = arith.index_cast %600 : i32 to index
    %c0_349 = arith.constant 0 : index
    %602 = vector.load %arg19[%601, %c0_349] : memref<48x128xf32, #tpu.memory_space<vmem>>, vector<16x128xf32>
    %c0_350 = arith.constant 0 : index
    %c0_351 = arith.constant 0 : index
    %603 = vector.load %arg17[%c0_350, %c0_351] : memref<16x32xf32, #tpu.memory_space<vmem>>, vector<16x32xf32>
    %604 = arith.truncf %603 : vector<16x32xf32> to vector<16x32xbf16>
    %cst_352 = arith.constant dense<0.000000e+00> : vector<16x128xf32>
    %605 = tpu.matmul %604, %530, %cst_352 {dimension_numbers = #tpu.dot_dimension_numbers<[1], [0], [0], [1], [0, 0, 1, 1], [], []>} : vector<16x32xbf16>, vector<32x128xbf16>, vector<16x128xf32> -> vector<16x128xf32>
    %606 = arith.addf %602, %605 : vector<16x128xf32>
    %607 = vector.extract_strided_slice %606 {offsets = [0, 0], sizes = [16, 96], strides = [1, 1]} : vector<16x128xf32> to vector<16x96xf32>
    %608 = arith.negf %607 : vector<16x96xf32>
    %609 = math.exp %608 : vector<16x96xf32>
    %cst_353 = arith.constant 1.000000e+00 : f32
    %610 = vector.broadcast %cst_353 : f32 to vector<16x96xf32>
    %611 = arith.addf %610, %609 : vector<16x96xf32>
    %612 = arith.divf %610, %611 : vector<16x96xf32>
    %613 = vector.extract_strided_slice %612 {offsets = [0, 0], sizes = [16, 32], strides = [1, 1]} : vector<16x96xf32> to vector<16x32xf32>
    %614 = vector.extract_strided_slice %612 {offsets = [0, 32], sizes = [16, 32], strides = [1, 1]} : vector<16x96xf32> to vector<16x32xf32>
    %615 = vector.extract_strided_slice %612 {offsets = [0, 64], sizes = [16, 32], strides = [1, 1]} : vector<16x96xf32> to vector<16x32xf32>
    %616 = vector.extract_strided_slice %606 {offsets = [0, 96], sizes = [16, 32], strides = [1, 1]} : vector<16x128xf32> to vector<16x32xf32>
    %617 = math.tanh %616 : vector<16x32xf32>
    %c0_354 = arith.constant 0 : index
    %c0_355 = arith.constant 0 : index
    %618 = vector.load %arg18[%c0_354, %c0_355] : memref<16x32xf32, #tpu.memory_space<vmem>>, vector<16x32xf32>
    %619 = arith.mulf %614, %618 : vector<16x32xf32>
    %620 = arith.mulf %613, %617 : vector<16x32xf32>
    %621 = arith.addf %619, %620 : vector<16x32xf32>
    %622 = math.tanh %621 : vector<16x32xf32>
    %623 = arith.mulf %615, %622 : vector<16x32xf32>
    %c0_356 = arith.constant 0 : index
    %c0_357 = arith.constant 0 : index
    %624 = vector.load %arg18[%c0_356, %c0_357] : memref<16x32xf32, #tpu.memory_space<vmem>>, vector<16x32xf32>
    tpu.vector_store %arg18[%c0_356, %c0_357], %621 {strides = array<i32>} : memref<16x32xf32, #tpu.memory_space<vmem>>, vector<16x32xf32>,
    %c0_358 = arith.constant 0 : index
    %c0_359 = arith.constant 0 : index
    %625 = vector.load %arg17[%c0_358, %c0_359] : memref<16x32xf32, #tpu.memory_space<vmem>>, vector<16x32xf32>
    tpu.vector_store %arg17[%c0_358, %c0_359], %623 {strides = array<i32>} : memref<16x32xf32, #tpu.memory_space<vmem>>, vector<16x32xf32>,
    %626 = arith.index_cast %600 : i32 to index
    %c0_360 = arith.constant 0 : index
    %627 = vector.load %arg20[%626, %c0_360] : memref<48x32xf32, #tpu.memory_space<vmem>>, vector<16x32xf32>
    tpu.vector_store %arg20[%626, %c0_360], %623 {strides = array<i32>} : memref<48x32xf32, #tpu.memory_space<vmem>>, vector<16x32xf32>,
    %c3_i32_361 = arith.constant 3 : i32
    %c0_362 = arith.constant 0 : index
    %c0_363 = arith.constant 0 : index
    %628 = vector.load %arg20[%c0_362, %c0_363] : memref<48x32xf32, #tpu.memory_space<vmem>>, vector<48x32xf32>
    %629 = arith.truncf %628 : vector<48x32xf32> to vector<48x32xbf16>
    %c0_364 = arith.constant 0 : index
    %c0_365 = arith.constant 0 : index
    %630 = vector.load %arg21[%c0_364, %c0_365] : memref<128x32xbf16, #tpu.memory_space<vmem>>, vector<48x32xbf16>
    tpu.vector_store %arg21[%c0_364, %c0_365], %629 {strides = array<i32>} : memref<128x32xbf16, #tpu.memory_space<vmem>>, vector<48x32xbf16>,
    %c48_366 = arith.constant 48 : index
    %c0_367 = arith.constant 0 : index
    %631 = vector.load %arg21[%c48_366, %c0_367] : memref<128x32xbf16, #tpu.memory_space<vmem>>, vector<48x32xbf16>
    %cst_368 = arith.constant dense<0.000000e+00> : vector<48x128xf32>
    %632 = tpu.matmul %631, %529, %cst_368 {dimension_numbers = #tpu.dot_dimension_numbers<[1], [0], [0], [1], [0, 0, 1, 1], [], []>} : vector<48x32xbf16>, vector<32x128xbf16>, vector<48x128xf32> -> vector<48x128xf32>
    %633 = vector.broadcast %531 : vector<1x128xf32> to vector<48x128xf32>
    %634 = arith.addf %632, %633 : vector<48x128xf32>
    %c0_369 = arith.constant 0 : index
    %c0_370 = arith.constant 0 : index
    %635 = vector.load %arg19[%c0_369, %c0_370] : memref<48x128xf32, #tpu.memory_space<vmem>>, vector<48x128xf32>
    tpu.vector_store %arg19[%c0_369, %c0_370], %634 {strides = array<i32>} : memref<48x128xf32, #tpu.memory_space<vmem>>, vector<48x128xf32>,
    %c0_i32_371 = arith.constant 0 : i32
    %c16_i32_372 = arith.constant 16 : i32
    %636 = arith.muli %c0_i32_371, %c16_i32_372 : i32
    %637 = tpu.assume_multiple %636, 16 : i32
    %638 = arith.index_cast %637 : i32 to index
    %c0_373 = arith.constant 0 : index
    %639 = vector.load %arg19[%638, %c0_373] : memref<48x128xf32, #tpu.memory_space<vmem>>, vector<16x128xf32>
    %c0_374 = arith.constant 0 : index
    %c0_375 = arith.constant 0 : index
    %640 = vector.load %arg17[%c0_374, %c0_375] : memref<16x32xf32, #tpu.memory_space<vmem>>, vector<16x32xf32>
    %641 = arith.truncf %640 : vector<16x32xf32> to vector<16x32xbf16>
    %cst_376 = arith.constant dense<0.000000e+00> : vector<16x128xf32>
    %642 = tpu.matmul %641, %530, %cst_376 {dimension_numbers = #tpu.dot_dimension_numbers<[1], [0], [0], [1], [0, 0, 1, 1], [], []>} : vector<16x32xbf16>, vector<32x128xbf16>, vector<16x128xf32> -> vector<16x128xf32>
    %643 = arith.addf %639, %642 : vector<16x128xf32>
    %644 = vector.extract_strided_slice %643 {offsets = [0, 0], sizes = [16, 96], strides = [1, 1]} : vector<16x128xf32> to vector<16x96xf32>
    %645 = arith.negf %644 : vector<16x96xf32>
    %646 = math.exp %645 : vector<16x96xf32>
    %cst_377 = arith.constant 1.000000e+00 : f32
    %647 = vector.broadcast %cst_377 : f32 to vector<16x96xf32>
    %648 = arith.addf %647, %646 : vector<16x96xf32>
    %649 = arith.divf %647, %648 : vector<16x96xf32>
    %650 = vector.extract_strided_slice %649 {offsets = [0, 0], sizes = [16, 32], strides = [1, 1]} : vector<16x96xf32> to vector<16x32xf32>
    %651 = vector.extract_strided_slice %649 {offsets = [0, 32], sizes = [16, 32], strides = [1, 1]} : vector<16x96xf32> to vector<16x32xf32>
    %652 = vector.extract_strided_slice %649 {offsets = [0, 64], sizes = [16, 32], strides = [1, 1]} : vector<16x96xf32> to vector<16x32xf32>
    %653 = vector.extract_strided_slice %643 {offsets = [0, 96], sizes = [16, 32], strides = [1, 1]} : vector<16x128xf32> to vector<16x32xf32>
    %654 = math.tanh %653 : vector<16x32xf32>
    %c0_378 = arith.constant 0 : index
    %c0_379 = arith.constant 0 : index
    %655 = vector.load %arg18[%c0_378, %c0_379] : memref<16x32xf32, #tpu.memory_space<vmem>>, vector<16x32xf32>
    %656 = arith.mulf %651, %655 : vector<16x32xf32>
    %657 = arith.mulf %650, %654 : vector<16x32xf32>
    %658 = arith.addf %656, %657 : vector<16x32xf32>
    %659 = math.tanh %658 : vector<16x32xf32>
    %660 = arith.mulf %652, %659 : vector<16x32xf32>
    %c0_380 = arith.constant 0 : index
    %c0_381 = arith.constant 0 : index
    %661 = vector.load %arg18[%c0_380, %c0_381] : memref<16x32xf32, #tpu.memory_space<vmem>>, vector<16x32xf32>
    tpu.vector_store %arg18[%c0_380, %c0_381], %658 {strides = array<i32>} : memref<16x32xf32, #tpu.memory_space<vmem>>, vector<16x32xf32>,
    %c0_382 = arith.constant 0 : index
    %c0_383 = arith.constant 0 : index
    %662 = vector.load %arg17[%c0_382, %c0_383] : memref<16x32xf32, #tpu.memory_space<vmem>>, vector<16x32xf32>
    tpu.vector_store %arg17[%c0_382, %c0_383], %660 {strides = array<i32>} : memref<16x32xf32, #tpu.memory_space<vmem>>, vector<16x32xf32>,
    %663 = arith.index_cast %637 : i32 to index
    %c0_384 = arith.constant 0 : index
    %664 = vector.load %arg20[%663, %c0_384] : memref<48x32xf32, #tpu.memory_space<vmem>>, vector<16x32xf32>
    tpu.vector_store %arg20[%663, %c0_384], %660 {strides = array<i32>} : memref<48x32xf32, #tpu.memory_space<vmem>>, vector<16x32xf32>,
    %c1_i32_385 = arith.constant 1 : i32
    %c16_i32_386 = arith.constant 16 : i32
    %665 = arith.muli %c1_i32_385, %c16_i32_386 : i32
    %666 = tpu.assume_multiple %665, 16 : i32
    %667 = arith.index_cast %666 : i32 to index
    %c0_387 = arith.constant 0 : index
    %668 = vector.load %arg19[%667, %c0_387] : memref<48x128xf32, #tpu.memory_space<vmem>>, vector<16x128xf32>
    %c0_388 = arith.constant 0 : index
    %c0_389 = arith.constant 0 : index
    %669 = vector.load %arg17[%c0_388, %c0_389] : memref<16x32xf32, #tpu.memory_space<vmem>>, vector<16x32xf32>
    %670 = arith.truncf %669 : vector<16x32xf32> to vector<16x32xbf16>
    %cst_390 = arith.constant dense<0.000000e+00> : vector<16x128xf32>
    %671 = tpu.matmul %670, %530, %cst_390 {dimension_numbers = #tpu.dot_dimension_numbers<[1], [0], [0], [1], [0, 0, 1, 1], [], []>} : vector<16x32xbf16>, vector<32x128xbf16>, vector<16x128xf32> -> vector<16x128xf32>
    %672 = arith.addf %668, %671 : vector<16x128xf32>
    %673 = vector.extract_strided_slice %672 {offsets = [0, 0], sizes = [16, 96], strides = [1, 1]} : vector<16x128xf32> to vector<16x96xf32>
    %674 = arith.negf %673 : vector<16x96xf32>
    %675 = math.exp %674 : vector<16x96xf32>
    %cst_391 = arith.constant 1.000000e+00 : f32
    %676 = vector.broadcast %cst_391 : f32 to vector<16x96xf32>
    %677 = arith.addf %676, %675 : vector<16x96xf32>
    %678 = arith.divf %676, %677 : vector<16x96xf32>
    %679 = vector.extract_strided_slice %678 {offsets = [0, 0], sizes = [16, 32], strides = [1, 1]} : vector<16x96xf32> to vector<16x32xf32>
    %680 = vector.extract_strided_slice %678 {offsets = [0, 32], sizes = [16, 32], strides = [1, 1]} : vector<16x96xf32> to vector<16x32xf32>
    %681 = vector.extract_strided_slice %678 {offsets = [0, 64], sizes = [16, 32], strides = [1, 1]} : vector<16x96xf32> to vector<16x32xf32>
    %682 = vector.extract_strided_slice %672 {offsets = [0, 96], sizes = [16, 32], strides = [1, 1]} : vector<16x128xf32> to vector<16x32xf32>
    %683 = math.tanh %682 : vector<16x32xf32>
    %c0_392 = arith.constant 0 : index
    %c0_393 = arith.constant 0 : index
    %684 = vector.load %arg18[%c0_392, %c0_393] : memref<16x32xf32, #tpu.memory_space<vmem>>, vector<16x32xf32>
    %685 = arith.mulf %680, %684 : vector<16x32xf32>
    %686 = arith.mulf %679, %683 : vector<16x32xf32>
    %687 = arith.addf %685, %686 : vector<16x32xf32>
    %688 = math.tanh %687 : vector<16x32xf32>
    %689 = arith.mulf %681, %688 : vector<16x32xf32>
    %c0_394 = arith.constant 0 : index
    %c0_395 = arith.constant 0 : index
    %690 = vector.load %arg18[%c0_394, %c0_395] : memref<16x32xf32, #tpu.memory_space<vmem>>, vector<16x32xf32>
    tpu.vector_store %arg18[%c0_394, %c0_395], %687 {strides = array<i32>} : memref<16x32xf32, #tpu.memory_space<vmem>>, vector<16x32xf32>,
    %c0_396 = arith.constant 0 : index
    %c0_397 = arith.constant 0 : index
    %691 = vector.load %arg17[%c0_396, %c0_397] : memref<16x32xf32, #tpu.memory_space<vmem>>, vector<16x32xf32>
    tpu.vector_store %arg17[%c0_396, %c0_397], %689 {strides = array<i32>} : memref<16x32xf32, #tpu.memory_space<vmem>>, vector<16x32xf32>,
    %692 = arith.index_cast %666 : i32 to index
    %c0_398 = arith.constant 0 : index
    %693 = vector.load %arg20[%692, %c0_398] : memref<48x32xf32, #tpu.memory_space<vmem>>, vector<16x32xf32>
    tpu.vector_store %arg20[%692, %c0_398], %689 {strides = array<i32>} : memref<48x32xf32, #tpu.memory_space<vmem>>, vector<16x32xf32>,
    %c2_i32_399 = arith.constant 2 : i32
    %c16_i32_400 = arith.constant 16 : i32
    %694 = arith.muli %c2_i32_399, %c16_i32_400 : i32
    %695 = tpu.assume_multiple %694, 16 : i32
    %696 = arith.index_cast %695 : i32 to index
    %c0_401 = arith.constant 0 : index
    %697 = vector.load %arg19[%696, %c0_401] : memref<48x128xf32, #tpu.memory_space<vmem>>, vector<16x128xf32>
    %c0_402 = arith.constant 0 : index
    %c0_403 = arith.constant 0 : index
    %698 = vector.load %arg17[%c0_402, %c0_403] : memref<16x32xf32, #tpu.memory_space<vmem>>, vector<16x32xf32>
    %699 = arith.truncf %698 : vector<16x32xf32> to vector<16x32xbf16>
    %cst_404 = arith.constant dense<0.000000e+00> : vector<16x128xf32>
    %700 = tpu.matmul %699, %530, %cst_404 {dimension_numbers = #tpu.dot_dimension_numbers<[1], [0], [0], [1], [0, 0, 1, 1], [], []>} : vector<16x32xbf16>, vector<32x128xbf16>, vector<16x128xf32> -> vector<16x128xf32>
    %701 = arith.addf %697, %700 : vector<16x128xf32>
    %702 = vector.extract_strided_slice %701 {offsets = [0, 0], sizes = [16, 96], strides = [1, 1]} : vector<16x128xf32> to vector<16x96xf32>
    %703 = arith.negf %702 : vector<16x96xf32>
    %704 = math.exp %703 : vector<16x96xf32>
    %cst_405 = arith.constant 1.000000e+00 : f32
    %705 = vector.broadcast %cst_405 : f32 to vector<16x96xf32>
    %706 = arith.addf %705, %704 : vector<16x96xf32>
    %707 = arith.divf %705, %706 : vector<16x96xf32>
    %708 = vector.extract_strided_slice %707 {offsets = [0, 0], sizes = [16, 32], strides = [1, 1]} : vector<16x96xf32> to vector<16x32xf32>
    %709 = vector.extract_strided_slice %707 {offsets = [0, 32], sizes = [16, 32], strides = [1, 1]} : vector<16x96xf32> to vector<16x32xf32>
    %710 = vector.extract_strided_slice %707 {offsets = [0, 64], sizes = [16, 32], strides = [1, 1]} : vector<16x96xf32> to vector<16x32xf32>
    %711 = vector.extract_strided_slice %701 {offsets = [0, 96], sizes = [16, 32], strides = [1, 1]} : vector<16x128xf32> to vector<16x32xf32>
    %712 = math.tanh %711 : vector<16x32xf32>
    %c0_406 = arith.constant 0 : index
    %c0_407 = arith.constant 0 : index
    %713 = vector.load %arg18[%c0_406, %c0_407] : memref<16x32xf32, #tpu.memory_space<vmem>>, vector<16x32xf32>
    %714 = arith.mulf %709, %713 : vector<16x32xf32>
    %715 = arith.mulf %708, %712 : vector<16x32xf32>
    %716 = arith.addf %714, %715 : vector<16x32xf32>
    %717 = math.tanh %716 : vector<16x32xf32>
    %718 = arith.mulf %710, %717 : vector<16x32xf32>
    %c0_408 = arith.constant 0 : index
    %c0_409 = arith.constant 0 : index
    %719 = vector.load %arg18[%c0_408, %c0_409] : memref<16x32xf32, #tpu.memory_space<vmem>>, vector<16x32xf32>
    tpu.vector_store %arg18[%c0_408, %c0_409], %716 {strides = array<i32>} : memref<16x32xf32, #tpu.memory_space<vmem>>, vector<16x32xf32>,
    %c0_410 = arith.constant 0 : index
    %c0_411 = arith.constant 0 : index
    %720 = vector.load %arg17[%c0_410, %c0_411] : memref<16x32xf32, #tpu.memory_space<vmem>>, vector<16x32xf32>
    tpu.vector_store %arg17[%c0_410, %c0_411], %718 {strides = array<i32>} : memref<16x32xf32, #tpu.memory_space<vmem>>, vector<16x32xf32>,
    %721 = arith.index_cast %695 : i32 to index
    %c0_412 = arith.constant 0 : index
    %722 = vector.load %arg20[%721, %c0_412] : memref<48x32xf32, #tpu.memory_space<vmem>>, vector<16x32xf32>
    tpu.vector_store %arg20[%721, %c0_412], %718 {strides = array<i32>} : memref<48x32xf32, #tpu.memory_space<vmem>>, vector<16x32xf32>,
    %c3_i32_413 = arith.constant 3 : i32
    %c0_414 = arith.constant 0 : index
    %c0_415 = arith.constant 0 : index
    %723 = vector.load %arg20[%c0_414, %c0_415] : memref<48x32xf32, #tpu.memory_space<vmem>>, vector<48x32xf32>
    %724 = arith.truncf %723 : vector<48x32xf32> to vector<48x32xbf16>
    %c48_416 = arith.constant 48 : index
    %c0_417 = arith.constant 0 : index
    %725 = vector.load %arg21[%c48_416, %c0_417] : memref<128x32xbf16, #tpu.memory_space<vmem>>, vector<48x32xbf16>
    tpu.vector_store %arg21[%c48_416, %c0_417], %724 {strides = array<i32>} : memref<128x32xbf16, #tpu.memory_space<vmem>>, vector<48x32xbf16>,
    %c96_418 = arith.constant 96 : index
    %c0_419 = arith.constant 0 : index
    %726 = vector.load %arg21[%c96_418, %c0_419] : memref<128x32xbf16, #tpu.memory_space<vmem>>, vector<32x32xbf16>
    %cst_420 = arith.constant dense<0.000000e+00> : vector<32x128xf32>
    %727 = tpu.matmul %726, %529, %cst_420 {dimension_numbers = #tpu.dot_dimension_numbers<[1], [0], [0], [1], [0, 0, 1, 1], [], []>} : vector<32x32xbf16>, vector<32x128xbf16>, vector<32x128xf32> -> vector<32x128xf32>
    %728 = vector.broadcast %531 : vector<1x128xf32> to vector<32x128xf32>
    %729 = arith.addf %727, %728 : vector<32x128xf32>
    %c0_421 = arith.constant 0 : index
    %c0_422 = arith.constant 0 : index
    %730 = vector.load %arg19[%c0_421, %c0_422] : memref<48x128xf32, #tpu.memory_space<vmem>>, vector<32x128xf32>
    tpu.vector_store %arg19[%c0_421, %c0_422], %729 {strides = array<i32>} : memref<48x128xf32, #tpu.memory_space<vmem>>, vector<32x128xf32>,
    %c0_i32_423 = arith.constant 0 : i32
    %c16_i32_424 = arith.constant 16 : i32
    %731 = arith.muli %c0_i32_423, %c16_i32_424 : i32
    %732 = tpu.assume_multiple %731, 16 : i32
    %733 = arith.index_cast %732 : i32 to index
    %c0_425 = arith.constant 0 : index
    %734 = vector.load %arg19[%733, %c0_425] : memref<48x128xf32, #tpu.memory_space<vmem>>, vector<16x128xf32>
    %c0_426 = arith.constant 0 : index
    %c0_427 = arith.constant 0 : index
    %735 = vector.load %arg17[%c0_426, %c0_427] : memref<16x32xf32, #tpu.memory_space<vmem>>, vector<16x32xf32>
    %736 = arith.truncf %735 : vector<16x32xf32> to vector<16x32xbf16>
    %cst_428 = arith.constant dense<0.000000e+00> : vector<16x128xf32>
    %737 = tpu.matmul %736, %530, %cst_428 {dimension_numbers = #tpu.dot_dimension_numbers<[1], [0], [0], [1], [0, 0, 1, 1], [], []>} : vector<16x32xbf16>, vector<32x128xbf16>, vector<16x128xf32> -> vector<16x128xf32>
    %738 = arith.addf %734, %737 : vector<16x128xf32>
    %739 = vector.extract_strided_slice %738 {offsets = [0, 0], sizes = [16, 96], strides = [1, 1]} : vector<16x128xf32> to vector<16x96xf32>
    %740 = arith.negf %739 : vector<16x96xf32>
    %741 = math.exp %740 : vector<16x96xf32>
    %cst_429 = arith.constant 1.000000e+00 : f32
    %742 = vector.broadcast %cst_429 : f32 to vector<16x96xf32>
    %743 = arith.addf %742, %741 : vector<16x96xf32>
    %744 = arith.divf %742, %743 : vector<16x96xf32>
    %745 = vector.extract_strided_slice %744 {offsets = [0, 0], sizes = [16, 32], strides = [1, 1]} : vector<16x96xf32> to vector<16x32xf32>
    %746 = vector.extract_strided_slice %744 {offsets = [0, 32], sizes = [16, 32], strides = [1, 1]} : vector<16x96xf32> to vector<16x32xf32>
    %747 = vector.extract_strided_slice %744 {offsets = [0, 64], sizes = [16, 32], strides = [1, 1]} : vector<16x96xf32> to vector<16x32xf32>
    %748 = vector.extract_strided_slice %738 {offsets = [0, 96], sizes = [16, 32], strides = [1, 1]} : vector<16x128xf32> to vector<16x32xf32>
    %749 = math.tanh %748 : vector<16x32xf32>
    %c0_430 = arith.constant 0 : index
    %c0_431 = arith.constant 0 : index
    %750 = vector.load %arg18[%c0_430, %c0_431] : memref<16x32xf32, #tpu.memory_space<vmem>>, vector<16x32xf32>
    %751 = arith.mulf %746, %750 : vector<16x32xf32>
    %752 = arith.mulf %745, %749 : vector<16x32xf32>
    %753 = arith.addf %751, %752 : vector<16x32xf32>
    %754 = math.tanh %753 : vector<16x32xf32>
    %755 = arith.mulf %747, %754 : vector<16x32xf32>
    %c0_432 = arith.constant 0 : index
    %c0_433 = arith.constant 0 : index
    %756 = vector.load %arg18[%c0_432, %c0_433] : memref<16x32xf32, #tpu.memory_space<vmem>>, vector<16x32xf32>
    tpu.vector_store %arg18[%c0_432, %c0_433], %753 {strides = array<i32>} : memref<16x32xf32, #tpu.memory_space<vmem>>, vector<16x32xf32>,
    %c0_434 = arith.constant 0 : index
    %c0_435 = arith.constant 0 : index
    %757 = vector.load %arg17[%c0_434, %c0_435] : memref<16x32xf32, #tpu.memory_space<vmem>>, vector<16x32xf32>
    tpu.vector_store %arg17[%c0_434, %c0_435], %755 {strides = array<i32>} : memref<16x32xf32, #tpu.memory_space<vmem>>, vector<16x32xf32>,
    %758 = arith.index_cast %732 : i32 to index
    %c0_436 = arith.constant 0 : index
    %759 = vector.load %arg20[%758, %c0_436] : memref<48x32xf32, #tpu.memory_space<vmem>>, vector<16x32xf32>
    tpu.vector_store %arg20[%758, %c0_436], %755 {strides = array<i32>} : memref<48x32xf32, #tpu.memory_space<vmem>>, vector<16x32xf32>,
    %c1_i32_437 = arith.constant 1 : i32
    %c16_i32_438 = arith.constant 16 : i32
    %760 = arith.muli %c1_i32_437, %c16_i32_438 : i32
    %761 = tpu.assume_multiple %760, 16 : i32
    %762 = arith.index_cast %761 : i32 to index
    %c0_439 = arith.constant 0 : index
    %763 = vector.load %arg19[%762, %c0_439] : memref<48x128xf32, #tpu.memory_space<vmem>>, vector<16x128xf32>
    %c0_440 = arith.constant 0 : index
    %c0_441 = arith.constant 0 : index
    %764 = vector.load %arg17[%c0_440, %c0_441] : memref<16x32xf32, #tpu.memory_space<vmem>>, vector<16x32xf32>
    %765 = arith.truncf %764 : vector<16x32xf32> to vector<16x32xbf16>
    %cst_442 = arith.constant dense<0.000000e+00> : vector<16x128xf32>
    %766 = tpu.matmul %765, %530, %cst_442 {dimension_numbers = #tpu.dot_dimension_numbers<[1], [0], [0], [1], [0, 0, 1, 1], [], []>} : vector<16x32xbf16>, vector<32x128xbf16>, vector<16x128xf32> -> vector<16x128xf32>
    %767 = arith.addf %763, %766 : vector<16x128xf32>
    %768 = vector.extract_strided_slice %767 {offsets = [0, 0], sizes = [16, 96], strides = [1, 1]} : vector<16x128xf32> to vector<16x96xf32>
    %769 = arith.negf %768 : vector<16x96xf32>
    %770 = math.exp %769 : vector<16x96xf32>
    %cst_443 = arith.constant 1.000000e+00 : f32
    %771 = vector.broadcast %cst_443 : f32 to vector<16x96xf32>
    %772 = arith.addf %771, %770 : vector<16x96xf32>
    %773 = arith.divf %771, %772 : vector<16x96xf32>
    %774 = vector.extract_strided_slice %773 {offsets = [0, 0], sizes = [16, 32], strides = [1, 1]} : vector<16x96xf32> to vector<16x32xf32>
    %775 = vector.extract_strided_slice %773 {offsets = [0, 32], sizes = [16, 32], strides = [1, 1]} : vector<16x96xf32> to vector<16x32xf32>
    %776 = vector.extract_strided_slice %773 {offsets = [0, 64], sizes = [16, 32], strides = [1, 1]} : vector<16x96xf32> to vector<16x32xf32>
    %777 = vector.extract_strided_slice %767 {offsets = [0, 96], sizes = [16, 32], strides = [1, 1]} : vector<16x128xf32> to vector<16x32xf32>
    %778 = math.tanh %777 : vector<16x32xf32>
    %c0_444 = arith.constant 0 : index
    %c0_445 = arith.constant 0 : index
    %779 = vector.load %arg18[%c0_444, %c0_445] : memref<16x32xf32, #tpu.memory_space<vmem>>, vector<16x32xf32>
    %780 = arith.mulf %775, %779 : vector<16x32xf32>
    %781 = arith.mulf %774, %778 : vector<16x32xf32>
    %782 = arith.addf %780, %781 : vector<16x32xf32>
    %783 = math.tanh %782 : vector<16x32xf32>
    %784 = arith.mulf %776, %783 : vector<16x32xf32>
    %c0_446 = arith.constant 0 : index
    %c0_447 = arith.constant 0 : index
    %785 = vector.load %arg18[%c0_446, %c0_447] : memref<16x32xf32, #tpu.memory_space<vmem>>, vector<16x32xf32>
    tpu.vector_store %arg18[%c0_446, %c0_447], %782 {strides = array<i32>} : memref<16x32xf32, #tpu.memory_space<vmem>>, vector<16x32xf32>,
    %c0_448 = arith.constant 0 : index
    %c0_449 = arith.constant 0 : index
    %786 = vector.load %arg17[%c0_448, %c0_449] : memref<16x32xf32, #tpu.memory_space<vmem>>, vector<16x32xf32>
    tpu.vector_store %arg17[%c0_448, %c0_449], %784 {strides = array<i32>} : memref<16x32xf32, #tpu.memory_space<vmem>>, vector<16x32xf32>,
    %787 = arith.index_cast %761 : i32 to index
    %c0_450 = arith.constant 0 : index
    %788 = vector.load %arg20[%787, %c0_450] : memref<48x32xf32, #tpu.memory_space<vmem>>, vector<16x32xf32>
    tpu.vector_store %arg20[%787, %c0_450], %784 {strides = array<i32>} : memref<48x32xf32, #tpu.memory_space<vmem>>, vector<16x32xf32>,
    %c2_i32_451 = arith.constant 2 : i32
    %c0_452 = arith.constant 0 : index
    %c0_453 = arith.constant 0 : index
    %789 = vector.load %arg20[%c0_452, %c0_453] : memref<48x32xf32, #tpu.memory_space<vmem>>, vector<32x32xf32>
    %790 = arith.truncf %789 : vector<32x32xf32> to vector<32x32xbf16>
    %c96_454 = arith.constant 96 : index
    %c0_455 = arith.constant 0 : index
    %791 = vector.load %arg21[%c96_454, %c0_455] : memref<128x32xbf16, #tpu.memory_space<vmem>>, vector<32x32xbf16>
    tpu.vector_store %arg21[%c96_454, %c0_455], %790 {strides = array<i32>} : memref<128x32xbf16, #tpu.memory_space<vmem>>, vector<32x32xbf16>,
    %c0_456 = arith.constant 0 : index
    %c0_457 = arith.constant 0 : index
    %792 = vector.load %arg11[%c0_456, %c0_457] : memref<32x128xbf16, #tpu.memory_space<vmem>>, vector<32x128xbf16>
    %c0_458 = arith.constant 0 : index
    %c0_459 = arith.constant 0 : index
    %793 = vector.load %arg12[%c0_458, %c0_459] : memref<32x128xbf16, #tpu.memory_space<vmem>>, vector<32x128xbf16>
    %c0_460 = arith.constant 0 : index
    %c0_461 = arith.constant 0 : index
    %794 = vector.load %arg13[%c0_460, %c0_461] : memref<1x128xf32, #tpu.memory_space<vmem>>, vector<1x128xf32>
    %cst_462 = arith.constant 0.000000e+00 : f32
    %795 = vector.broadcast %cst_462 : f32 to vector<16x32xf32>
    %c0_463 = arith.constant 0 : index
    %c0_464 = arith.constant 0 : index
    %796 = vector.load %arg17[%c0_463, %c0_464] : memref<16x32xf32, #tpu.memory_space<vmem>>, vector<16x32xf32>
    tpu.vector_store %arg17[%c0_463, %c0_464], %795 {strides = array<i32>} : memref<16x32xf32, #tpu.memory_space<vmem>>, vector<16x32xf32>,
    %cst_465 = arith.constant 0.000000e+00 : f32
    %797 = vector.broadcast %cst_465 : f32 to vector<16x32xf32>
    %c0_466 = arith.constant 0 : index
    %c0_467 = arith.constant 0 : index
    %798 = vector.load %arg18[%c0_466, %c0_467] : memref<16x32xf32, #tpu.memory_space<vmem>>, vector<16x32xf32>
    tpu.vector_store %arg18[%c0_466, %c0_467], %797 {strides = array<i32>} : memref<16x32xf32, #tpu.memory_space<vmem>>, vector<16x32xf32>,
    %c0_468 = arith.constant 0 : index
    %c0_469 = arith.constant 0 : index
    %799 = vector.load %arg21[%c0_468, %c0_469] : memref<128x32xbf16, #tpu.memory_space<vmem>>, vector<48x32xbf16>
    %cst_470 = arith.constant dense<0.000000e+00> : vector<48x128xf32>
    %800 = tpu.matmul %799, %792, %cst_470 {dimension_numbers = #tpu.dot_dimension_numbers<[1], [0], [0], [1], [0, 0, 1, 1], [], []>} : vector<48x32xbf16>, vector<32x128xbf16>, vector<48x128xf32> -> vector<48x128xf32>
    %801 = vector.broadcast %794 : vector<1x128xf32> to vector<48x128xf32>
    %802 = arith.addf %800, %801 : vector<48x128xf32>
    %c0_471 = arith.constant 0 : index
    %c0_472 = arith.constant 0 : index
    %803 = vector.load %arg19[%c0_471, %c0_472] : memref<48x128xf32, #tpu.memory_space<vmem>>, vector<48x128xf32>
    tpu.vector_store %arg19[%c0_471, %c0_472], %802 {strides = array<i32>} : memref<48x128xf32, #tpu.memory_space<vmem>>, vector<48x128xf32>,
    %c0_i32_473 = arith.constant 0 : i32
    %c16_i32_474 = arith.constant 16 : i32
    %804 = arith.muli %c0_i32_473, %c16_i32_474 : i32
    %805 = tpu.assume_multiple %804, 16 : i32
    %806 = arith.index_cast %805 : i32 to index
    %c0_475 = arith.constant 0 : index
    %807 = vector.load %arg19[%806, %c0_475] : memref<48x128xf32, #tpu.memory_space<vmem>>, vector<16x128xf32>
    %c0_476 = arith.constant 0 : index
    %c0_477 = arith.constant 0 : index
    %808 = vector.load %arg17[%c0_476, %c0_477] : memref<16x32xf32, #tpu.memory_space<vmem>>, vector<16x32xf32>
    %809 = arith.truncf %808 : vector<16x32xf32> to vector<16x32xbf16>
    %cst_478 = arith.constant dense<0.000000e+00> : vector<16x128xf32>
    %810 = tpu.matmul %809, %793, %cst_478 {dimension_numbers = #tpu.dot_dimension_numbers<[1], [0], [0], [1], [0, 0, 1, 1], [], []>} : vector<16x32xbf16>, vector<32x128xbf16>, vector<16x128xf32> -> vector<16x128xf32>
    %811 = arith.addf %807, %810 : vector<16x128xf32>
    %812 = vector.extract_strided_slice %811 {offsets = [0, 0], sizes = [16, 96], strides = [1, 1]} : vector<16x128xf32> to vector<16x96xf32>
    %813 = arith.negf %812 : vector<16x96xf32>
    %814 = math.exp %813 : vector<16x96xf32>
    %cst_479 = arith.constant 1.000000e+00 : f32
    %815 = vector.broadcast %cst_479 : f32 to vector<16x96xf32>
    %816 = arith.addf %815, %814 : vector<16x96xf32>
    %817 = arith.divf %815, %816 : vector<16x96xf32>
    %818 = vector.extract_strided_slice %817 {offsets = [0, 0], sizes = [16, 32], strides = [1, 1]} : vector<16x96xf32> to vector<16x32xf32>
    %819 = vector.extract_strided_slice %817 {offsets = [0, 32], sizes = [16, 32], strides = [1, 1]} : vector<16x96xf32> to vector<16x32xf32>
    %820 = vector.extract_strided_slice %817 {offsets = [0, 64], sizes = [16, 32], strides = [1, 1]} : vector<16x96xf32> to vector<16x32xf32>
    %821 = vector.extract_strided_slice %811 {offsets = [0, 96], sizes = [16, 32], strides = [1, 1]} : vector<16x128xf32> to vector<16x32xf32>
    %822 = math.tanh %821 : vector<16x32xf32>
    %c0_480 = arith.constant 0 : index
    %c0_481 = arith.constant 0 : index
    %823 = vector.load %arg18[%c0_480, %c0_481] : memref<16x32xf32, #tpu.memory_space<vmem>>, vector<16x32xf32>
    %824 = arith.mulf %819, %823 : vector<16x32xf32>
    %825 = arith.mulf %818, %822 : vector<16x32xf32>
    %826 = arith.addf %824, %825 : vector<16x32xf32>
    %827 = math.tanh %826 : vector<16x32xf32>
    %828 = arith.mulf %820, %827 : vector<16x32xf32>
    %c0_482 = arith.constant 0 : index
    %c0_483 = arith.constant 0 : index
    %829 = vector.load %arg18[%c0_482, %c0_483] : memref<16x32xf32, #tpu.memory_space<vmem>>, vector<16x32xf32>
    tpu.vector_store %arg18[%c0_482, %c0_483], %826 {strides = array<i32>} : memref<16x32xf32, #tpu.memory_space<vmem>>, vector<16x32xf32>,
    %c0_484 = arith.constant 0 : index
    %c0_485 = arith.constant 0 : index
    %830 = vector.load %arg17[%c0_484, %c0_485] : memref<16x32xf32, #tpu.memory_space<vmem>>, vector<16x32xf32>
    tpu.vector_store %arg17[%c0_484, %c0_485], %828 {strides = array<i32>} : memref<16x32xf32, #tpu.memory_space<vmem>>, vector<16x32xf32>,
    %c1_i32_486 = arith.constant 1 : i32
    %c16_i32_487 = arith.constant 16 : i32
    %831 = arith.muli %c1_i32_486, %c16_i32_487 : i32
    %832 = tpu.assume_multiple %831, 16 : i32
    %833 = arith.index_cast %832 : i32 to index
    %c0_488 = arith.constant 0 : index
    %834 = vector.load %arg19[%833, %c0_488] : memref<48x128xf32, #tpu.memory_space<vmem>>, vector<16x128xf32>
    %c0_489 = arith.constant 0 : index
    %c0_490 = arith.constant 0 : index
    %835 = vector.load %arg17[%c0_489, %c0_490] : memref<16x32xf32, #tpu.memory_space<vmem>>, vector<16x32xf32>
    %836 = arith.truncf %835 : vector<16x32xf32> to vector<16x32xbf16>
    %cst_491 = arith.constant dense<0.000000e+00> : vector<16x128xf32>
    %837 = tpu.matmul %836, %793, %cst_491 {dimension_numbers = #tpu.dot_dimension_numbers<[1], [0], [0], [1], [0, 0, 1, 1], [], []>} : vector<16x32xbf16>, vector<32x128xbf16>, vector<16x128xf32> -> vector<16x128xf32>
    %838 = arith.addf %834, %837 : vector<16x128xf32>
    %839 = vector.extract_strided_slice %838 {offsets = [0, 0], sizes = [16, 96], strides = [1, 1]} : vector<16x128xf32> to vector<16x96xf32>
    %840 = arith.negf %839 : vector<16x96xf32>
    %841 = math.exp %840 : vector<16x96xf32>
    %cst_492 = arith.constant 1.000000e+00 : f32
    %842 = vector.broadcast %cst_492 : f32 to vector<16x96xf32>
    %843 = arith.addf %842, %841 : vector<16x96xf32>
    %844 = arith.divf %842, %843 : vector<16x96xf32>
    %845 = vector.extract_strided_slice %844 {offsets = [0, 0], sizes = [16, 32], strides = [1, 1]} : vector<16x96xf32> to vector<16x32xf32>
    %846 = vector.extract_strided_slice %844 {offsets = [0, 32], sizes = [16, 32], strides = [1, 1]} : vector<16x96xf32> to vector<16x32xf32>
    %847 = vector.extract_strided_slice %844 {offsets = [0, 64], sizes = [16, 32], strides = [1, 1]} : vector<16x96xf32> to vector<16x32xf32>
    %848 = vector.extract_strided_slice %838 {offsets = [0, 96], sizes = [16, 32], strides = [1, 1]} : vector<16x128xf32> to vector<16x32xf32>
    %849 = math.tanh %848 : vector<16x32xf32>
    %c0_493 = arith.constant 0 : index
    %c0_494 = arith.constant 0 : index
    %850 = vector.load %arg18[%c0_493, %c0_494] : memref<16x32xf32, #tpu.memory_space<vmem>>, vector<16x32xf32>
    %851 = arith.mulf %846, %850 : vector<16x32xf32>
    %852 = arith.mulf %845, %849 : vector<16x32xf32>
    %853 = arith.addf %851, %852 : vector<16x32xf32>
    %854 = math.tanh %853 : vector<16x32xf32>
    %855 = arith.mulf %847, %854 : vector<16x32xf32>
    %c0_495 = arith.constant 0 : index
    %c0_496 = arith.constant 0 : index
    %856 = vector.load %arg18[%c0_495, %c0_496] : memref<16x32xf32, #tpu.memory_space<vmem>>, vector<16x32xf32>
    tpu.vector_store %arg18[%c0_495, %c0_496], %853 {strides = array<i32>} : memref<16x32xf32, #tpu.memory_space<vmem>>, vector<16x32xf32>,
    %c0_497 = arith.constant 0 : index
    %c0_498 = arith.constant 0 : index
    %857 = vector.load %arg17[%c0_497, %c0_498] : memref<16x32xf32, #tpu.memory_space<vmem>>, vector<16x32xf32>
    tpu.vector_store %arg17[%c0_497, %c0_498], %855 {strides = array<i32>} : memref<16x32xf32, #tpu.memory_space<vmem>>, vector<16x32xf32>,
    %c2_i32_499 = arith.constant 2 : i32
    %c16_i32_500 = arith.constant 16 : i32
    %858 = arith.muli %c2_i32_499, %c16_i32_500 : i32
    %859 = tpu.assume_multiple %858, 16 : i32
    %860 = arith.index_cast %859 : i32 to index
    %c0_501 = arith.constant 0 : index
    %861 = vector.load %arg19[%860, %c0_501] : memref<48x128xf32, #tpu.memory_space<vmem>>, vector<16x128xf32>
    %c0_502 = arith.constant 0 : index
    %c0_503 = arith.constant 0 : index
    %862 = vector.load %arg17[%c0_502, %c0_503] : memref<16x32xf32, #tpu.memory_space<vmem>>, vector<16x32xf32>
    %863 = arith.truncf %862 : vector<16x32xf32> to vector<16x32xbf16>
    %cst_504 = arith.constant dense<0.000000e+00> : vector<16x128xf32>
    %864 = tpu.matmul %863, %793, %cst_504 {dimension_numbers = #tpu.dot_dimension_numbers<[1], [0], [0], [1], [0, 0, 1, 1], [], []>} : vector<16x32xbf16>, vector<32x128xbf16>, vector<16x128xf32> -> vector<16x128xf32>
    %865 = arith.addf %861, %864 : vector<16x128xf32>
    %866 = vector.extract_strided_slice %865 {offsets = [0, 0], sizes = [16, 96], strides = [1, 1]} : vector<16x128xf32> to vector<16x96xf32>
    %867 = arith.negf %866 : vector<16x96xf32>
    %868 = math.exp %867 : vector<16x96xf32>
    %cst_505 = arith.constant 1.000000e+00 : f32
    %869 = vector.broadcast %cst_505 : f32 to vector<16x96xf32>
    %870 = arith.addf %869, %868 : vector<16x96xf32>
    %871 = arith.divf %869, %870 : vector<16x96xf32>
    %872 = vector.extract_strided_slice %871 {offsets = [0, 0], sizes = [16, 32], strides = [1, 1]} : vector<16x96xf32> to vector<16x32xf32>
    %873 = vector.extract_strided_slice %871 {offsets = [0, 32], sizes = [16, 32], strides = [1, 1]} : vector<16x96xf32> to vector<16x32xf32>
    %874 = vector.extract_strided_slice %871 {offsets = [0, 64], sizes = [16, 32], strides = [1, 1]} : vector<16x96xf32> to vector<16x32xf32>
    %875 = vector.extract_strided_slice %865 {offsets = [0, 96], sizes = [16, 32], strides = [1, 1]} : vector<16x128xf32> to vector<16x32xf32>
    %876 = math.tanh %875 : vector<16x32xf32>
    %c0_506 = arith.constant 0 : index
    %c0_507 = arith.constant 0 : index
    %877 = vector.load %arg18[%c0_506, %c0_507] : memref<16x32xf32, #tpu.memory_space<vmem>>, vector<16x32xf32>
    %878 = arith.mulf %873, %877 : vector<16x32xf32>
    %879 = arith.mulf %872, %876 : vector<16x32xf32>
    %880 = arith.addf %878, %879 : vector<16x32xf32>
    %881 = math.tanh %880 : vector<16x32xf32>
    %882 = arith.mulf %874, %881 : vector<16x32xf32>
    %c0_508 = arith.constant 0 : index
    %c0_509 = arith.constant 0 : index
    %883 = vector.load %arg18[%c0_508, %c0_509] : memref<16x32xf32, #tpu.memory_space<vmem>>, vector<16x32xf32>
    tpu.vector_store %arg18[%c0_508, %c0_509], %880 {strides = array<i32>} : memref<16x32xf32, #tpu.memory_space<vmem>>, vector<16x32xf32>,
    %c0_510 = arith.constant 0 : index
    %c0_511 = arith.constant 0 : index
    %884 = vector.load %arg17[%c0_510, %c0_511] : memref<16x32xf32, #tpu.memory_space<vmem>>, vector<16x32xf32>
    tpu.vector_store %arg17[%c0_510, %c0_511], %882 {strides = array<i32>} : memref<16x32xf32, #tpu.memory_space<vmem>>, vector<16x32xf32>,
    %c3_i32_512 = arith.constant 3 : i32
    %c48_513 = arith.constant 48 : index
    %c0_514 = arith.constant 0 : index
    %885 = vector.load %arg21[%c48_513, %c0_514] : memref<128x32xbf16, #tpu.memory_space<vmem>>, vector<48x32xbf16>
    %cst_515 = arith.constant dense<0.000000e+00> : vector<48x128xf32>
    %886 = tpu.matmul %885, %792, %cst_515 {dimension_numbers = #tpu.dot_dimension_numbers<[1], [0], [0], [1], [0, 0, 1, 1], [], []>} : vector<48x32xbf16>, vector<32x128xbf16>, vector<48x128xf32> -> vector<48x128xf32>
    %887 = vector.broadcast %794 : vector<1x128xf32> to vector<48x128xf32>
    %888 = arith.addf %886, %887 : vector<48x128xf32>
    %c0_516 = arith.constant 0 : index
    %c0_517 = arith.constant 0 : index
    %889 = vector.load %arg19[%c0_516, %c0_517] : memref<48x128xf32, #tpu.memory_space<vmem>>, vector<48x128xf32>
    tpu.vector_store %arg19[%c0_516, %c0_517], %888 {strides = array<i32>} : memref<48x128xf32, #tpu.memory_space<vmem>>, vector<48x128xf32>,
    %c0_i32_518 = arith.constant 0 : i32
    %c16_i32_519 = arith.constant 16 : i32
    %890 = arith.muli %c0_i32_518, %c16_i32_519 : i32
    %891 = tpu.assume_multiple %890, 16 : i32
    %892 = arith.index_cast %891 : i32 to index
    %c0_520 = arith.constant 0 : index
    %893 = vector.load %arg19[%892, %c0_520] : memref<48x128xf32, #tpu.memory_space<vmem>>, vector<16x128xf32>
    %c0_521 = arith.constant 0 : index
    %c0_522 = arith.constant 0 : index
    %894 = vector.load %arg17[%c0_521, %c0_522] : memref<16x32xf32, #tpu.memory_space<vmem>>, vector<16x32xf32>
    %895 = arith.truncf %894 : vector<16x32xf32> to vector<16x32xbf16>
    %cst_523 = arith.constant dense<0.000000e+00> : vector<16x128xf32>
    %896 = tpu.matmul %895, %793, %cst_523 {dimension_numbers = #tpu.dot_dimension_numbers<[1], [0], [0], [1], [0, 0, 1, 1], [], []>} : vector<16x32xbf16>, vector<32x128xbf16>, vector<16x128xf32> -> vector<16x128xf32>
    %897 = arith.addf %893, %896 : vector<16x128xf32>
    %898 = vector.extract_strided_slice %897 {offsets = [0, 0], sizes = [16, 96], strides = [1, 1]} : vector<16x128xf32> to vector<16x96xf32>
    %899 = arith.negf %898 : vector<16x96xf32>
    %900 = math.exp %899 : vector<16x96xf32>
    %cst_524 = arith.constant 1.000000e+00 : f32
    %901 = vector.broadcast %cst_524 : f32 to vector<16x96xf32>
    %902 = arith.addf %901, %900 : vector<16x96xf32>
    %903 = arith.divf %901, %902 : vector<16x96xf32>
    %904 = vector.extract_strided_slice %903 {offsets = [0, 0], sizes = [16, 32], strides = [1, 1]} : vector<16x96xf32> to vector<16x32xf32>
    %905 = vector.extract_strided_slice %903 {offsets = [0, 32], sizes = [16, 32], strides = [1, 1]} : vector<16x96xf32> to vector<16x32xf32>
    %906 = vector.extract_strided_slice %903 {offsets = [0, 64], sizes = [16, 32], strides = [1, 1]} : vector<16x96xf32> to vector<16x32xf32>
    %907 = vector.extract_strided_slice %897 {offsets = [0, 96], sizes = [16, 32], strides = [1, 1]} : vector<16x128xf32> to vector<16x32xf32>
    %908 = math.tanh %907 : vector<16x32xf32>
    %c0_525 = arith.constant 0 : index
    %c0_526 = arith.constant 0 : index
    %909 = vector.load %arg18[%c0_525, %c0_526] : memref<16x32xf32, #tpu.memory_space<vmem>>, vector<16x32xf32>
    %910 = arith.mulf %905, %909 : vector<16x32xf32>
    %911 = arith.mulf %904, %908 : vector<16x32xf32>
    %912 = arith.addf %910, %911 : vector<16x32xf32>
    %913 = math.tanh %912 : vector<16x32xf32>
    %914 = arith.mulf %906, %913 : vector<16x32xf32>
    %c0_527 = arith.constant 0 : index
    %c0_528 = arith.constant 0 : index
    %915 = vector.load %arg18[%c0_527, %c0_528] : memref<16x32xf32, #tpu.memory_space<vmem>>, vector<16x32xf32>
    tpu.vector_store %arg18[%c0_527, %c0_528], %912 {strides = array<i32>} : memref<16x32xf32, #tpu.memory_space<vmem>>, vector<16x32xf32>,
    %c0_529 = arith.constant 0 : index
    %c0_530 = arith.constant 0 : index
    %916 = vector.load %arg17[%c0_529, %c0_530] : memref<16x32xf32, #tpu.memory_space<vmem>>, vector<16x32xf32>
    tpu.vector_store %arg17[%c0_529, %c0_530], %914 {strides = array<i32>} : memref<16x32xf32, #tpu.memory_space<vmem>>, vector<16x32xf32>,
    %c1_i32_531 = arith.constant 1 : i32
    %c16_i32_532 = arith.constant 16 : i32
    %917 = arith.muli %c1_i32_531, %c16_i32_532 : i32
    %918 = tpu.assume_multiple %917, 16 : i32
    %919 = arith.index_cast %918 : i32 to index
    %c0_533 = arith.constant 0 : index
    %920 = vector.load %arg19[%919, %c0_533] : memref<48x128xf32, #tpu.memory_space<vmem>>, vector<16x128xf32>
    %c0_534 = arith.constant 0 : index
    %c0_535 = arith.constant 0 : index
    %921 = vector.load %arg17[%c0_534, %c0_535] : memref<16x32xf32, #tpu.memory_space<vmem>>, vector<16x32xf32>
    %922 = arith.truncf %921 : vector<16x32xf32> to vector<16x32xbf16>
    %cst_536 = arith.constant dense<0.000000e+00> : vector<16x128xf32>
    %923 = tpu.matmul %922, %793, %cst_536 {dimension_numbers = #tpu.dot_dimension_numbers<[1], [0], [0], [1], [0, 0, 1, 1], [], []>} : vector<16x32xbf16>, vector<32x128xbf16>, vector<16x128xf32> -> vector<16x128xf32>
    %924 = arith.addf %920, %923 : vector<16x128xf32>
    %925 = vector.extract_strided_slice %924 {offsets = [0, 0], sizes = [16, 96], strides = [1, 1]} : vector<16x128xf32> to vector<16x96xf32>
    %926 = arith.negf %925 : vector<16x96xf32>
    %927 = math.exp %926 : vector<16x96xf32>
    %cst_537 = arith.constant 1.000000e+00 : f32
    %928 = vector.broadcast %cst_537 : f32 to vector<16x96xf32>
    %929 = arith.addf %928, %927 : vector<16x96xf32>
    %930 = arith.divf %928, %929 : vector<16x96xf32>
    %931 = vector.extract_strided_slice %930 {offsets = [0, 0], sizes = [16, 32], strides = [1, 1]} : vector<16x96xf32> to vector<16x32xf32>
    %932 = vector.extract_strided_slice %930 {offsets = [0, 32], sizes = [16, 32], strides = [1, 1]} : vector<16x96xf32> to vector<16x32xf32>
    %933 = vector.extract_strided_slice %930 {offsets = [0, 64], sizes = [16, 32], strides = [1, 1]} : vector<16x96xf32> to vector<16x32xf32>
    %934 = vector.extract_strided_slice %924 {offsets = [0, 96], sizes = [16, 32], strides = [1, 1]} : vector<16x128xf32> to vector<16x32xf32>
    %935 = math.tanh %934 : vector<16x32xf32>
    %c0_538 = arith.constant 0 : index
    %c0_539 = arith.constant 0 : index
    %936 = vector.load %arg18[%c0_538, %c0_539] : memref<16x32xf32, #tpu.memory_space<vmem>>, vector<16x32xf32>
    %937 = arith.mulf %932, %936 : vector<16x32xf32>
    %938 = arith.mulf %931, %935 : vector<16x32xf32>
    %939 = arith.addf %937, %938 : vector<16x32xf32>
    %940 = math.tanh %939 : vector<16x32xf32>
    %941 = arith.mulf %933, %940 : vector<16x32xf32>
    %c0_540 = arith.constant 0 : index
    %c0_541 = arith.constant 0 : index
    %942 = vector.load %arg18[%c0_540, %c0_541] : memref<16x32xf32, #tpu.memory_space<vmem>>, vector<16x32xf32>
    tpu.vector_store %arg18[%c0_540, %c0_541], %939 {strides = array<i32>} : memref<16x32xf32, #tpu.memory_space<vmem>>, vector<16x32xf32>,
    %c0_542 = arith.constant 0 : index
    %c0_543 = arith.constant 0 : index
    %943 = vector.load %arg17[%c0_542, %c0_543] : memref<16x32xf32, #tpu.memory_space<vmem>>, vector<16x32xf32>
    tpu.vector_store %arg17[%c0_542, %c0_543], %941 {strides = array<i32>} : memref<16x32xf32, #tpu.memory_space<vmem>>, vector<16x32xf32>,
    %c2_i32_544 = arith.constant 2 : i32
    %c16_i32_545 = arith.constant 16 : i32
    %944 = arith.muli %c2_i32_544, %c16_i32_545 : i32
    %945 = tpu.assume_multiple %944, 16 : i32
    %946 = arith.index_cast %945 : i32 to index
    %c0_546 = arith.constant 0 : index
    %947 = vector.load %arg19[%946, %c0_546] : memref<48x128xf32, #tpu.memory_space<vmem>>, vector<16x128xf32>
    %c0_547 = arith.constant 0 : index
    %c0_548 = arith.constant 0 : index
    %948 = vector.load %arg17[%c0_547, %c0_548] : memref<16x32xf32, #tpu.memory_space<vmem>>, vector<16x32xf32>
    %949 = arith.truncf %948 : vector<16x32xf32> to vector<16x32xbf16>
    %cst_549 = arith.constant dense<0.000000e+00> : vector<16x128xf32>
    %950 = tpu.matmul %949, %793, %cst_549 {dimension_numbers = #tpu.dot_dimension_numbers<[1], [0], [0], [1], [0, 0, 1, 1], [], []>} : vector<16x32xbf16>, vector<32x128xbf16>, vector<16x128xf32> -> vector<16x128xf32>
    %951 = arith.addf %947, %950 : vector<16x128xf32>
    %952 = vector.extract_strided_slice %951 {offsets = [0, 0], sizes = [16, 96], strides = [1, 1]} : vector<16x128xf32> to vector<16x96xf32>
    %953 = arith.negf %952 : vector<16x96xf32>
    %954 = math.exp %953 : vector<16x96xf32>
    %cst_550 = arith.constant 1.000000e+00 : f32
    %955 = vector.broadcast %cst_550 : f32 to vector<16x96xf32>
    %956 = arith.addf %955, %954 : vector<16x96xf32>
    %957 = arith.divf %955, %956 : vector<16x96xf32>
    %958 = vector.extract_strided_slice %957 {offsets = [0, 0], sizes = [16, 32], strides = [1, 1]} : vector<16x96xf32> to vector<16x32xf32>
    %959 = vector.extract_strided_slice %957 {offsets = [0, 32], sizes = [16, 32], strides = [1, 1]} : vector<16x96xf32> to vector<16x32xf32>
    %960 = vector.extract_strided_slice %957 {offsets = [0, 64], sizes = [16, 32], strides = [1, 1]} : vector<16x96xf32> to vector<16x32xf32>
    %961 = vector.extract_strided_slice %951 {offsets = [0, 96], sizes = [16, 32], strides = [1, 1]} : vector<16x128xf32> to vector<16x32xf32>
    %962 = math.tanh %961 : vector<16x32xf32>
    %c0_551 = arith.constant 0 : index
    %c0_552 = arith.constant 0 : index
    %963 = vector.load %arg18[%c0_551, %c0_552] : memref<16x32xf32, #tpu.memory_space<vmem>>, vector<16x32xf32>
    %964 = arith.mulf %959, %963 : vector<16x32xf32>
    %965 = arith.mulf %958, %962 : vector<16x32xf32>
    %966 = arith.addf %964, %965 : vector<16x32xf32>
    %967 = math.tanh %966 : vector<16x32xf32>
    %968 = arith.mulf %960, %967 : vector<16x32xf32>
    %c0_553 = arith.constant 0 : index
    %c0_554 = arith.constant 0 : index
    %969 = vector.load %arg18[%c0_553, %c0_554] : memref<16x32xf32, #tpu.memory_space<vmem>>, vector<16x32xf32>
    tpu.vector_store %arg18[%c0_553, %c0_554], %966 {strides = array<i32>} : memref<16x32xf32, #tpu.memory_space<vmem>>, vector<16x32xf32>,
    %c0_555 = arith.constant 0 : index
    %c0_556 = arith.constant 0 : index
    %970 = vector.load %arg17[%c0_555, %c0_556] : memref<16x32xf32, #tpu.memory_space<vmem>>, vector<16x32xf32>
    tpu.vector_store %arg17[%c0_555, %c0_556], %968 {strides = array<i32>} : memref<16x32xf32, #tpu.memory_space<vmem>>, vector<16x32xf32>,
    %c3_i32_557 = arith.constant 3 : i32
    %c96_558 = arith.constant 96 : index
    %c0_559 = arith.constant 0 : index
    %971 = vector.load %arg21[%c96_558, %c0_559] : memref<128x32xbf16, #tpu.memory_space<vmem>>, vector<32x32xbf16>
    %cst_560 = arith.constant dense<0.000000e+00> : vector<32x128xf32>
    %972 = tpu.matmul %971, %792, %cst_560 {dimension_numbers = #tpu.dot_dimension_numbers<[1], [0], [0], [1], [0, 0, 1, 1], [], []>} : vector<32x32xbf16>, vector<32x128xbf16>, vector<32x128xf32> -> vector<32x128xf32>
    %973 = vector.broadcast %794 : vector<1x128xf32> to vector<32x128xf32>
    %974 = arith.addf %972, %973 : vector<32x128xf32>
    %c0_561 = arith.constant 0 : index
    %c0_562 = arith.constant 0 : index
    %975 = vector.load %arg19[%c0_561, %c0_562] : memref<48x128xf32, #tpu.memory_space<vmem>>, vector<32x128xf32>
    tpu.vector_store %arg19[%c0_561, %c0_562], %974 {strides = array<i32>} : memref<48x128xf32, #tpu.memory_space<vmem>>, vector<32x128xf32>,
    %c0_i32_563 = arith.constant 0 : i32
    %c16_i32_564 = arith.constant 16 : i32
    %976 = arith.muli %c0_i32_563, %c16_i32_564 : i32
    %977 = tpu.assume_multiple %976, 16 : i32
    %978 = arith.index_cast %977 : i32 to index
    %c0_565 = arith.constant 0 : index
    %979 = vector.load %arg19[%978, %c0_565] : memref<48x128xf32, #tpu.memory_space<vmem>>, vector<16x128xf32>
    %c0_566 = arith.constant 0 : index
    %c0_567 = arith.constant 0 : index
    %980 = vector.load %arg17[%c0_566, %c0_567] : memref<16x32xf32, #tpu.memory_space<vmem>>, vector<16x32xf32>
    %981 = arith.truncf %980 : vector<16x32xf32> to vector<16x32xbf16>
    %cst_568 = arith.constant dense<0.000000e+00> : vector<16x128xf32>
    %982 = tpu.matmul %981, %793, %cst_568 {dimension_numbers = #tpu.dot_dimension_numbers<[1], [0], [0], [1], [0, 0, 1, 1], [], []>} : vector<16x32xbf16>, vector<32x128xbf16>, vector<16x128xf32> -> vector<16x128xf32>
    %983 = arith.addf %979, %982 : vector<16x128xf32>
    %984 = vector.extract_strided_slice %983 {offsets = [0, 0], sizes = [16, 96], strides = [1, 1]} : vector<16x128xf32> to vector<16x96xf32>
    %985 = arith.negf %984 : vector<16x96xf32>
    %986 = math.exp %985 : vector<16x96xf32>
    %cst_569 = arith.constant 1.000000e+00 : f32
    %987 = vector.broadcast %cst_569 : f32 to vector<16x96xf32>
    %988 = arith.addf %987, %986 : vector<16x96xf32>
    %989 = arith.divf %987, %988 : vector<16x96xf32>
    %990 = vector.extract_strided_slice %989 {offsets = [0, 0], sizes = [16, 32], strides = [1, 1]} : vector<16x96xf32> to vector<16x32xf32>
    %991 = vector.extract_strided_slice %989 {offsets = [0, 32], sizes = [16, 32], strides = [1, 1]} : vector<16x96xf32> to vector<16x32xf32>
    %992 = vector.extract_strided_slice %989 {offsets = [0, 64], sizes = [16, 32], strides = [1, 1]} : vector<16x96xf32> to vector<16x32xf32>
    %993 = vector.extract_strided_slice %983 {offsets = [0, 96], sizes = [16, 32], strides = [1, 1]} : vector<16x128xf32> to vector<16x32xf32>
    %994 = math.tanh %993 : vector<16x32xf32>
    %c0_570 = arith.constant 0 : index
    %c0_571 = arith.constant 0 : index
    %995 = vector.load %arg18[%c0_570, %c0_571] : memref<16x32xf32, #tpu.memory_space<vmem>>, vector<16x32xf32>
    %996 = arith.mulf %991, %995 : vector<16x32xf32>
    %997 = arith.mulf %990, %994 : vector<16x32xf32>
    %998 = arith.addf %996, %997 : vector<16x32xf32>
    %999 = math.tanh %998 : vector<16x32xf32>
    %1000 = arith.mulf %992, %999 : vector<16x32xf32>
    %c0_572 = arith.constant 0 : index
    %c0_573 = arith.constant 0 : index
    %1001 = vector.load %arg18[%c0_572, %c0_573] : memref<16x32xf32, #tpu.memory_space<vmem>>, vector<16x32xf32>
    tpu.vector_store %arg18[%c0_572, %c0_573], %998 {strides = array<i32>} : memref<16x32xf32, #tpu.memory_space<vmem>>, vector<16x32xf32>,
    %c0_574 = arith.constant 0 : index
    %c0_575 = arith.constant 0 : index
    %1002 = vector.load %arg17[%c0_574, %c0_575] : memref<16x32xf32, #tpu.memory_space<vmem>>, vector<16x32xf32>
    tpu.vector_store %arg17[%c0_574, %c0_575], %1000 {strides = array<i32>} : memref<16x32xf32, #tpu.memory_space<vmem>>, vector<16x32xf32>,
    %c1_i32_576 = arith.constant 1 : i32
    %c16_i32_577 = arith.constant 16 : i32
    %1003 = arith.muli %c1_i32_576, %c16_i32_577 : i32
    %1004 = tpu.assume_multiple %1003, 16 : i32
    %1005 = arith.index_cast %1004 : i32 to index
    %c0_578 = arith.constant 0 : index
    %1006 = vector.load %arg19[%1005, %c0_578] : memref<48x128xf32, #tpu.memory_space<vmem>>, vector<16x128xf32>
    %c0_579 = arith.constant 0 : index
    %c0_580 = arith.constant 0 : index
    %1007 = vector.load %arg17[%c0_579, %c0_580] : memref<16x32xf32, #tpu.memory_space<vmem>>, vector<16x32xf32>
    %1008 = arith.truncf %1007 : vector<16x32xf32> to vector<16x32xbf16>
    %cst_581 = arith.constant dense<0.000000e+00> : vector<16x128xf32>
    %1009 = tpu.matmul %1008, %793, %cst_581 {dimension_numbers = #tpu.dot_dimension_numbers<[1], [0], [0], [1], [0, 0, 1, 1], [], []>} : vector<16x32xbf16>, vector<32x128xbf16>, vector<16x128xf32> -> vector<16x128xf32>
    %1010 = arith.addf %1006, %1009 : vector<16x128xf32>
    %1011 = vector.extract_strided_slice %1010 {offsets = [0, 0], sizes = [16, 96], strides = [1, 1]} : vector<16x128xf32> to vector<16x96xf32>
    %1012 = arith.negf %1011 : vector<16x96xf32>
    %1013 = math.exp %1012 : vector<16x96xf32>
    %cst_582 = arith.constant 1.000000e+00 : f32
    %1014 = vector.broadcast %cst_582 : f32 to vector<16x96xf32>
    %1015 = arith.addf %1014, %1013 : vector<16x96xf32>
    %1016 = arith.divf %1014, %1015 : vector<16x96xf32>
    %1017 = vector.extract_strided_slice %1016 {offsets = [0, 0], sizes = [16, 32], strides = [1, 1]} : vector<16x96xf32> to vector<16x32xf32>
    %1018 = vector.extract_strided_slice %1016 {offsets = [0, 32], sizes = [16, 32], strides = [1, 1]} : vector<16x96xf32> to vector<16x32xf32>
    %1019 = vector.extract_strided_slice %1016 {offsets = [0, 64], sizes = [16, 32], strides = [1, 1]} : vector<16x96xf32> to vector<16x32xf32>
    %1020 = vector.extract_strided_slice %1010 {offsets = [0, 96], sizes = [16, 32], strides = [1, 1]} : vector<16x128xf32> to vector<16x32xf32>
    %1021 = math.tanh %1020 : vector<16x32xf32>
    %c0_583 = arith.constant 0 : index
    %c0_584 = arith.constant 0 : index
    %1022 = vector.load %arg18[%c0_583, %c0_584] : memref<16x32xf32, #tpu.memory_space<vmem>>, vector<16x32xf32>
    %1023 = arith.mulf %1018, %1022 : vector<16x32xf32>
    %1024 = arith.mulf %1017, %1021 : vector<16x32xf32>
    %1025 = arith.addf %1023, %1024 : vector<16x32xf32>
    %1026 = math.tanh %1025 : vector<16x32xf32>
    %1027 = arith.mulf %1019, %1026 : vector<16x32xf32>
    %c0_585 = arith.constant 0 : index
    %c0_586 = arith.constant 0 : index
    %1028 = vector.load %arg18[%c0_585, %c0_586] : memref<16x32xf32, #tpu.memory_space<vmem>>, vector<16x32xf32>
    tpu.vector_store %arg18[%c0_585, %c0_586], %1025 {strides = array<i32>} : memref<16x32xf32, #tpu.memory_space<vmem>>, vector<16x32xf32>,
    %c0_587 = arith.constant 0 : index
    %c0_588 = arith.constant 0 : index
    %1029 = vector.load %arg17[%c0_587, %c0_588] : memref<16x32xf32, #tpu.memory_space<vmem>>, vector<16x32xf32>
    tpu.vector_store %arg17[%c0_587, %c0_588], %1027 {strides = array<i32>} : memref<16x32xf32, #tpu.memory_space<vmem>>, vector<16x32xf32>,
    %c2_i32_589 = arith.constant 2 : i32
    %c0_590 = arith.constant 0 : index
    %c0_591 = arith.constant 0 : index
    %1030 = vector.load %arg17[%c0_590, %c0_591] : memref<16x32xf32, #tpu.memory_space<vmem>>, vector<16x32xf32>
    %1031 = arith.truncf %1030 : vector<16x32xf32> to vector<16x32xbf16>
    %c0_592 = arith.constant 0 : index
    %c0_593 = arith.constant 0 : index
    %1032 = vector.load %arg14[%c0_592, %c0_593] : memref<32x128xbf16, #tpu.memory_space<vmem>>, vector<32x128xbf16>
    %cst_594 = arith.constant dense<0.000000e+00> : vector<16x128xf32>
    %1033 = tpu.matmul %1031, %1032, %cst_594 {dimension_numbers = #tpu.dot_dimension_numbers<[1], [0], [0], [1], [0, 0, 1, 1], [], []>} : vector<16x32xbf16>, vector<32x128xbf16>, vector<16x128xf32> -> vector<16x128xf32>
    %c0_595 = arith.constant 0 : index
    %c0_596 = arith.constant 0 : index
    %1034 = vector.load %arg15[%c0_595, %c0_596] : memref<1x128xf32, #tpu.memory_space<vmem>>, vector<1x128xf32>
    %1035 = vector.broadcast %1034 : vector<1x128xf32> to vector<16x128xf32>
    %1036 = arith.addf %1033, %1035 : vector<16x128xf32>
    %cst_597 = arith.constant dense<0xFF800000> : vector<16xf32>
    %1037 = vector.multi_reduction <maximumf>, %1036, %cst_597 [1] : vector<16x128xf32> to vector<16xf32>
    %1038 = vector.shape_cast %1037 : vector<16xf32> to vector<16x1xf32>
    %1039 = vector.broadcast %1038 : vector<16x1xf32> to vector<16x128xf32>
    %1040 = arith.subf %1036, %1039 : vector<16x128xf32>
    %1041 = math.exp %1040 : vector<16x128xf32>
    %cst_598 = arith.constant dense<0.000000e+00> : vector<16xf32>
    %1042 = vector.multi_reduction <add>, %1041, %cst_598 [1] : vector<16x128xf32> to vector<16xf32>
    %1043 = vector.shape_cast %1042 : vector<16xf32> to vector<16x1xf32>
    %1044 = math.log %1043 : vector<16x1xf32>
    %1045 = vector.broadcast %1044 : vector<16x1xf32> to vector<16x128xf32>
    %1046 = arith.subf %1040, %1045 : vector<16x128xf32>
    %c0_599 = arith.constant 0 : index
    %c0_600 = arith.constant 0 : index
    %1047 = vector.load %arg16[%c0_599, %c0_600] : memref<16x128xf32, #tpu.memory_space<vmem>>, vector<16x128xf32>
    tpu.vector_store %arg16[%c0_599, %c0_600], %1046 {strides = array<i32>} : memref<16x128xf32, #tpu.memory_space<vmem>>, vector<16x128xf32>,
    return
  }
  func.func @transform_0(%arg0: i32) -> (i32, i32, i32) {
    %c0_i32 = arith.constant 0 : i32
    %c0_i32_0 = arith.constant 0 : i32
    %c0_i32_1 = arith.constant 0 : i32
    return %arg0, %c0_i32, %c0_i32_0 : i32, i32, i32
  }
  func.func @transform_1(%arg0: i32) -> (i32, i32) {
    %c0_i32 = arith.constant 0 : i32
    %c0_i32_0 = arith.constant 0 : i32
    %c0_i32_1 = arith.constant 0 : i32
    return %c0_i32, %c0_i32_0 : i32, i32
  }
  func.func @transform_2(%arg0: i32) -> (i32, i32) {
    %c0_i32 = arith.constant 0 : i32
    %c0_i32_0 = arith.constant 0 : i32
    %c0_i32_1 = arith.constant 0 : i32
    return %c0_i32, %c0_i32_0 : i32, i32
  }
  func.func @transform_3(%arg0: i32) -> (i32, i32) {
    %c0_i32 = arith.constant 0 : i32
    %c0_i32_0 = arith.constant 0 : i32
    %c0_i32_1 = arith.constant 0 : i32
    return %c0_i32, %c0_i32_0 : i32, i32
  }
  func.func @transform_4(%arg0: i32) -> (i32, i32) {
    %c0_i32 = arith.constant 0 : i32
    %c0_i32_0 = arith.constant 0 : i32
    %c0_i32_1 = arith.constant 0 : i32
    return %c0_i32, %c0_i32_0 : i32, i32
  }
  func.func @transform_5(%arg0: i32) -> (i32, i32) {
    %c0_i32 = arith.constant 0 : i32
    %c0_i32_0 = arith.constant 0 : i32
    %c0_i32_1 = arith.constant 0 : i32
    return %c0_i32, %c0_i32_0 : i32, i32
  }
  func.func @transform_6(%arg0: i32) -> (i32, i32) {
    %c0_i32 = arith.constant 0 : i32
    %c0_i32_0 = arith.constant 0 : i32
    %c0_i32_1 = arith.constant 0 : i32
    return %c0_i32, %c0_i32_0 : i32, i32
  }
  func.func @transform_7(%arg0: i32) -> (i32, i32) {
    %c0_i32 = arith.constant 0 : i32
    %c0_i32_0 = arith.constant 0 : i32
    %c0_i32_1 = arith.constant 0 : i32
    return %c0_i32, %c0_i32_0 : i32, i32
  }
  func.func @transform_8(%arg0: i32) -> (i32, i32) {
    %c0_i32 = arith.constant 0 : i32
    %c0_i32_0 = arith.constant 0 : i32
    %c0_i32_1 = arith.constant 0 : i32
    return %c0_i32, %c0_i32_0 : i32, i32
  }
  func.func @transform_9(%arg0: i32) -> (i32, i32) {
    %c0_i32 = arith.constant 0 : i32
    %c0_i32_0 = arith.constant 0 : i32
    %c0_i32_1 = arith.constant 0 : i32
    return %c0_i32, %c0_i32_0 : i32, i32
  }
  func.func @transform_10(%arg0: i32) -> (i32, i32) {
    %c0_i32 = arith.constant 0 : i32
    %c0_i32_0 = arith.constant 0 : i32
    %c0_i32_1 = arith.constant 0 : i32
    return %c0_i32, %c0_i32_0 : i32, i32
  }
  func.func @transform_11(%arg0: i32) -> (i32, i32) {
    %c0_i32 = arith.constant 0 : i32
    %c0_i32_0 = arith.constant 0 : i32
    %c0_i32_1 = arith.constant 0 : i32
    return %c0_i32, %c0_i32_0 : i32, i32
  }
  func.func @transform_12(%arg0: i32) -> (i32, i32) {
    %c0_i32 = arith.constant 0 : i32
    %c0_i32_0 = arith.constant 0 : i32
    %c0_i32_1 = arith.constant 0 : i32
    return %c0_i32, %c0_i32_0 : i32, i32
  }
  func.func @transform_13(%arg0: i32) -> (i32, i32) {
    %c0_i32 = arith.constant 0 : i32
    %c0_i32_0 = arith.constant 0 : i32
    %c0_i32_1 = arith.constant 0 : i32
    return %c0_i32, %c0_i32_0 : i32, i32
  }
  func.func @transform_14(%arg0: i32) -> (i32, i32) {
    %c0_i32 = arith.constant 0 : i32
    %c0_i32_0 = arith.constant 0 : i32
    %c0_i32_1 = arith.constant 0 : i32
    return %c0_i32, %c0_i32_0 : i32, i32
  }
  func.func @transform_15(%arg0: i32) -> (i32, i32) {
    %c0_i32 = arith.constant 0 : i32
    %c0_i32_0 = arith.constant 0 : i32
    return %arg0, %c0_i32 : i32, i32
  }
}

</mosaic_0001>

<llo_original>
// kernel: tpu_custom_call.1
$region0: #{tpu_custom_call.1}
  #allocation0 [shape = 'u32[]', space=smem, size = 0x4, offset = 0x4, fixed_abs, tag = 'smem constant byte address 0x4 - core index']
  #allocation1 [shape = 'u32[72,128]{1,0:T(1,128)}', space=vmem, size = 0x9000, scoped, tag = 'internal scratch']
  #allocation2 [shape = 'f32[16,32]{1,0:T(8,128)}', space=vmem, size = 0x2000, scoped, tag = 'scratch operand']
  #allocation3 [shape = 'f32[16,32]{1,0:T(8,128)}', space=vmem, size = 0x2000, scoped, tag = 'scratch operand']
  #allocation4 [shape = 'f32[48,128]{1,0:T(8,128)}', space=vmem, size = 0x6000, scoped, tag = 'scratch operand']
  #allocation5 [shape = 'f32[48,32]{1,0:T(8,128)}', space=vmem, size = 0x6000, scoped, tag = 'scratch operand']
  #allocation6 [shape = 'bf16[128,32]{1,0:T(8,128)(2,1)}', space=vmem, size = 0x8000, scoped, tag = 'scratch operand']
  %s0 = inlined_call_operand.vmem [shape: bf16[2,128,16], index: 0, kind: input, shape index: {}]
  %s1 = inlined_call_operand.vmem [shape: bf16[16,128], index: 1, kind: input, shape index: {}]
  %s2 = inlined_call_operand.vmem [shape: bf16[32,128], index: 2, kind: input, shape index: {}]
  %s3 = inlined_call_operand.vmem [shape: f32[1,128], index: 3, kind: input, shape index: {}]
  %s4 = inlined_call_operand.vmem [shape: bf16[32,128], index: 4, kind: input, shape index: {}]
  %s5 = inlined_call_operand.vmem [shape: bf16[32,128], index: 5, kind: input, shape index: {}]
  %s6 = inlined_call_operand.vmem [shape: f32[1,128], index: 6, kind: input, shape index: {}]
  %s7 = inlined_call_operand.vmem [shape: bf16[32,128], index: 7, kind: input, shape index: {}]
  %s8 = inlined_call_operand.vmem [shape: bf16[32,128], index: 8, kind: input, shape index: {}]
  %s9 = inlined_call_operand.vmem [shape: f32[1,128], index: 9, kind: input, shape index: {}]
  %s10 = inlined_call_operand.vmem [shape: bf16[32,128], index: 10, kind: input, shape index: {}]
  %s11 = inlined_call_operand.vmem [shape: bf16[32,128], index: 11, kind: input, shape index: {}]
  %s12 = inlined_call_operand.vmem [shape: f32[1,128], index: 12, kind: input, shape index: {}]
  %s13 = inlined_call_operand.vmem [shape: bf16[32,128], index: 13, kind: input, shape index: {}]
  %s14 = inlined_call_operand.vmem [shape: f32[1,128], index: 14, kind: input, shape index: {}]
  %s15 = inlined_call_operand.hbm [shape: f32[32,128], index: 15, kind: output, shape index: {}]
  %s16 = sld [smem:[#allocation0]]
  $region93: #{tpu_custom_call.1} parent=0
    _
  %s18 = ssub.s32 1, %s16
  %s19 = scalar_select 0, %s18, %s16
  $region1: #{tpu_custom_call.1} parent=0
    #allocation7 [shape = 'u8[16384]{0}', space=vmem, size = 0x4000, scoped, tag = 'output window, operand 0']
    #allocation8 [shape = 's32[2]{0}', space=sflag, size = 0x8, scoped, tag = 'scoped memory for tpu_custom_call.1']
    %20 = vsyncpa [#allocation8], 0
    %s21 = scalar_lea.sflag [#allocation8], 1
    %22 = vsyncpa %s21, 0
    loop: start=0, step=1, limit=4
    $region2: #{tpu_custom_call.1} parent=1 // loop_pre_header
      _
    $region3: #{tpu_custom_call.1} parent=1 // loop_header
      %s24 = sphi 0, %s28
      %p25 = scmp.ge.s32.totalorder %s24, 4
      %s34 = sphi 0, %s36
      %s37 = sphi 0, %s34
      %s38 = sphi 0, %s37
      %s54 = sphi 0, %s38
      %s58 = sphi 0, %s58
      %s60 = sphi 0, %s58
      %s61 = sphi 0, %s60
      %s75 = sphi 0, %s61
      %s79 = sphi 0, %s79
      %s81 = sphi 0, %s79
      %s82 = sphi 0, %s81
      %s96 = sphi 0, %s82
      %s100 = sphi 0, %s100
      %s102 = sphi 0, %s100
      %s103 = sphi 0, %s102
      %s117 = sphi 0, %s103
      %s121 = sphi 0, %s121
      %s123 = sphi 0, %s121
      %s124 = sphi 0, %s123
      %s138 = sphi 0, %s124
      %s142 = sphi 0, %s142
      %s144 = sphi 0, %s142
      %s145 = sphi 0, %s144
      %s159 = sphi 0, %s145
      %s163 = sphi 0, %s163
      %s165 = sphi 0, %s163
      %s166 = sphi 0, %s165
      %s180 = sphi 0, %s166
      %s184 = sphi 0, %s184
      %s186 = sphi 0, %s184
      %s187 = sphi 0, %s186
      %s201 = sphi 0, %s187
      %s205 = sphi 0, %s205
      %s207 = sphi 0, %s205
      %s208 = sphi 0, %s207
      %s222 = sphi 0, %s208
      %s226 = sphi 0, %s226
      %s228 = sphi 0, %s226
      %s229 = sphi 0, %s228
      %s243 = sphi 0, %s229
      %s247 = sphi 0, %s247
      %s249 = sphi 0, %s247
      %s250 = sphi 0, %s249
      %s264 = sphi 0, %s250
      %s268 = sphi 0, %s268
      %s270 = sphi 0, %s268
      %s271 = sphi 0, %s270
      %s285 = sphi 0, %s271
      %s289 = sphi 0, %s289
      %s291 = sphi 0, %s289
      %s292 = sphi 0, %s291
      %s306 = sphi 0, %s292
      %s310 = sphi 0, %s310
      %s312 = sphi 0, %s310
      %s313 = sphi 0, %s312
      %s327 = sphi 0, %s313
      %s331 = sphi 0, %s331
      %s333 = sphi 0, %s331
      %s334 = sphi 0, %s333
      %s348 = sphi 0, %s334
      %s354 = sphi 0, %s356
      %s357 = sphi 0, %s354
      %s358 = sphi 0, %s357
      %s374 = sphi 0, %s358
    $region4: #{tpu_custom_call.1} parent=1 // loop_header_branch
      %27 = sbr.rel (%p25) target = $region8
    $region5: #{tpu_custom_call.1} parent=1 // loop_body
      %s29 = ssub.s32 %s24, 1
      %s30 = ssub.s32 %s24, 2
      %s31 = sadd.s32 %s24, 1
      %s32 = ssub.s32 %s24, %s31
      %p33 = scmp.eq.s32.totalorder %s32, 0
      %s35 = sadd.s32 %s34, 1
      %s36 = scalar_select %p33, %s34, %s35
      %p39 = pneg %p33
      %p40 = scmp.eq.s32.totalorder %s24, 1
      %p41 = por %p39, %p40
      %p42 = scmp.ne.s32.totalorder %s34, %s37
      %p43 = scmp.eq.s32.totalorder %s24, 0
      %p44 = por %p42, %p43
      %p45 = scmp.ne.s32.totalorder %s34, %s37
      %p46 = scmp.eq.s32.totalorder %s29, 1
      %p47 = por %p45, %p46
      %p48 = scmp.ne.s32.totalorder %s37, %s38
      %p49 = scmp.eq.s32.totalorder %s29, 0
      %p50 = por %p48, %p49
      %p51 = scmp.ne.s32.totalorder %s37, %s38
      %p52 = scmp.eq.s32.totalorder %s30, 1
      %p53 = por %p51, %p52
      %p55 = scmp.ne.s32.totalorder %s38, %s54
      %p56 = scmp.eq.s32.totalorder %s30, 0
      %p57 = por %p55, %p56
      %s59 = sadd.s32 %s58, 1
      %p62 = scmp.eq.s32.totalorder %s24, 1
      %p63 = scmp.ne.s32.totalorder %s58, %s60
      %p64 = scmp.eq.s32.totalorder %s24, 0
      %p65 = por %p63, %p64
      %p66 = scmp.ne.s32.totalorder %s58, %s60
      %p67 = scmp.eq.s32.totalorder %s29, 1
      %p68 = por %p66, %p67
      %p69 = scmp.ne.s32.totalorder %s60, %s61
      %p70 = scmp.eq.s32.totalorder %s29, 0
      %p71 = por %p69, %p70
      %p72 = scmp.ne.s32.totalorder %s60, %s61
      %p73 = scmp.eq.s32.totalorder %s30, 1
      %p74 = por %p72, %p73
      %p76 = scmp.ne.s32.totalorder %s61, %s75
      %p77 = scmp.eq.s32.totalorder %s30, 0
      %p78 = por %p76, %p77
      %s80 = sadd.s32 %s79, 1
      %p83 = scmp.eq.s32.totalorder %s24, 1
      %p84 = scmp.ne.s32.totalorder %s79, %s81
      %p85 = scmp.eq.s32.totalorder %s24, 0
      %p86 = por %p84, %p85
      %p87 = scmp.ne.s32.totalorder %s79, %s81
      %p88 = scmp.eq.s32.totalorder %s29, 1
      %p89 = por %p87, %p88
      %p90 = scmp.ne.s32.totalorder %s81, %s82
      %p91 = scmp.eq.s32.totalorder %s29, 0
      %p92 = por %p90, %p91
      %p93 = scmp.ne.s32.totalorder %s81, %s82
      %p94 = scmp.eq.s32.totalorder %s30, 1
      %p95 = por %p93, %p94
      %p97 = scmp.ne.s32.totalorder %s82, %s96
      %p98 = scmp.eq.s32.totalorder %s30, 0
      %p99 = por %p97, %p98
      %s101 = sadd.s32 %s100, 1
      %p104 = scmp.eq.s32.totalorder %s24, 1
      %p105 = scmp.ne.s32.totalorder %s100, %s102
      %p106 = scmp.eq.s32.totalorder %s24, 0
      %p107 = por %p105, %p106
      %p108 = scmp.ne.s32.totalorder %s100, %s102
      %p109 = scmp.eq.s32.totalorder %s29, 1
      %p110 = por %p108, %p109
      %p111 = scmp.ne.s32.totalorder %s102, %s103
      %p112 = scmp.eq.s32.totalorder %s29, 0
      %p113 = por %p111, %p112
      %p114 = scmp.ne.s32.totalorder %s102, %s103
      %p115 = scmp.eq.s32.totalorder %s30, 1
      %p116 = por %p114, %p115
      %p118 = scmp.ne.s32.totalorder %s103, %s117
      %p119 = scmp.eq.s32.totalorder %s30, 0
      %p120 = por %p118, %p119
      %s122 = sadd.s32 %s121, 1
      %p125 = scmp.eq.s32.totalorder %s24, 1
      %p126 = scmp.ne.s32.totalorder %s121, %s123
      %p127 = scmp.eq.s32.totalorder %s24, 0
      %p128 = por %p126, %p127
      %p129 = scmp.ne.s32.totalorder %s121, %s123
      %p130 = scmp.eq.s32.totalorder %s29, 1
      %p131 = por %p129, %p130
      %p132 = scmp.ne.s32.totalorder %s123, %s124
      %p133 = scmp.eq.s32.totalorder %s29, 0
      %p134 = por %p132, %p133
      %p135 = scmp.ne.s32.totalorder %s123, %s124
      %p136 = scmp.eq.s32.totalorder %s30, 1
      %p137 = por %p135, %p136
      %p139 = scmp.ne.s32.totalorder %s124, %s138
      %p140 = scmp.eq.s32.totalorder %s30, 0
      %p141 = por %p139, %p140
      %s143 = sadd.s32 %s142, 1
      %p146 = scmp.eq.s32.totalorder %s24, 1
      %p147 = scmp.ne.s32.totalorder %s142, %s144
      %p148 = scmp.eq.s32.totalorder %s24, 0
      %p149 = por %p147, %p148
      %p150 = scmp.ne.s32.totalorder %s142, %s144
      %p151 = scmp.eq.s32.totalorder %s29, 1
      %p152 = por %p150, %p151
      %p153 = scmp.ne.s32.totalorder %s144, %s145
      %p154 = scmp.eq.s32.totalorder %s29, 0
      %p155 = por %p153, %p154
      %p156 = scmp.ne.s32.totalorder %s144, %s145
      %p157 = scmp.eq.s32.totalorder %s30, 1
      %p158 = por %p156, %p157
      %p160 = scmp.ne.s32.totalorder %s145, %s159
      %p161 = scmp.eq.s32.totalorder %s30, 0
      %p162 = por %p160, %p161
      %s164 = sadd.s32 %s163, 1
      %p167 = scmp.eq.s32.totalorder %s24, 1
      %p168 = scmp.ne.s32.totalorder %s163, %s165
      %p169 = scmp.eq.s32.totalorder %s24, 0
      %p170 = por %p168, %p169
      %p171 = scmp.ne.s32.totalorder %s163, %s165
      %p172 = scmp.eq.s32.totalorder %s29, 1
      %p173 = por %p171, %p172
      %p174 = scmp.ne.s32.totalorder %s165, %s166
      %p175 = scmp.eq.s32.totalorder %s29, 0
      %p176 = por %p174, %p175
      %p177 = scmp.ne.s32.totalorder %s165, %s166
      %p178 = scmp.eq.s32.totalorder %s30, 1
      %p179 = por %p177, %p178
      %p181 = scmp.ne.s32.totalorder %s166, %s180
      %p182 = scmp.eq.s32.totalorder %s30, 0
      %p183 = por %p181, %p182
      %s185 = sadd.s32 %s184, 1
      %p188 = scmp.eq.s32.totalorder %s24, 1
      %p189 = scmp.ne.s32.totalorder %s184, %s186
      %p190 = scmp.eq.s32.totalorder %s24, 0
      %p191 = por %p189, %p190
      %p192 = scmp.ne.s32.totalorder %s184, %s186
      %p193 = scmp.eq.s32.totalorder %s29, 1
      %p194 = por %p192, %p193
      %p195 = scmp.ne.s32.totalorder %s186, %s187
      %p196 = scmp.eq.s32.totalorder %s29, 0
      %p197 = por %p195, %p196
      %p198 = scmp.ne.s32.totalorder %s186, %s187
      %p199 = scmp.eq.s32.totalorder %s30, 1
      %p200 = por %p198, %p199
      %p202 = scmp.ne.s32.totalorder %s187, %s201
      %p203 = scmp.eq.s32.totalorder %s30, 0
      %p204 = por %p202, %p203
      %s206 = sadd.s32 %s205, 1
      %p209 = scmp.eq.s32.totalorder %s24, 1
      %p210 = scmp.ne.s32.totalorder %s205, %s207
      %p211 = scmp.eq.s32.totalorder %s24, 0
      %p212 = por %p210, %p211
      %p213 = scmp.ne.s32.totalorder %s205, %s207
      %p214 = scmp.eq.s32.totalorder %s29, 1
      %p215 = por %p213, %p214
      %p216 = scmp.ne.s32.totalorder %s207, %s208
      %p217 = scmp.eq.s32.totalorder %s29, 0
      %p218 = por %p216, %p217
      %p219 = scmp.ne.s32.totalorder %s207, %s208
      %p220 = scmp.eq.s32.totalorder %s30, 1
      %p221 = por %p219, %p220
      %p223 = scmp.ne.s32.totalorder %s208, %s222
      %p224 = scmp.eq.s32.totalorder %s30, 0
      %p225 = por %p223, %p224
      %s227 = sadd.s32 %s226, 1
      %p230 = scmp.eq.s32.totalorder %s24, 1
      %p231 = scmp.ne.s32.totalorder %s226, %s228
      %p232 = scmp.eq.s32.totalorder %s24, 0
      %p233 = por %p231, %p232
      %p234 = scmp.ne.s32.totalorder %s226, %s228
      %p235 = scmp.eq.s32.totalorder %s29, 1
      %p236 = por %p234, %p235
      %p237 = scmp.ne.s32.totalorder %s228, %s229
      %p238 = scmp.eq.s32.totalorder %s29, 0
      %p239 = por %p237, %p238
      %p240 = scmp.ne.s32.totalorder %s228, %s229
      %p241 = scmp.eq.s32.totalorder %s30, 1
      %p242 = por %p240, %p241
      %p244 = scmp.ne.s32.totalorder %s229, %s243
      %p245 = scmp.eq.s32.totalorder %s30, 0
      %p246 = por %p244, %p245
      %s248 = sadd.s32 %s247, 1
      %p251 = scmp.eq.s32.totalorder %s24, 1
      %p252 = scmp.ne.s32.totalorder %s247, %s249
      %p253 = scmp.eq.s32.totalorder %s24, 0
      %p254 = por %p252, %p253
      %p255 = scmp.ne.s32.totalorder %s247, %s249
      %p256 = scmp.eq.s32.totalorder %s29, 1
      %p257 = por %p255, %p256
      %p258 = scmp.ne.s32.totalorder %s249, %s250
      %p259 = scmp.eq.s32.totalorder %s29, 0
      %p260 = por %p258, %p259
      %p261 = scmp.ne.s32.totalorder %s249, %s250
      %p262 = scmp.eq.s32.totalorder %s30, 1
      %p263 = por %p261, %p262
      %p265 = scmp.ne.s32.totalorder %s250, %s264
      %p266 = scmp.eq.s32.totalorder %s30, 0
      %p267 = por %p265, %p266
      %s269 = sadd.s32 %s268, 1
      %p272 = scmp.eq.s32.totalorder %s24, 1
      %p273 = scmp.ne.s32.totalorder %s268, %s270
      %p274 = scmp.eq.s32.totalorder %s24, 0
      %p275 = por %p273, %p274
      %p276 = scmp.ne.s32.totalorder %s268, %s270
      %p277 = scmp.eq.s32.totalorder %s29, 1
      %p278 = por %p276, %p277
      %p279 = scmp.ne.s32.totalorder %s270, %s271
      %p280 = scmp.eq.s32.totalorder %s29, 0
      %p281 = por %p279, %p280
      %p282 = scmp.ne.s32.totalorder %s270, %s271
      %p283 = scmp.eq.s32.totalorder %s30, 1
      %p284 = por %p282, %p283
      %p286 = scmp.ne.s32.totalorder %s271, %s285
      %p287 = scmp.eq.s32.totalorder %s30, 0
      %p288 = por %p286, %p287
      %s290 = sadd.s32 %s289, 1
      %p293 = scmp.eq.s32.totalorder %s24, 1
      %p294 = scmp.ne.s32.totalorder %s289, %s291
      %p295 = scmp.eq.s32.totalorder %s24, 0
      %p296 = por %p294, %p295
      %p297 = scmp.ne.s32.totalorder %s289, %s291
      %p298 = scmp.eq.s32.totalorder %s29, 1
      %p299 = por %p297, %p298
      %p300 = scmp.ne.s32.totalorder %s291, %s292
      %p301 = scmp.eq.s32.totalorder %s29, 0
      %p302 = por %p300, %p301
      %p303 = scmp.ne.s32.totalorder %s291, %s292
      %p304 = scmp.eq.s32.totalorder %s30, 1
      %p305 = por %p303, %p304
      %p307 = scmp.ne.s32.totalorder %s292, %s306
      %p308 = scmp.eq.s32.totalorder %s30, 0
      %p309 = por %p307, %p308
      %s311 = sadd.s32 %s310, 1
      %p314 = scmp.eq.s32.totalorder %s24, 1
      %p315 = scmp.ne.s32.totalorder %s310, %s312
      %p316 = scmp.eq.s32.totalorder %s24, 0
      %p317 = por %p315, %p316
      %p318 = scmp.ne.s32.totalorder %s310, %s312
      %p319 = scmp.eq.s32.totalorder %s29, 1
      %p320 = por %p318, %p319
      %p321 = scmp.ne.s32.totalorder %s312, %s313
      %p322 = scmp.eq.s32.totalorder %s29, 0
      %p323 = por %p321, %p322
      %p324 = scmp.ne.s32.totalorder %s312, %s313
      %p325 = scmp.eq.s32.totalorder %s30, 1
      %p326 = por %p324, %p325
      %p328 = scmp.ne.s32.totalorder %s313, %s327
      %p329 = scmp.eq.s32.totalorder %s30, 0
      %p330 = por %p328, %p329
      %s332 = sadd.s32 %s331, 1
      %p335 = scmp.eq.s32.totalorder %s24, 1
      %p336 = scmp.ne.s32.totalorder %s331, %s333
      %p337 = scmp.eq.s32.totalorder %s24, 0
      %p338 = por %p336, %p337
      %p339 = scmp.ne.s32.totalorder %s331, %s333
      %p340 = scmp.eq.s32.totalorder %s29, 1
      %p341 = por %p339, %p340
      %p342 = scmp.ne.s32.totalorder %s333, %s334
      %p343 = scmp.eq.s32.totalorder %s29, 0
      %p344 = por %p342, %p343
      %p345 = scmp.ne.s32.totalorder %s333, %s334
      %p346 = scmp.eq.s32.totalorder %s30, 1
      %p347 = por %p345, %p346
      %p349 = scmp.ne.s32.totalorder %s334, %s348
      %p350 = scmp.eq.s32.totalorder %s30, 0
      %p351 = por %p349, %p350
      %s352 = ssub.s32 %s24, %s31
      %p353 = scmp.eq.s32.totalorder %s352, 0
      %s355 = sadd.s32 %s354, 1
      %s356 = scalar_select %p353, %s354, %s355
      %p359 = pneg %p353
      %p360 = scmp.eq.s32.totalorder %s24, 1
      %p361 = por %p359, %p360
      %p362 = scmp.ne.s32.totalorder %s354, %s357
      %p363 = scmp.eq.s32.totalorder %s24, 0
      %p364 = por %p362, %p363
      %p365 = scmp.ne.s32.totalorder %s354, %s357
      %p366 = scmp.eq.s32.totalorder %s29, 1
      %p367 = por %p365, %p366
      %p368 = scmp.ne.s32.totalorder %s357, %s358
      %p369 = scmp.eq.s32.totalorder %s29, 0
      %p370 = por %p368, %p369
      %p371 = scmp.ne.s32.totalorder %s357, %s358
      %p372 = scmp.eq.s32.totalorder %s30, 1
      %p373 = por %p371, %p372
      %p375 = scmp.ne.s32.totalorder %s358, %s374
      %p376 = scmp.eq.s32.totalorder %s30, 0
      %p377 = por %p375, %p376
      %p378 = scmp.le.s32.totalorder 1, %s24
      %p379 = scmp.lt.s32.totalorder %s24, 3
      %p380 = pnand %p378, %p379
      %p381 = pneg %p380
      // Predicated region
      $region9: #{tpu_custom_call.1} parent=5 // pred_check
        _
      $region10: #{tpu_custom_call.1} parent=5 // pred_check_branch
        %383 = sbr.rel (%p380) target = $region12
      $region11: #{tpu_custom_call.1} parent=5 // pred_region
        %s384 = ssub.s32 %s24, 1
        // Predicated region
        $region13: #{tpu_custom_call.1} parent=11 // pred_check
          %p385 = pneg %p71
        $region14: #{tpu_custom_call.1} parent=11 // pred_check_branch
          %387 = sbr.rel (%p385) target = $region16
        $region15: #{tpu_custom_call.1} parent=11 // pred_region
          _
        $region16: #{tpu_custom_call.1} parent=11 // pred_fallthru
          _
        // Predicated region
        $region17: #{tpu_custom_call.1} parent=11 // pred_check
          %p388 = pneg %p92
        $region18: #{tpu_custom_call.1} parent=11 // pred_check_branch
          %390 = sbr.rel (%p388) target = $region20
        $region19: #{tpu_custom_call.1} parent=11 // pred_region
          _
        $region20: #{tpu_custom_call.1} parent=11 // pred_fallthru
          _
        // Predicated region
        $region21: #{tpu_custom_call.1} parent=11 // pred_check
          %p391 = pneg %p113
        $region22: #{tpu_custom_call.1} parent=11 // pred_check_branch
          %393 = sbr.rel (%p391) target = $region24
        $region23: #{tpu_custom_call.1} parent=11 // pred_region
          _
        $region24: #{tpu_custom_call.1} parent=11 // pred_fallthru
          _
        // Predicated region
        $region25: #{tpu_custom_call.1} parent=11 // pred_check
          %p394 = pneg %p134
        $region26: #{tpu_custom_call.1} parent=11 // pred_check_branch
          %396 = sbr.rel (%p394) target = $region28
        $region27: #{tpu_custom_call.1} parent=11 // pred_region
          _
        $region28: #{tpu_custom_call.1} parent=11 // pred_fallthru
          _
        // Predicated region
        $region29: #{tpu_custom_call.1} parent=11 // pred_check
          %p397 = pneg %p155
        $region30: #{tpu_custom_call.1} parent=11 // pred_check_branch
          %399 = sbr.rel (%p397) target = $region32
        $region31: #{tpu_custom_call.1} parent=11 // pred_region
          _
        $region32: #{tpu_custom_call.1} parent=11 // pred_fallthru
          _
        // Predicated region
        $region33: #{tpu_custom_call.1} parent=11 // pred_check
          %p400 = pneg %p176
        $region34: #{tpu_custom_call.1} parent=11 // pred_check_branch
          %402 = sbr.rel (%p400) target = $region36
        $region35: #{tpu_custom_call.1} parent=11 // pred_region
          _
        $region36: #{tpu_custom_call.1} parent=11 // pred_fallthru
          _
        // Predicated region
        $region37: #{tpu_custom_call.1} parent=11 // pred_check
          %p403 = pneg %p197
        $region38: #{tpu_custom_call.1} parent=11 // pred_check_branch
          %405 = sbr.rel (%p403) target = $region40
        $region39: #{tpu_custom_call.1} parent=11 // pred_region
          _
        $region40: #{tpu_custom_call.1} parent=11 // pred_fallthru
          _
        // Predicated region
        $region41: #{tpu_custom_call.1} parent=11 // pred_check
          %p406 = pneg %p218
        $region42: #{tpu_custom_call.1} parent=11 // pred_check_branch
          %408 = sbr.rel (%p406) target = $region44
        $region43: #{tpu_custom_call.1} parent=11 // pred_region
          _
        $region44: #{tpu_custom_call.1} parent=11 // pred_fallthru
          _
        // Predicated region
        $region45: #{tpu_custom_call.1} parent=11 // pred_check
          %p409 = pneg %p239
        $region46: #{tpu_custom_call.1} parent=11 // pred_check_branch
          %411 = sbr.rel (%p409) target = $region48
        $region47: #{tpu_custom_call.1} parent=11 // pred_region
          _
        $region48: #{tpu_custom_call.1} parent=11 // pred_fallthru
          _
        // Predicated region
        $region49: #{tpu_custom_call.1} parent=11 // pred_check
          %p412 = pneg %p260
        $region50: #{tpu_custom_call.1} parent=11 // pred_check_branch
          %414 = sbr.rel (%p412) target = $region52
        $region51: #{tpu_custom_call.1} parent=11 // pred_region
          _
        $region52: #{tpu_custom_call.1} parent=11 // pred_fallthru
          _
        // Predicated region
        $region53: #{tpu_custom_call.1} parent=11 // pred_check
          %p415 = pneg %p281
        $region54: #{tpu_custom_call.1} parent=11 // pred_check_branch
          %417 = sbr.rel (%p415) target = $region56
        $region55: #{tpu_custom_call.1} parent=11 // pred_region
          _
        $region56: #{tpu_custom_call.1} parent=11 // pred_fallthru
          _
        // Predicated region
        $region57: #{tpu_custom_call.1} parent=11 // pred_check
          %p418 = pneg %p302
        $region58: #{tpu_custom_call.1} parent=11 // pred_check_branch
          %420 = sbr.rel (%p418) target = $region60
        $region59: #{tpu_custom_call.1} parent=11 // pred_region
          _
        $region60: #{tpu_custom_call.1} parent=11 // pred_fallthru
          _
        // Predicated region
        $region61: #{tpu_custom_call.1} parent=11 // pred_check
          %p421 = pneg %p323
        $region62: #{tpu_custom_call.1} parent=11 // pred_check_branch
          %423 = sbr.rel (%p421) target = $region64
        $region63: #{tpu_custom_call.1} parent=11 // pred_region
          _
        $region64: #{tpu_custom_call.1} parent=11 // pred_fallthru
          _
        // Predicated region
        $region65: #{tpu_custom_call.1} parent=11 // pred_check
          %p424 = pneg %p344
        $region66: #{tpu_custom_call.1} parent=11 // pred_check_branch
          %426 = sbr.rel (%p424) target = $region68
        $region67: #{tpu_custom_call.1} parent=11 // pred_region
          _
        $region68: #{tpu_custom_call.1} parent=11 // pred_fallthru
          _
      $region12: #{tpu_custom_call.1} parent=5 // pred_fallthru
        _
      %p427 = scmp.lt.s32.totalorder %s24, 2
      // Predicated region
      $region69: #{tpu_custom_call.1} parent=5 // pred_check
        %p428 = pneg %p427
      $region70: #{tpu_custom_call.1} parent=5 // pred_check_branch
        %430 = sbr.rel (%p428) target = $region72
      $region71: #{tpu_custom_call.1} parent=5 // pred_region
        // Predicated region
        $region73: #{tpu_custom_call.1} parent=71 // pred_check
          %p431 = pneg %p44
        $region74: #{tpu_custom_call.1} parent=71 // pred_check_branch
          %433 = sbr.rel (%p431) target = $region76
        $region75: #{tpu_custom_call.1} parent=71 // pred_region
          %p434 = scmp.lt.s32.totalorder %s24, 1
          %s435 = scalar_select %p434, %s24, 1
          %s436 = smul.addr %s435, 16
          %s437 = smul.addr %s436, 4
          %s438 = scalar_lea.vmem %s0, %s437
        $region76: #{tpu_custom_call.1} parent=71 // pred_fallthru
          _
      $region72: #{tpu_custom_call.1} parent=5 // pred_fallthru
        _
      %p439 = scmp.le.s32.totalorder 1, %s24
      %p440 = scmp.lt.s32.totalorder %s24, 3
      %p441 = pnand %p439, %p440
      %p442 = pneg %p441
      // Predicated region
      $region77: #{tpu_custom_call.1} parent=5 // pred_check
        _
      $region78: #{tpu_custom_call.1} parent=5 // pred_check_branch
        %444 = sbr.rel (%p441) target = $region80
      $region79: #{tpu_custom_call.1} parent=5 // pred_region
        %s445 = ssub.s32 %s24, 1
        %p446 = scmp.lt.s32.totalorder %s29, 1
        %s447 = scalar_select %p446, %s29, 1
        %s448 = smul.addr %s447, 16
        %s449 = smul.addr %s448, 4
        %s450 = scalar_lea.vmem %s0, %s449
        %p451 = pneg %p50
        %p452 = pneg %p47
        %p453 = pneg %p71
        %p454 = pneg %p68
        %p455 = pneg %p92
        %p456 = pneg %p89
        %p457 = pneg %p113
        %p458 = pneg %p110
        %p459 = pneg %p134
        %p460 = pneg %p131
        %p461 = pneg %p155
        %p462 = pneg %p152
        %p463 = pneg %p176
        %p464 = pneg %p173
        %p465 = pneg %p197
        %p466 = pneg %p194
        %p467 = pneg %p218
        %p468 = pneg %p215
        %p469 = pneg %p239
        %p470 = pneg %p236
        %p471 = pneg %p260
        %p472 = pneg %p257
        %p473 = pneg %p281
        %p474 = pneg %p278
        %p475 = pneg %p302
        %p476 = pneg %p299
        %p477 = pneg %p323
        %p478 = pneg %p320
        %p479 = pneg %p344
        %p480 = pneg %p341
        %p481 = pneg %p370
        %p482 = pneg %p367
        %s483 = sand.u32 %s357, 1
        %s484 = scalar_lea.sflag [#allocation8], %s483
        %s485 = sand.u32 %s357, 1
        %s486 = smul.addr %s485, 16
        %s487 = scalar_lea.vmem [#allocation7], %s486
        %p488 = scmp.lt.s32.totalorder %s29, 1
        %s489 = scalar_select %p488, %s29, 1
        %s490 = smul.addr %s489, 16
        %s491 = smul.addr %s490, 4
        %s492 = scalar_lea.vmem %s0, %s491
        %s493 = smul.u32 2, %s29
        %v495 = vld [vmem:[%s1] sm:$0xf]
        %v496 = vld [vmem:[%s1 + $0x4] sm:$0xf]
        %v497 = vld [vmem:[%s2] sm:$0xf]
        %v498 = vld [vmem:[%s2 + $0x4] sm:$0xf]
        %v499 = vld [vmem:[%s2 + $0x8] sm:$0xf]
        %v500 = vld [vmem:[%s2 + $0xc] sm:$0xf]
        %v501 = vld [vmem:[%s3] sm:$0x1]
        %vm502 = vcmask 261120
        %503 = vst.msk [vmem:[#allocation2] sm:$0xff] %vm502, 0.0
        %504 = vst.msk [vmem:[#allocation2 + $0x8] sm:$0xff] %vm502, 0.0
        %505 = vst.msk [vmem:[#allocation3] sm:$0xff] %vm502, 0.0
        %506 = vst.msk [vmem:[#allocation3 + $0x8] sm:$0xff] %vm502, 0.0
        %v507 = vld [vmem:[%s492] sm:$0xf]
        %v508 = vld [vmem:[%s492 + $0x4] sm:$0xf]
        %v509 = vld [vmem:[%s492 + $0x8] sm:$0xf]
        %v510 = vld [vmem:[%s492 + $0xc] sm:$0xf]
        %v511 = vld [vmem:[%s492 + $0x10] sm:$0xf]
        %v512 = vld [vmem:[%s492 + $0x14] sm:$0xf]
        %v514 = vperm.slane %v501, 0
        %v522 = vunpack.c.l.b16 %v507
        %v523 = vunpack.c.l.b16 %v508
        %v524 = vunpack.c.l.b16 %v509
        %v525 = vunpack.c.l.b16 %v510
        %v526 = vunpack.c.l.b16 %v511
        %v527 = vunpack.c.l.b16 %v512
        %v528 = vpack.c.b16 %v523, %v522
        %v529 = vpack.c.b16 %v525, %v524
        %v530 = vpack.c.b16 %v527, %v526
        %v533 = vunpack.c.l.b16 %v495
        %v534 = vunpack.c.l.b16 %v496
        %v535 = vpack.c.b16 %v534, %v533
        %vm537 = vcmask 130048
        %v539 = vsel %vm537, %v528, 0
        %v542 = vsel %vm537, %v529, 0
        %v545 = vsel %vm537, %v530, 0
        %547 = vmatpush.bf16.msra.mxu0 0
        %548 = vmatpush.bf16.msra.mxu0 0
        %549 = vmatpush.bf16.msra.mxu0 0
        %550 = vmatpush.bf16.msra.mxu0 0
        %551 = vmatpush.bf16.msra.mxu0 0
        %552 = vmatpush.bf16.msra.mxu0 0
        %553 = vmatpush.bf16.msra.mxu0 0
        %554 = vmatpush.bf16.msra.mxu0 %v535
        %555 = vmatmul.bf16.gmra.mxu0 %v539
        %v556 = vpop.f32.mrf.mxu0
        %v557 = vadd.f32 %v514, %v556
        %v558 = vpop.f32.mrf.mxu0
        %v559 = vadd.f32 %v514, %v558
        %560 = vmatmul.bf16.gmra.mxu0 %v542
        %v561 = vpop.f32.mrf.mxu0
        %v562 = vadd.f32 %v514, %v561
        %v563 = vpop.f32.mrf.mxu0
        %v564 = vadd.f32 %v514, %v563
        %565 = vmatmul.bf16.gmra.mxu0 %v545
        %v566 = vpop.f32.mrf.mxu0
        %v567 = vadd.f32 %v514, %v566
        %v568 = vpop.f32.mrf.mxu0
        %v569 = vadd.f32 %v514, %v568
        %570 = vdwg.mxu0
        %571 = vst [vmem:[#allocation4] sm:$0xff] %v557
        %572 = vst [vmem:[#allocation4 + $0x8] sm:$0xff] %v559
        %573 = vst [vmem:[#allocation4 + $0x10] sm:$0xff] %v562
        %574 = vst [vmem:[#allocation4 + $0x18] sm:$0xff] %v564
        %575 = vst [vmem:[#allocation4 + $0x20] sm:$0xff] %v567
        %576 = vst [vmem:[#allocation4 + $0x28] sm:$0xff] %v569
        %v577 = vld [vmem:[#allocation4] sm:$0xff]
        %v578 = vld [vmem:[#allocation4 + $0x8] sm:$0xff]
        %v579 = vld [vmem:[#allocation2] sm:$0xff]
        %v580 = vld [vmem:[#allocation2 + $0x8] sm:$0xff]
        %v581 = vpack.c.bf16 %v580, %v579
        %v586 = vunpack.c.l.b16 %v497
        %v587 = vunpack.c.l.b16 %v498
        %v588 = vunpack.c.l.b16 %v499
        %v589 = vunpack.c.l.b16 %v500
        %v590 = vpack.c.b16 %v587, %v586
        %v591 = vpack.c.b16 %v589, %v588
        %v595 = vsel %vm502, %v581, 0
        %597 = vmatpush.bf16.msra.mxu0 0
        %598 = vmatpush.bf16.msra.mxu0 0
        %599 = vmatpush.bf16.msra.mxu0 0
        %600 = vmatpush.bf16.msra.mxu0 0
        %601 = vmatpush.bf16.msra.mxu0 0
        %602 = vmatpush.bf16.msra.mxu0 0
        %603 = vmatpush.bf16.msra.mxu0 %v591
        %604 = vmatpush.bf16.msra.mxu0 %v590
        %605 = vmatmul.bf16.gmra.mxu0 %v595
        %v606 = vpop.f32.mrf.mxu0
        %v607 = vadd.f32 0.0, %v606
        %v608 = vpop.f32.mrf.mxu0
        %v609 = vadd.f32 0.0, %v608
        %610 = vdwg.mxu0
        %v611 = vadd.f32 %v577, %v607
        %v612 = vadd.f32 %v578, %v609
        %v613 = vxor.u32 %v611, 2147483648
        %v614 = vxor.u32 %v612, 2147483648
        %v615 = vmul.f32 %v613, 1.442695
        %v616 = vpow.pop %v615
        %v617 = vmul.f32 %v614, 1.442695
        %v618 = vpow.pop %v617
        %v619 = vadd.f32 %v616, 1.0
        %v620 = vadd.f32 %v618, 1.0
        %v621 = vrcp.pop %v619
        %v622 = vmul.f32 %v619, %v621
        %v623 = vsub.f32 1.0, %v622
        %v624 = vmul.f32 %v621, %v623
        %v625 = vadd.f32 %v621, %v624
        %vm626 = vweird.f32 %v619
        %vm627 = vweird.f32 %v621
        %vm628 = vmor %vm626, %vm627
        %v629 = vsel %vm628, %v621, %v625
        %v630 = vand.u32 2147483647, %v619
        %vm631 = vcmp.eq.f32.partialorder %v630, 8.507059e+37
        %v632 = vand.u32 %v619, 2147483648
        %v633 = vor.u32 1.1754944e-38, %v632
        %v634 = vsel %vm631, %v633, %v629
        %v635 = vmul.f32 1.0, %v634
        %v636 = vrcp.pop %v620
        %v637 = vmul.f32 %v620, %v636
        %v638 = vsub.f32 1.0, %v637
        %v639 = vmul.f32 %v636, %v638
        %v640 = vadd.f32 %v636, %v639
        %vm641 = vweird.f32 %v620
        %vm642 = vweird.f32 %v636
        %vm643 = vmor %vm641, %vm642
        %v644 = vsel %vm643, %v636, %v640
        %v645 = vand.u32 2147483647, %v620
        %vm646 = vcmp.eq.f32.partialorder %v645, 8.507059e+37
        %v647 = vand.u32 %v620, 2147483648
        %v648 = vor.u32 1.1754944e-38, %v647
        %v649 = vsel %vm646, %v648, %v644
        %v650 = vmul.f32 1.0, %v649
        %v651 = vtanh.pop %v611
        %v652 = vtanh.pop %v612
        %v653 = vld [vmem:[#allocation3] sm:$0xff]
        %v654 = vld [vmem:[#allocation3 + $0x8] sm:$0xff]
        %657 = vrot.lane.b32.xlu0 %v653, 32
        %v658 = vpop.permute.xlu0 %657
        %659 = vrot.lane.b32.xlu0 %v654, 32
        %v660 = vpop.permute.xlu0 %659
        %v663 = vmul.f32 %v635, %v658
        %v664 = vmul.f32 %v650, %v660
        %667 = vrot.lane.b32.xlu0 %v651, 32
        %v668 = vpop.permute.xlu0 %667
        %669 = vrot.lane.b32.xlu0 %v652, 32
        %v670 = vpop.permute.xlu0 %669
        %v673 = vmul.f32 %v635, %v668
        %v674 = vmul.f32 %v650, %v670
        %677 = vrot.lane.b32.xlu0 %v673, 32
        %v678 = vpop.permute.xlu0 %677
        %679 = vrot.lane.b32.xlu0 %v674, 32
        %v680 = vpop.permute.xlu0 %679
        %v683 = vadd.f32 %v663, %v678
        %v684 = vadd.f32 %v664, %v680
        %v685 = vtanh.pop %v683
        %v686 = vtanh.pop %v684
        %689 = vrot.lane.b32.xlu0 %v685, 32
        %v690 = vpop.permute.xlu0 %689
        %691 = vrot.lane.b32.xlu0 %v686, 32
        %v692 = vpop.permute.xlu0 %691
        %v695 = vmul.f32 %v635, %v690
        %v696 = vmul.f32 %v650, %v692
        %699 = vrot.lane.b32.xlu0 %v683, 96
        %v700 = vpop.permute.xlu0 %699
        %701 = vrot.lane.b32.xlu0 %v684, 96
        %v702 = vpop.permute.xlu0 %701
        %705 = vst.msk [vmem:[#allocation3] sm:$0xff] %vm502, %v700
        %706 = vst.msk [vmem:[#allocation3 + $0x8] sm:$0xff] %vm502, %v702
        %709 = vrot.lane.b32.xlu0 %v695, 64
        %v710 = vpop.permute.xlu0 %709
        %711 = vrot.lane.b32.xlu0 %v696, 64
        %v712 = vpop.permute.xlu0 %711
        %715 = vst.msk [vmem:[#allocation2] sm:$0xff] %vm502, %v710
        %716 = vst.msk [vmem:[#allocation2 + $0x8] sm:$0xff] %vm502, %v712
        %717 = vst.msk [vmem:[#allocation5] sm:$0xff] %vm502, %v710
        %718 = vst.msk [vmem:[#allocation5 + $0x8] sm:$0xff] %vm502, %v712
        %s719 = scalar_lea.vmem [#allocation4], 16
        %v720 = vld [vmem:[%s719] sm:$0xff]
        %v721 = vld [vmem:[%s719 + $0x8] sm:$0xff]
        %v722 = vld [vmem:[#allocation2] sm:$0xff]
        %v723 = vld [vmem:[#allocation2 + $0x8] sm:$0xff]
        %v724 = vpack.c.bf16 %v723, %v722
        %v726 = vsel %vm502, %v724, 0
        %728 = vmatpush.bf16.msra.mxu0 0
        %729 = vmatpush.bf16.msra.mxu0 0
        %730 = vmatpush.bf16.msra.mxu0 0
        %731 = vmatpush.bf16.msra.mxu0 0
        %732 = vmatpush.bf16.msra.mxu0 0
        %733 = vmatpush.bf16.msra.mxu0 0
        %734 = vmatpush.bf16.msra.mxu0 %v591
        %735 = vmatpush.bf16.msra.mxu0 %v590
        %736 = vmatmul.bf16.gmra.mxu0 %v726
        %v737 = vpop.f32.mrf.mxu0
        %v738 = vadd.f32 0.0, %v737
        %v739 = vpop.f32.mrf.mxu0
        %v740 = vadd.f32 0.0, %v739
        %741 = vdwg.mxu0
        %v742 = vadd.f32 %v720, %v738
        %v743 = vadd.f32 %v721, %v740
        %v744 = vxor.u32 %v742, 2147483648
        %v745 = vxor.u32 %v743, 2147483648
        %v746 = vmul.f32 %v744, 1.442695
        %v747 = vpow.pop %v746
        %v748 = vmul.f32 %v745, 1.442695
        %v749 = vpow.pop %v748
        %v750 = vadd.f32 %v747, 1.0
        %v751 = vadd.f32 %v749, 1.0
        %v752 = vrcp.pop %v750
        %v753 = vmul.f32 %v750, %v752
        %v754 = vsub.f32 1.0, %v753
        %v755 = vmul.f32 %v752, %v754
        %v756 = vadd.f32 %v752, %v755
        %vm757 = vweird.f32 %v750
        %vm758 = vweird.f32 %v752
        %vm759 = vmor %vm757, %vm758
        %v760 = vsel %vm759, %v752, %v756
        %v761 = vand.u32 2147483647, %v750
        %vm762 = vcmp.eq.f32.partialorder %v761, 8.507059e+37
        %v763 = vand.u32 %v750, 2147483648
        %v764 = vor.u32 1.1754944e-38, %v763
        %v765 = vsel %vm762, %v764, %v760
        %v766 = vmul.f32 1.0, %v765
        %v767 = vrcp.pop %v751
        %v768 = vmul.f32 %v751, %v767
        %v769 = vsub.f32 1.0, %v768
        %v770 = vmul.f32 %v767, %v769
        %v771 = vadd.f32 %v767, %v770
        %vm772 = vweird.f32 %v751
        %vm773 = vweird.f32 %v767
        %vm774 = vmor %vm772, %vm773
        %v775 = vsel %vm774, %v767, %v771
        %v776 = vand.u32 2147483647, %v751
        %vm777 = vcmp.eq.f32.partialorder %v776, 8.507059e+37
        %v778 = vand.u32 %v751, 2147483648
        %v779 = vor.u32 1.1754944e-38, %v778
        %v780 = vsel %vm777, %v779, %v775
        %v781 = vmul.f32 1.0, %v780
        %v782 = vtanh.pop %v742
        %v783 = vtanh.pop %v743
        %v784 = vld [vmem:[#allocation3] sm:$0xff]
        %v785 = vld [vmem:[#allocation3 + $0x8] sm:$0xff]
        %788 = vrot.lane.b32.xlu0 %v784, 32
        %v789 = vpop.permute.xlu0 %788
        %790 = vrot.lane.b32.xlu0 %v785, 32
        %v791 = vpop.permute.xlu0 %790
        %v794 = vmul.f32 %v766, %v789
        %v795 = vmul.f32 %v781, %v791
        %798 = vrot.lane.b32.xlu0 %v782, 32
        %v799 = vpop.permute.xlu0 %798
        %800 = vrot.lane.b32.xlu0 %v783, 32
        %v801 = vpop.permute.xlu0 %800
        %v804 = vmul.f32 %v766, %v799
        %v805 = vmul.f32 %v781, %v801
        %808 = vrot.lane.b32.xlu0 %v804, 32
        %v809 = vpop.permute.xlu0 %808
        %810 = vrot.lane.b32.xlu0 %v805, 32
        %v811 = vpop.permute.xlu0 %810
        %v814 = vadd.f32 %v794, %v809
        %v815 = vadd.f32 %v795, %v811
        %v816 = vtanh.pop %v814
        %v817 = vtanh.pop %v815
        %820 = vrot.lane.b32.xlu0 %v816, 32
        %v821 = vpop.permute.xlu0 %820
        %822 = vrot.lane.b32.xlu0 %v817, 32
        %v823 = vpop.permute.xlu0 %822
        %v826 = vmul.f32 %v766, %v821
        %v827 = vmul.f32 %v781, %v823
        %830 = vrot.lane.b32.xlu0 %v814, 96
        %v831 = vpop.permute.xlu0 %830
        %832 = vrot.lane.b32.xlu0 %v815, 96
        %v833 = vpop.permute.xlu0 %832
        %836 = vst.msk [vmem:[#allocation3] sm:$0xff] %vm502, %v831
        %837 = vst.msk [vmem:[#allocation3 + $0x8] sm:$0xff] %vm502, %v833
        %840 = vrot.lane.b32.xlu0 %v826, 64
        %v841 = vpop.permute.xlu0 %840
        %842 = vrot.lane.b32.xlu0 %v827, 64
        %v843 = vpop.permute.xlu0 %842
        %846 = vst.msk [vmem:[#allocation2] sm:$0xff] %vm502, %v841
        %847 = vst.msk [vmem:[#allocation2 + $0x8] sm:$0xff] %vm502, %v843
        %s848 = scalar_lea.vmem [#allocation5], 16
        %849 = vst.msk [vmem:[%s848] sm:$0xff] %vm502, %v841
        %850 = vst.msk [vmem:[%s848 + $0x8] sm:$0xff] %vm502, %v843
        %s851 = scalar_lea.vmem [#allocation4], 32
        %v852 = vld [vmem:[%s851] sm:$0xff]
        %v853 = vld [vmem:[%s851 + $0x8] sm:$0xff]
        %v854 = vld [vmem:[#allocation2] sm:$0xff]
        %v855 = vld [vmem:[#allocation2 + $0x8] sm:$0xff]
        %v856 = vpack.c.bf16 %v855, %v854
        %v858 = vsel %vm502, %v856, 0
        %860 = vmatpush.bf16.msra.mxu0 0
        %861 = vmatpush.bf16.msra.mxu0 0
        %862 = vmatpush.bf16.msra.mxu0 0
        %863 = vmatpush.bf16.msra.mxu0 0
        %864 = vmatpush.bf16.msra.mxu0 0
        %865 = vmatpush.bf16.msra.mxu0 0
        %866 = vmatpush.bf16.msra.mxu0 %v591
        %867 = vmatpush.bf16.msra.mxu0 %v590
        %868 = vmatmul.bf16.gmra.mxu0 %v858
        %v869 = vpop.f32.mrf.mxu0
        %v870 = vadd.f32 0.0, %v869
        %v871 = vpop.f32.mrf.mxu0
        %v872 = vadd.f32 0.0, %v871
        %873 = vdwg.mxu0
        %v874 = vadd.f32 %v852, %v870
        %v875 = vadd.f32 %v853, %v872
        %v876 = vxor.u32 %v874, 2147483648
        %v877 = vxor.u32 %v875, 2147483648
        %v878 = vmul.f32 %v876, 1.442695
        %v879 = vpow.pop %v878
        %v880 = vmul.f32 %v877, 1.442695
        %v881 = vpow.pop %v880
        %v882 = vadd.f32 %v879, 1.0
        %v883 = vadd.f32 %v881, 1.0
        %v884 = vrcp.pop %v882
        %v885 = vmul.f32 %v882, %v884
        %v886 = vsub.f32 1.0, %v885
        %v887 = vmul.f32 %v884, %v886
        %v888 = vadd.f32 %v884, %v887
        %vm889 = vweird.f32 %v882
        %vm890 = vweird.f32 %v884
        %vm891 = vmor %vm889, %vm890
        %v892 = vsel %vm891, %v884, %v888
        %v893 = vand.u32 2147483647, %v882
        %vm894 = vcmp.eq.f32.partialorder %v893, 8.507059e+37
        %v895 = vand.u32 %v882, 2147483648
        %v896 = vor.u32 1.1754944e-38, %v895
        %v897 = vsel %vm894, %v896, %v892
        %v898 = vmul.f32 1.0, %v897
        %v899 = vrcp.pop %v883
        %v900 = vmul.f32 %v883, %v899
        %v901 = vsub.f32 1.0, %v900
        %v902 = vmul.f32 %v899, %v901
        %v903 = vadd.f32 %v899, %v902
        %vm904 = vweird.f32 %v883
        %vm905 = vweird.f32 %v899
        %vm906 = vmor %vm904, %vm905
        %v907 = vsel %vm906, %v899, %v903
        %v908 = vand.u32 2147483647, %v883
        %vm909 = vcmp.eq.f32.partialorder %v908, 8.507059e+37
        %v910 = vand.u32 %v883, 2147483648
        %v911 = vor.u32 1.1754944e-38, %v910
        %v912 = vsel %vm909, %v911, %v907
        %v913 = vmul.f32 1.0, %v912
        %v914 = vtanh.pop %v874
        %v915 = vtanh.pop %v875
        %v916 = vld [vmem:[#allocation3] sm:$0xff]
        %v917 = vld [vmem:[#allocation3 + $0x8] sm:$0xff]
        %920 = vrot.lane.b32.xlu0 %v916, 32
        %v921 = vpop.permute.xlu0 %920
        %922 = vrot.lane.b32.xlu0 %v917, 32
        %v923 = vpop.permute.xlu0 %922
        %v926 = vmul.f32 %v898, %v921
        %v927 = vmul.f32 %v913, %v923
        %930 = vrot.lane.b32.xlu0 %v914, 32
        %v931 = vpop.permute.xlu0 %930
        %932 = vrot.lane.b32.xlu0 %v915, 32
        %v933 = vpop.permute.xlu0 %932
        %v936 = vmul.f32 %v898, %v931
        %v937 = vmul.f32 %v913, %v933
        %940 = vrot.lane.b32.xlu0 %v936, 32
        %v941 = vpop.permute.xlu0 %940
        %942 = vrot.lane.b32.xlu0 %v937, 32
        %v943 = vpop.permute.xlu0 %942
        %v946 = vadd.f32 %v926, %v941
        %v947 = vadd.f32 %v927, %v943
        %v948 = vtanh.pop %v946
        %v949 = vtanh.pop %v947
        %952 = vrot.lane.b32.xlu0 %v948, 32
        %v953 = vpop.permute.xlu0 %952
        %954 = vrot.lane.b32.xlu0 %v949, 32
        %v955 = vpop.permute.xlu0 %954
        %v958 = vmul.f32 %v898, %v953
        %v959 = vmul.f32 %v913, %v955
        %962 = vrot.lane.b32.xlu0 %v946, 96
        %v963 = vpop.permute.xlu0 %962
        %964 = vrot.lane.b32.xlu0 %v947, 96
        %v965 = vpop.permute.xlu0 %964
        %968 = vst.msk [vmem:[#allocation3] sm:$0xff] %vm502, %v963
        %969 = vst.msk [vmem:[#allocation3 + $0x8] sm:$0xff] %vm502, %v965
        %972 = vrot.lane.b32.xlu0 %v958, 64
        %v973 = vpop.permute.xlu0 %972
        %974 = vrot.lane.b32.xlu0 %v959, 64
        %v975 = vpop.permute.xlu0 %974
        %978 = vst.msk [vmem:[#allocation2] sm:$0xff] %vm502, %v973
        %979 = vst.msk [vmem:[#allocation2 + $0x8] sm:$0xff] %vm502, %v975
        %s980 = scalar_lea.vmem [#allocation5], 32
        %981 = vst.msk [vmem:[%s980] sm:$0xff] %vm502, %v973
        %982 = vst.msk [vmem:[%s980 + $0x8] sm:$0xff] %vm502, %v975
        %v983 = vld [vmem:[#allocation5] sm:$0xff]
        %v984 = vld [vmem:[#allocation5 + $0x8] sm:$0xff]
        %v985 = vld [vmem:[#allocation5 + $0x10] sm:$0xff]
        %v986 = vld [vmem:[#allocation5 + $0x18] sm:$0xff]
        %v987 = vld [vmem:[#allocation5 + $0x20] sm:$0xff]
        %v988 = vld [vmem:[#allocation5 + $0x28] sm:$0xff]
        %v989 = vpack.c.bf16 %v983, %v983
        %v990 = vpack.c.bf16 %v984, %v984
        %v991 = vpack.c.bf16 %v985, %v985
        %v992 = vpack.c.bf16 %v986, %v986
        %v993 = vpack.c.bf16 %v987, %v987
        %v994 = vpack.c.bf16 %v988, %v988
        %vm995 = vcmask 257024
        %996 = vst.msk [vmem:[#allocation6] sm:$0xf] %vm995, %v989
        %997 = vst.msk [vmem:[#allocation6 + $0x4] sm:$0xf] %vm995, %v990
        %998 = vst.msk [vmem:[#allocation6 + $0x8] sm:$0xf] %vm995, %v991
        %999 = vst.msk [vmem:[#allocation6 + $0xc] sm:$0xf] %vm995, %v992
        %1000 = vst.msk [vmem:[#allocation6 + $0x10] sm:$0xf] %vm995, %v993
        %1001 = vst.msk [vmem:[#allocation6 + $0x14] sm:$0xf] %vm995, %v994
        %v1002 = vld [vmem:[%s492 + $0x18] sm:$0xf]
        %v1003 = vld [vmem:[%s492 + $0x1c] sm:$0xf]
        %v1004 = vld [vmem:[%s492 + $0x20] sm:$0xf]
        %v1005 = vld [vmem:[%s492 + $0x24] sm:$0xf]
        %v1006 = vld [vmem:[%s492 + $0x28] sm:$0xf]
        %v1007 = vld [vmem:[%s492 + $0x2c] sm:$0xf]
        %v1014 = vunpack.c.l.b16 %v1002
        %v1015 = vunpack.c.l.b16 %v1003
        %v1016 = vunpack.c.l.b16 %v1004
        %v1017 = vunpack.c.l.b16 %v1005
        %v1018 = vunpack.c.l.b16 %v1006
        %v1019 = vunpack.c.l.b16 %v1007
        %v1020 = vpack.c.b16 %v1015, %v1014
        %v1021 = vpack.c.b16 %v1017, %v1016
        %v1022 = vpack.c.b16 %v1019, %v1018
        %v1024 = vsel %vm537, %v1020, 0
        %v1027 = vsel %vm537, %v1021, 0
        %v1030 = vsel %vm537, %v1022, 0
        %1032 = vmatpush.bf16.msra.mxu0 0
        %1033 = vmatpush.bf16.msra.mxu0 0
        %1034 = vmatpush.bf16.msra.mxu0 0
        %1035 = vmatpush.bf16.msra.mxu0 0
        %1036 = vmatpush.bf16.msra.mxu0 0
        %1037 = vmatpush.bf16.msra.mxu0 0
        %1038 = vmatpush.bf16.msra.mxu0 0
        %1039 = vmatpush.bf16.msra.mxu0 %v535
        %1040 = vmatmul.bf16.gmra.mxu0 %v1024
        %v1041 = vpop.f32.mrf.mxu0
        %v1042 = vadd.f32 %v514, %v1041
        %v1043 = vpop.f32.mrf.mxu0
        %v1044 = vadd.f32 %v514, %v1043
        %1045 = vmatmul.bf16.gmra.mxu0 %v1027
        %v1046 = vpop.f32.mrf.mxu0
        %v1047 = vadd.f32 %v514, %v1046
        %v1048 = vpop.f32.mrf.mxu0
        %v1049 = vadd.f32 %v514, %v1048
        %1050 = vmatmul.bf16.gmra.mxu0 %v1030
        %v1051 = vpop.f32.mrf.mxu0
        %v1052 = vadd.f32 %v514, %v1051
        %v1053 = vpop.f32.mrf.mxu0
        %v1054 = vadd.f32 %v514, %v1053
        %1055 = vdwg.mxu0
        %1056 = vst [vmem:[#allocation4] sm:$0xff] %v1042
        %1057 = vst [vmem:[#allocation4 + $0x8] sm:$0xff] %v1044
        %1058 = vst [vmem:[#allocation4 + $0x10] sm:$0xff] %v1047
        %1059 = vst [vmem:[#allocation4 + $0x18] sm:$0xff] %v1049
        %1060 = vst [vmem:[#allocation4 + $0x20] sm:$0xff] %v1052
        %1061 = vst [vmem:[#allocation4 + $0x28] sm:$0xff] %v1054
        %v1062 = vld [vmem:[#allocation4] sm:$0xff]
        %v1063 = vld [vmem:[#allocation4 + $0x8] sm:$0xff]
        %v1064 = vld [vmem:[#allocation2] sm:$0xff]
        %v1065 = vld [vmem:[#allocation2 + $0x8] sm:$0xff]
        %v1066 = vpack.c.bf16 %v1065, %v1064
        %v1068 = vsel %vm502, %v1066, 0
        %1070 = vmatpush.bf16.msra.mxu0 0
        %1071 = vmatpush.bf16.msra.mxu0 0
        %1072 = vmatpush.bf16.msra.mxu0 0
        %1073 = vmatpush.bf16.msra.mxu0 0
        %1074 = vmatpush.bf16.msra.mxu0 0
        %1075 = vmatpush.bf16.msra.mxu0 0
        %1076 = vmatpush.bf16.msra.mxu0 %v591
        %1077 = vmatpush.bf16.msra.mxu0 %v590
        %1078 = vmatmul.bf16.gmra.mxu0 %v1068
        %v1079 = vpop.f32.mrf.mxu0
        %v1080 = vadd.f32 0.0, %v1079
        %v1081 = vpop.f32.mrf.mxu0
        %v1082 = vadd.f32 0.0, %v1081
        %1083 = vdwg.mxu0
        %v1084 = vadd.f32 %v1062, %v1080
        %v1085 = vadd.f32 %v1063, %v1082
        %v1086 = vxor.u32 %v1084, 2147483648
        %v1087 = vxor.u32 %v1085, 2147483648
        %v1088 = vmul.f32 %v1086, 1.442695
        %v1089 = vpow.pop %v1088
        %v1090 = vmul.f32 %v1087, 1.442695
        %v1091 = vpow.pop %v1090
        %v1092 = vadd.f32 %v1089, 1.0
        %v1093 = vadd.f32 %v1091, 1.0
        %v1094 = vrcp.pop %v1092
        %v1095 = vmul.f32 %v1092, %v1094
        %v1096 = vsub.f32 1.0, %v1095
        %v1097 = vmul.f32 %v1094, %v1096
        %v1098 = vadd.f32 %v1094, %v1097
        %vm1099 = vweird.f32 %v1092
        %vm1100 = vweird.f32 %v1094
        %vm1101 = vmor %vm1099, %vm1100
        %v1102 = vsel %vm1101, %v1094, %v1098
        %v1103 = vand.u32 2147483647, %v1092
        %vm1104 = vcmp.eq.f32.partialorder %v1103, 8.507059e+37
        %v1105 = vand.u32 %v1092, 2147483648
        %v1106 = vor.u32 1.1754944e-38, %v1105
        %v1107 = vsel %vm1104, %v1106, %v1102
        %v1108 = vmul.f32 1.0, %v1107
        %v1109 = vrcp.pop %v1093
        %v1110 = vmul.f32 %v1093, %v1109
        %v1111 = vsub.f32 1.0, %v1110
        %v1112 = vmul.f32 %v1109, %v1111
        %v1113 = vadd.f32 %v1109, %v1112
        %vm1114 = vweird.f32 %v1093
        %vm1115 = vweird.f32 %v1109
        %vm1116 = vmor %vm1114, %vm1115
        %v1117 = vsel %vm1116, %v1109, %v1113
        %v1118 = vand.u32 2147483647, %v1093
        %vm1119 = vcmp.eq.f32.partialorder %v1118, 8.507059e+37
        %v1120 = vand.u32 %v1093, 2147483648
        %v1121 = vor.u32 1.1754944e-38, %v1120
        %v1122 = vsel %vm1119, %v1121, %v1117
        %v1123 = vmul.f32 1.0, %v1122
        %v1124 = vtanh.pop %v1084
        %v1125 = vtanh.pop %v1085
        %v1126 = vld [vmem:[#allocation3] sm:$0xff]
        %v1127 = vld [vmem:[#allocation3 + $0x8] sm:$0xff]
        %1130 = vrot.lane.b32.xlu0 %v1126, 32
        %v1131 = vpop.permute.xlu0 %1130
        %1132 = vrot.lane.b32.xlu0 %v1127, 32
        %v1133 = vpop.permute.xlu0 %1132
        %v1136 = vmul.f32 %v1108, %v1131
        %v1137 = vmul.f32 %v1123, %v1133
        %1140 = vrot.lane.b32.xlu0 %v1124, 32
        %v1141 = vpop.permute.xlu0 %1140
        %1142 = vrot.lane.b32.xlu0 %v1125, 32
        %v1143 = vpop.permute.xlu0 %1142
        %v1146 = vmul.f32 %v1108, %v1141
        %v1147 = vmul.f32 %v1123, %v1143
        %1150 = vrot.lane.b32.xlu0 %v1146, 32
        %v1151 = vpop.permute.xlu0 %1150
        %1152 = vrot.lane.b32.xlu0 %v1147, 32
        %v1153 = vpop.permute.xlu0 %1152
        %v1156 = vadd.f32 %v1136, %v1151
        %v1157 = vadd.f32 %v1137, %v1153
        %v1158 = vtanh.pop %v1156
        %v1159 = vtanh.pop %v1157
        %1162 = vrot.lane.b32.xlu0 %v1158, 32
        %v1163 = vpop.permute.xlu0 %1162
        %1164 = vrot.lane.b32.xlu0 %v1159, 32
        %v1165 = vpop.permute.xlu0 %1164
        %v1168 = vmul.f32 %v1108, %v1163
        %v1169 = vmul.f32 %v1123, %v1165
        %1172 = vrot.lane.b32.xlu0 %v1156, 96
        %v1173 = vpop.permute.xlu0 %1172
        %1174 = vrot.lane.b32.xlu0 %v1157, 96
        %v1175 = vpop.permute.xlu0 %1174
        %1178 = vst.msk [vmem:[#allocation3] sm:$0xff] %vm502, %v1173
        %1179 = vst.msk [vmem:[#allocation3 + $0x8] sm:$0xff] %vm502, %v1175
        %1182 = vrot.lane.b32.xlu0 %v1168, 64
        %v1183 = vpop.permute.xlu0 %1182
        %1184 = vrot.lane.b32.xlu0 %v1169, 64
        %v1185 = vpop.permute.xlu0 %1184
        %1188 = vst.msk [vmem:[#allocation2] sm:$0xff] %vm502, %v1183
        %1189 = vst.msk [vmem:[#allocation2 + $0x8] sm:$0xff] %vm502, %v1185
        %1190 = vst.msk [vmem:[#allocation5] sm:$0xff] %vm502, %v1183
        %1191 = vst.msk [vmem:[#allocation5 + $0x8] sm:$0xff] %vm502, %v1185
        %v1192 = vld [vmem:[%s719] sm:$0xff]
        %v1193 = vld [vmem:[%s719 + $0x8] sm:$0xff]
        %v1194 = vld [vmem:[#allocation2] sm:$0xff]
        %v1195 = vld [vmem:[#allocation2 + $0x8] sm:$0xff]
        %v1196 = vpack.c.bf16 %v1195, %v1194
        %v1198 = vsel %vm502, %v1196, 0
        %1200 = vmatpush.bf16.msra.mxu0 0
        %1201 = vmatpush.bf16.msra.mxu0 0
        %1202 = vmatpush.bf16.msra.mxu0 0
        %1203 = vmatpush.bf16.msra.mxu0 0
        %1204 = vmatpush.bf16.msra.mxu0 0
        %1205 = vmatpush.bf16.msra.mxu0 0
        %1206 = vmatpush.bf16.msra.mxu0 %v591
        %1207 = vmatpush.bf16.msra.mxu0 %v590
        %1208 = vmatmul.bf16.gmra.mxu0 %v1198
        %v1209 = vpop.f32.mrf.mxu0
        %v1210 = vadd.f32 0.0, %v1209
        %v1211 = vpop.f32.mrf.mxu0
        %v1212 = vadd.f32 0.0, %v1211
        %1213 = vdwg.mxu0
        %v1214 = vadd.f32 %v1192, %v1210
        %v1215 = vadd.f32 %v1193, %v1212
        %v1216 = vxor.u32 %v1214, 2147483648
        %v1217 = vxor.u32 %v1215, 2147483648
        %v1218 = vmul.f32 %v1216, 1.442695
        %v1219 = vpow.pop %v1218
        %v1220 = vmul.f32 %v1217, 1.442695
        %v1221 = vpow.pop %v1220
        %v1222 = vadd.f32 %v1219, 1.0
        %v1223 = vadd.f32 %v1221, 1.0
        %v1224 = vrcp.pop %v1222
        %v1225 = vmul.f32 %v1222, %v1224
        %v1226 = vsub.f32 1.0, %v1225
        %v1227 = vmul.f32 %v1224, %v1226
        %v1228 = vadd.f32 %v1224, %v1227
        %vm1229 = vweird.f32 %v1222
        %vm1230 = vweird.f32 %v1224
        %vm1231 = vmor %vm1229, %vm1230
        %v1232 = vsel %vm1231, %v1224, %v1228
        %v1233 = vand.u32 2147483647, %v1222
        %vm1234 = vcmp.eq.f32.partialorder %v1233, 8.507059e+37
        %v1235 = vand.u32 %v1222, 2147483648
        %v1236 = vor.u32 1.1754944e-38, %v1235
        %v1237 = vsel %vm1234, %v1236, %v1232
        %v1238 = vmul.f32 1.0, %v1237
        %v1239 = vrcp.pop %v1223
        %v1240 = vmul.f32 %v1223, %v1239
        %v1241 = vsub.f32 1.0, %v1240
        %v1242 = vmul.f32 %v1239, %v1241
        %v1243 = vadd.f32 %v1239, %v1242
        %vm1244 = vweird.f32 %v1223
        %vm1245 = vweird.f32 %v1239
        %vm1246 = vmor %vm1244, %vm1245
        %v1247 = vsel %vm1246, %v1239, %v1243
        %v1248 = vand.u32 2147483647, %v1223
        %vm1249 = vcmp.eq.f32.partialorder %v1248, 8.507059e+37
        %v1250 = vand.u32 %v1223, 2147483648
        %v1251 = vor.u32 1.1754944e-38, %v1250
        %v1252 = vsel %vm1249, %v1251, %v1247
        %v1253 = vmul.f32 1.0, %v1252
        %v1254 = vtanh.pop %v1214
        %v1255 = vtanh.pop %v1215
        %v1256 = vld [vmem:[#allocation3] sm:$0xff]
        %v1257 = vld [vmem:[#allocation3 + $0x8] sm:$0xff]
        %1260 = vrot.lane.b32.xlu0 %v1256, 32
        %v1261 = vpop.permute.xlu0 %1260
        %1262 = vrot.lane.b32.xlu0 %v1257, 32
        %v1263 = vpop.permute.xlu0 %1262
        %v1266 = vmul.f32 %v1238, %v1261
        %v1267 = vmul.f32 %v1253, %v1263
        %1270 = vrot.lane.b32.xlu0 %v1254, 32
        %v1271 = vpop.permute.xlu0 %1270
        %1272 = vrot.lane.b32.xlu0 %v1255, 32
        %v1273 = vpop.permute.xlu0 %1272
        %v1276 = vmul.f32 %v1238, %v1271
        %v1277 = vmul.f32 %v1253, %v1273
        %1280 = vrot.lane.b32.xlu0 %v1276, 32
        %v1281 = vpop.permute.xlu0 %1280
        %1282 = vrot.lane.b32.xlu0 %v1277, 32
        %v1283 = vpop.permute.xlu0 %1282
        %v1286 = vadd.f32 %v1266, %v1281
        %v1287 = vadd.f32 %v1267, %v1283
        %v1288 = vtanh.pop %v1286
        %v1289 = vtanh.pop %v1287
        %1292 = vrot.lane.b32.xlu0 %v1288, 32
        %v1293 = vpop.permute.xlu0 %1292
        %1294 = vrot.lane.b32.xlu0 %v1289, 32
        %v1295 = vpop.permute.xlu0 %1294
        %v1298 = vmul.f32 %v1238, %v1293
        %v1299 = vmul.f32 %v1253, %v1295
        %1302 = vrot.lane.b32.xlu0 %v1286, 96
        %v1303 = vpop.permute.xlu0 %1302
        %1304 = vrot.lane.b32.xlu0 %v1287, 96
        %v1305 = vpop.permute.xlu0 %1304
        %1308 = vst.msk [vmem:[#allocation3] sm:$0xff] %vm502, %v1303
        %1309 = vst.msk [vmem:[#allocation3 + $0x8] sm:$0xff] %vm502, %v1305
        %1312 = vrot.lane.b32.xlu0 %v1298, 64
        %v1313 = vpop.permute.xlu0 %1312
        %1314 = vrot.lane.b32.xlu0 %v1299, 64
        %v1315 = vpop.permute.xlu0 %1314
        %1318 = vst.msk [vmem:[#allocation2] sm:$0xff] %vm502, %v1313
        %1319 = vst.msk [vmem:[#allocation2 + $0x8] sm:$0xff] %vm502, %v1315
        %1320 = vst.msk [vmem:[%s848] sm:$0xff] %vm502, %v1313
        %1321 = vst.msk [vmem:[%s848 + $0x8] sm:$0xff] %vm502, %v1315
        %v1322 = vld [vmem:[%s851] sm:$0xff]
        %v1323 = vld [vmem:[%s851 + $0x8] sm:$0xff]
        %v1324 = vld [vmem:[#allocation2] sm:$0xff]
        %v1325 = vld [vmem:[#allocation2 + $0x8] sm:$0xff]
        %v1326 = vpack.c.bf16 %v1325, %v1324
        %v1328 = vsel %vm502, %v1326, 0
        %1330 = vmatpush.bf16.msra.mxu0 0
        %1331 = vmatpush.bf16.msra.mxu0 0
        %1332 = vmatpush.bf16.msra.mxu0 0
        %1333 = vmatpush.bf16.msra.mxu0 0
        %1334 = vmatpush.bf16.msra.mxu0 0
        %1335 = vmatpush.bf16.msra.mxu0 0
        %1336 = vmatpush.bf16.msra.mxu0 %v591
        %1337 = vmatpush.bf16.msra.mxu0 %v590
        %1338 = vmatmul.bf16.gmra.mxu0 %v1328
        %v1339 = vpop.f32.mrf.mxu0
        %v1340 = vadd.f32 0.0, %v1339
        %v1341 = vpop.f32.mrf.mxu0
        %v1342 = vadd.f32 0.0, %v1341
        %1343 = vdwg.mxu0
        %v1344 = vadd.f32 %v1322, %v1340
        %v1345 = vadd.f32 %v1323, %v1342
        %v1346 = vxor.u32 %v1344, 2147483648
        %v1347 = vxor.u32 %v1345, 2147483648
        %v1348 = vmul.f32 %v1346, 1.442695
        %v1349 = vpow.pop %v1348
        %v1350 = vmul.f32 %v1347, 1.442695
        %v1351 = vpow.pop %v1350
        %v1352 = vadd.f32 %v1349, 1.0
        %v1353 = vadd.f32 %v1351, 1.0
        %v1354 = vrcp.pop %v1352
        %v1355 = vmul.f32 %v1352, %v1354
        %v1356 = vsub.f32 1.0, %v1355
        %v1357 = vmul.f32 %v1354, %v1356
        %v1358 = vadd.f32 %v1354, %v1357
        %vm1359 = vweird.f32 %v1352
        %vm1360 = vweird.f32 %v1354
        %vm1361 = vmor %vm1359, %vm1360
        %v1362 = vsel %vm1361, %v1354, %v1358
        %v1363 = vand.u32 2147483647, %v1352
        %vm1364 = vcmp.eq.f32.partialorder %v1363, 8.507059e+37
        %v1365 = vand.u32 %v1352, 2147483648
        %v1366 = vor.u32 1.1754944e-38, %v1365
        %v1367 = vsel %vm1364, %v1366, %v1362
        %v1368 = vmul.f32 1.0, %v1367
        %v1369 = vrcp.pop %v1353
        %v1370 = vmul.f32 %v1353, %v1369
        %v1371 = vsub.f32 1.0, %v1370
        %v1372 = vmul.f32 %v1369, %v1371
        %v1373 = vadd.f32 %v1369, %v1372
        %vm1374 = vweird.f32 %v1353
        %vm1375 = vweird.f32 %v1369
        %vm1376 = vmor %vm1374, %vm1375
        %v1377 = vsel %vm1376, %v1369, %v1373
        %v1378 = vand.u32 2147483647, %v1353
        %vm1379 = vcmp.eq.f32.partialorder %v1378, 8.507059e+37
        %v1380 = vand.u32 %v1353, 2147483648
        %v1381 = vor.u32 1.1754944e-38, %v1380
        %v1382 = vsel %vm1379, %v1381, %v1377
        %v1383 = vmul.f32 1.0, %v1382
        %v1384 = vtanh.pop %v1344
        %v1385 = vtanh.pop %v1345
        %v1386 = vld [vmem:[#allocation3] sm:$0xff]
        %v1387 = vld [vmem:[#allocation3 + $0x8] sm:$0xff]
        %1390 = vrot.lane.b32.xlu0 %v1386, 32
        %v1391 = vpop.permute.xlu0 %1390
        %1392 = vrot.lane.b32.xlu0 %v1387, 32
        %v1393 = vpop.permute.xlu0 %1392
        %v1396 = vmul.f32 %v1368, %v1391
        %v1397 = vmul.f32 %v1383, %v1393
        %1400 = vrot.lane.b32.xlu0 %v1384, 32
        %v1401 = vpop.permute.xlu0 %1400
        %1402 = vrot.lane.b32.xlu0 %v1385, 32
        %v1403 = vpop.permute.xlu0 %1402
        %v1406 = vmul.f32 %v1368, %v1401
        %v1407 = vmul.f32 %v1383, %v1403
        %1410 = vrot.lane.b32.xlu0 %v1406, 32
        %v1411 = vpop.permute.xlu0 %1410
        %1412 = vrot.lane.b32.xlu0 %v1407, 32
        %v1413 = vpop.permute.xlu0 %1412
        %v1416 = vadd.f32 %v1396, %v1411
        %v1417 = vadd.f32 %v1397, %v1413
        %v1418 = vtanh.pop %v1416
        %v1419 = vtanh.pop %v1417
        %1422 = vrot.lane.b32.xlu0 %v1418, 32
        %v1423 = vpop.permute.xlu0 %1422
        %1424 = vrot.lane.b32.xlu0 %v1419, 32
        %v1425 = vpop.permute.xlu0 %1424
        %v1428 = vmul.f32 %v1368, %v1423
        %v1429 = vmul.f32 %v1383, %v1425
        %1432 = vrot.lane.b32.xlu0 %v1416, 96
        %v1433 = vpop.permute.xlu0 %1432
        %1434 = vrot.lane.b32.xlu0 %v1417, 96
        %v1435 = vpop.permute.xlu0 %1434
        %1438 = vst.msk [vmem:[#allocation3] sm:$0xff] %vm502, %v1433
        %1439 = vst.msk [vmem:[#allocation3 + $0x8] sm:$0xff] %vm502, %v1435
        %1442 = vrot.lane.b32.xlu0 %v1428, 64
        %v1443 = vpop.permute.xlu0 %1442
        %1444 = vrot.lane.b32.xlu0 %v1429, 64
        %v1445 = vpop.permute.xlu0 %1444
        %1448 = vst.msk [vmem:[#allocation2] sm:$0xff] %vm502, %v1443
        %1449 = vst.msk [vmem:[#allocation2 + $0x8] sm:$0xff] %vm502, %v1445
        %1450 = vst.msk [vmem:[%s980] sm:$0xff] %vm502, %v1443
        %1451 = vst.msk [vmem:[%s980 + $0x8] sm:$0xff] %vm502, %v1445
        %v1452 = vld [vmem:[#allocation5] sm:$0xff]
        %v1453 = vld [vmem:[#allocation5 + $0x8] sm:$0xff]
        %v1454 = vld [vmem:[#allocation5 + $0x10] sm:$0xff]
        %v1455 = vld [vmem:[#allocation5 + $0x18] sm:$0xff]
        %v1456 = vld [vmem:[#allocation5 + $0x20] sm:$0xff]
        %v1457 = vld [vmem:[#allocation5 + $0x28] sm:$0xff]
        %v1458 = vpack.c.bf16 %v1452, %v1452
        %v1459 = vpack.c.bf16 %v1453, %v1453
        %v1460 = vpack.c.bf16 %v1454, %v1454
        %v1461 = vpack.c.bf16 %v1455, %v1455
        %v1462 = vpack.c.bf16 %v1456, %v1456
        %v1463 = vpack.c.bf16 %v1457, %v1457
        %1464 = vst.msk [vmem:[#allocation6 + $0x18] sm:$0xf] %vm995, %v1458
        %1465 = vst.msk [vmem:[#allocation6 + $0x1c] sm:$0xf] %vm995, %v1459
        %1466 = vst.msk [vmem:[#allocation6 + $0x20] sm:$0xf] %vm995, %v1460
        %1467 = vst.msk [vmem:[#allocation6 + $0x24] sm:$0xf] %vm995, %v1461
        %1468 = vst.msk [vmem:[#allocation6 + $0x28] sm:$0xf] %vm995, %v1462
        %1469 = vst.msk [vmem:[#allocation6 + $0x2c] sm:$0xf] %vm995, %v1463
        %v1470 = vld [vmem:[%s492 + $0x30] sm:$0xf]
        %v1471 = vld [vmem:[%s492 + $0x34] sm:$0xf]
        %v1472 = vld [vmem:[%s492 + $0x38] sm:$0xf]
        %v1473 = vld [vmem:[%s492 + $0x3c] sm:$0xf]
        %v1478 = vunpack.c.l.b16 %v1470
        %v1479 = vunpack.c.l.b16 %v1471
        %v1480 = vunpack.c.l.b16 %v1472
        %v1481 = vunpack.c.l.b16 %v1473
        %v1482 = vpack.c.b16 %v1479, %v1478
        %v1483 = vpack.c.b16 %v1481, %v1480
        %v1485 = vsel %vm537, %v1482, 0
        %v1488 = vsel %vm537, %v1483, 0
        %1490 = vmatpush.bf16.msra.mxu0 0
        %1491 = vmatpush.bf16.msra.mxu0 0
        %1492 = vmatpush.bf16.msra.mxu0 0
        %1493 = vmatpush.bf16.msra.mxu0 0
        %1494 = vmatpush.bf16.msra.mxu0 0
        %1495 = vmatpush.bf16.msra.mxu0 0
        %1496 = vmatpush.bf16.msra.mxu0 0
        %1497 = vmatpush.bf16.msra.mxu0 %v535
        %1498 = vmatmul.bf16.gmra.mxu0 %v1485
        %v1499 = vpop.f32.mrf.mxu0
        %v1500 = vadd.f32 %v514, %v1499
        %v1501 = vpop.f32.mrf.mxu0
        %v1502 = vadd.f32 %v514, %v1501
        %1503 = vmatmul.bf16.gmra.mxu0 %v1488
        %v1504 = vpop.f32.mrf.mxu0
        %v1505 = vadd.f32 %v514, %v1504
        %v1506 = vpop.f32.mrf.mxu0
        %v1507 = vadd.f32 %v514, %v1506
        %1508 = vdwg.mxu0
        %1509 = vst [vmem:[#allocation4] sm:$0xff] %v1500
        %1510 = vst [vmem:[#allocation4 + $0x8] sm:$0xff] %v1502
        %1511 = vst [vmem:[#allocation4 + $0x10] sm:$0xff] %v1505
        %1512 = vst [vmem:[#allocation4 + $0x18] sm:$0xff] %v1507
        %v1513 = vld [vmem:[#allocation4] sm:$0xff]
        %v1514 = vld [vmem:[#allocation4 + $0x8] sm:$0xff]
        %v1515 = vld [vmem:[#allocation2] sm:$0xff]
        %v1516 = vld [vmem:[#allocation2 + $0x8] sm:$0xff]
        %v1517 = vpack.c.bf16 %v1516, %v1515
        %v1519 = vsel %vm502, %v1517, 0
        %1521 = vmatpush.bf16.msra.mxu0 0
        %1522 = vmatpush.bf16.msra.mxu0 0
        %1523 = vmatpush.bf16.msra.mxu0 0
        %1524 = vmatpush.bf16.msra.mxu0 0
        %1525 = vmatpush.bf16.msra.mxu0 0
        %1526 = vmatpush.bf16.msra.mxu0 0
        %1527 = vmatpush.bf16.msra.mxu0 %v591
        %1528 = vmatpush.bf16.msra.mxu0 %v590
        %1529 = vmatmul.bf16.gmra.mxu0 %v1519
        %v1530 = vpop.f32.mrf.mxu0
        %v1531 = vadd.f32 0.0, %v1530
        %v1532 = vpop.f32.mrf.mxu0
        %v1533 = vadd.f32 0.0, %v1532
        %1534 = vdwg.mxu0
        %v1535 = vadd.f32 %v1513, %v1531
        %v1536 = vadd.f32 %v1514, %v1533
        %v1537 = vxor.u32 %v1535, 2147483648
        %v1538 = vxor.u32 %v1536, 2147483648
        %v1539 = vmul.f32 %v1537, 1.442695
        %v1540 = vpow.pop %v1539
        %v1541 = vmul.f32 %v1538, 1.442695
        %v1542 = vpow.pop %v1541
        %v1543 = vadd.f32 %v1540, 1.0
        %v1544 = vadd.f32 %v1542, 1.0
        %v1545 = vrcp.pop %v1543
        %v1546 = vmul.f32 %v1543, %v1545
        %v1547 = vsub.f32 1.0, %v1546
        %v1548 = vmul.f32 %v1545, %v1547
        %v1549 = vadd.f32 %v1545, %v1548
        %vm1550 = vweird.f32 %v1543
        %vm1551 = vweird.f32 %v1545
        %vm1552 = vmor %vm1550, %vm1551
        %v1553 = vsel %vm1552, %v1545, %v1549
        %v1554 = vand.u32 2147483647, %v1543
        %vm1555 = vcmp.eq.f32.partialorder %v1554, 8.507059e+37
        %v1556 = vand.u32 %v1543, 2147483648
        %v1557 = vor.u32 1.1754944e-38, %v1556
        %v1558 = vsel %vm1555, %v1557, %v1553
        %v1559 = vmul.f32 1.0, %v1558
        %v1560 = vrcp.pop %v1544
        %v1561 = vmul.f32 %v1544, %v1560
        %v1562 = vsub.f32 1.0, %v1561
        %v1563 = vmul.f32 %v1560, %v1562
        %v1564 = vadd.f32 %v1560, %v1563
        %vm1565 = vweird.f32 %v1544
        %vm1566 = vweird.f32 %v1560
        %vm1567 = vmor %vm1565, %vm1566
        %v1568 = vsel %vm1567, %v1560, %v1564
        %v1569 = vand.u32 2147483647, %v1544
        %vm1570 = vcmp.eq.f32.partialorder %v1569, 8.507059e+37
        %v1571 = vand.u32 %v1544, 2147483648
        %v1572 = vor.u32 1.1754944e-38, %v1571
        %v1573 = vsel %vm1570, %v1572, %v1568
        %v1574 = vmul.f32 1.0, %v1573
        %v1575 = vtanh.pop %v1535
        %v1576 = vtanh.pop %v1536
        %v1577 = vld [vmem:[#allocation3] sm:$0xff]
        %v1578 = vld [vmem:[#allocation3 + $0x8] sm:$0xff]
        %1581 = vrot.lane.b32.xlu0 %v1577, 32
        %v1582 = vpop.permute.xlu0 %1581
        %1583 = vrot.lane.b32.xlu0 %v1578, 32
        %v1584 = vpop.permute.xlu0 %1583
        %v1587 = vmul.f32 %v1559, %v1582
        %v1588 = vmul.f32 %v1574, %v1584
        %1591 = vrot.lane.b32.xlu0 %v1575, 32
        %v1592 = vpop.permute.xlu0 %1591
        %1593 = vrot.lane.b32.xlu0 %v1576, 32
        %v1594 = vpop.permute.xlu0 %1593
        %v1597 = vmul.f32 %v1559, %v1592
        %v1598 = vmul.f32 %v1574, %v1594
        %1601 = vrot.lane.b32.xlu0 %v1597, 32
        %v1602 = vpop.permute.xlu0 %1601
        %1603 = vrot.lane.b32.xlu0 %v1598, 32
        %v1604 = vpop.permute.xlu0 %1603
        %v1607 = vadd.f32 %v1587, %v1602
        %v1608 = vadd.f32 %v1588, %v1604
        %v1609 = vtanh.pop %v1607
        %v1610 = vtanh.pop %v1608
        %1613 = vrot.lane.b32.xlu0 %v1609, 32
        %v1614 = vpop.permute.xlu0 %1613
        %1615 = vrot.lane.b32.xlu0 %v1610, 32
        %v1616 = vpop.permute.xlu0 %1615
        %v1619 = vmul.f32 %v1559, %v1614
        %v1620 = vmul.f32 %v1574, %v1616
        %1623 = vrot.lane.b32.xlu0 %v1607, 96
        %v1624 = vpop.permute.xlu0 %1623
        %1625 = vrot.lane.b32.xlu0 %v1608, 96
        %v1626 = vpop.permute.xlu0 %1625
        %1629 = vst.msk [vmem:[#allocation3] sm:$0xff] %vm502, %v1624
        %1630 = vst.msk [vmem:[#allocation3 + $0x8] sm:$0xff] %vm502, %v1626
        %1633 = vrot.lane.b32.xlu0 %v1619, 64
        %v1634 = vpop.permute.xlu0 %1633
        %1635 = vrot.lane.b32.xlu0 %v1620, 64
        %v1636 = vpop.permute.xlu0 %1635
        %1639 = vst.msk [vmem:[#allocation2] sm:$0xff] %vm502, %v1634
        %1640 = vst.msk [vmem:[#allocation2 + $0x8] sm:$0xff] %vm502, %v1636
        %1641 = vst.msk [vmem:[#allocation5] sm:$0xff] %vm502, %v1634
        %1642 = vst.msk [vmem:[#allocation5 + $0x8] sm:$0xff] %vm502, %v1636
        %v1643 = vld [vmem:[%s719] sm:$0xff]
        %v1644 = vld [vmem:[%s719 + $0x8] sm:$0xff]
        %v1645 = vld [vmem:[#allocation2] sm:$0xff]
        %v1646 = vld [vmem:[#allocation2 + $0x8] sm:$0xff]
        %v1647 = vpack.c.bf16 %v1646, %v1645
        %v1649 = vsel %vm502, %v1647, 0
        %1651 = vmatpush.bf16.msra.mxu0 0
        %1652 = vmatpush.bf16.msra.mxu0 0
        %1653 = vmatpush.bf16.msra.mxu0 0
        %1654 = vmatpush.bf16.msra.mxu0 0
        %1655 = vmatpush.bf16.msra.mxu0 0
        %1656 = vmatpush.bf16.msra.mxu0 0
        %1657 = vmatpush.bf16.msra.mxu0 %v591
        %1658 = vmatpush.bf16.msra.mxu0 %v590
        %1659 = vmatmul.bf16.gmra.mxu0 %v1649
        %v1660 = vpop.f32.mrf.mxu0
        %v1661 = vadd.f32 0.0, %v1660
        %v1662 = vpop.f32.mrf.mxu0
        %v1663 = vadd.f32 0.0, %v1662
        %1664 = vdwg.mxu0
        %v1665 = vadd.f32 %v1643, %v1661
        %v1666 = vadd.f32 %v1644, %v1663
        %v1667 = vxor.u32 %v1665, 2147483648
        %v1668 = vxor.u32 %v1666, 2147483648
        %v1669 = vmul.f32 %v1667, 1.442695
        %v1670 = vpow.pop %v1669
        %v1671 = vmul.f32 %v1668, 1.442695
        %v1672 = vpow.pop %v1671
        %v1673 = vadd.f32 %v1670, 1.0
        %v1674 = vadd.f32 %v1672, 1.0
        %v1675 = vrcp.pop %v1673
        %v1676 = vmul.f32 %v1673, %v1675
        %v1677 = vsub.f32 1.0, %v1676
        %v1678 = vmul.f32 %v1675, %v1677
        %v1679 = vadd.f32 %v1675, %v1678
        %vm1680 = vweird.f32 %v1673
        %vm1681 = vweird.f32 %v1675
        %vm1682 = vmor %vm1680, %vm1681
        %v1683 = vsel %vm1682, %v1675, %v1679
        %v1684 = vand.u32 2147483647, %v1673
        %vm1685 = vcmp.eq.f32.partialorder %v1684, 8.507059e+37
        %v1686 = vand.u32 %v1673, 2147483648
        %v1687 = vor.u32 1.1754944e-38, %v1686
        %v1688 = vsel %vm1685, %v1687, %v1683
        %v1689 = vmul.f32 1.0, %v1688
        %v1690 = vrcp.pop %v1674
        %v1691 = vmul.f32 %v1674, %v1690
        %v1692 = vsub.f32 1.0, %v1691
        %v1693 = vmul.f32 %v1690, %v1692
        %v1694 = vadd.f32 %v1690, %v1693
        %vm1695 = vweird.f32 %v1674
        %vm1696 = vweird.f32 %v1690
        %vm1697 = vmor %vm1695, %vm1696
        %v1698 = vsel %vm1697, %v1690, %v1694
        %v1699 = vand.u32 2147483647, %v1674
        %vm1700 = vcmp.eq.f32.partialorder %v1699, 8.507059e+37
        %v1701 = vand.u32 %v1674, 2147483648
        %v1702 = vor.u32 1.1754944e-38, %v1701
        %v1703 = vsel %vm1700, %v1702, %v1698
        %v1704 = vmul.f32 1.0, %v1703
        %v1705 = vtanh.pop %v1665
        %v1706 = vtanh.pop %v1666
        %v1707 = vld [vmem:[#allocation3] sm:$0xff]
        %v1708 = vld [vmem:[#allocation3 + $0x8] sm:$0xff]
        %1711 = vrot.lane.b32.xlu0 %v1707, 32
        %v1712 = vpop.permute.xlu0 %1711
        %1713 = vrot.lane.b32.xlu0 %v1708, 32
        %v1714 = vpop.permute.xlu0 %1713
        %v1717 = vmul.f32 %v1689, %v1712
        %v1718 = vmul.f32 %v1704, %v1714
        %1721 = vrot.lane.b32.xlu0 %v1705, 32
        %v1722 = vpop.permute.xlu0 %1721
        %1723 = vrot.lane.b32.xlu0 %v1706, 32
        %v1724 = vpop.permute.xlu0 %1723
        %v1727 = vmul.f32 %v1689, %v1722
        %v1728 = vmul.f32 %v1704, %v1724
        %1731 = vrot.lane.b32.xlu0 %v1727, 32
        %v1732 = vpop.permute.xlu0 %1731
        %1733 = vrot.lane.b32.xlu0 %v1728, 32
        %v1734 = vpop.permute.xlu0 %1733
        %v1737 = vadd.f32 %v1717, %v1732
        %v1738 = vadd.f32 %v1718, %v1734
        %v1739 = vtanh.pop %v1737
        %v1740 = vtanh.pop %v1738
        %1743 = vrot.lane.b32.xlu0 %v1739, 32
        %v1744 = vpop.permute.xlu0 %1743
        %1745 = vrot.lane.b32.xlu0 %v1740, 32
        %v1746 = vpop.permute.xlu0 %1745
        %v1749 = vmul.f32 %v1689, %v1744
        %v1750 = vmul.f32 %v1704, %v1746
        %1753 = vrot.lane.b32.xlu0 %v1737, 96
        %v1754 = vpop.permute.xlu0 %1753
        %1755 = vrot.lane.b32.xlu0 %v1738, 96
        %v1756 = vpop.permute.xlu0 %1755
        %1759 = vst.msk [vmem:[#allocation3] sm:$0xff] %vm502, %v1754
        %1760 = vst.msk [vmem:[#allocation3 + $0x8] sm:$0xff] %vm502, %v1756
        %1763 = vrot.lane.b32.xlu0 %v1749, 64
        %v1764 = vpop.permute.xlu0 %1763
        %1765 = vrot.lane.b32.xlu0 %v1750, 64
        %v1766 = vpop.permute.xlu0 %1765
        %1769 = vst.msk [vmem:[#allocation2] sm:$0xff] %vm502, %v1764
        %1770 = vst.msk [vmem:[#allocation2 + $0x8] sm:$0xff] %vm502, %v1766
        %1771 = vst.msk [vmem:[%s848] sm:$0xff] %vm502, %v1764
        %1772 = vst.msk [vmem:[%s848 + $0x8] sm:$0xff] %vm502, %v1766
        %v1773 = vld [vmem:[#allocation5] sm:$0xff]
        %v1774 = vld [vmem:[#allocation5 + $0x8] sm:$0xff]
        %v1775 = vld [vmem:[#allocation5 + $0x10] sm:$0xff]
        %v1776 = vld [vmem:[#allocation5 + $0x18] sm:$0xff]
        %v1777 = vpack.c.bf16 %v1773, %v1773
        %v1778 = vpack.c.bf16 %v1774, %v1774
        %v1779 = vpack.c.bf16 %v1775, %v1775
        %v1780 = vpack.c.bf16 %v1776, %v1776
        %1781 = vst.msk [vmem:[#allocation6 + $0x30] sm:$0xf] %vm995, %v1777
        %1782 = vst.msk [vmem:[#allocation6 + $0x34] sm:$0xf] %vm995, %v1778
        %1783 = vst.msk [vmem:[#allocation6 + $0x38] sm:$0xf] %vm995, %v1779
        %1784 = vst.msk [vmem:[#allocation6 + $0x3c] sm:$0xf] %vm995, %v1780
        %v1785 = vld [vmem:[%s4] sm:$0xf]
        %v1786 = vld [vmem:[%s4 + $0x4] sm:$0xf]
        %v1787 = vld [vmem:[%s4 + $0x8] sm:$0xf]
        %v1788 = vld [vmem:[%s4 + $0xc] sm:$0xf]
        %v1789 = vld [vmem:[%s5] sm:$0xf]
        %v1790 = vld [vmem:[%s5 + $0x4] sm:$0xf]
        %v1791 = vld [vmem:[%s5 + $0x8] sm:$0xf]
        %v1792 = vld [vmem:[%s5 + $0xc] sm:$0xf]
        %v1793 = vld [vmem:[%s6] sm:$0x1]
        %1794 = vst.msk [vmem:[#allocation2] sm:$0xff] %vm502, 0.0
        %1795 = vst.msk [vmem:[#allocation2 + $0x8] sm:$0xff] %vm502, 0.0
        %1796 = vst.msk [vmem:[#allocation3] sm:$0xff] %vm502, 0.0
        %1797 = vst.msk [vmem:[#allocation3 + $0x8] sm:$0xff] %vm502, 0.0
        %v1798 = vld [vmem:[#allocation6] sm:$0xf]
        %v1799 = vld [vmem:[#allocation6 + $0x4] sm:$0xf]
        %v1800 = vld [vmem:[#allocation6 + $0x8] sm:$0xf]
        %v1801 = vld [vmem:[#allocation6 + $0xc] sm:$0xf]
        %v1802 = vld [vmem:[#allocation6 + $0x10] sm:$0xf]
        %v1803 = vld [vmem:[#allocation6 + $0x14] sm:$0xf]
        %v1805 = vperm.slane %v1793, 0
        %v1813 = vunpack.c.l.b16 %v1798
        %v1814 = vunpack.c.l.b16 %v1799
        %v1815 = vunpack.c.l.b16 %v1800
        %v1816 = vunpack.c.l.b16 %v1801
        %v1817 = vunpack.c.l.b16 %v1802
        %v1818 = vunpack.c.l.b16 %v1803
        %v1819 = vpack.c.b16 %v1814, %v1813
        %v1820 = vpack.c.b16 %v1816, %v1815
        %v1821 = vpack.c.b16 %v1818, %v1817
        %v1826 = vunpack.c.l.b16 %v1785
        %v1827 = vunpack.c.l.b16 %v1786
        %v1828 = vunpack.c.l.b16 %v1787
        %v1829 = vunpack.c.l.b16 %v1788
        %v1830 = vpack.c.b16 %v1827, %v1826
        %v1831 = vpack.c.b16 %v1829, %v1828
        %v1835 = vsel %vm502, %v1819, 0
        %v1838 = vsel %vm502, %v1820, 0
        %v1841 = vsel %vm502, %v1821, 0
        %1843 = vmatpush.bf16.msra.mxu0 0
        %1844 = vmatpush.bf16.msra.mxu0 0
        %1845 = vmatpush.bf16.msra.mxu0 0
        %1846 = vmatpush.bf16.msra.mxu0 0
        %1847 = vmatpush.bf16.msra.mxu0 0
        %1848 = vmatpush.bf16.msra.mxu0 0
        %1849 = vmatpush.bf16.msra.mxu0 %v1831
        %1850 = vmatpush.bf16.msra.mxu0 %v1830
        %1851 = vmatmul.bf16.gmra.mxu0 %v1835
        %v1852 = vpop.f32.mrf.mxu0
        %v1853 = vadd.f32 %v1805, %v1852
        %v1854 = vpop.f32.mrf.mxu0
        %v1855 = vadd.f32 %v1805, %v1854
        %1856 = vmatmul.bf16.gmra.mxu0 %v1838
        %v1857 = vpop.f32.mrf.mxu0
        %v1858 = vadd.f32 %v1805, %v1857
        %v1859 = vpop.f32.mrf.mxu0
        %v1860 = vadd.f32 %v1805, %v1859
        %1861 = vmatmul.bf16.gmra.mxu0 %v1841
        %v1862 = vpop.f32.mrf.mxu0
        %v1863 = vadd.f32 %v1805, %v1862
        %v1864 = vpop.f32.mrf.mxu0
        %v1865 = vadd.f32 %v1805, %v1864
        %1866 = vdwg.mxu0
        %1867 = vst [vmem:[#allocation4] sm:$0xff] %v1853
        %1868 = vst [vmem:[#allocation4 + $0x8] sm:$0xff] %v1855
        %1869 = vst [vmem:[#allocation4 + $0x10] sm:$0xff] %v1858
        %1870 = vst [vmem:[#allocation4 + $0x18] sm:$0xff] %v1860
        %1871 = vst [vmem:[#allocation4 + $0x20] sm:$0xff] %v1863
        %1872 = vst [vmem:[#allocation4 + $0x28] sm:$0xff] %v1865
        %v1873 = vld [vmem:[#allocation4] sm:$0xff]
        %v1874 = vld [vmem:[#allocation4 + $0x8] sm:$0xff]
        %v1875 = vld [vmem:[#allocation2] sm:$0xff]
        %v1876 = vld [vmem:[#allocation2 + $0x8] sm:$0xff]
        %v1877 = vpack.c.bf16 %v1876, %v1875
        %v1882 = vunpack.c.l.b16 %v1789
        %v1883 = vunpack.c.l.b16 %v1790
        %v1884 = vunpack.c.l.b16 %v1791
        %v1885 = vunpack.c.l.b16 %v1792
        %v1886 = vpack.c.b16 %v1883, %v1882
        %v1887 = vpack.c.b16 %v1885, %v1884
        %v1891 = vsel %vm502, %v1877, 0
        %1893 = vmatpush.bf16.msra.mxu0 0
        %1894 = vmatpush.bf16.msra.mxu0 0
        %1895 = vmatpush.bf16.msra.mxu0 0
        %1896 = vmatpush.bf16.msra.mxu0 0
        %1897 = vmatpush.bf16.msra.mxu0 0
        %1898 = vmatpush.bf16.msra.mxu0 0
        %1899 = vmatpush.bf16.msra.mxu0 %v1887
        %1900 = vmatpush.bf16.msra.mxu0 %v1886
        %1901 = vmatmul.bf16.gmra.mxu0 %v1891
        %v1902 = vpop.f32.mrf.mxu0
        %v1903 = vadd.f32 0.0, %v1902
        %v1904 = vpop.f32.mrf.mxu0
        %v1905 = vadd.f32 0.0, %v1904
        %1906 = vdwg.mxu0
        %v1907 = vadd.f32 %v1873, %v1903
        %v1908 = vadd.f32 %v1874, %v1905
        %v1909 = vxor.u32 %v1907, 2147483648
        %v1910 = vxor.u32 %v1908, 2147483648
        %v1911 = vmul.f32 %v1909, 1.442695
        %v1912 = vpow.pop %v1911
        %v1913 = vmul.f32 %v1910, 1.442695
        %v1914 = vpow.pop %v1913
        %v1915 = vadd.f32 %v1912, 1.0
        %v1916 = vadd.f32 %v1914, 1.0
        %v1917 = vrcp.pop %v1915
        %v1918 = vmul.f32 %v1915, %v1917
        %v1919 = vsub.f32 1.0, %v1918
        %v1920 = vmul.f32 %v1917, %v1919
        %v1921 = vadd.f32 %v1917, %v1920
        %vm1922 = vweird.f32 %v1915
        %vm1923 = vweird.f32 %v1917
        %vm1924 = vmor %vm1922, %vm1923
        %v1925 = vsel %vm1924, %v1917, %v1921
        %v1926 = vand.u32 2147483647, %v1915
        %vm1927 = vcmp.eq.f32.partialorder %v1926, 8.507059e+37
        %v1928 = vand.u32 %v1915, 2147483648
        %v1929 = vor.u32 1.1754944e-38, %v1928
        %v1930 = vsel %vm1927, %v1929, %v1925
        %v1931 = vmul.f32 1.0, %v1930
        %v1932 = vrcp.pop %v1916
        %v1933 = vmul.f32 %v1916, %v1932
        %v1934 = vsub.f32 1.0, %v1933
        %v1935 = vmul.f32 %v1932, %v1934
        %v1936 = vadd.f32 %v1932, %v1935
        %vm1937 = vweird.f32 %v1916
        %vm1938 = vweird.f32 %v1932
        %vm1939 = vmor %vm1937, %vm1938
        %v1940 = vsel %vm1939, %v1932, %v1936
        %v1941 = vand.u32 2147483647, %v1916
        %vm1942 = vcmp.eq.f32.partialorder %v1941, 8.507059e+37
        %v1943 = vand.u32 %v1916, 2147483648
        %v1944 = vor.u32 1.1754944e-38, %v1943
        %v1945 = vsel %vm1942, %v1944, %v1940
        %v1946 = vmul.f32 1.0, %v1945
        %v1947 = vtanh.pop %v1907
        %v1948 = vtanh.pop %v1908
        %v1949 = vld [vmem:[#allocation3] sm:$0xff]
        %v1950 = vld [vmem:[#allocation3 + $0x8] sm:$0xff]
        %1953 = vrot.lane.b32.xlu0 %v1949, 32
        %v1954 = vpop.permute.xlu0 %1953
        %1955 = vrot.lane.b32.xlu0 %v1950, 32
        %v1956 = vpop.permute.xlu0 %1955
        %v1959 = vmul.f32 %v1931, %v1954
        %v1960 = vmul.f32 %v1946, %v1956
        %1963 = vrot.lane.b32.xlu0 %v1947, 32
        %v1964 = vpop.permute.xlu0 %1963
        %1965 = vrot.lane.b32.xlu0 %v1948, 32
        %v1966 = vpop.permute.xlu0 %1965
        %v1969 = vmul.f32 %v1931, %v1964
        %v1970 = vmul.f32 %v1946, %v1966
        %1973 = vrot.lane.b32.xlu0 %v1969, 32
        %v1974 = vpop.permute.xlu0 %1973
        %1975 = vrot.lane.b32.xlu0 %v1970, 32
        %v1976 = vpop.permute.xlu0 %1975
        %v1979 = vadd.f32 %v1959, %v1974
        %v1980 = vadd.f32 %v1960, %v1976
        %v1981 = vtanh.pop %v1979
        %v1982 = vtanh.pop %v1980
        %1985 = vrot.lane.b32.xlu0 %v1981, 32
        %v1986 = vpop.permute.xlu0 %1985
        %1987 = vrot.lane.b32.xlu0 %v1982, 32
        %v1988 = vpop.permute.xlu0 %1987
        %v1991 = vmul.f32 %v1931, %v1986
        %v1992 = vmul.f32 %v1946, %v1988
        %1995 = vrot.lane.b32.xlu0 %v1979, 96
        %v1996 = vpop.permute.xlu0 %1995
        %1997 = vrot.lane.b32.xlu0 %v1980, 96
        %v1998 = vpop.permute.xlu0 %1997
        %2001 = vst.msk [vmem:[#allocation3] sm:$0xff] %vm502, %v1996
        %2002 = vst.msk [vmem:[#allocation3 + $0x8] sm:$0xff] %vm502, %v1998
        %2005 = vrot.lane.b32.xlu0 %v1991, 64
        %v2006 = vpop.permute.xlu0 %2005
        %2007 = vrot.lane.b32.xlu0 %v1992, 64
        %v2008 = vpop.permute.xlu0 %2007
        %2011 = vst.msk [vmem:[#allocation2] sm:$0xff] %vm502, %v2006
        %2012 = vst.msk [vmem:[#allocation2 + $0x8] sm:$0xff] %vm502, %v2008
        %2013 = vst.msk [vmem:[#allocation5] sm:$0xff] %vm502, %v2006
        %2014 = vst.msk [vmem:[#allocation5 + $0x8] sm:$0xff] %vm502, %v2008
        %v2015 = vld [vmem:[%s719] sm:$0xff]
        %v2016 = vld [vmem:[%s719 + $0x8] sm:$0xff]
        %v2017 = vld [vmem:[#allocation2] sm:$0xff]
        %v2018 = vld [vmem:[#allocation2 + $0x8] sm:$0xff]
        %v2019 = vpack.c.bf16 %v2018, %v2017
        %v2021 = vsel %vm502, %v2019, 0
        %2023 = vmatpush.bf16.msra.mxu0 0
        %2024 = vmatpush.bf16.msra.mxu0 0
        %2025 = vmatpush.bf16.msra.mxu0 0
        %2026 = vmatpush.bf16.msra.mxu0 0
        %2027 = vmatpush.bf16.msra.mxu0 0
        %2028 = vmatpush.bf16.msra.mxu0 0
        %2029 = vmatpush.bf16.msra.mxu0 %v1887
        %2030 = vmatpush.bf16.msra.mxu0 %v1886
        %2031 = vmatmul.bf16.gmra.mxu0 %v2021
        %v2032 = vpop.f32.mrf.mxu0
        %v2033 = vadd.f32 0.0, %v2032
        %v2034 = vpop.f32.mrf.mxu0
        %v2035 = vadd.f32 0.0, %v2034
        %2036 = vdwg.mxu0
        %v2037 = vadd.f32 %v2015, %v2033
        %v2038 = vadd.f32 %v2016, %v2035
        %v2039 = vxor.u32 %v2037, 2147483648
        %v2040 = vxor.u32 %v2038, 2147483648
        %v2041 = vmul.f32 %v2039, 1.442695
        %v2042 = vpow.pop %v2041
        %v2043 = vmul.f32 %v2040, 1.442695
        %v2044 = vpow.pop %v2043
        %v2045 = vadd.f32 %v2042, 1.0
        %v2046 = vadd.f32 %v2044, 1.0
        %v2047 = vrcp.pop %v2045
        %v2048 = vmul.f32 %v2045, %v2047
        %v2049 = vsub.f32 1.0, %v2048
        %v2050 = vmul.f32 %v2047, %v2049
        %v2051 = vadd.f32 %v2047, %v2050
        %vm2052 = vweird.f32 %v2045
        %vm2053 = vweird.f32 %v2047
        %vm2054 = vmor %vm2052, %vm2053
        %v2055 = vsel %vm2054, %v2047, %v2051
        %v2056 = vand.u32 2147483647, %v2045
        %vm2057 = vcmp.eq.f32.partialorder %v2056, 8.507059e+37
        %v2058 = vand.u32 %v2045, 2147483648
        %v2059 = vor.u32 1.1754944e-38, %v2058
        %v2060 = vsel %vm2057, %v2059, %v2055
        %v2061 = vmul.f32 1.0, %v2060
        %v2062 = vrcp.pop %v2046
        %v2063 = vmul.f32 %v2046, %v2062
        %v2064 = vsub.f32 1.0, %v2063
        %v2065 = vmul.f32 %v2062, %v2064
        %v2066 = vadd.f32 %v2062, %v2065
        %vm2067 = vweird.f32 %v2046
        %vm2068 = vweird.f32 %v2062
        %vm2069 = vmor %vm2067, %vm2068
        %v2070 = vsel %vm2069, %v2062, %v2066
        %v2071 = vand.u32 2147483647, %v2046
        %vm2072 = vcmp.eq.f32.partialorder %v2071, 8.507059e+37
        %v2073 = vand.u32 %v2046, 2147483648
        %v2074 = vor.u32 1.1754944e-38, %v2073
        %v2075 = vsel %vm2072, %v2074, %v2070
        %v2076 = vmul.f32 1.0, %v2075
        %v2077 = vtanh.pop %v2037
        %v2078 = vtanh.pop %v2038
        %v2079 = vld [vmem:[#allocation3] sm:$0xff]
        %v2080 = vld [vmem:[#allocation3 + $0x8] sm:$0xff]
        %2083 = vrot.lane.b32.xlu0 %v2079, 32
        %v2084 = vpop.permute.xlu0 %2083
        %2085 = vrot.lane.b32.xlu0 %v2080, 32
        %v2086 = vpop.permute.xlu0 %2085
        %v2089 = vmul.f32 %v2061, %v2084
        %v2090 = vmul.f32 %v2076, %v2086
        %2093 = vrot.lane.b32.xlu0 %v2077, 32
        %v2094 = vpop.permute.xlu0 %2093
        %2095 = vrot.lane.b32.xlu0 %v2078, 32
        %v2096 = vpop.permute.xlu0 %2095
        %v2099 = vmul.f32 %v2061, %v2094
        %v2100 = vmul.f32 %v2076, %v2096
        %2103 = vrot.lane.b32.xlu0 %v2099, 32
        %v2104 = vpop.permute.xlu0 %2103
        %2105 = vrot.lane.b32.xlu0 %v2100, 32
        %v2106 = vpop.permute.xlu0 %2105
        %v2109 = vadd.f32 %v2089, %v2104
        %v2110 = vadd.f32 %v2090, %v2106
        %v2111 = vtanh.pop %v2109
        %v2112 = vtanh.pop %v2110
        %2115 = vrot.lane.b32.xlu0 %v2111, 32
        %v2116 = vpop.permute.xlu0 %2115
        %2117 = vrot.lane.b32.xlu0 %v2112, 32
        %v2118 = vpop.permute.xlu0 %2117
        %v2121 = vmul.f32 %v2061, %v2116
        %v2122 = vmul.f32 %v2076, %v2118
        %2125 = vrot.lane.b32.xlu0 %v2109, 96
        %v2126 = vpop.permute.xlu0 %2125
        %2127 = vrot.lane.b32.xlu0 %v2110, 96
        %v2128 = vpop.permute.xlu0 %2127
        %2131 = vst.msk [vmem:[#allocation3] sm:$0xff] %vm502, %v2126
        %2132 = vst.msk [vmem:[#allocation3 + $0x8] sm:$0xff] %vm502, %v2128
        %2135 = vrot.lane.b32.xlu0 %v2121, 64
        %v2136 = vpop.permute.xlu0 %2135
        %2137 = vrot.lane.b32.xlu0 %v2122, 64
        %v2138 = vpop.permute.xlu0 %2137
        %2141 = vst.msk [vmem:[#allocation2] sm:$0xff] %vm502, %v2136
        %2142 = vst.msk [vmem:[#allocation2 + $0x8] sm:$0xff] %vm502, %v2138
        %2143 = vst.msk [vmem:[%s848] sm:$0xff] %vm502, %v2136
        %2144 = vst.msk [vmem:[%s848 + $0x8] sm:$0xff] %vm502, %v2138
        %v2145 = vld [vmem:[%s851] sm:$0xff]
        %v2146 = vld [vmem:[%s851 + $0x8] sm:$0xff]
        %v2147 = vld [vmem:[#allocation2] sm:$0xff]
        %v2148 = vld [vmem:[#allocation2 + $0x8] sm:$0xff]
        %v2149 = vpack.c.bf16 %v2148, %v2147
        %v2151 = vsel %vm502, %v2149, 0
        %2153 = vmatpush.bf16.msra.mxu0 0
        %2154 = vmatpush.bf16.msra.mxu0 0
        %2155 = vmatpush.bf16.msra.mxu0 0
        %2156 = vmatpush.bf16.msra.mxu0 0
        %2157 = vmatpush.bf16.msra.mxu0 0
        %2158 = vmatpush.bf16.msra.mxu0 0
        %2159 = vmatpush.bf16.msra.mxu0 %v1887
        %2160 = vmatpush.bf16.msra.mxu0 %v1886
        %2161 = vmatmul.bf16.gmra.mxu0 %v2151
        %v2162 = vpop.f32.mrf.mxu0
        %v2163 = vadd.f32 0.0, %v2162
        %v2164 = vpop.f32.mrf.mxu0
        %v2165 = vadd.f32 0.0, %v2164
        %2166 = vdwg.mxu0
        %v2167 = vadd.f32 %v2145, %v2163
        %v2168 = vadd.f32 %v2146, %v2165
        %v2169 = vxor.u32 %v2167, 2147483648
        %v2170 = vxor.u32 %v2168, 2147483648
        %v2171 = vmul.f32 %v2169, 1.442695
        %v2172 = vpow.pop %v2171
        %v2173 = vmul.f32 %v2170, 1.442695
        %v2174 = vpow.pop %v2173
        %v2175 = vadd.f32 %v2172, 1.0
        %v2176 = vadd.f32 %v2174, 1.0
        %v2177 = vrcp.pop %v2175
        %v2178 = vmul.f32 %v2175, %v2177
        %v2179 = vsub.f32 1.0, %v2178
        %v2180 = vmul.f32 %v2177, %v2179
        %v2181 = vadd.f32 %v2177, %v2180
        %vm2182 = vweird.f32 %v2175
        %vm2183 = vweird.f32 %v2177
        %vm2184 = vmor %vm2182, %vm2183
        %v2185 = vsel %vm2184, %v2177, %v2181
        %v2186 = vand.u32 2147483647, %v2175
        %vm2187 = vcmp.eq.f32.partialorder %v2186, 8.507059e+37
        %v2188 = vand.u32 %v2175, 2147483648
        %v2189 = vor.u32 1.1754944e-38, %v2188
        %v2190 = vsel %vm2187, %v2189, %v2185
        %v2191 = vmul.f32 1.0, %v2190
        %v2192 = vrcp.pop %v2176
        %v2193 = vmul.f32 %v2176, %v2192
        %v2194 = vsub.f32 1.0, %v2193
        %v2195 = vmul.f32 %v2192, %v2194
        %v2196 = vadd.f32 %v2192, %v2195
        %vm2197 = vweird.f32 %v2176
        %vm2198 = vweird.f32 %v2192
        %vm2199 = vmor %vm2197, %vm2198
        %v2200 = vsel %vm2199, %v2192, %v2196
        %v2201 = vand.u32 2147483647, %v2176
        %vm2202 = vcmp.eq.f32.partialorder %v2201, 8.507059e+37
        %v2203 = vand.u32 %v2176, 2147483648
        %v2204 = vor.u32 1.1754944e-38, %v2203
        %v2205 = vsel %vm2202, %v2204, %v2200
        %v2206 = vmul.f32 1.0, %v2205
        %v2207 = vtanh.pop %v2167
        %v2208 = vtanh.pop %v2168
        %v2209 = vld [vmem:[#allocation3] sm:$0xff]
        %v2210 = vld [vmem:[#allocation3 + $0x8] sm:$0xff]
        %2213 = vrot.lane.b32.xlu0 %v2209, 32
        %v2214 = vpop.permute.xlu0 %2213
        %2215 = vrot.lane.b32.xlu0 %v2210, 32
        %v2216 = vpop.permute.xlu0 %2215
        %v2219 = vmul.f32 %v2191, %v2214
        %v2220 = vmul.f32 %v2206, %v2216
        %2223 = vrot.lane.b32.xlu0 %v2207, 32
        %v2224 = vpop.permute.xlu0 %2223
        %2225 = vrot.lane.b32.xlu0 %v2208, 32
        %v2226 = vpop.permute.xlu0 %2225
        %v2229 = vmul.f32 %v2191, %v2224
        %v2230 = vmul.f32 %v2206, %v2226
        %2233 = vrot.lane.b32.xlu0 %v2229, 32
        %v2234 = vpop.permute.xlu0 %2233
        %2235 = vrot.lane.b32.xlu0 %v2230, 32
        %v2236 = vpop.permute.xlu0 %2235
        %v2239 = vadd.f32 %v2219, %v2234
        %v2240 = vadd.f32 %v2220, %v2236
        %v2241 = vtanh.pop %v2239
        %v2242 = vtanh.pop %v2240
        %2245 = vrot.lane.b32.xlu0 %v2241, 32
        %v2246 = vpop.permute.xlu0 %2245
        %2247 = vrot.lane.b32.xlu0 %v2242, 32
        %v2248 = vpop.permute.xlu0 %2247
        %v2251 = vmul.f32 %v2191, %v2246
        %v2252 = vmul.f32 %v2206, %v2248
        %2255 = vrot.lane.b32.xlu0 %v2239, 96
        %v2256 = vpop.permute.xlu0 %2255
        %2257 = vrot.lane.b32.xlu0 %v2240, 96
        %v2258 = vpop.permute.xlu0 %2257
        %2261 = vst.msk [vmem:[#allocation3] sm:$0xff] %vm502, %v2256
        %2262 = vst.msk [vmem:[#allocation3 + $0x8] sm:$0xff] %vm502, %v2258
        %2265 = vrot.lane.b32.xlu0 %v2251, 64
        %v2266 = vpop.permute.xlu0 %2265
        %2267 = vrot.lane.b32.xlu0 %v2252, 64
        %v2268 = vpop.permute.xlu0 %2267
        %2271 = vst.msk [vmem:[#allocation2] sm:$0xff] %vm502, %v2266
        %2272 = vst.msk [vmem:[#allocation2 + $0x8] sm:$0xff] %vm502, %v2268
        %2273 = vst.msk [vmem:[%s980] sm:$0xff] %vm502, %v2266
        %2274 = vst.msk [vmem:[%s980 + $0x8] sm:$0xff] %vm502, %v2268
        %v2275 = vld [vmem:[#allocation5] sm:$0xff]
        %v2276 = vld [vmem:[#allocation5 + $0x8] sm:$0xff]
        %v2277 = vld [vmem:[#allocation5 + $0x10] sm:$0xff]
        %v2278 = vld [vmem:[#allocation5 + $0x18] sm:$0xff]
        %v2279 = vld [vmem:[#allocation5 + $0x20] sm:$0xff]
        %v2280 = vld [vmem:[#allocation5 + $0x28] sm:$0xff]
        %v2281 = vpack.c.bf16 %v2275, %v2275
        %v2282 = vpack.c.bf16 %v2276, %v2276
        %v2283 = vpack.c.bf16 %v2277, %v2277
        %v2284 = vpack.c.bf16 %v2278, %v2278
        %v2285 = vpack.c.bf16 %v2279, %v2279
        %v2286 = vpack.c.bf16 %v2280, %v2280
        %2287 = vst.msk [vmem:[#allocation6] sm:$0xf] %vm995, %v2281
        %2288 = vst.msk [vmem:[#allocation6 + $0x4] sm:$0xf] %vm995, %v2282
        %2289 = vst.msk [vmem:[#allocation6 + $0x8] sm:$0xf] %vm995, %v2283
        %2290 = vst.msk [vmem:[#allocation6 + $0xc] sm:$0xf] %vm995, %v2284
        %2291 = vst.msk [vmem:[#allocation6 + $0x10] sm:$0xf] %vm995, %v2285
        %2292 = vst.msk [vmem:[#allocation6 + $0x14] sm:$0xf] %vm995, %v2286
        %v2293 = vld [vmem:[#allocation6 + $0x18] sm:$0xf]
        %v2294 = vld [vmem:[#allocation6 + $0x1c] sm:$0xf]
        %v2295 = vld [vmem:[#allocation6 + $0x20] sm:$0xf]
        %v2296 = vld [vmem:[#allocation6 + $0x24] sm:$0xf]
        %v2297 = vld [vmem:[#allocation6 + $0x28] sm:$0xf]
        %v2298 = vld [vmem:[#allocation6 + $0x2c] sm:$0xf]
        %v2305 = vunpack.c.l.b16 %v2293
        %v2306 = vunpack.c.l.b16 %v2294
        %v2307 = vunpack.c.l.b16 %v2295
        %v2308 = vunpack.c.l.b16 %v2296
        %v2309 = vunpack.c.l.b16 %v2297
        %v2310 = vunpack.c.l.b16 %v2298
        %v2311 = vpack.c.b16 %v2306, %v2305
        %v2312 = vpack.c.b16 %v2308, %v2307
        %v2313 = vpack.c.b16 %v2310, %v2309
        %v2315 = vsel %vm502, %v2311, 0
        %v2318 = vsel %vm502, %v2312, 0
        %v2321 = vsel %vm502, %v2313, 0
        %2323 = vmatpush.bf16.msra.mxu0 0
        %2324 = vmatpush.bf16.msra.mxu0 0
        %2325 = vmatpush.bf16.msra.mxu0 0
        %2326 = vmatpush.bf16.msra.mxu0 0
        %2327 = vmatpush.bf16.msra.mxu0 0
        %2328 = vmatpush.bf16.msra.mxu0 0
        %2329 = vmatpush.bf16.msra.mxu0 %v1831
        %2330 = vmatpush.bf16.msra.mxu0 %v1830
        %2331 = vmatmul.bf16.gmra.mxu0 %v2315
        %v2332 = vpop.f32.mrf.mxu0
        %v2333 = vadd.f32 %v1805, %v2332
        %v2334 = vpop.f32.mrf.mxu0
        %v2335 = vadd.f32 %v1805, %v2334
        %2336 = vmatmul.bf16.gmra.mxu0 %v2318
        %v2337 = vpop.f32.mrf.mxu0
        %v2338 = vadd.f32 %v1805, %v2337
        %v2339 = vpop.f32.mrf.mxu0
        %v2340 = vadd.f32 %v1805, %v2339
        %2341 = vmatmul.bf16.gmra.mxu0 %v2321
        %v2342 = vpop.f32.mrf.mxu0
        %v2343 = vadd.f32 %v1805, %v2342
        %v2344 = vpop.f32.mrf.mxu0
        %v2345 = vadd.f32 %v1805, %v2344
        %2346 = vdwg.mxu0
        %2347 = vst [vmem:[#allocation4] sm:$0xff] %v2333
        %2348 = vst [vmem:[#allocation4 + $0x8] sm:$0xff] %v2335
        %2349 = vst [vmem:[#allocation4 + $0x10] sm:$0xff] %v2338
        %2350 = vst [vmem:[#allocation4 + $0x18] sm:$0xff] %v2340
        %2351 = vst [vmem:[#allocation4 + $0x20] sm:$0xff] %v2343
        %2352 = vst [vmem:[#allocation4 + $0x28] sm:$0xff] %v2345
        %v2353 = vld [vmem:[#allocation4] sm:$0xff]
        %v2354 = vld [vmem:[#allocation4 + $0x8] sm:$0xff]
        %v2355 = vld [vmem:[#allocation2] sm:$0xff]
        %v2356 = vld [vmem:[#allocation2 + $0x8] sm:$0xff]
        %v2357 = vpack.c.bf16 %v2356, %v2355
        %v2359 = vsel %vm502, %v2357, 0
        %2361 = vmatpush.bf16.msra.mxu0 0
        %2362 = vmatpush.bf16.msra.mxu0 0
        %2363 = vmatpush.bf16.msra.mxu0 0
        %2364 = vmatpush.bf16.msra.mxu0 0
        %2365 = vmatpush.bf16.msra.mxu0 0
        %2366 = vmatpush.bf16.msra.mxu0 0
        %2367 = vmatpush.bf16.msra.mxu0 %v1887
        %2368 = vmatpush.bf16.msra.mxu0 %v1886
        %2369 = vmatmul.bf16.gmra.mxu0 %v2359
        %v2370 = vpop.f32.mrf.mxu0
        %v2371 = vadd.f32 0.0, %v2370
        %v2372 = vpop.f32.mrf.mxu0
        %v2373 = vadd.f32 0.0, %v2372
        %2374 = vdwg.mxu0
        %v2375 = vadd.f32 %v2353, %v2371
        %v2376 = vadd.f32 %v2354, %v2373
        %v2377 = vxor.u32 %v2375, 2147483648
        %v2378 = vxor.u32 %v2376, 2147483648
        %v2379 = vmul.f32 %v2377, 1.442695
        %v2380 = vpow.pop %v2379
        %v2381 = vmul.f32 %v2378, 1.442695
        %v2382 = vpow.pop %v2381
        %v2383 = vadd.f32 %v2380, 1.0
        %v2384 = vadd.f32 %v2382, 1.0
        %v2385 = vrcp.pop %v2383
        %v2386 = vmul.f32 %v2383, %v2385
        %v2387 = vsub.f32 1.0, %v2386
        %v2388 = vmul.f32 %v2385, %v2387
        %v2389 = vadd.f32 %v2385, %v2388
        %vm2390 = vweird.f32 %v2383
        %vm2391 = vweird.f32 %v2385
        %vm2392 = vmor %vm2390, %vm2391
        %v2393 = vsel %vm2392, %v2385, %v2389
        %v2394 = vand.u32 2147483647, %v2383
        %vm2395 = vcmp.eq.f32.partialorder %v2394, 8.507059e+37
        %v2396 = vand.u32 %v2383, 2147483648
        %v2397 = vor.u32 1.1754944e-38, %v2396
        %v2398 = vsel %vm2395, %v2397, %v2393
        %v2399 = vmul.f32 1.0, %v2398
        %v2400 = vrcp.pop %v2384
        %v2401 = vmul.f32 %v2384, %v2400
        %v2402 = vsub.f32 1.0, %v2401
        %v2403 = vmul.f32 %v2400, %v2402
        %v2404 = vadd.f32 %v2400, %v2403
        %vm2405 = vweird.f32 %v2384
        %vm2406 = vweird.f32 %v2400
        %vm2407 = vmor %vm2405, %vm2406
        %v2408 = vsel %vm2407, %v2400, %v2404
        %v2409 = vand.u32 2147483647, %v2384
        %vm2410 = vcmp.eq.f32.partialorder %v2409, 8.507059e+37
        %v2411 = vand.u32 %v2384, 2147483648
        %v2412 = vor.u32 1.1754944e-38, %v2411
        %v2413 = vsel %vm2410, %v2412, %v2408
        %v2414 = vmul.f32 1.0, %v2413
        %v2415 = vtanh.pop %v2375
        %v2416 = vtanh.pop %v2376
        %v2417 = vld [vmem:[#allocation3] sm:$0xff]
        %v2418 = vld [vmem:[#allocation3 + $0x8] sm:$0xff]
        %2421 = vrot.lane.b32.xlu0 %v2417, 32
        %v2422 = vpop.permute.xlu0 %2421
        %2423 = vrot.lane.b32.xlu0 %v2418, 32
        %v2424 = vpop.permute.xlu0 %2423
        %v2427 = vmul.f32 %v2399, %v2422
        %v2428 = vmul.f32 %v2414, %v2424
        %2431 = vrot.lane.b32.xlu0 %v2415, 32
        %v2432 = vpop.permute.xlu0 %2431
        %2433 = vrot.lane.b32.xlu0 %v2416, 32
        %v2434 = vpop.permute.xlu0 %2433
        %v2437 = vmul.f32 %v2399, %v2432
        %v2438 = vmul.f32 %v2414, %v2434
        %2441 = vrot.lane.b32.xlu0 %v2437, 32
        %v2442 = vpop.permute.xlu0 %2441
        %2443 = vrot.lane.b32.xlu0 %v2438, 32
        %v2444 = vpop.permute.xlu0 %2443
        %v2447 = vadd.f32 %v2427, %v2442
        %v2448 = vadd.f32 %v2428, %v2444
        %v2449 = vtanh.pop %v2447
        %v2450 = vtanh.pop %v2448
        %2453 = vrot.lane.b32.xlu0 %v2449, 32
        %v2454 = vpop.permute.xlu0 %2453
        %2455 = vrot.lane.b32.xlu0 %v2450, 32
        %v2456 = vpop.permute.xlu0 %2455
        %v2459 = vmul.f32 %v2399, %v2454
        %v2460 = vmul.f32 %v2414, %v2456
        %2463 = vrot.lane.b32.xlu0 %v2447, 96
        %v2464 = vpop.permute.xlu0 %2463
        %2465 = vrot.lane.b32.xlu0 %v2448, 96
        %v2466 = vpop.permute.xlu0 %2465
        %2469 = vst.msk [vmem:[#allocation3] sm:$0xff] %vm502, %v2464
        %2470 = vst.msk [vmem:[#allocation3 + $0x8] sm:$0xff] %vm502, %v2466
        %2473 = vrot.lane.b32.xlu0 %v2459, 64
        %v2474 = vpop.permute.xlu0 %2473
        %2475 = vrot.lane.b32.xlu0 %v2460, 64
        %v2476 = vpop.permute.xlu0 %2475
        %2479 = vst.msk [vmem:[#allocation2] sm:$0xff] %vm502, %v2474
        %2480 = vst.msk [vmem:[#allocation2 + $0x8] sm:$0xff] %vm502, %v2476
        %2481 = vst.msk [vmem:[#allocation5] sm:$0xff] %vm502, %v2474
        %2482 = vst.msk [vmem:[#allocation5 + $0x8] sm:$0xff] %vm502, %v2476
        %v2483 = vld [vmem:[%s719] sm:$0xff]
        %v2484 = vld [vmem:[%s719 + $0x8] sm:$0xff]
        %v2485 = vld [vmem:[#allocation2] sm:$0xff]
        %v2486 = vld [vmem:[#allocation2 + $0x8] sm:$0xff]
        %v2487 = vpack.c.bf16 %v2486, %v2485
        %v2489 = vsel %vm502, %v2487, 0
        %2491 = vmatpush.bf16.msra.mxu0 0
        %2492 = vmatpush.bf16.msra.mxu0 0
        %2493 = vmatpush.bf16.msra.mxu0 0
        %2494 = vmatpush.bf16.msra.mxu0 0
        %2495 = vmatpush.bf16.msra.mxu0 0
        %2496 = vmatpush.bf16.msra.mxu0 0
        %2497 = vmatpush.bf16.msra.mxu0 %v1887
        %2498 = vmatpush.bf16.msra.mxu0 %v1886
        %2499 = vmatmul.bf16.gmra.mxu0 %v2489
        %v2500 = vpop.f32.mrf.mxu0
        %v2501 = vadd.f32 0.0, %v2500
        %v2502 = vpop.f32.mrf.mxu0
        %v2503 = vadd.f32 0.0, %v2502
        %2504 = vdwg.mxu0
        %v2505 = vadd.f32 %v2483, %v2501
        %v2506 = vadd.f32 %v2484, %v2503
        %v2507 = vxor.u32 %v2505, 2147483648
        %v2508 = vxor.u32 %v2506, 2147483648
        %v2509 = vmul.f32 %v2507, 1.442695
        %v2510 = vpow.pop %v2509
        %v2511 = vmul.f32 %v2508, 1.442695
        %v2512 = vpow.pop %v2511
        %v2513 = vadd.f32 %v2510, 1.0
        %v2514 = vadd.f32 %v2512, 1.0
        %v2515 = vrcp.pop %v2513
        %v2516 = vmul.f32 %v2513, %v2515
        %v2517 = vsub.f32 1.0, %v2516
        %v2518 = vmul.f32 %v2515, %v2517
        %v2519 = vadd.f32 %v2515, %v2518
        %vm2520 = vweird.f32 %v2513
        %vm2521 = vweird.f32 %v2515
        %vm2522 = vmor %vm2520, %vm2521
        %v2523 = vsel %vm2522, %v2515, %v2519
        %v2524 = vand.u32 2147483647, %v2513
        %vm2525 = vcmp.eq.f32.partialorder %v2524, 8.507059e+37
        %v2526 = vand.u32 %v2513, 2147483648
        %v2527 = vor.u32 1.1754944e-38, %v2526
        %v2528 = vsel %vm2525, %v2527, %v2523
        %v2529 = vmul.f32 1.0, %v2528
        %v2530 = vrcp.pop %v2514
        %v2531 = vmul.f32 %v2514, %v2530
        %v2532 = vsub.f32 1.0, %v2531
        %v2533 = vmul.f32 %v2530, %v2532
        %v2534 = vadd.f32 %v2530, %v2533
        %vm2535 = vweird.f32 %v2514
        %vm2536 = vweird.f32 %v2530
        %vm2537 = vmor %vm2535, %vm2536
        %v2538 = vsel %vm2537, %v2530, %v2534
        %v2539 = vand.u32 2147483647, %v2514
        %vm2540 = vcmp.eq.f32.partialorder %v2539, 8.507059e+37
        %v2541 = vand.u32 %v2514, 2147483648
        %v2542 = vor.u32 1.1754944e-38, %v2541
        %v2543 = vsel %vm2540, %v2542, %v2538
        %v2544 = vmul.f32 1.0, %v2543
        %v2545 = vtanh.pop %v2505
        %v2546 = vtanh.pop %v2506
        %v2547 = vld [vmem:[#allocation3] sm:$0xff]
        %v2548 = vld [vmem:[#allocation3 + $0x8] sm:$0xff]
        %2551 = vrot.lane.b32.xlu0 %v2547, 32
        %v2552 = vpop.permute.xlu0 %2551
        %2553 = vrot.lane.b32.xlu0 %v2548, 32
        %v2554 = vpop.permute.xlu0 %2553
        %v2557 = vmul.f32 %v2529, %v2552
        %v2558 = vmul.f32 %v2544, %v2554
        %2561 = vrot.lane.b32.xlu0 %v2545, 32
        %v2562 = vpop.permute.xlu0 %2561
        %2563 = vrot.lane.b32.xlu0 %v2546, 32
        %v2564 = vpop.permute.xlu0 %2563
        %v2567 = vmul.f32 %v2529, %v2562
        %v2568 = vmul.f32 %v2544, %v2564
        %2571 = vrot.lane.b32.xlu0 %v2567, 32
        %v2572 = vpop.permute.xlu0 %2571
        %2573 = vrot.lane.b32.xlu0 %v2568, 32
        %v2574 = vpop.permute.xlu0 %2573
        %v2577 = vadd.f32 %v2557, %v2572
        %v2578 = vadd.f32 %v2558, %v2574
        %v2579 = vtanh.pop %v2577
        %v2580 = vtanh.pop %v2578
        %2583 = vrot.lane.b32.xlu0 %v2579, 32
        %v2584 = vpop.permute.xlu0 %2583
        %2585 = vrot.lane.b32.xlu0 %v2580, 32
        %v2586 = vpop.permute.xlu0 %2585
        %v2589 = vmul.f32 %v2529, %v2584
        %v2590 = vmul.f32 %v2544, %v2586
        %2593 = vrot.lane.b32.xlu0 %v2577, 96
        %v2594 = vpop.permute.xlu0 %2593
        %2595 = vrot.lane.b32.xlu0 %v2578, 96
        %v2596 = vpop.permute.xlu0 %2595
        %2599 = vst.msk [vmem:[#allocation3] sm:$0xff] %vm502, %v2594
        %2600 = vst.msk [vmem:[#allocation3 + $0x8] sm:$0xff] %vm502, %v2596
        %2603 = vrot.lane.b32.xlu0 %v2589, 64
        %v2604 = vpop.permute.xlu0 %2603
        %2605 = vrot.lane.b32.xlu0 %v2590, 64
        %v2606 = vpop.permute.xlu0 %2605
        %2609 = vst.msk [vmem:[#allocation2] sm:$0xff] %vm502, %v2604
        %2610 = vst.msk [vmem:[#allocation2 + $0x8] sm:$0xff] %vm502, %v2606
        %2611 = vst.msk [vmem:[%s848] sm:$0xff] %vm502, %v2604
        %2612 = vst.msk [vmem:[%s848 + $0x8] sm:$0xff] %vm502, %v2606
        %v2613 = vld [vmem:[%s851] sm:$0xff]
        %v2614 = vld [vmem:[%s851 + $0x8] sm:$0xff]
        %v2615 = vld [vmem:[#allocation2] sm:$0xff]
        %v2616 = vld [vmem:[#allocation2 + $0x8] sm:$0xff]
        %v2617 = vpack.c.bf16 %v2616, %v2615
        %v2619 = vsel %vm502, %v2617, 0
        %2621 = vmatpush.bf16.msra.mxu0 0
        %2622 = vmatpush.bf16.msra.mxu0 0
        %2623 = vmatpush.bf16.msra.mxu0 0
        %2624 = vmatpush.bf16.msra.mxu0 0
        %2625 = vmatpush.bf16.msra.mxu0 0
        %2626 = vmatpush.bf16.msra.mxu0 0
        %2627 = vmatpush.bf16.msra.mxu0 %v1887
        %2628 = vmatpush.bf16.msra.mxu0 %v1886
        %2629 = vmatmul.bf16.gmra.mxu0 %v2619
        %v2630 = vpop.f32.mrf.mxu0
        %v2631 = vadd.f32 0.0, %v2630
        %v2632 = vpop.f32.mrf.mxu0
        %v2633 = vadd.f32 0.0, %v2632
        %2634 = vdwg.mxu0
        %v2635 = vadd.f32 %v2613, %v2631
        %v2636 = vadd.f32 %v2614, %v2633
        %v2637 = vxor.u32 %v2635, 2147483648
        %v2638 = vxor.u32 %v2636, 2147483648
        %v2639 = vmul.f32 %v2637, 1.442695
        %v2640 = vpow.pop %v2639
        %v2641 = vmul.f32 %v2638, 1.442695
        %v2642 = vpow.pop %v2641
        %v2643 = vadd.f32 %v2640, 1.0
        %v2644 = vadd.f32 %v2642, 1.0
        %v2645 = vrcp.pop %v2643
        %v2646 = vmul.f32 %v2643, %v2645
        %v2647 = vsub.f32 1.0, %v2646
        %v2648 = vmul.f32 %v2645, %v2647
        %v2649 = vadd.f32 %v2645, %v2648
        %vm2650 = vweird.f32 %v2643
        %vm2651 = vweird.f32 %v2645
        %vm2652 = vmor %vm2650, %vm2651
        %v2653 = vsel %vm2652, %v2645, %v2649
        %v2654 = vand.u32 2147483647, %v2643
        %vm2655 = vcmp.eq.f32.partialorder %v2654, 8.507059e+37
        %v2656 = vand.u32 %v2643, 2147483648
        %v2657 = vor.u32 1.1754944e-38, %v2656
        %v2658 = vsel %vm2655, %v2657, %v2653
        %v2659 = vmul.f32 1.0, %v2658
        %v2660 = vrcp.pop %v2644
        %v2661 = vmul.f32 %v2644, %v2660
        %v2662 = vsub.f32 1.0, %v2661
        %v2663 = vmul.f32 %v2660, %v2662
        %v2664 = vadd.f32 %v2660, %v2663
        %vm2665 = vweird.f32 %v2644
        %vm2666 = vweird.f32 %v2660
        %vm2667 = vmor %vm2665, %vm2666
        %v2668 = vsel %vm2667, %v2660, %v2664
        %v2669 = vand.u32 2147483647, %v2644
        %vm2670 = vcmp.eq.f32.partialorder %v2669, 8.507059e+37
        %v2671 = vand.u32 %v2644, 2147483648
        %v2672 = vor.u32 1.1754944e-38, %v2671
        %v2673 = vsel %vm2670, %v2672, %v2668
        %v2674 = vmul.f32 1.0, %v2673
        %v2675 = vtanh.pop %v2635
        %v2676 = vtanh.pop %v2636
        %v2677 = vld [vmem:[#allocation3] sm:$0xff]
        %v2678 = vld [vmem:[#allocation3 + $0x8] sm:$0xff]
        %2681 = vrot.lane.b32.xlu0 %v2677, 32
        %v2682 = vpop.permute.xlu0 %2681
        %2683 = vrot.lane.b32.xlu0 %v2678, 32
        %v2684 = vpop.permute.xlu0 %2683
        %v2687 = vmul.f32 %v2659, %v2682
        %v2688 = vmul.f32 %v2674, %v2684
        %2691 = vrot.lane.b32.xlu0 %v2675, 32
        %v2692 = vpop.permute.xlu0 %2691
        %2693 = vrot.lane.b32.xlu0 %v2676, 32
        %v2694 = vpop.permute.xlu0 %2693
        %v2697 = vmul.f32 %v2659, %v2692
        %v2698 = vmul.f32 %v2674, %v2694
        %2701 = vrot.lane.b32.xlu0 %v2697, 32
        %v2702 = vpop.permute.xlu0 %2701
        %2703 = vrot.lane.b32.xlu0 %v2698, 32
        %v2704 = vpop.permute.xlu0 %2703
        %v2707 = vadd.f32 %v2687, %v2702
        %v2708 = vadd.f32 %v2688, %v2704
        %v2709 = vtanh.pop %v2707
        %v2710 = vtanh.pop %v2708
        %2713 = vrot.lane.b32.xlu0 %v2709, 32
        %v2714 = vpop.permute.xlu0 %2713
        %2715 = vrot.lane.b32.xlu0 %v2710, 32
        %v2716 = vpop.permute.xlu0 %2715
        %v2719 = vmul.f32 %v2659, %v2714
        %v2720 = vmul.f32 %v2674, %v2716
        %2723 = vrot.lane.b32.xlu0 %v2707, 96
        %v2724 = vpop.permute.xlu0 %2723
        %2725 = vrot.lane.b32.xlu0 %v2708, 96
        %v2726 = vpop.permute.xlu0 %2725
        %2729 = vst.msk [vmem:[#allocation3] sm:$0xff] %vm502, %v2724
        %2730 = vst.msk [vmem:[#allocation3 + $0x8] sm:$0xff] %vm502, %v2726
        %2733 = vrot.lane.b32.xlu0 %v2719, 64
        %v2734 = vpop.permute.xlu0 %2733
        %2735 = vrot.lane.b32.xlu0 %v2720, 64
        %v2736 = vpop.permute.xlu0 %2735
        %2739 = vst.msk [vmem:[#allocation2] sm:$0xff] %vm502, %v2734
        %2740 = vst.msk [vmem:[#allocation2 + $0x8] sm:$0xff] %vm502, %v2736
        %2741 = vst.msk [vmem:[%s980] sm:$0xff] %vm502, %v2734
        %2742 = vst.msk [vmem:[%s980 + $0x8] sm:$0xff] %vm502, %v2736
        %v2743 = vld [vmem:[#allocation5] sm:$0xff]
        %v2744 = vld [vmem:[#allocation5 + $0x8] sm:$0xff]
        %v2745 = vld [vmem:[#allocation5 + $0x10] sm:$0xff]
        %v2746 = vld [vmem:[#allocation5 + $0x18] sm:$0xff]
        %v2747 = vld [vmem:[#allocation5 + $0x20] sm:$0xff]
        %v2748 = vld [vmem:[#allocation5 + $0x28] sm:$0xff]
        %v2749 = vpack.c.bf16 %v2743, %v2743
        %v2750 = vpack.c.bf16 %v2744, %v2744
        %v2751 = vpack.c.bf16 %v2745, %v2745
        %v2752 = vpack.c.bf16 %v2746, %v2746
        %v2753 = vpack.c.bf16 %v2747, %v2747
        %v2754 = vpack.c.bf16 %v2748, %v2748
        %2755 = vst.msk [vmem:[#allocation6 + $0x18] sm:$0xf] %vm995, %v2749
        %2756 = vst.msk [vmem:[#allocation6 + $0x1c] sm:$0xf] %vm995, %v2750
        %2757 = vst.msk [vmem:[#allocation6 + $0x20] sm:$0xf] %vm995, %v2751
        %2758 = vst.msk [vmem:[#allocation6 + $0x24] sm:$0xf] %vm995, %v2752
        %2759 = vst.msk [vmem:[#allocation6 + $0x28] sm:$0xf] %vm995, %v2753
        %2760 = vst.msk [vmem:[#allocation6 + $0x2c] sm:$0xf] %vm995, %v2754
        %v2761 = vld [vmem:[#allocation6 + $0x30] sm:$0xf]
        %v2762 = vld [vmem:[#allocation6 + $0x34] sm:$0xf]
        %v2763 = vld [vmem:[#allocation6 + $0x38] sm:$0xf]
        %v2764 = vld [vmem:[#allocation6 + $0x3c] sm:$0xf]
        %v2769 = vunpack.c.l.b16 %v2761
        %v2770 = vunpack.c.l.b16 %v2762
        %v2771 = vunpack.c.l.b16 %v2763
        %v2772 = vunpack.c.l.b16 %v2764
        %v2773 = vpack.c.b16 %v2770, %v2769
        %v2774 = vpack.c.b16 %v2772, %v2771
        %v2776 = vsel %vm502, %v2773, 0
        %v2779 = vsel %vm502, %v2774, 0
        %2781 = vmatpush.bf16.msra.mxu0 0
        %2782 = vmatpush.bf16.msra.mxu0 0
        %2783 = vmatpush.bf16.msra.mxu0 0
        %2784 = vmatpush.bf16.msra.mxu0 0
        %2785 = vmatpush.bf16.msra.mxu0 0
        %2786 = vmatpush.bf16.msra.mxu0 0
        %2787 = vmatpush.bf16.msra.mxu0 %v1831
        %2788 = vmatpush.bf16.msra.mxu0 %v1830
        %2789 = vmatmul.bf16.gmra.mxu0 %v2776
        %v2790 = vpop.f32.mrf.mxu0
        %v2791 = vadd.f32 %v1805, %v2790
        %v2792 = vpop.f32.mrf.mxu0
        %v2793 = vadd.f32 %v1805, %v2792
        %2794 = vmatmul.bf16.gmra.mxu0 %v2779
        %v2795 = vpop.f32.mrf.mxu0
        %v2796 = vadd.f32 %v1805, %v2795
        %v2797 = vpop.f32.mrf.mxu0
        %v2798 = vadd.f32 %v1805, %v2797
        %2799 = vdwg.mxu0
        %2800 = vst [vmem:[#allocation4] sm:$0xff] %v2791
        %2801 = vst [vmem:[#allocation4 + $0x8] sm:$0xff] %v2793
        %2802 = vst [vmem:[#allocation4 + $0x10] sm:$0xff] %v2796
        %2803 = vst [vmem:[#allocation4 + $0x18] sm:$0xff] %v2798
        %v2804 = vld [vmem:[#allocation4] sm:$0xff]
        %v2805 = vld [vmem:[#allocation4 + $0x8] sm:$0xff]
        %v2806 = vld [vmem:[#allocation2] sm:$0xff]
        %v2807 = vld [vmem:[#allocation2 + $0x8] sm:$0xff]
        %v2808 = vpack.c.bf16 %v2807, %v2806
        %v2810 = vsel %vm502, %v2808, 0
        %2812 = vmatpush.bf16.msra.mxu0 0
        %2813 = vmatpush.bf16.msra.mxu0 0
        %2814 = vmatpush.bf16.msra.mxu0 0
        %2815 = vmatpush.bf16.msra.mxu0 0
        %2816 = vmatpush.bf16.msra.mxu0 0
        %2817 = vmatpush.bf16.msra.mxu0 0
        %2818 = vmatpush.bf16.msra.mxu0 %v1887
        %2819 = vmatpush.bf16.msra.mxu0 %v1886
        %2820 = vmatmul.bf16.gmra.mxu0 %v2810
        %v2821 = vpop.f32.mrf.mxu0
        %v2822 = vadd.f32 0.0, %v2821
        %v2823 = vpop.f32.mrf.mxu0
        %v2824 = vadd.f32 0.0, %v2823
        %2825 = vdwg.mxu0
        %v2826 = vadd.f32 %v2804, %v2822
        %v2827 = vadd.f32 %v2805, %v2824
        %v2828 = vxor.u32 %v2826, 2147483648
        %v2829 = vxor.u32 %v2827, 2147483648
        %v2830 = vmul.f32 %v2828, 1.442695
        %v2831 = vpow.pop %v2830
        %v2832 = vmul.f32 %v2829, 1.442695
        %v2833 = vpow.pop %v2832
        %v2834 = vadd.f32 %v2831, 1.0
        %v2835 = vadd.f32 %v2833, 1.0
        %v2836 = vrcp.pop %v2834
        %v2837 = vmul.f32 %v2834, %v2836
        %v2838 = vsub.f32 1.0, %v2837
        %v2839 = vmul.f32 %v2836, %v2838
        %v2840 = vadd.f32 %v2836, %v2839
        %vm2841 = vweird.f32 %v2834
        %vm2842 = vweird.f32 %v2836
        %vm2843 = vmor %vm2841, %vm2842
        %v2844 = vsel %vm2843, %v2836, %v2840
        %v2845 = vand.u32 2147483647, %v2834
        %vm2846 = vcmp.eq.f32.partialorder %v2845, 8.507059e+37
        %v2847 = vand.u32 %v2834, 2147483648
        %v2848 = vor.u32 1.1754944e-38, %v2847
        %v2849 = vsel %vm2846, %v2848, %v2844
        %v2850 = vmul.f32 1.0, %v2849
        %v2851 = vrcp.pop %v2835
        %v2852 = vmul.f32 %v2835, %v2851
        %v2853 = vsub.f32 1.0, %v2852
        %v2854 = vmul.f32 %v2851, %v2853
        %v2855 = vadd.f32 %v2851, %v2854
        %vm2856 = vweird.f32 %v2835
        %vm2857 = vweird.f32 %v2851
        %vm2858 = vmor %vm2856, %vm2857
        %v2859 = vsel %vm2858, %v2851, %v2855
        %v2860 = vand.u32 2147483647, %v2835
        %vm2861 = vcmp.eq.f32.partialorder %v2860, 8.507059e+37
        %v2862 = vand.u32 %v2835, 2147483648
        %v2863 = vor.u32 1.1754944e-38, %v2862
        %v2864 = vsel %vm2861, %v2863, %v2859
        %v2865 = vmul.f32 1.0, %v2864
        %v2866 = vtanh.pop %v2826
        %v2867 = vtanh.pop %v2827
        %v2868 = vld [vmem:[#allocation3] sm:$0xff]
        %v2869 = vld [vmem:[#allocation3 + $0x8] sm:$0xff]
        %2872 = vrot.lane.b32.xlu0 %v2868, 32
        %v2873 = vpop.permute.xlu0 %2872
        %2874 = vrot.lane.b32.xlu0 %v2869, 32
        %v2875 = vpop.permute.xlu0 %2874
        %v2878 = vmul.f32 %v2850, %v2873
        %v2879 = vmul.f32 %v2865, %v2875
        %2882 = vrot.lane.b32.xlu0 %v2866, 32
        %v2883 = vpop.permute.xlu0 %2882
        %2884 = vrot.lane.b32.xlu0 %v2867, 32
        %v2885 = vpop.permute.xlu0 %2884
        %v2888 = vmul.f32 %v2850, %v2883
        %v2889 = vmul.f32 %v2865, %v2885
        %2892 = vrot.lane.b32.xlu0 %v2888, 32
        %v2893 = vpop.permute.xlu0 %2892
        %2894 = vrot.lane.b32.xlu0 %v2889, 32
        %v2895 = vpop.permute.xlu0 %2894
        %v2898 = vadd.f32 %v2878, %v2893
        %v2899 = vadd.f32 %v2879, %v2895
        %v2900 = vtanh.pop %v2898
        %v2901 = vtanh.pop %v2899
        %2904 = vrot.lane.b32.xlu0 %v2900, 32
        %v2905 = vpop.permute.xlu0 %2904
        %2906 = vrot.lane.b32.xlu0 %v2901, 32
        %v2907 = vpop.permute.xlu0 %2906
        %v2910 = vmul.f32 %v2850, %v2905
        %v2911 = vmul.f32 %v2865, %v2907
        %2914 = vrot.lane.b32.xlu0 %v2898, 96
        %v2915 = vpop.permute.xlu0 %2914
        %2916 = vrot.lane.b32.xlu0 %v2899, 96
        %v2917 = vpop.permute.xlu0 %2916
        %2920 = vst.msk [vmem:[#allocation3] sm:$0xff] %vm502, %v2915
        %2921 = vst.msk [vmem:[#allocation3 + $0x8] sm:$0xff] %vm502, %v2917
        %2924 = vrot.lane.b32.xlu0 %v2910, 64
        %v2925 = vpop.permute.xlu0 %2924
        %2926 = vrot.lane.b32.xlu0 %v2911, 64
        %v2927 = vpop.permute.xlu0 %2926
        %2930 = vst.msk [vmem:[#allocation2] sm:$0xff] %vm502, %v2925
        %2931 = vst.msk [vmem:[#allocation2 + $0x8] sm:$0xff] %vm502, %v2927
        %2932 = vst.msk [vmem:[#allocation5] sm:$0xff] %vm502, %v2925
        %2933 = vst.msk [vmem:[#allocation5 + $0x8] sm:$0xff] %vm502, %v2927
        %v2934 = vld [vmem:[%s719] sm:$0xff]
        %v2935 = vld [vmem:[%s719 + $0x8] sm:$0xff]
        %v2936 = vld [vmem:[#allocation2] sm:$0xff]
        %v2937 = vld [vmem:[#allocation2 + $0x8] sm:$0xff]
        %v2938 = vpack.c.bf16 %v2937, %v2936
        %v2940 = vsel %vm502, %v2938, 0
        %2942 = vmatpush.bf16.msra.mxu0 0
        %2943 = vmatpush.bf16.msra.mxu0 0
        %2944 = vmatpush.bf16.msra.mxu0 0
        %2945 = vmatpush.bf16.msra.mxu0 0
        %2946 = vmatpush.bf16.msra.mxu0 0
        %2947 = vmatpush.bf16.msra.mxu0 0
        %2948 = vmatpush.bf16.msra.mxu0 %v1887
        %2949 = vmatpush.bf16.msra.mxu0 %v1886
        %2950 = vmatmul.bf16.gmra.mxu0 %v2940
        %v2951 = vpop.f32.mrf.mxu0
        %v2952 = vadd.f32 0.0, %v2951
        %v2953 = vpop.f32.mrf.mxu0
        %v2954 = vadd.f32 0.0, %v2953
        %2955 = vdwg.mxu0
        %v2956 = vadd.f32 %v2934, %v2952
        %v2957 = vadd.f32 %v2935, %v2954
        %v2958 = vxor.u32 %v2956, 2147483648
        %v2959 = vxor.u32 %v2957, 2147483648
        %v2960 = vmul.f32 %v2958, 1.442695
        %v2961 = vpow.pop %v2960
        %v2962 = vmul.f32 %v2959, 1.442695
        %v2963 = vpow.pop %v2962
        %v2964 = vadd.f32 %v2961, 1.0
        %v2965 = vadd.f32 %v2963, 1.0
        %v2966 = vrcp.pop %v2964
        %v2967 = vmul.f32 %v2964, %v2966
        %v2968 = vsub.f32 1.0, %v2967
        %v2969 = vmul.f32 %v2966, %v2968
        %v2970 = vadd.f32 %v2966, %v2969
        %vm2971 = vweird.f32 %v2964
        %vm2972 = vweird.f32 %v2966
        %vm2973 = vmor %vm2971, %vm2972
        %v2974 = vsel %vm2973, %v2966, %v2970
        %v2975 = vand.u32 2147483647, %v2964
        %vm2976 = vcmp.eq.f32.partialorder %v2975, 8.507059e+37
        %v2977 = vand.u32 %v2964, 2147483648
        %v2978 = vor.u32 1.1754944e-38, %v2977
        %v2979 = vsel %vm2976, %v2978, %v2974
        %v2980 = vmul.f32 1.0, %v2979
        %v2981 = vrcp.pop %v2965
        %v2982 = vmul.f32 %v2965, %v2981
        %v2983 = vsub.f32 1.0, %v2982
        %v2984 = vmul.f32 %v2981, %v2983
        %v2985 = vadd.f32 %v2981, %v2984
        %vm2986 = vweird.f32 %v2965
        %vm2987 = vweird.f32 %v2981
        %vm2988 = vmor %vm2986, %vm2987
        %v2989 = vsel %vm2988, %v2981, %v2985
        %v2990 = vand.u32 2147483647, %v2965
        %vm2991 = vcmp.eq.f32.partialorder %v2990, 8.507059e+37
        %v2992 = vand.u32 %v2965, 2147483648
        %v2993 = vor.u32 1.1754944e-38, %v2992
        %v2994 = vsel %vm2991, %v2993, %v2989
        %v2995 = vmul.f32 1.0, %v2994
        %v2996 = vtanh.pop %v2956
        %v2997 = vtanh.pop %v2957
        %v2998 = vld [vmem:[#allocation3] sm:$0xff]
        %v2999 = vld [vmem:[#allocation3 + $0x8] sm:$0xff]
        %3002 = vrot.lane.b32.xlu0 %v2998, 32
        %v3003 = vpop.permute.xlu0 %3002
        %3004 = vrot.lane.b32.xlu0 %v2999, 32
        %v3005 = vpop.permute.xlu0 %3004
        %v3008 = vmul.f32 %v2980, %v3003
        %v3009 = vmul.f32 %v2995, %v3005
        %3012 = vrot.lane.b32.xlu0 %v2996, 32
        %v3013 = vpop.permute.xlu0 %3012
        %3014 = vrot.lane.b32.xlu0 %v2997, 32
        %v3015 = vpop.permute.xlu0 %3014
        %v3018 = vmul.f32 %v2980, %v3013
        %v3019 = vmul.f32 %v2995, %v3015
        %3022 = vrot.lane.b32.xlu0 %v3018, 32
        %v3023 = vpop.permute.xlu0 %3022
        %3024 = vrot.lane.b32.xlu0 %v3019, 32
        %v3025 = vpop.permute.xlu0 %3024
        %v3028 = vadd.f32 %v3008, %v3023
        %v3029 = vadd.f32 %v3009, %v3025
        %v3030 = vtanh.pop %v3028
        %v3031 = vtanh.pop %v3029
        %3034 = vrot.lane.b32.xlu0 %v3030, 32
        %v3035 = vpop.permute.xlu0 %3034
        %3036 = vrot.lane.b32.xlu0 %v3031, 32
        %v3037 = vpop.permute.xlu0 %3036
        %v3040 = vmul.f32 %v2980, %v3035
        %v3041 = vmul.f32 %v2995, %v3037
        %3044 = vrot.lane.b32.xlu0 %v3028, 96
        %v3045 = vpop.permute.xlu0 %3044
        %3046 = vrot.lane.b32.xlu0 %v3029, 96
        %v3047 = vpop.permute.xlu0 %3046
        %3050 = vst.msk [vmem:[#allocation3] sm:$0xff] %vm502, %v3045
        %3051 = vst.msk [vmem:[#allocation3 + $0x8] sm:$0xff] %vm502, %v3047
        %3054 = vrot.lane.b32.xlu0 %v3040, 64
        %v3055 = vpop.permute.xlu0 %3054
        %3056 = vrot.lane.b32.xlu0 %v3041, 64
        %v3057 = vpop.permute.xlu0 %3056
        %3060 = vst.msk [vmem:[#allocation2] sm:$0xff] %vm502, %v3055
        %3061 = vst.msk [vmem:[#allocation2 + $0x8] sm:$0xff] %vm502, %v3057
        %3062 = vst.msk [vmem:[%s848] sm:$0xff] %vm502, %v3055
        %3063 = vst.msk [vmem:[%s848 + $0x8] sm:$0xff] %vm502, %v3057
        %v3064 = vld [vmem:[#allocation5] sm:$0xff]
        %v3065 = vld [vmem:[#allocation5 + $0x8] sm:$0xff]
        %v3066 = vld [vmem:[#allocation5 + $0x10] sm:$0xff]
        %v3067 = vld [vmem:[#allocation5 + $0x18] sm:$0xff]
        %v3068 = vpack.c.bf16 %v3064, %v3064
        %v3069 = vpack.c.bf16 %v3065, %v3065
        %v3070 = vpack.c.bf16 %v3066, %v3066
        %v3071 = vpack.c.bf16 %v3067, %v3067
        %3072 = vst.msk [vmem:[#allocation6 + $0x30] sm:$0xf] %vm995, %v3068
        %3073 = vst.msk [vmem:[#allocation6 + $0x34] sm:$0xf] %vm995, %v3069
        %3074 = vst.msk [vmem:[#allocation6 + $0x38] sm:$0xf] %vm995, %v3070
        %3075 = vst.msk [vmem:[#allocation6 + $0x3c] sm:$0xf] %vm995, %v3071
        %v3076 = vld [vmem:[%s7] sm:$0xf]
        %v3077 = vld [vmem:[%s7 + $0x4] sm:$0xf]
        %v3078 = vld [vmem:[%s7 + $0x8] sm:$0xf]
        %v3079 = vld [vmem:[%s7 + $0xc] sm:$0xf]
        %v3080 = vld [vmem:[%s8] sm:$0xf]
        %v3081 = vld [vmem:[%s8 + $0x4] sm:$0xf]
        %v3082 = vld [vmem:[%s8 + $0x8] sm:$0xf]
        %v3083 = vld [vmem:[%s8 + $0xc] sm:$0xf]
        %v3084 = vld [vmem:[%s9] sm:$0x1]
        %3085 = vst.msk [vmem:[#allocation2] sm:$0xff] %vm502, 0.0
        %3086 = vst.msk [vmem:[#allocation2 + $0x8] sm:$0xff] %vm502, 0.0
        %3087 = vst.msk [vmem:[#allocation3] sm:$0xff] %vm502, 0.0
        %3088 = vst.msk [vmem:[#allocation3 + $0x8] sm:$0xff] %vm502, 0.0
        %v3089 = vld [vmem:[#allocation6] sm:$0xf]
        %v3090 = vld [vmem:[#allocation6 + $0x4] sm:$0xf]
        %v3091 = vld [vmem:[#allocation6 + $0x8] sm:$0xf]
        %v3092 = vld [vmem:[#allocation6 + $0xc] sm:$0xf]
        %v3093 = vld [vmem:[#allocation6 + $0x10] sm:$0xf]
        %v3094 = vld [vmem:[#allocation6 + $0x14] sm:$0xf]
        %v3096 = vperm.slane %v3084, 0
        %v3104 = vunpack.c.l.b16 %v3089
        %v3105 = vunpack.c.l.b16 %v3090
        %v3106 = vunpack.c.l.b16 %v3091
        %v3107 = vunpack.c.l.b16 %v3092
        %v3108 = vunpack.c.l.b16 %v3093
        %v3109 = vunpack.c.l.b16 %v3094
        %v3110 = vpack.c.b16 %v3105, %v3104
        %v3111 = vpack.c.b16 %v3107, %v3106
        %v3112 = vpack.c.b16 %v3109, %v3108
        %v3117 = vunpack.c.l.b16 %v3076
        %v3118 = vunpack.c.l.b16 %v3077
        %v3119 = vunpack.c.l.b16 %v3078
        %v3120 = vunpack.c.l.b16 %v3079
        %v3121 = vpack.c.b16 %v3118, %v3117
        %v3122 = vpack.c.b16 %v3120, %v3119
        %v3126 = vsel %vm502, %v3110, 0
        %v3129 = vsel %vm502, %v3111, 0
        %v3132 = vsel %vm502, %v3112, 0
        %3134 = vmatpush.bf16.msra.mxu0 0
        %3135 = vmatpush.bf16.msra.mxu0 0
        %3136 = vmatpush.bf16.msra.mxu0 0
        %3137 = vmatpush.bf16.msra.mxu0 0
        %3138 = vmatpush.bf16.msra.mxu0 0
        %3139 = vmatpush.bf16.msra.mxu0 0
        %3140 = vmatpush.bf16.msra.mxu0 %v3122
        %3141 = vmatpush.bf16.msra.mxu0 %v3121
        %3142 = vmatmul.bf16.gmra.mxu0 %v3126
        %v3143 = vpop.f32.mrf.mxu0
        %v3144 = vadd.f32 %v3096, %v3143
        %v3145 = vpop.f32.mrf.mxu0
        %v3146 = vadd.f32 %v3096, %v3145
        %3147 = vmatmul.bf16.gmra.mxu0 %v3129
        %v3148 = vpop.f32.mrf.mxu0
        %v3149 = vadd.f32 %v3096, %v3148
        %v3150 = vpop.f32.mrf.mxu0
        %v3151 = vadd.f32 %v3096, %v3150
        %3152 = vmatmul.bf16.gmra.mxu0 %v3132
        %v3153 = vpop.f32.mrf.mxu0
        %v3154 = vadd.f32 %v3096, %v3153
        %v3155 = vpop.f32.mrf.mxu0
        %v3156 = vadd.f32 %v3096, %v3155
        %3157 = vdwg.mxu0
        %3158 = vst [vmem:[#allocation4] sm:$0xff] %v3144
        %3159 = vst [vmem:[#allocation4 + $0x8] sm:$0xff] %v3146
        %3160 = vst [vmem:[#allocation4 + $0x10] sm:$0xff] %v3149
        %3161 = vst [vmem:[#allocation4 + $0x18] sm:$0xff] %v3151
        %3162 = vst [vmem:[#allocation4 + $0x20] sm:$0xff] %v3154
        %3163 = vst [vmem:[#allocation4 + $0x28] sm:$0xff] %v3156
        %v3164 = vld [vmem:[#allocation4] sm:$0xff]
        %v3165 = vld [vmem:[#allocation4 + $0x8] sm:$0xff]
        %v3166 = vld [vmem:[#allocation2] sm:$0xff]
        %v3167 = vld [vmem:[#allocation2 + $0x8] sm:$0xff]
        %v3168 = vpack.c.bf16 %v3167, %v3166
        %v3173 = vunpack.c.l.b16 %v3080
        %v3174 = vunpack.c.l.b16 %v3081
        %v3175 = vunpack.c.l.b16 %v3082
        %v3176 = vunpack.c.l.b16 %v3083
        %v3177 = vpack.c.b16 %v3174, %v3173
        %v3178 = vpack.c.b16 %v3176, %v3175
        %v3182 = vsel %vm502, %v3168, 0
        %3184 = vmatpush.bf16.msra.mxu0 0
        %3185 = vmatpush.bf16.msra.mxu0 0
        %3186 = vmatpush.bf16.msra.mxu0 0
        %3187 = vmatpush.bf16.msra.mxu0 0
        %3188 = vmatpush.bf16.msra.mxu0 0
        %3189 = vmatpush.bf16.msra.mxu0 0
        %3190 = vmatpush.bf16.msra.mxu0 %v3178
        %3191 = vmatpush.bf16.msra.mxu0 %v3177
        %3192 = vmatmul.bf16.gmra.mxu0 %v3182
        %v3193 = vpop.f32.mrf.mxu0
        %v3194 = vadd.f32 0.0, %v3193
        %v3195 = vpop.f32.mrf.mxu0
        %v3196 = vadd.f32 0.0, %v3195
        %3197 = vdwg.mxu0
        %v3198 = vadd.f32 %v3164, %v3194
        %v3199 = vadd.f32 %v3165, %v3196
        %v3200 = vxor.u32 %v3198, 2147483648
        %v3201 = vxor.u32 %v3199, 2147483648
        %v3202 = vmul.f32 %v3200, 1.442695
        %v3203 = vpow.pop %v3202
        %v3204 = vmul.f32 %v3201, 1.442695
        %v3205 = vpow.pop %v3204
        %v3206 = vadd.f32 %v3203, 1.0
        %v3207 = vadd.f32 %v3205, 1.0
        %v3208 = vrcp.pop %v3206
        %v3209 = vmul.f32 %v3206, %v3208
        %v3210 = vsub.f32 1.0, %v3209
        %v3211 = vmul.f32 %v3208, %v3210
        %v3212 = vadd.f32 %v3208, %v3211
        %vm3213 = vweird.f32 %v3206
        %vm3214 = vweird.f32 %v3208
        %vm3215 = vmor %vm3213, %vm3214
        %v3216 = vsel %vm3215, %v3208, %v3212
        %v3217 = vand.u32 2147483647, %v3206
        %vm3218 = vcmp.eq.f32.partialorder %v3217, 8.507059e+37
        %v3219 = vand.u32 %v3206, 2147483648
        %v3220 = vor.u32 1.1754944e-38, %v3219
        %v3221 = vsel %vm3218, %v3220, %v3216
        %v3222 = vmul.f32 1.0, %v3221
        %v3223 = vrcp.pop %v3207
        %v3224 = vmul.f32 %v3207, %v3223
        %v3225 = vsub.f32 1.0, %v3224
        %v3226 = vmul.f32 %v3223, %v3225
        %v3227 = vadd.f32 %v3223, %v3226
        %vm3228 = vweird.f32 %v3207
        %vm3229 = vweird.f32 %v3223
        %vm3230 = vmor %vm3228, %vm3229
        %v3231 = vsel %vm3230, %v3223, %v3227
        %v3232 = vand.u32 2147483647, %v3207
        %vm3233 = vcmp.eq.f32.partialorder %v3232, 8.507059e+37
        %v3234 = vand.u32 %v3207, 2147483648
        %v3235 = vor.u32 1.1754944e-38, %v3234
        %v3236 = vsel %vm3233, %v3235, %v3231
        %v3237 = vmul.f32 1.0, %v3236
        %v3238 = vtanh.pop %v3198
        %v3239 = vtanh.pop %v3199
        %v3240 = vld [vmem:[#allocation3] sm:$0xff]
        %v3241 = vld [vmem:[#allocation3 + $0x8] sm:$0xff]
        %3244 = vrot.lane.b32.xlu0 %v3240, 32
        %v3245 = vpop.permute.xlu0 %3244
        %3246 = vrot.lane.b32.xlu0 %v3241, 32
        %v3247 = vpop.permute.xlu0 %3246
        %v3250 = vmul.f32 %v3222, %v3245
        %v3251 = vmul.f32 %v3237, %v3247
        %3254 = vrot.lane.b32.xlu0 %v3238, 32
        %v3255 = vpop.permute.xlu0 %3254
        %3256 = vrot.lane.b32.xlu0 %v3239, 32
        %v3257 = vpop.permute.xlu0 %3256
        %v3260 = vmul.f32 %v3222, %v3255
        %v3261 = vmul.f32 %v3237, %v3257
        %3264 = vrot.lane.b32.xlu0 %v3260, 32
        %v3265 = vpop.permute.xlu0 %3264
        %3266 = vrot.lane.b32.xlu0 %v3261, 32
        %v3267 = vpop.permute.xlu0 %3266
        %v3270 = vadd.f32 %v3250, %v3265
        %v3271 = vadd.f32 %v3251, %v3267
        %v3272 = vtanh.pop %v3270
        %v3273 = vtanh.pop %v3271
        %3276 = vrot.lane.b32.xlu0 %v3272, 32
        %v3277 = vpop.permute.xlu0 %3276
        %3278 = vrot.lane.b32.xlu0 %v3273, 32
        %v3279 = vpop.permute.xlu0 %3278
        %v3282 = vmul.f32 %v3222, %v3277
        %v3283 = vmul.f32 %v3237, %v3279
        %3286 = vrot.lane.b32.xlu0 %v3270, 96
        %v3287 = vpop.permute.xlu0 %3286
        %3288 = vrot.lane.b32.xlu0 %v3271, 96
        %v3289 = vpop.permute.xlu0 %3288
        %3292 = vst.msk [vmem:[#allocation3] sm:$0xff] %vm502, %v3287
        %3293 = vst.msk [vmem:[#allocation3 + $0x8] sm:$0xff] %vm502, %v3289
        %3296 = vrot.lane.b32.xlu0 %v3282, 64
        %v3297 = vpop.permute.xlu0 %3296
        %3298 = vrot.lane.b32.xlu0 %v3283, 64
        %v3299 = vpop.permute.xlu0 %3298
        %3302 = vst.msk [vmem:[#allocation2] sm:$0xff] %vm502, %v3297
        %3303 = vst.msk [vmem:[#allocation2 + $0x8] sm:$0xff] %vm502, %v3299
        %3304 = vst.msk [vmem:[#allocation5] sm:$0xff] %vm502, %v3297
        %3305 = vst.msk [vmem:[#allocation5 + $0x8] sm:$0xff] %vm502, %v3299
        %v3306 = vld [vmem:[%s719] sm:$0xff]
        %v3307 = vld [vmem:[%s719 + $0x8] sm:$0xff]
        %v3308 = vld [vmem:[#allocation2] sm:$0xff]
        %v3309 = vld [vmem:[#allocation2 + $0x8] sm:$0xff]
        %v3310 = vpack.c.bf16 %v3309, %v3308
        %v3312 = vsel %vm502, %v3310, 0
        %3314 = vmatpush.bf16.msra.mxu0 0
        %3315 = vmatpush.bf16.msra.mxu0 0
        %3316 = vmatpush.bf16.msra.mxu0 0
        %3317 = vmatpush.bf16.msra.mxu0 0
        %3318 = vmatpush.bf16.msra.mxu0 0
        %3319 = vmatpush.bf16.msra.mxu0 0
        %3320 = vmatpush.bf16.msra.mxu0 %v3178
        %3321 = vmatpush.bf16.msra.mxu0 %v3177
        %3322 = vmatmul.bf16.gmra.mxu0 %v3312
        %v3323 = vpop.f32.mrf.mxu0
        %v3324 = vadd.f32 0.0, %v3323
        %v3325 = vpop.f32.mrf.mxu0
        %v3326 = vadd.f32 0.0, %v3325
        %3327 = vdwg.mxu0
        %v3328 = vadd.f32 %v3306, %v3324
        %v3329 = vadd.f32 %v3307, %v3326
        %v3330 = vxor.u32 %v3328, 2147483648
        %v3331 = vxor.u32 %v3329, 2147483648
        %v3332 = vmul.f32 %v3330, 1.442695
        %v3333 = vpow.pop %v3332
        %v3334 = vmul.f32 %v3331, 1.442695
        %v3335 = vpow.pop %v3334
        %v3336 = vadd.f32 %v3333, 1.0
        %v3337 = vadd.f32 %v3335, 1.0
        %v3338 = vrcp.pop %v3336
        %v3339 = vmul.f32 %v3336, %v3338
        %v3340 = vsub.f32 1.0, %v3339
        %v3341 = vmul.f32 %v3338, %v3340
        %v3342 = vadd.f32 %v3338, %v3341
        %vm3343 = vweird.f32 %v3336
        %vm3344 = vweird.f32 %v3338
        %vm3345 = vmor %vm3343, %vm3344
        %v3346 = vsel %vm3345, %v3338, %v3342
        %v3347 = vand.u32 2147483647, %v3336
        %vm3348 = vcmp.eq.f32.partialorder %v3347, 8.507059e+37
        %v3349 = vand.u32 %v3336, 2147483648
        %v3350 = vor.u32 1.1754944e-38, %v3349
        %v3351 = vsel %vm3348, %v3350, %v3346
        %v3352 = vmul.f32 1.0, %v3351
        %v3353 = vrcp.pop %v3337
        %v3354 = vmul.f32 %v3337, %v3353
        %v3355 = vsub.f32 1.0, %v3354
        %v3356 = vmul.f32 %v3353, %v3355
        %v3357 = vadd.f32 %v3353, %v3356
        %vm3358 = vweird.f32 %v3337
        %vm3359 = vweird.f32 %v3353
        %vm3360 = vmor %vm3358, %vm3359
        %v3361 = vsel %vm3360, %v3353, %v3357
        %v3362 = vand.u32 2147483647, %v3337
        %vm3363 = vcmp.eq.f32.partialorder %v3362, 8.507059e+37
        %v3364 = vand.u32 %v3337, 2147483648
        %v3365 = vor.u32 1.1754944e-38, %v3364
        %v3366 = vsel %vm3363, %v3365, %v3361
        %v3367 = vmul.f32 1.0, %v3366
        %v3368 = vtanh.pop %v3328
        %v3369 = vtanh.pop %v3329
        %v3370 = vld [vmem:[#allocation3] sm:$0xff]
        %v3371 = vld [vmem:[#allocation3 + $0x8] sm:$0xff]
        %3374 = vrot.lane.b32.xlu0 %v3370, 32
        %v3375 = vpop.permute.xlu0 %3374
        %3376 = vrot.lane.b32.xlu0 %v3371, 32
        %v3377 = vpop.permute.xlu0 %3376
        %v3380 = vmul.f32 %v3352, %v3375
        %v3381 = vmul.f32 %v3367, %v3377
        %3384 = vrot.lane.b32.xlu0 %v3368, 32
        %v3385 = vpop.permute.xlu0 %3384
        %3386 = vrot.lane.b32.xlu0 %v3369, 32
        %v3387 = vpop.permute.xlu0 %3386
        %v3390 = vmul.f32 %v3352, %v3385
        %v3391 = vmul.f32 %v3367, %v3387
        %3394 = vrot.lane.b32.xlu0 %v3390, 32
        %v3395 = vpop.permute.xlu0 %3394
        %3396 = vrot.lane.b32.xlu0 %v3391, 32
        %v3397 = vpop.permute.xlu0 %3396
        %v3400 = vadd.f32 %v3380, %v3395
        %v3401 = vadd.f32 %v3381, %v3397
        %v3402 = vtanh.pop %v3400
        %v3403 = vtanh.pop %v3401
        %3406 = vrot.lane.b32.xlu0 %v3402, 32
        %v3407 = vpop.permute.xlu0 %3406
        %3408 = vrot.lane.b32.xlu0 %v3403, 32
        %v3409 = vpop.permute.xlu0 %3408
        %v3412 = vmul.f32 %v3352, %v3407
        %v3413 = vmul.f32 %v3367, %v3409
        %3416 = vrot.lane.b32.xlu0 %v3400, 96
        %v3417 = vpop.permute.xlu0 %3416
        %3418 = vrot.lane.b32.xlu0 %v3401, 96
        %v3419 = vpop.permute.xlu0 %3418
        %3422 = vst.msk [vmem:[#allocation3] sm:$0xff] %vm502, %v3417
        %3423 = vst.msk [vmem:[#allocation3 + $0x8] sm:$0xff] %vm502, %v3419
        %3426 = vrot.lane.b32.xlu0 %v3412, 64
        %v3427 = vpop.permute.xlu0 %3426
        %3428 = vrot.lane.b32.xlu0 %v3413, 64
        %v3429 = vpop.permute.xlu0 %3428
        %3432 = vst.msk [vmem:[#allocation2] sm:$0xff] %vm502, %v3427
        %3433 = vst.msk [vmem:[#allocation2 + $0x8] sm:$0xff] %vm502, %v3429
        %3434 = vst.msk [vmem:[%s848] sm:$0xff] %vm502, %v3427
        %3435 = vst.msk [vmem:[%s848 + $0x8] sm:$0xff] %vm502, %v3429
        %v3436 = vld [vmem:[%s851] sm:$0xff]
        %v3437 = vld [vmem:[%s851 + $0x8] sm:$0xff]
        %v3438 = vld [vmem:[#allocation2] sm:$0xff]
        %v3439 = vld [vmem:[#allocation2 + $0x8] sm:$0xff]
        %v3440 = vpack.c.bf16 %v3439, %v3438
        %v3442 = vsel %vm502, %v3440, 0
        %3444 = vmatpush.bf16.msra.mxu0 0
        %3445 = vmatpush.bf16.msra.mxu0 0
        %3446 = vmatpush.bf16.msra.mxu0 0
        %3447 = vmatpush.bf16.msra.mxu0 0
        %3448 = vmatpush.bf16.msra.mxu0 0
        %3449 = vmatpush.bf16.msra.mxu0 0
        %3450 = vmatpush.bf16.msra.mxu0 %v3178
        %3451 = vmatpush.bf16.msra.mxu0 %v3177
        %3452 = vmatmul.bf16.gmra.mxu0 %v3442
        %v3453 = vpop.f32.mrf.mxu0
        %v3454 = vadd.f32 0.0, %v3453
        %v3455 = vpop.f32.mrf.mxu0
        %v3456 = vadd.f32 0.0, %v3455
        %3457 = vdwg.mxu0
        %v3458 = vadd.f32 %v3436, %v3454
        %v3459 = vadd.f32 %v3437, %v3456
        %v3460 = vxor.u32 %v3458, 2147483648
        %v3461 = vxor.u32 %v3459, 2147483648
        %v3462 = vmul.f32 %v3460, 1.442695
        %v3463 = vpow.pop %v3462
        %v3464 = vmul.f32 %v3461, 1.442695
        %v3465 = vpow.pop %v3464
        %v3466 = vadd.f32 %v3463, 1.0
        %v3467 = vadd.f32 %v3465, 1.0
        %v3468 = vrcp.pop %v3466
        %v3469 = vmul.f32 %v3466, %v3468
        %v3470 = vsub.f32 1.0, %v3469
        %v3471 = vmul.f32 %v3468, %v3470
        %v3472 = vadd.f32 %v3468, %v3471
        %vm3473 = vweird.f32 %v3466
        %vm3474 = vweird.f32 %v3468
        %vm3475 = vmor %vm3473, %vm3474
        %v3476 = vsel %vm3475, %v3468, %v3472
        %v3477 = vand.u32 2147483647, %v3466
        %vm3478 = vcmp.eq.f32.partialorder %v3477, 8.507059e+37
        %v3479 = vand.u32 %v3466, 2147483648
        %v3480 = vor.u32 1.1754944e-38, %v3479
        %v3481 = vsel %vm3478, %v3480, %v3476
        %v3482 = vmul.f32 1.0, %v3481
        %v3483 = vrcp.pop %v3467
        %v3484 = vmul.f32 %v3467, %v3483
        %v3485 = vsub.f32 1.0, %v3484
        %v3486 = vmul.f32 %v3483, %v3485
        %v3487 = vadd.f32 %v3483, %v3486
        %vm3488 = vweird.f32 %v3467
        %vm3489 = vweird.f32 %v3483
        %vm3490 = vmor %vm3488, %vm3489
        %v3491 = vsel %vm3490, %v3483, %v3487
        %v3492 = vand.u32 2147483647, %v3467
        %vm3493 = vcmp.eq.f32.partialorder %v3492, 8.507059e+37
        %v3494 = vand.u32 %v3467, 2147483648
        %v3495 = vor.u32 1.1754944e-38, %v3494
        %v3496 = vsel %vm3493, %v3495, %v3491
        %v3497 = vmul.f32 1.0, %v3496
        %v3498 = vtanh.pop %v3458
        %v3499 = vtanh.pop %v3459
        %v3500 = vld [vmem:[#allocation3] sm:$0xff]
        %v3501 = vld [vmem:[#allocation3 + $0x8] sm:$0xff]
        %3504 = vrot.lane.b32.xlu0 %v3500, 32
        %v3505 = vpop.permute.xlu0 %3504
        %3506 = vrot.lane.b32.xlu0 %v3501, 32
        %v3507 = vpop.permute.xlu0 %3506
        %v3510 = vmul.f32 %v3482, %v3505
        %v3511 = vmul.f32 %v3497, %v3507
        %3514 = vrot.lane.b32.xlu0 %v3498, 32
        %v3515 = vpop.permute.xlu0 %3514
        %3516 = vrot.lane.b32.xlu0 %v3499, 32
        %v3517 = vpop.permute.xlu0 %3516
        %v3520 = vmul.f32 %v3482, %v3515
        %v3521 = vmul.f32 %v3497, %v3517
        %3524 = vrot.lane.b32.xlu0 %v3520, 32
        %v3525 = vpop.permute.xlu0 %3524
        %3526 = vrot.lane.b32.xlu0 %v3521, 32
        %v3527 = vpop.permute.xlu0 %3526
        %v3530 = vadd.f32 %v3510, %v3525
        %v3531 = vadd.f32 %v3511, %v3527
        %v3532 = vtanh.pop %v3530
        %v3533 = vtanh.pop %v3531
        %3536 = vrot.lane.b32.xlu0 %v3532, 32
        %v3537 = vpop.permute.xlu0 %3536
        %3538 = vrot.lane.b32.xlu0 %v3533, 32
        %v3539 = vpop.permute.xlu0 %3538
        %v3542 = vmul.f32 %v3482, %v3537
        %v3543 = vmul.f32 %v3497, %v3539
        %3546 = vrot.lane.b32.xlu0 %v3530, 96
        %v3547 = vpop.permute.xlu0 %3546
        %3548 = vrot.lane.b32.xlu0 %v3531, 96
        %v3549 = vpop.permute.xlu0 %3548
        %3552 = vst.msk [vmem:[#allocation3] sm:$0xff] %vm502, %v3547
        %3553 = vst.msk [vmem:[#allocation3 + $0x8] sm:$0xff] %vm502, %v3549
        %3556 = vrot.lane.b32.xlu0 %v3542, 64
        %v3557 = vpop.permute.xlu0 %3556
        %3558 = vrot.lane.b32.xlu0 %v3543, 64
        %v3559 = vpop.permute.xlu0 %3558
        %3562 = vst.msk [vmem:[#allocation2] sm:$0xff] %vm502, %v3557
        %3563 = vst.msk [vmem:[#allocation2 + $0x8] sm:$0xff] %vm502, %v3559
        %3564 = vst.msk [vmem:[%s980] sm:$0xff] %vm502, %v3557
        %3565 = vst.msk [vmem:[%s980 + $0x8] sm:$0xff] %vm502, %v3559
        %v3566 = vld [vmem:[#allocation5] sm:$0xff]
        %v3567 = vld [vmem:[#allocation5 + $0x8] sm:$0xff]
        %v3568 = vld [vmem:[#allocation5 + $0x10] sm:$0xff]
        %v3569 = vld [vmem:[#allocation5 + $0x18] sm:$0xff]
        %v3570 = vld [vmem:[#allocation5 + $0x20] sm:$0xff]
        %v3571 = vld [vmem:[#allocation5 + $0x28] sm:$0xff]
        %v3572 = vpack.c.bf16 %v3566, %v3566
        %v3573 = vpack.c.bf16 %v3567, %v3567
        %v3574 = vpack.c.bf16 %v3568, %v3568
        %v3575 = vpack.c.bf16 %v3569, %v3569
        %v3576 = vpack.c.bf16 %v3570, %v3570
        %v3577 = vpack.c.bf16 %v3571, %v3571
        %3578 = vst.msk [vmem:[#allocation6] sm:$0xf] %vm995, %v3572
        %3579 = vst.msk [vmem:[#allocation6 + $0x4] sm:$0xf] %vm995, %v3573
        %3580 = vst.msk [vmem:[#allocation6 + $0x8] sm:$0xf] %vm995, %v3574
        %3581 = vst.msk [vmem:[#allocation6 + $0xc] sm:$0xf] %vm995, %v3575
        %3582 = vst.msk [vmem:[#allocation6 + $0x10] sm:$0xf] %vm995, %v3576
        %3583 = vst.msk [vmem:[#allocation6 + $0x14] sm:$0xf] %vm995, %v3577
        %v3584 = vld [vmem:[#allocation6 + $0x18] sm:$0xf]
        %v3585 = vld [vmem:[#allocation6 + $0x1c] sm:$0xf]
        %v3586 = vld [vmem:[#allocation6 + $0x20] sm:$0xf]
        %v3587 = vld [vmem:[#allocation6 + $0x24] sm:$0xf]
        %v3588 = vld [vmem:[#allocation6 + $0x28] sm:$0xf]
        %v3589 = vld [vmem:[#allocation6 + $0x2c] sm:$0xf]
        %v3596 = vunpack.c.l.b16 %v3584
        %v3597 = vunpack.c.l.b16 %v3585
        %v3598 = vunpack.c.l.b16 %v3586
        %v3599 = vunpack.c.l.b16 %v3587
        %v3600 = vunpack.c.l.b16 %v3588
        %v3601 = vunpack.c.l.b16 %v3589
        %v3602 = vpack.c.b16 %v3597, %v3596
        %v3603 = vpack.c.b16 %v3599, %v3598
        %v3604 = vpack.c.b16 %v3601, %v3600
        %v3606 = vsel %vm502, %v3602, 0
        %v3609 = vsel %vm502, %v3603, 0
        %v3612 = vsel %vm502, %v3604, 0
        %3614 = vmatpush.bf16.msra.mxu0 0
        %3615 = vmatpush.bf16.msra.mxu0 0
        %3616 = vmatpush.bf16.msra.mxu0 0
        %3617 = vmatpush.bf16.msra.mxu0 0
        %3618 = vmatpush.bf16.msra.mxu0 0
        %3619 = vmatpush.bf16.msra.mxu0 0
        %3620 = vmatpush.bf16.msra.mxu0 %v3122
        %3621 = vmatpush.bf16.msra.mxu0 %v3121
        %3622 = vmatmul.bf16.gmra.mxu0 %v3606
        %v3623 = vpop.f32.mrf.mxu0
        %v3624 = vadd.f32 %v3096, %v3623
        %v3625 = vpop.f32.mrf.mxu0
        %v3626 = vadd.f32 %v3096, %v3625
        %3627 = vmatmul.bf16.gmra.mxu0 %v3609
        %v3628 = vpop.f32.mrf.mxu0
        %v3629 = vadd.f32 %v3096, %v3628
        %v3630 = vpop.f32.mrf.mxu0
        %v3631 = vadd.f32 %v3096, %v3630
        %3632 = vmatmul.bf16.gmra.mxu0 %v3612
        %v3633 = vpop.f32.mrf.mxu0
        %v3634 = vadd.f32 %v3096, %v3633
        %v3635 = vpop.f32.mrf.mxu0
        %v3636 = vadd.f32 %v3096, %v3635
        %3637 = vdwg.mxu0
        %3638 = vst [vmem:[#allocation4] sm:$0xff] %v3624
        %3639 = vst [vmem:[#allocation4 + $0x8] sm:$0xff] %v3626
        %3640 = vst [vmem:[#allocation4 + $0x10] sm:$0xff] %v3629
        %3641 = vst [vmem:[#allocation4 + $0x18] sm:$0xff] %v3631
        %3642 = vst [vmem:[#allocation4 + $0x20] sm:$0xff] %v3634
        %3643 = vst [vmem:[#allocation4 + $0x28] sm:$0xff] %v3636
        %v3644 = vld [vmem:[#allocation4] sm:$0xff]
        %v3645 = vld [vmem:[#allocation4 + $0x8] sm:$0xff]
        %v3646 = vld [vmem:[#allocation2] sm:$0xff]
        %v3647 = vld [vmem:[#allocation2 + $0x8] sm:$0xff]
        %v3648 = vpack.c.bf16 %v3647, %v3646
        %v3650 = vsel %vm502, %v3648, 0
        %3652 = vmatpush.bf16.msra.mxu0 0
        %3653 = vmatpush.bf16.msra.mxu0 0
        %3654 = vmatpush.bf16.msra.mxu0 0
        %3655 = vmatpush.bf16.msra.mxu0 0
        %3656 = vmatpush.bf16.msra.mxu0 0
        %3657 = vmatpush.bf16.msra.mxu0 0
        %3658 = vmatpush.bf16.msra.mxu0 %v3178
        %3659 = vmatpush.bf16.msra.mxu0 %v3177
        %3660 = vmatmul.bf16.gmra.mxu0 %v3650
        %v3661 = vpop.f32.mrf.mxu0
        %v3662 = vadd.f32 0.0, %v3661
        %v3663 = vpop.f32.mrf.mxu0
        %v3664 = vadd.f32 0.0, %v3663
        %3665 = vdwg.mxu0
        %v3666 = vadd.f32 %v3644, %v3662
        %v3667 = vadd.f32 %v3645, %v3664
        %v3668 = vxor.u32 %v3666, 2147483648
        %v3669 = vxor.u32 %v3667, 2147483648
        %v3670 = vmul.f32 %v3668, 1.442695
        %v3671 = vpow.pop %v3670
        %v3672 = vmul.f32 %v3669, 1.442695
        %v3673 = vpow.pop %v3672
        %v3674 = vadd.f32 %v3671, 1.0
        %v3675 = vadd.f32 %v3673, 1.0
        %v3676 = vrcp.pop %v3674
        %v3677 = vmul.f32 %v3674, %v3676
        %v3678 = vsub.f32 1.0, %v3677
        %v3679 = vmul.f32 %v3676, %v3678
        %v3680 = vadd.f32 %v3676, %v3679
        %vm3681 = vweird.f32 %v3674
        %vm3682 = vweird.f32 %v3676
        %vm3683 = vmor %vm3681, %vm3682
        %v3684 = vsel %vm3683, %v3676, %v3680
        %v3685 = vand.u32 2147483647, %v3674
        %vm3686 = vcmp.eq.f32.partialorder %v3685, 8.507059e+37
        %v3687 = vand.u32 %v3674, 2147483648
        %v3688 = vor.u32 1.1754944e-38, %v3687
        %v3689 = vsel %vm3686, %v3688, %v3684
        %v3690 = vmul.f32 1.0, %v3689
        %v3691 = vrcp.pop %v3675
        %v3692 = vmul.f32 %v3675, %v3691
        %v3693 = vsub.f32 1.0, %v3692
        %v3694 = vmul.f32 %v3691, %v3693
        %v3695 = vadd.f32 %v3691, %v3694
        %vm3696 = vweird.f32 %v3675
        %vm3697 = vweird.f32 %v3691
        %vm3698 = vmor %vm3696, %vm3697
        %v3699 = vsel %vm3698, %v3691, %v3695
        %v3700 = vand.u32 2147483647, %v3675
        %vm3701 = vcmp.eq.f32.partialorder %v3700, 8.507059e+37
        %v3702 = vand.u32 %v3675, 2147483648
        %v3703 = vor.u32 1.1754944e-38, %v3702
        %v3704 = vsel %vm3701, %v3703, %v3699
        %v3705 = vmul.f32 1.0, %v3704
        %v3706 = vtanh.pop %v3666
        %v3707 = vtanh.pop %v3667
        %v3708 = vld [vmem:[#allocation3] sm:$0xff]
        %v3709 = vld [vmem:[#allocation3 + $0x8] sm:$0xff]
        %3712 = vrot.lane.b32.xlu0 %v3708, 32
        %v3713 = vpop.permute.xlu0 %3712
        %3714 = vrot.lane.b32.xlu0 %v3709, 32
        %v3715 = vpop.permute.xlu0 %3714
        %v3718 = vmul.f32 %v3690, %v3713
        %v3719 = vmul.f32 %v3705, %v3715
        %3722 = vrot.lane.b32.xlu0 %v3706, 32
        %v3723 = vpop.permute.xlu0 %3722
        %3724 = vrot.lane.b32.xlu0 %v3707, 32
        %v3725 = vpop.permute.xlu0 %3724
        %v3728 = vmul.f32 %v3690, %v3723
        %v3729 = vmul.f32 %v3705, %v3725
        %3732 = vrot.lane.b32.xlu0 %v3728, 32
        %v3733 = vpop.permute.xlu0 %3732
        %3734 = vrot.lane.b32.xlu0 %v3729, 32
        %v3735 = vpop.permute.xlu0 %3734
        %v3738 = vadd.f32 %v3718, %v3733
        %v3739 = vadd.f32 %v3719, %v3735
        %v3740 = vtanh.pop %v3738
        %v3741 = vtanh.pop %v3739
        %3744 = vrot.lane.b32.xlu0 %v3740, 32
        %v3745 = vpop.permute.xlu0 %3744
        %3746 = vrot.lane.b32.xlu0 %v3741, 32
        %v3747 = vpop.permute.xlu0 %3746
        %v3750 = vmul.f32 %v3690, %v3745
        %v3751 = vmul.f32 %v3705, %v3747
        %3754 = vrot.lane.b32.xlu0 %v3738, 96
        %v3755 = vpop.permute.xlu0 %3754
        %3756 = vrot.lane.b32.xlu0 %v3739, 96
        %v3757 = vpop.permute.xlu0 %3756
        %3760 = vst.msk [vmem:[#allocation3] sm:$0xff] %vm502, %v3755
        %3761 = vst.msk [vmem:[#allocation3 + $0x8] sm:$0xff] %vm502, %v3757
        %3764 = vrot.lane.b32.xlu0 %v3750, 64
        %v3765 = vpop.permute.xlu0 %3764
        %3766 = vrot.lane.b32.xlu0 %v3751, 64
        %v3767 = vpop.permute.xlu0 %3766
        %3770 = vst.msk [vmem:[#allocation2] sm:$0xff] %vm502, %v3765
        %3771 = vst.msk [vmem:[#allocation2 + $0x8] sm:$0xff] %vm502, %v3767
        %3772 = vst.msk [vmem:[#allocation5] sm:$0xff] %vm502, %v3765
        %3773 = vst.msk [vmem:[#allocation5 + $0x8] sm:$0xff] %vm502, %v3767
        %v3774 = vld [vmem:[%s719] sm:$0xff]
        %v3775 = vld [vmem:[%s719 + $0x8] sm:$0xff]
        %v3776 = vld [vmem:[#allocation2] sm:$0xff]
        %v3777 = vld [vmem:[#allocation2 + $0x8] sm:$0xff]
        %v3778 = vpack.c.bf16 %v3777, %v3776
        %v3780 = vsel %vm502, %v3778, 0
        %3782 = vmatpush.bf16.msra.mxu0 0
        %3783 = vmatpush.bf16.msra.mxu0 0
        %3784 = vmatpush.bf16.msra.mxu0 0
        %3785 = vmatpush.bf16.msra.mxu0 0
        %3786 = vmatpush.bf16.msra.mxu0 0
        %3787 = vmatpush.bf16.msra.mxu0 0
        %3788 = vmatpush.bf16.msra.mxu0 %v3178
        %3789 = vmatpush.bf16.msra.mxu0 %v3177
        %3790 = vmatmul.bf16.gmra.mxu0 %v3780
        %v3791 = vpop.f32.mrf.mxu0
        %v3792 = vadd.f32 0.0, %v3791
        %v3793 = vpop.f32.mrf.mxu0
        %v3794 = vadd.f32 0.0, %v3793
        %3795 = vdwg.mxu0
        %v3796 = vadd.f32 %v3774, %v3792
        %v3797 = vadd.f32 %v3775, %v3794
        %v3798 = vxor.u32 %v3796, 2147483648
        %v3799 = vxor.u32 %v3797, 2147483648
        %v3800 = vmul.f32 %v3798, 1.442695
        %v3801 = vpow.pop %v3800
        %v3802 = vmul.f32 %v3799, 1.442695
        %v3803 = vpow.pop %v3802
        %v3804 = vadd.f32 %v3801, 1.0
        %v3805 = vadd.f32 %v3803, 1.0
        %v3806 = vrcp.pop %v3804
        %v3807 = vmul.f32 %v3804, %v3806
        %v3808 = vsub.f32 1.0, %v3807
        %v3809 = vmul.f32 %v3806, %v3808
        %v3810 = vadd.f32 %v3806, %v3809
        %vm3811 = vweird.f32 %v3804
        %vm3812 = vweird.f32 %v3806
        %vm3813 = vmor %vm3811, %vm3812
        %v3814 = vsel %vm3813, %v3806, %v3810
        %v3815 = vand.u32 2147483647, %v3804
        %vm3816 = vcmp.eq.f32.partialorder %v3815, 8.507059e+37
        %v3817 = vand.u32 %v3804, 2147483648
        %v3818 = vor.u32 1.1754944e-38, %v3817
        %v3819 = vsel %vm3816, %v3818, %v3814
        %v3820 = vmul.f32 1.0, %v3819
        %v3821 = vrcp.pop %v3805
        %v3822 = vmul.f32 %v3805, %v3821
        %v3823 = vsub.f32 1.0, %v3822
        %v3824 = vmul.f32 %v3821, %v3823
        %v3825 = vadd.f32 %v3821, %v3824
        %vm3826 = vweird.f32 %v3805
        %vm3827 = vweird.f32 %v3821
        %vm3828 = vmor %vm3826, %vm3827
        %v3829 = vsel %vm3828, %v3821, %v3825
        %v3830 = vand.u32 2147483647, %v3805
        %vm3831 = vcmp.eq.f32.partialorder %v3830, 8.507059e+37
        %v3832 = vand.u32 %v3805, 2147483648
        %v3833 = vor.u32 1.1754944e-38, %v3832
        %v3834 = vsel %vm3831, %v3833, %v3829
        %v3835 = vmul.f32 1.0, %v3834
        %v3836 = vtanh.pop %v3796
        %v3837 = vtanh.pop %v3797
        %v3838 = vld [vmem:[#allocation3] sm:$0xff]
        %v3839 = vld [vmem:[#allocation3 + $0x8] sm:$0xff]
        %3842 = vrot.lane.b32.xlu0 %v3838, 32
        %v3843 = vpop.permute.xlu0 %3842
        %3844 = vrot.lane.b32.xlu0 %v3839, 32
        %v3845 = vpop.permute.xlu0 %3844
        %v3848 = vmul.f32 %v3820, %v3843
        %v3849 = vmul.f32 %v3835, %v3845
        %3852 = vrot.lane.b32.xlu0 %v3836, 32
        %v3853 = vpop.permute.xlu0 %3852
        %3854 = vrot.lane.b32.xlu0 %v3837, 32
        %v3855 = vpop.permute.xlu0 %3854
        %v3858 = vmul.f32 %v3820, %v3853
        %v3859 = vmul.f32 %v3835, %v3855
        %3862 = vrot.lane.b32.xlu0 %v3858, 32
        %v3863 = vpop.permute.xlu0 %3862
        %3864 = vrot.lane.b32.xlu0 %v3859, 32
        %v3865 = vpop.permute.xlu0 %3864
        %v3868 = vadd.f32 %v3848, %v3863
        %v3869 = vadd.f32 %v3849, %v3865
        %v3870 = vtanh.pop %v3868
        %v3871 = vtanh.pop %v3869
        %3874 = vrot.lane.b32.xlu0 %v3870, 32
        %v3875 = vpop.permute.xlu0 %3874
        %3876 = vrot.lane.b32.xlu0 %v3871, 32
        %v3877 = vpop.permute.xlu0 %3876
        %v3880 = vmul.f32 %v3820, %v3875
        %v3881 = vmul.f32 %v3835, %v3877
        %3884 = vrot.lane.b32.xlu0 %v3868, 96
        %v3885 = vpop.permute.xlu0 %3884
        %3886 = vrot.lane.b32.xlu0 %v3869, 96
        %v3887 = vpop.permute.xlu0 %3886
        %3890 = vst.msk [vmem:[#allocation3] sm:$0xff] %vm502, %v3885
        %3891 = vst.msk [vmem:[#allocation3 + $0x8] sm:$0xff] %vm502, %v3887
        %3894 = vrot.lane.b32.xlu0 %v3880, 64
        %v3895 = vpop.permute.xlu0 %3894
        %3896 = vrot.lane.b32.xlu0 %v3881, 64
        %v3897 = vpop.permute.xlu0 %3896
        %3900 = vst.msk [vmem:[#allocation2] sm:$0xff] %vm502, %v3895
        %3901 = vst.msk [vmem:[#allocation2 + $0x8] sm:$0xff] %vm502, %v3897
        %3902 = vst.msk [vmem:[%s848] sm:$0xff] %vm502, %v3895
        %3903 = vst.msk [vmem:[%s848 + $0x8] sm:$0xff] %vm502, %v3897
        %v3904 = vld [vmem:[%s851] sm:$0xff]
        %v3905 = vld [vmem:[%s851 + $0x8] sm:$0xff]
        %v3906 = vld [vmem:[#allocation2] sm:$0xff]
        %v3907 = vld [vmem:[#allocation2 + $0x8] sm:$0xff]
        %v3908 = vpack.c.bf16 %v3907, %v3906
        %v3910 = vsel %vm502, %v3908, 0
        %3912 = vmatpush.bf16.msra.mxu0 0
        %3913 = vmatpush.bf16.msra.mxu0 0
        %3914 = vmatpush.bf16.msra.mxu0 0
        %3915 = vmatpush.bf16.msra.mxu0 0
        %3916 = vmatpush.bf16.msra.mxu0 0
        %3917 = vmatpush.bf16.msra.mxu0 0
        %3918 = vmatpush.bf16.msra.mxu0 %v3178
        %3919 = vmatpush.bf16.msra.mxu0 %v3177
        %3920 = vmatmul.bf16.gmra.mxu0 %v3910
        %v3921 = vpop.f32.mrf.mxu0
        %v3922 = vadd.f32 0.0, %v3921
        %v3923 = vpop.f32.mrf.mxu0
        %v3924 = vadd.f32 0.0, %v3923
        %3925 = vdwg.mxu0
        %v3926 = vadd.f32 %v3904, %v3922
        %v3927 = vadd.f32 %v3905, %v3924
        %v3928 = vxor.u32 %v3926, 2147483648
        %v3929 = vxor.u32 %v3927, 2147483648
        %v3930 = vmul.f32 %v3928, 1.442695
        %v3931 = vpow.pop %v3930
        %v3932 = vmul.f32 %v3929, 1.442695
        %v3933 = vpow.pop %v3932
        %v3934 = vadd.f32 %v3931, 1.0
        %v3935 = vadd.f32 %v3933, 1.0
        %v3936 = vrcp.pop %v3934
        %v3937 = vmul.f32 %v3934, %v3936
        %v3938 = vsub.f32 1.0, %v3937
        %v3939 = vmul.f32 %v3936, %v3938
        %v3940 = vadd.f32 %v3936, %v3939
        %vm3941 = vweird.f32 %v3934
        %vm3942 = vweird.f32 %v3936
        %vm3943 = vmor %vm3941, %vm3942
        %v3944 = vsel %vm3943, %v3936, %v3940
        %v3945 = vand.u32 2147483647, %v3934
        %vm3946 = vcmp.eq.f32.partialorder %v3945, 8.507059e+37
        %v3947 = vand.u32 %v3934, 2147483648
        %v3948 = vor.u32 1.1754944e-38, %v3947
        %v3949 = vsel %vm3946, %v3948, %v3944
        %v3950 = vmul.f32 1.0, %v3949
        %v3951 = vrcp.pop %v3935
        %v3952 = vmul.f32 %v3935, %v3951
        %v3953 = vsub.f32 1.0, %v3952
        %v3954 = vmul.f32 %v3951, %v3953
        %v3955 = vadd.f32 %v3951, %v3954
        %vm3956 = vweird.f32 %v3935
        %vm3957 = vweird.f32 %v3951
        %vm3958 = vmor %vm3956, %vm3957
        %v3959 = vsel %vm3958, %v3951, %v3955
        %v3960 = vand.u32 2147483647, %v3935
        %vm3961 = vcmp.eq.f32.partialorder %v3960, 8.507059e+37
        %v3962 = vand.u32 %v3935, 2147483648
        %v3963 = vor.u32 1.1754944e-38, %v3962
        %v3964 = vsel %vm3961, %v3963, %v3959
        %v3965 = vmul.f32 1.0, %v3964
        %v3966 = vtanh.pop %v3926
        %v3967 = vtanh.pop %v3927
        %v3968 = vld [vmem:[#allocation3] sm:$0xff]
        %v3969 = vld [vmem:[#allocation3 + $0x8] sm:$0xff]
        %3972 = vrot.lane.b32.xlu0 %v3968, 32
        %v3973 = vpop.permute.xlu0 %3972
        %3974 = vrot.lane.b32.xlu0 %v3969, 32
        %v3975 = vpop.permute.xlu0 %3974
        %v3978 = vmul.f32 %v3950, %v3973
        %v3979 = vmul.f32 %v3965, %v3975
        %3982 = vrot.lane.b32.xlu0 %v3966, 32
        %v3983 = vpop.permute.xlu0 %3982
        %3984 = vrot.lane.b32.xlu0 %v3967, 32
        %v3985 = vpop.permute.xlu0 %3984
        %v3988 = vmul.f32 %v3950, %v3983
        %v3989 = vmul.f32 %v3965, %v3985
        %3992 = vrot.lane.b32.xlu0 %v3988, 32
        %v3993 = vpop.permute.xlu0 %3992
        %3994 = vrot.lane.b32.xlu0 %v3989, 32
        %v3995 = vpop.permute.xlu0 %3994
        %v3998 = vadd.f32 %v3978, %v3993
        %v3999 = vadd.f32 %v3979, %v3995
        %v4000 = vtanh.pop %v3998
        %v4001 = vtanh.pop %v3999
        %4004 = vrot.lane.b32.xlu0 %v4000, 32
        %v4005 = vpop.permute.xlu0 %4004
        %4006 = vrot.lane.b32.xlu0 %v4001, 32
        %v4007 = vpop.permute.xlu0 %4006
        %v4010 = vmul.f32 %v3950, %v4005
        %v4011 = vmul.f32 %v3965, %v4007
        %4014 = vrot.lane.b32.xlu0 %v3998, 96
        %v4015 = vpop.permute.xlu0 %4014
        %4016 = vrot.lane.b32.xlu0 %v3999, 96
        %v4017 = vpop.permute.xlu0 %4016
        %4020 = vst.msk [vmem:[#allocation3] sm:$0xff] %vm502, %v4015
        %4021 = vst.msk [vmem:[#allocation3 + $0x8] sm:$0xff] %vm502, %v4017
        %4024 = vrot.lane.b32.xlu0 %v4010, 64
        %v4025 = vpop.permute.xlu0 %4024
        %4026 = vrot.lane.b32.xlu0 %v4011, 64
        %v4027 = vpop.permute.xlu0 %4026
        %4030 = vst.msk [vmem:[#allocation2] sm:$0xff] %vm502, %v4025
        %4031 = vst.msk [vmem:[#allocation2 + $0x8] sm:$0xff] %vm502, %v4027
        %4032 = vst.msk [vmem:[%s980] sm:$0xff] %vm502, %v4025
        %4033 = vst.msk [vmem:[%s980 + $0x8] sm:$0xff] %vm502, %v4027
        %v4034 = vld [vmem:[#allocation5] sm:$0xff]
        %v4035 = vld [vmem:[#allocation5 + $0x8] sm:$0xff]
        %v4036 = vld [vmem:[#allocation5 + $0x10] sm:$0xff]
        %v4037 = vld [vmem:[#allocation5 + $0x18] sm:$0xff]
        %v4038 = vld [vmem:[#allocation5 + $0x20] sm:$0xff]
        %v4039 = vld [vmem:[#allocation5 + $0x28] sm:$0xff]
        %v4040 = vpack.c.bf16 %v4034, %v4034
        %v4041 = vpack.c.bf16 %v4035, %v4035
        %v4042 = vpack.c.bf16 %v4036, %v4036
        %v4043 = vpack.c.bf16 %v4037, %v4037
        %v4044 = vpack.c.bf16 %v4038, %v4038
        %v4045 = vpack.c.bf16 %v4039, %v4039
        %4046 = vst.msk [vmem:[#allocation6 + $0x18] sm:$0xf] %vm995, %v4040
        %4047 = vst.msk [vmem:[#allocation6 + $0x1c] sm:$0xf] %vm995, %v4041
        %4048 = vst.msk [vmem:[#allocation6 + $0x20] sm:$0xf] %vm995, %v4042
        %4049 = vst.msk [vmem:[#allocation6 + $0x24] sm:$0xf] %vm995, %v4043
        %4050 = vst.msk [vmem:[#allocation6 + $0x28] sm:$0xf] %vm995, %v4044
        %4051 = vst.msk [vmem:[#allocation6 + $0x2c] sm:$0xf] %vm995, %v4045
        %v4052 = vld [vmem:[#allocation6 + $0x30] sm:$0xf]
        %v4053 = vld [vmem:[#allocation6 + $0x34] sm:$0xf]
        %v4054 = vld [vmem:[#allocation6 + $0x38] sm:$0xf]
        %v4055 = vld [vmem:[#allocation6 + $0x3c] sm:$0xf]
        %v4060 = vunpack.c.l.b16 %v4052
        %v4061 = vunpack.c.l.b16 %v4053
        %v4062 = vunpack.c.l.b16 %v4054
        %v4063 = vunpack.c.l.b16 %v4055
        %v4064 = vpack.c.b16 %v4061, %v4060
        %v4065 = vpack.c.b16 %v4063, %v4062
        %v4067 = vsel %vm502, %v4064, 0
        %v4070 = vsel %vm502, %v4065, 0
        %4072 = vmatpush.bf16.msra.mxu0 0
        %4073 = vmatpush.bf16.msra.mxu0 0
        %4074 = vmatpush.bf16.msra.mxu0 0
        %4075 = vmatpush.bf16.msra.mxu0 0
        %4076 = vmatpush.bf16.msra.mxu0 0
        %4077 = vmatpush.bf16.msra.mxu0 0
        %4078 = vmatpush.bf16.msra.mxu0 %v3122
        %4079 = vmatpush.bf16.msra.mxu0 %v3121
        %4080 = vmatmul.bf16.gmra.mxu0 %v4067
        %v4081 = vpop.f32.mrf.mxu0
        %v4082 = vadd.f32 %v3096, %v4081
        %v4083 = vpop.f32.mrf.mxu0
        %v4084 = vadd.f32 %v3096, %v4083
        %4085 = vmatmul.bf16.gmra.mxu0 %v4070
        %v4086 = vpop.f32.mrf.mxu0
        %v4087 = vadd.f32 %v3096, %v4086
        %v4088 = vpop.f32.mrf.mxu0
        %v4089 = vadd.f32 %v3096, %v4088
        %4090 = vdwg.mxu0
        %4091 = vst [vmem:[#allocation4] sm:$0xff] %v4082
        %4092 = vst [vmem:[#allocation4 + $0x8] sm:$0xff] %v4084
        %4093 = vst [vmem:[#allocation4 + $0x10] sm:$0xff] %v4087
        %4094 = vst [vmem:[#allocation4 + $0x18] sm:$0xff] %v4089
        %v4095 = vld [vmem:[#allocation4] sm:$0xff]
        %v4096 = vld [vmem:[#allocation4 + $0x8] sm:$0xff]
        %v4097 = vld [vmem:[#allocation2] sm:$0xff]
        %v4098 = vld [vmem:[#allocation2 + $0x8] sm:$0xff]
        %v4099 = vpack.c.bf16 %v4098, %v4097
        %v4101 = vsel %vm502, %v4099, 0
        %4103 = vmatpush.bf16.msra.mxu0 0
        %4104 = vmatpush.bf16.msra.mxu0 0
        %4105 = vmatpush.bf16.msra.mxu0 0
        %4106 = vmatpush.bf16.msra.mxu0 0
        %4107 = vmatpush.bf16.msra.mxu0 0
        %4108 = vmatpush.bf16.msra.mxu0 0
        %4109 = vmatpush.bf16.msra.mxu0 %v3178
        %4110 = vmatpush.bf16.msra.mxu0 %v3177
        %4111 = vmatmul.bf16.gmra.mxu0 %v4101
        %v4112 = vpop.f32.mrf.mxu0
        %v4113 = vadd.f32 0.0, %v4112
        %v4114 = vpop.f32.mrf.mxu0
        %v4115 = vadd.f32 0.0, %v4114
        %4116 = vdwg.mxu0
        %v4117 = vadd.f32 %v4095, %v4113
        %v4118 = vadd.f32 %v4096, %v4115
        %v4119 = vxor.u32 %v4117, 2147483648
        %v4120 = vxor.u32 %v4118, 2147483648
        %v4121 = vmul.f32 %v4119, 1.442695
        %v4122 = vpow.pop %v4121
        %v4123 = vmul.f32 %v4120, 1.442695
        %v4124 = vpow.pop %v4123
        %v4125 = vadd.f32 %v4122, 1.0
        %v4126 = vadd.f32 %v4124, 1.0
        %v4127 = vrcp.pop %v4125
        %v4128 = vmul.f32 %v4125, %v4127
        %v4129 = vsub.f32 1.0, %v4128
        %v4130 = vmul.f32 %v4127, %v4129
        %v4131 = vadd.f32 %v4127, %v4130
        %vm4132 = vweird.f32 %v4125
        %vm4133 = vweird.f32 %v4127
        %vm4134 = vmor %vm4132, %vm4133
        %v4135 = vsel %vm4134, %v4127, %v4131
        %v4136 = vand.u32 2147483647, %v4125
        %vm4137 = vcmp.eq.f32.partialorder %v4136, 8.507059e+37
        %v4138 = vand.u32 %v4125, 2147483648
        %v4139 = vor.u32 1.1754944e-38, %v4138
        %v4140 = vsel %vm4137, %v4139, %v4135
        %v4141 = vmul.f32 1.0, %v4140
        %v4142 = vrcp.pop %v4126
        %v4143 = vmul.f32 %v4126, %v4142
        %v4144 = vsub.f32 1.0, %v4143
        %v4145 = vmul.f32 %v4142, %v4144
        %v4146 = vadd.f32 %v4142, %v4145
        %vm4147 = vweird.f32 %v4126
        %vm4148 = vweird.f32 %v4142
        %vm4149 = vmor %vm4147, %vm4148
        %v4150 = vsel %vm4149, %v4142, %v4146
        %v4151 = vand.u32 2147483647, %v4126
        %vm4152 = vcmp.eq.f32.partialorder %v4151, 8.507059e+37
        %v4153 = vand.u32 %v4126, 2147483648
        %v4154 = vor.u32 1.1754944e-38, %v4153
        %v4155 = vsel %vm4152, %v4154, %v4150
        %v4156 = vmul.f32 1.0, %v4155
        %v4157 = vtanh.pop %v4117
        %v4158 = vtanh.pop %v4118
        %v4159 = vld [vmem:[#allocation3] sm:$0xff]
        %v4160 = vld [vmem:[#allocation3 + $0x8] sm:$0xff]
        %4163 = vrot.lane.b32.xlu0 %v4159, 32
        %v4164 = vpop.permute.xlu0 %4163
        %4165 = vrot.lane.b32.xlu0 %v4160, 32
        %v4166 = vpop.permute.xlu0 %4165
        %v4169 = vmul.f32 %v4141, %v4164
        %v4170 = vmul.f32 %v4156, %v4166
        %4173 = vrot.lane.b32.xlu0 %v4157, 32
        %v4174 = vpop.permute.xlu0 %4173
        %4175 = vrot.lane.b32.xlu0 %v4158, 32
        %v4176 = vpop.permute.xlu0 %4175
        %v4179 = vmul.f32 %v4141, %v4174
        %v4180 = vmul.f32 %v4156, %v4176
        %4183 = vrot.lane.b32.xlu0 %v4179, 32
        %v4184 = vpop.permute.xlu0 %4183
        %4185 = vrot.lane.b32.xlu0 %v4180, 32
        %v4186 = vpop.permute.xlu0 %4185
        %v4189 = vadd.f32 %v4169, %v4184
        %v4190 = vadd.f32 %v4170, %v4186
        %v4191 = vtanh.pop %v4189
        %v4192 = vtanh.pop %v4190
        %4195 = vrot.lane.b32.xlu0 %v4191, 32
        %v4196 = vpop.permute.xlu0 %4195
        %4197 = vrot.lane.b32.xlu0 %v4192, 32
        %v4198 = vpop.permute.xlu0 %4197
        %v4201 = vmul.f32 %v4141, %v4196
        %v4202 = vmul.f32 %v4156, %v4198
        %4205 = vrot.lane.b32.xlu0 %v4189, 96
        %v4206 = vpop.permute.xlu0 %4205
        %4207 = vrot.lane.b32.xlu0 %v4190, 96
        %v4208 = vpop.permute.xlu0 %4207
        %4211 = vst.msk [vmem:[#allocation3] sm:$0xff] %vm502, %v4206
        %4212 = vst.msk [vmem:[#allocation3 + $0x8] sm:$0xff] %vm502, %v4208
        %4215 = vrot.lane.b32.xlu0 %v4201, 64
        %v4216 = vpop.permute.xlu0 %4215
        %4217 = vrot.lane.b32.xlu0 %v4202, 64
        %v4218 = vpop.permute.xlu0 %4217
        %4221 = vst.msk [vmem:[#allocation2] sm:$0xff] %vm502, %v4216
        %4222 = vst.msk [vmem:[#allocation2 + $0x8] sm:$0xff] %vm502, %v4218
        %4223 = vst.msk [vmem:[#allocation5] sm:$0xff] %vm502, %v4216
        %4224 = vst.msk [vmem:[#allocation5 + $0x8] sm:$0xff] %vm502, %v4218
        %v4225 = vld [vmem:[%s719] sm:$0xff]
        %v4226 = vld [vmem:[%s719 + $0x8] sm:$0xff]
        %v4227 = vld [vmem:[#allocation2] sm:$0xff]
        %v4228 = vld [vmem:[#allocation2 + $0x8] sm:$0xff]
        %v4229 = vpack.c.bf16 %v4228, %v4227
        %v4231 = vsel %vm502, %v4229, 0
        %4233 = vmatpush.bf16.msra.mxu0 0
        %4234 = vmatpush.bf16.msra.mxu0 0
        %4235 = vmatpush.bf16.msra.mxu0 0
        %4236 = vmatpush.bf16.msra.mxu0 0
        %4237 = vmatpush.bf16.msra.mxu0 0
        %4238 = vmatpush.bf16.msra.mxu0 0
        %4239 = vmatpush.bf16.msra.mxu0 %v3178
        %4240 = vmatpush.bf16.msra.mxu0 %v3177
        %4241 = vmatmul.bf16.gmra.mxu0 %v4231
        %v4242 = vpop.f32.mrf.mxu0
        %v4243 = vadd.f32 0.0, %v4242
        %v4244 = vpop.f32.mrf.mxu0
        %v4245 = vadd.f32 0.0, %v4244
        %4246 = vdwg.mxu0
        %v4247 = vadd.f32 %v4225, %v4243
        %v4248 = vadd.f32 %v4226, %v4245
        %v4249 = vxor.u32 %v4247, 2147483648
        %v4250 = vxor.u32 %v4248, 2147483648
        %v4251 = vmul.f32 %v4249, 1.442695
        %v4252 = vpow.pop %v4251
        %v4253 = vmul.f32 %v4250, 1.442695
        %v4254 = vpow.pop %v4253
        %v4255 = vadd.f32 %v4252, 1.0
        %v4256 = vadd.f32 %v4254, 1.0
        %v4257 = vrcp.pop %v4255
        %v4258 = vmul.f32 %v4255, %v4257
        %v4259 = vsub.f32 1.0, %v4258
        %v4260 = vmul.f32 %v4257, %v4259
        %v4261 = vadd.f32 %v4257, %v4260
        %vm4262 = vweird.f32 %v4255
        %vm4263 = vweird.f32 %v4257
        %vm4264 = vmor %vm4262, %vm4263
        %v4265 = vsel %vm4264, %v4257, %v4261
        %v4266 = vand.u32 2147483647, %v4255
        %vm4267 = vcmp.eq.f32.partialorder %v4266, 8.507059e+37
        %v4268 = vand.u32 %v4255, 2147483648
        %v4269 = vor.u32 1.1754944e-38, %v4268
        %v4270 = vsel %vm4267, %v4269, %v4265
        %v4271 = vmul.f32 1.0, %v4270
        %v4272 = vrcp.pop %v4256
        %v4273 = vmul.f32 %v4256, %v4272
        %v4274 = vsub.f32 1.0, %v4273
        %v4275 = vmul.f32 %v4272, %v4274
        %v4276 = vadd.f32 %v4272, %v4275
        %vm4277 = vweird.f32 %v4256
        %vm4278 = vweird.f32 %v4272
        %vm4279 = vmor %vm4277, %vm4278
        %v4280 = vsel %vm4279, %v4272, %v4276
        %v4281 = vand.u32 2147483647, %v4256
        %vm4282 = vcmp.eq.f32.partialorder %v4281, 8.507059e+37
        %v4283 = vand.u32 %v4256, 2147483648
        %v4284 = vor.u32 1.1754944e-38, %v4283
        %v4285 = vsel %vm4282, %v4284, %v4280
        %v4286 = vmul.f32 1.0, %v4285
        %v4287 = vtanh.pop %v4247
        %v4288 = vtanh.pop %v4248
        %v4289 = vld [vmem:[#allocation3] sm:$0xff]
        %v4290 = vld [vmem:[#allocation3 + $0x8] sm:$0xff]
        %4293 = vrot.lane.b32.xlu0 %v4289, 32
        %v4294 = vpop.permute.xlu0 %4293
        %4295 = vrot.lane.b32.xlu0 %v4290, 32
        %v4296 = vpop.permute.xlu0 %4295
        %v4299 = vmul.f32 %v4271, %v4294
        %v4300 = vmul.f32 %v4286, %v4296
        %4303 = vrot.lane.b32.xlu0 %v4287, 32
        %v4304 = vpop.permute.xlu0 %4303
        %4305 = vrot.lane.b32.xlu0 %v4288, 32
        %v4306 = vpop.permute.xlu0 %4305
        %v4309 = vmul.f32 %v4271, %v4304
        %v4310 = vmul.f32 %v4286, %v4306
        %4313 = vrot.lane.b32.xlu0 %v4309, 32
        %v4314 = vpop.permute.xlu0 %4313
        %4315 = vrot.lane.b32.xlu0 %v4310, 32
        %v4316 = vpop.permute.xlu0 %4315
        %v4319 = vadd.f32 %v4299, %v4314
        %v4320 = vadd.f32 %v4300, %v4316
        %v4321 = vtanh.pop %v4319
        %v4322 = vtanh.pop %v4320
        %4325 = vrot.lane.b32.xlu0 %v4321, 32
        %v4326 = vpop.permute.xlu0 %4325
        %4327 = vrot.lane.b32.xlu0 %v4322, 32
        %v4328 = vpop.permute.xlu0 %4327
        %v4331 = vmul.f32 %v4271, %v4326
        %v4332 = vmul.f32 %v4286, %v4328
        %4335 = vrot.lane.b32.xlu0 %v4319, 96
        %v4336 = vpop.permute.xlu0 %4335
        %4337 = vrot.lane.b32.xlu0 %v4320, 96
        %v4338 = vpop.permute.xlu0 %4337
        %4341 = vst.msk [vmem:[#allocation3] sm:$0xff] %vm502, %v4336
        %4342 = vst.msk [vmem:[#allocation3 + $0x8] sm:$0xff] %vm502, %v4338
        %4345 = vrot.lane.b32.xlu0 %v4331, 64
        %v4346 = vpop.permute.xlu0 %4345
        %4347 = vrot.lane.b32.xlu0 %v4332, 64
        %v4348 = vpop.permute.xlu0 %4347
        %4351 = vst.msk [vmem:[#allocation2] sm:$0xff] %vm502, %v4346
        %4352 = vst.msk [vmem:[#allocation2 + $0x8] sm:$0xff] %vm502, %v4348
        %4353 = vst.msk [vmem:[%s848] sm:$0xff] %vm502, %v4346
        %4354 = vst.msk [vmem:[%s848 + $0x8] sm:$0xff] %vm502, %v4348
        %v4355 = vld [vmem:[#allocation5] sm:$0xff]
        %v4356 = vld [vmem:[#allocation5 + $0x8] sm:$0xff]
        %v4357 = vld [vmem:[#allocation5 + $0x10] sm:$0xff]
        %v4358 = vld [vmem:[#allocation5 + $0x18] sm:$0xff]
        %v4359 = vpack.c.bf16 %v4355, %v4355
        %v4360 = vpack.c.bf16 %v4356, %v4356
        %v4361 = vpack.c.bf16 %v4357, %v4357
        %v4362 = vpack.c.bf16 %v4358, %v4358
        %4363 = vst.msk [vmem:[#allocation6 + $0x30] sm:$0xf] %vm995, %v4359
        %4364 = vst.msk [vmem:[#allocation6 + $0x34] sm:$0xf] %vm995, %v4360
        %4365 = vst.msk [vmem:[#allocation6 + $0x38] sm:$0xf] %vm995, %v4361
        %4366 = vst.msk [vmem:[#allocation6 + $0x3c] sm:$0xf] %vm995, %v4362
        %v4367 = vld [vmem:[%s10] sm:$0xf]
        %v4368 = vld [vmem:[%s10 + $0x4] sm:$0xf]
        %v4369 = vld [vmem:[%s10 + $0x8] sm:$0xf]
        %v4370 = vld [vmem:[%s10 + $0xc] sm:$0xf]
        %v4371 = vld [vmem:[%s11] sm:$0xf]
        %v4372 = vld [vmem:[%s11 + $0x4] sm:$0xf]
        %v4373 = vld [vmem:[%s11 + $0x8] sm:$0xf]
        %v4374 = vld [vmem:[%s11 + $0xc] sm:$0xf]
        %v4375 = vld [vmem:[%s12] sm:$0x1]
        %4376 = vst.msk [vmem:[#allocation2] sm:$0xff] %vm502, 0.0
        %4377 = vst.msk [vmem:[#allocation2 + $0x8] sm:$0xff] %vm502, 0.0
        %4378 = vst.msk [vmem:[#allocation3] sm:$0xff] %vm502, 0.0
        %4379 = vst.msk [vmem:[#allocation3 + $0x8] sm:$0xff] %vm502, 0.0
        %v4380 = vld [vmem:[#allocation6] sm:$0xf]
        %v4381 = vld [vmem:[#allocation6 + $0x4] sm:$0xf]
        %v4382 = vld [vmem:[#allocation6 + $0x8] sm:$0xf]
        %v4383 = vld [vmem:[#allocation6 + $0xc] sm:$0xf]
        %v4384 = vld [vmem:[#allocation6 + $0x10] sm:$0xf]
        %v4385 = vld [vmem:[#allocation6 + $0x14] sm:$0xf]
        %v4387 = vperm.slane %v4375, 0
        %v4395 = vunpack.c.l.b16 %v4380
        %v4396 = vunpack.c.l.b16 %v4381
        %v4397 = vunpack.c.l.b16 %v4382
        %v4398 = vunpack.c.l.b16 %v4383
        %v4399 = vunpack.c.l.b16 %v4384
        %v4400 = vunpack.c.l.b16 %v4385
        %v4401 = vpack.c.b16 %v4396, %v4395
        %v4402 = vpack.c.b16 %v4398, %v4397
        %v4403 = vpack.c.b16 %v4400, %v4399
        %v4408 = vunpack.c.l.b16 %v4367
        %v4409 = vunpack.c.l.b16 %v4368
        %v4410 = vunpack.c.l.b16 %v4369
        %v4411 = vunpack.c.l.b16 %v4370
        %v4412 = vpack.c.b16 %v4409, %v4408
        %v4413 = vpack.c.b16 %v4411, %v4410
        %v4417 = vsel %vm502, %v4401, 0
        %v4420 = vsel %vm502, %v4402, 0
        %v4423 = vsel %vm502, %v4403, 0
        %4425 = vmatpush.bf16.msra.mxu0 0
        %4426 = vmatpush.bf16.msra.mxu0 0
        %4427 = vmatpush.bf16.msra.mxu0 0
        %4428 = vmatpush.bf16.msra.mxu0 0
        %4429 = vmatpush.bf16.msra.mxu0 0
        %4430 = vmatpush.bf16.msra.mxu0 0
        %4431 = vmatpush.bf16.msra.mxu0 %v4413
        %4432 = vmatpush.bf16.msra.mxu0 %v4412
        %4433 = vmatmul.bf16.gmra.mxu0 %v4417
        %v4434 = vpop.f32.mrf.mxu0
        %v4435 = vadd.f32 %v4387, %v4434
        %v4436 = vpop.f32.mrf.mxu0
        %v4437 = vadd.f32 %v4387, %v4436
        %4438 = vmatmul.bf16.gmra.mxu0 %v4420
        %v4439 = vpop.f32.mrf.mxu0
        %v4440 = vadd.f32 %v4387, %v4439
        %v4441 = vpop.f32.mrf.mxu0
        %v4442 = vadd.f32 %v4387, %v4441
        %4443 = vmatmul.bf16.gmra.mxu0 %v4423
        %v4444 = vpop.f32.mrf.mxu0
        %v4445 = vadd.f32 %v4387, %v4444
        %v4446 = vpop.f32.mrf.mxu0
        %v4447 = vadd.f32 %v4387, %v4446
        %4448 = vdwg.mxu0
        %4449 = vst [vmem:[#allocation4] sm:$0xff] %v4435
        %4450 = vst [vmem:[#allocation4 + $0x8] sm:$0xff] %v4437
        %4451 = vst [vmem:[#allocation4 + $0x10] sm:$0xff] %v4440
        %4452 = vst [vmem:[#allocation4 + $0x18] sm:$0xff] %v4442
        %4453 = vst [vmem:[#allocation4 + $0x20] sm:$0xff] %v4445
        %4454 = vst [vmem:[#allocation4 + $0x28] sm:$0xff] %v4447
        %v4455 = vld [vmem:[#allocation4] sm:$0xff]
        %v4456 = vld [vmem:[#allocation4 + $0x8] sm:$0xff]
        %v4457 = vld [vmem:[#allocation2] sm:$0xff]
        %v4458 = vld [vmem:[#allocation2 + $0x8] sm:$0xff]
        %v4459 = vpack.c.bf16 %v4458, %v4457
        %v4464 = vunpack.c.l.b16 %v4371
        %v4465 = vunpack.c.l.b16 %v4372
        %v4466 = vunpack.c.l.b16 %v4373
        %v4467 = vunpack.c.l.b16 %v4374
        %v4468 = vpack.c.b16 %v4465, %v4464
        %v4469 = vpack.c.b16 %v4467, %v4466
        %v4473 = vsel %vm502, %v4459, 0
        %4475 = vmatpush.bf16.msra.mxu0 0
        %4476 = vmatpush.bf16.msra.mxu0 0
        %4477 = vmatpush.bf16.msra.mxu0 0
        %4478 = vmatpush.bf16.msra.mxu0 0
        %4479 = vmatpush.bf16.msra.mxu0 0
        %4480 = vmatpush.bf16.msra.mxu0 0
        %4481 = vmatpush.bf16.msra.mxu0 %v4469
        %4482 = vmatpush.bf16.msra.mxu0 %v4468
        %4483 = vmatmul.bf16.gmra.mxu0 %v4473
        %v4484 = vpop.f32.mrf.mxu0
        %v4485 = vadd.f32 0.0, %v4484
        %v4486 = vpop.f32.mrf.mxu0
        %v4487 = vadd.f32 0.0, %v4486
        %4488 = vdwg.mxu0
        %v4489 = vadd.f32 %v4455, %v4485
        %v4490 = vadd.f32 %v4456, %v4487
        %v4491 = vxor.u32 %v4489, 2147483648
        %v4492 = vxor.u32 %v4490, 2147483648
        %v4493 = vmul.f32 %v4491, 1.442695
        %v4494 = vpow.pop %v4493
        %v4495 = vmul.f32 %v4492, 1.442695
        %v4496 = vpow.pop %v4495
        %v4497 = vadd.f32 %v4494, 1.0
        %v4498 = vadd.f32 %v4496, 1.0
        %v4499 = vrcp.pop %v4497
        %v4500 = vmul.f32 %v4497, %v4499
        %v4501 = vsub.f32 1.0, %v4500
        %v4502 = vmul.f32 %v4499, %v4501
        %v4503 = vadd.f32 %v4499, %v4502
        %vm4504 = vweird.f32 %v4497
        %vm4505 = vweird.f32 %v4499
        %vm4506 = vmor %vm4504, %vm4505
        %v4507 = vsel %vm4506, %v4499, %v4503
        %v4508 = vand.u32 2147483647, %v4497
        %vm4509 = vcmp.eq.f32.partialorder %v4508, 8.507059e+37
        %v4510 = vand.u32 %v4497, 2147483648
        %v4511 = vor.u32 1.1754944e-38, %v4510
        %v4512 = vsel %vm4509, %v4511, %v4507
        %v4513 = vmul.f32 1.0, %v4512
        %v4514 = vrcp.pop %v4498
        %v4515 = vmul.f32 %v4498, %v4514
        %v4516 = vsub.f32 1.0, %v4515
        %v4517 = vmul.f32 %v4514, %v4516
        %v4518 = vadd.f32 %v4514, %v4517
        %vm4519 = vweird.f32 %v4498
        %vm4520 = vweird.f32 %v4514
        %vm4521 = vmor %vm4519, %vm4520
        %v4522 = vsel %vm4521, %v4514, %v4518
        %v4523 = vand.u32 2147483647, %v4498
        %vm4524 = vcmp.eq.f32.partialorder %v4523, 8.507059e+37
        %v4525 = vand.u32 %v4498, 2147483648
        %v4526 = vor.u32 1.1754944e-38, %v4525
        %v4527 = vsel %vm4524, %v4526, %v4522
        %v4528 = vmul.f32 1.0, %v4527
        %v4529 = vtanh.pop %v4489
        %v4530 = vtanh.pop %v4490
        %v4531 = vld [vmem:[#allocation3] sm:$0xff]
        %v4532 = vld [vmem:[#allocation3 + $0x8] sm:$0xff]
        %4535 = vrot.lane.b32.xlu0 %v4531, 32
        %v4536 = vpop.permute.xlu0 %4535
        %4537 = vrot.lane.b32.xlu0 %v4532, 32
        %v4538 = vpop.permute.xlu0 %4537
        %v4541 = vmul.f32 %v4513, %v4536
        %v4542 = vmul.f32 %v4528, %v4538
        %4545 = vrot.lane.b32.xlu0 %v4529, 32
        %v4546 = vpop.permute.xlu0 %4545
        %4547 = vrot.lane.b32.xlu0 %v4530, 32
        %v4548 = vpop.permute.xlu0 %4547
        %v4551 = vmul.f32 %v4513, %v4546
        %v4552 = vmul.f32 %v4528, %v4548
        %4555 = vrot.lane.b32.xlu0 %v4551, 32
        %v4556 = vpop.permute.xlu0 %4555
        %4557 = vrot.lane.b32.xlu0 %v4552, 32
        %v4558 = vpop.permute.xlu0 %4557
        %v4561 = vadd.f32 %v4541, %v4556
        %v4562 = vadd.f32 %v4542, %v4558
        %v4563 = vtanh.pop %v4561
        %v4564 = vtanh.pop %v4562
        %4567 = vrot.lane.b32.xlu0 %v4563, 32
        %v4568 = vpop.permute.xlu0 %4567
        %4569 = vrot.lane.b32.xlu0 %v4564, 32
        %v4570 = vpop.permute.xlu0 %4569
        %v4573 = vmul.f32 %v4513, %v4568
        %v4574 = vmul.f32 %v4528, %v4570
        %4577 = vrot.lane.b32.xlu0 %v4561, 96
        %v4578 = vpop.permute.xlu0 %4577
        %4579 = vrot.lane.b32.xlu0 %v4562, 96
        %v4580 = vpop.permute.xlu0 %4579
        %4583 = vst.msk [vmem:[#allocation3] sm:$0xff] %vm502, %v4578
        %4584 = vst.msk [vmem:[#allocation3 + $0x8] sm:$0xff] %vm502, %v4580
        %4587 = vrot.lane.b32.xlu0 %v4573, 64
        %v4588 = vpop.permute.xlu0 %4587
        %4589 = vrot.lane.b32.xlu0 %v4574, 64
        %v4590 = vpop.permute.xlu0 %4589
        %4593 = vst.msk [vmem:[#allocation2] sm:$0xff] %vm502, %v4588
        %4594 = vst.msk [vmem:[#allocation2 + $0x8] sm:$0xff] %vm502, %v4590
        %v4595 = vld [vmem:[%s719] sm:$0xff]
        %v4596 = vld [vmem:[%s719 + $0x8] sm:$0xff]
        %v4597 = vld [vmem:[#allocation2] sm:$0xff]
        %v4598 = vld [vmem:[#allocation2 + $0x8] sm:$0xff]
        %v4599 = vpack.c.bf16 %v4598, %v4597
        %v4601 = vsel %vm502, %v4599, 0
        %4603 = vmatpush.bf16.msra.mxu0 0
        %4604 = vmatpush.bf16.msra.mxu0 0
        %4605 = vmatpush.bf16.msra.mxu0 0
        %4606 = vmatpush.bf16.msra.mxu0 0
        %4607 = vmatpush.bf16.msra.mxu0 0
        %4608 = vmatpush.bf16.msra.mxu0 0
        %4609 = vmatpush.bf16.msra.mxu0 %v4469
        %4610 = vmatpush.bf16.msra.mxu0 %v4468
        %4611 = vmatmul.bf16.gmra.mxu0 %v4601
        %v4612 = vpop.f32.mrf.mxu0
        %v4613 = vadd.f32 0.0, %v4612
        %v4614 = vpop.f32.mrf.mxu0
        %v4615 = vadd.f32 0.0, %v4614
        %4616 = vdwg.mxu0
        %v4617 = vadd.f32 %v4595, %v4613
        %v4618 = vadd.f32 %v4596, %v4615
        %v4619 = vxor.u32 %v4617, 2147483648
        %v4620 = vxor.u32 %v4618, 2147483648
        %v4621 = vmul.f32 %v4619, 1.442695
        %v4622 = vpow.pop %v4621
        %v4623 = vmul.f32 %v4620, 1.442695
        %v4624 = vpow.pop %v4623
        %v4625 = vadd.f32 %v4622, 1.0
        %v4626 = vadd.f32 %v4624, 1.0
        %v4627 = vrcp.pop %v4625
        %v4628 = vmul.f32 %v4625, %v4627
        %v4629 = vsub.f32 1.0, %v4628
        %v4630 = vmul.f32 %v4627, %v4629
        %v4631 = vadd.f32 %v4627, %v4630
        %vm4632 = vweird.f32 %v4625
        %vm4633 = vweird.f32 %v4627
        %vm4634 = vmor %vm4632, %vm4633
        %v4635 = vsel %vm4634, %v4627, %v4631
        %v4636 = vand.u32 2147483647, %v4625
        %vm4637 = vcmp.eq.f32.partialorder %v4636, 8.507059e+37
        %v4638 = vand.u32 %v4625, 2147483648
        %v4639 = vor.u32 1.1754944e-38, %v4638
        %v4640 = vsel %vm4637, %v4639, %v4635
        %v4641 = vmul.f32 1.0, %v4640
        %v4642 = vrcp.pop %v4626
        %v4643 = vmul.f32 %v4626, %v4642
        %v4644 = vsub.f32 1.0, %v4643
        %v4645 = vmul.f32 %v4642, %v4644
        %v4646 = vadd.f32 %v4642, %v4645
        %vm4647 = vweird.f32 %v4626
        %vm4648 = vweird.f32 %v4642
        %vm4649 = vmor %vm4647, %vm4648
        %v4650 = vsel %vm4649, %v4642, %v4646
        %v4651 = vand.u32 2147483647, %v4626
        %vm4652 = vcmp.eq.f32.partialorder %v4651, 8.507059e+37
        %v4653 = vand.u32 %v4626, 2147483648
        %v4654 = vor.u32 1.1754944e-38, %v4653
        %v4655 = vsel %vm4652, %v4654, %v4650
        %v4656 = vmul.f32 1.0, %v4655
        %v4657 = vtanh.pop %v4617
        %v4658 = vtanh.pop %v4618
        %v4659 = vld [vmem:[#allocation3] sm:$0xff]
        %v4660 = vld [vmem:[#allocation3 + $0x8] sm:$0xff]
        %4663 = vrot.lane.b32.xlu0 %v4659, 32
        %v4664 = vpop.permute.xlu0 %4663
        %4665 = vrot.lane.b32.xlu0 %v4660, 32
        %v4666 = vpop.permute.xlu0 %4665
        %v4669 = vmul.f32 %v4641, %v4664
        %v4670 = vmul.f32 %v4656, %v4666
        %4673 = vrot.lane.b32.xlu0 %v4657, 32
        %v4674 = vpop.permute.xlu0 %4673
        %4675 = vrot.lane.b32.xlu0 %v4658, 32
        %v4676 = vpop.permute.xlu0 %4675
        %v4679 = vmul.f32 %v4641, %v4674
        %v4680 = vmul.f32 %v4656, %v4676
        %4683 = vrot.lane.b32.xlu0 %v4679, 32
        %v4684 = vpop.permute.xlu0 %4683
        %4685 = vrot.lane.b32.xlu0 %v4680, 32
        %v4686 = vpop.permute.xlu0 %4685
        %v4689 = vadd.f32 %v4669, %v4684
        %v4690 = vadd.f32 %v4670, %v4686
        %v4691 = vtanh.pop %v4689
        %v4692 = vtanh.pop %v4690
        %4695 = vrot.lane.b32.xlu0 %v4691, 32
        %v4696 = vpop.permute.xlu0 %4695
        %4697 = vrot.lane.b32.xlu0 %v4692, 32
        %v4698 = vpop.permute.xlu0 %4697
        %v4701 = vmul.f32 %v4641, %v4696
        %v4702 = vmul.f32 %v4656, %v4698
        %4705 = vrot.lane.b32.xlu0 %v4689, 96
        %v4706 = vpop.permute.xlu0 %4705
        %4707 = vrot.lane.b32.xlu0 %v4690, 96
        %v4708 = vpop.permute.xlu0 %4707
        %4711 = vst.msk [vmem:[#allocation3] sm:$0xff] %vm502, %v4706
        %4712 = vst.msk [vmem:[#allocation3 + $0x8] sm:$0xff] %vm502, %v4708
        %4715 = vrot.lane.b32.xlu0 %v4701, 64
        %v4716 = vpop.permute.xlu0 %4715
        %4717 = vrot.lane.b32.xlu0 %v4702, 64
        %v4718 = vpop.permute.xlu0 %4717
        %4721 = vst.msk [vmem:[#allocation2] sm:$0xff] %vm502, %v4716
        %4722 = vst.msk [vmem:[#allocation2 + $0x8] sm:$0xff] %vm502, %v4718
        %v4723 = vld [vmem:[%s851] sm:$0xff]
        %v4724 = vld [vmem:[%s851 + $0x8] sm:$0xff]
        %v4725 = vld [vmem:[#allocation2] sm:$0xff]
        %v4726 = vld [vmem:[#allocation2 + $0x8] sm:$0xff]
        %v4727 = vpack.c.bf16 %v4726, %v4725
        %v4729 = vsel %vm502, %v4727, 0
        %4731 = vmatpush.bf16.msra.mxu0 0
        %4732 = vmatpush.bf16.msra.mxu0 0
        %4733 = vmatpush.bf16.msra.mxu0 0
        %4734 = vmatpush.bf16.msra.mxu0 0
        %4735 = vmatpush.bf16.msra.mxu0 0
        %4736 = vmatpush.bf16.msra.mxu0 0
        %4737 = vmatpush.bf16.msra.mxu0 %v4469
        %4738 = vmatpush.bf16.msra.mxu0 %v4468
        %4739 = vmatmul.bf16.gmra.mxu0 %v4729
        %v4740 = vpop.f32.mrf.mxu0
        %v4741 = vadd.f32 0.0, %v4740
        %v4742 = vpop.f32.mrf.mxu0
        %v4743 = vadd.f32 0.0, %v4742
        %4744 = vdwg.mxu0
        %v4745 = vadd.f32 %v4723, %v4741
        %v4746 = vadd.f32 %v4724, %v4743
        %v4747 = vxor.u32 %v4745, 2147483648
        %v4748 = vxor.u32 %v4746, 2147483648
        %v4749 = vmul.f32 %v4747, 1.442695
        %v4750 = vpow.pop %v4749
        %v4751 = vmul.f32 %v4748, 1.442695
        %v4752 = vpow.pop %v4751
        %v4753 = vadd.f32 %v4750, 1.0
        %v4754 = vadd.f32 %v4752, 1.0
        %v4755 = vrcp.pop %v4753
        %v4756 = vmul.f32 %v4753, %v4755
        %v4757 = vsub.f32 1.0, %v4756
        %v4758 = vmul.f32 %v4755, %v4757
        %v4759 = vadd.f32 %v4755, %v4758
        %vm4760 = vweird.f32 %v4753
        %vm4761 = vweird.f32 %v4755
        %vm4762 = vmor %vm4760, %vm4761
        %v4763 = vsel %vm4762, %v4755, %v4759
        %v4764 = vand.u32 2147483647, %v4753
        %vm4765 = vcmp.eq.f32.partialorder %v4764, 8.507059e+37
        %v4766 = vand.u32 %v4753, 2147483648
        %v4767 = vor.u32 1.1754944e-38, %v4766
        %v4768 = vsel %vm4765, %v4767, %v4763
        %v4769 = vmul.f32 1.0, %v4768
        %v4770 = vrcp.pop %v4754
        %v4771 = vmul.f32 %v4754, %v4770
        %v4772 = vsub.f32 1.0, %v4771
        %v4773 = vmul.f32 %v4770, %v4772
        %v4774 = vadd.f32 %v4770, %v4773
        %vm4775 = vweird.f32 %v4754
        %vm4776 = vweird.f32 %v4770
        %vm4777 = vmor %vm4775, %vm4776
        %v4778 = vsel %vm4777, %v4770, %v4774
        %v4779 = vand.u32 2147483647, %v4754
        %vm4780 = vcmp.eq.f32.partialorder %v4779, 8.507059e+37
        %v4781 = vand.u32 %v4754, 2147483648
        %v4782 = vor.u32 1.1754944e-38, %v4781
        %v4783 = vsel %vm4780, %v4782, %v4778
        %v4784 = vmul.f32 1.0, %v4783
        %v4785 = vtanh.pop %v4745
        %v4786 = vtanh.pop %v4746
        %v4787 = vld [vmem:[#allocation3] sm:$0xff]
        %v4788 = vld [vmem:[#allocation3 + $0x8] sm:$0xff]
        %4791 = vrot.lane.b32.xlu0 %v4787, 32
        %v4792 = vpop.permute.xlu0 %4791
        %4793 = vrot.lane.b32.xlu0 %v4788, 32
        %v4794 = vpop.permute.xlu0 %4793
        %v4797 = vmul.f32 %v4769, %v4792
        %v4798 = vmul.f32 %v4784, %v4794
        %4801 = vrot.lane.b32.xlu0 %v4785, 32
        %v4802 = vpop.permute.xlu0 %4801
        %4803 = vrot.lane.b32.xlu0 %v4786, 32
        %v4804 = vpop.permute.xlu0 %4803
        %v4807 = vmul.f32 %v4769, %v4802
        %v4808 = vmul.f32 %v4784, %v4804
        %4811 = vrot.lane.b32.xlu0 %v4807, 32
        %v4812 = vpop.permute.xlu0 %4811
        %4813 = vrot.lane.b32.xlu0 %v4808, 32
        %v4814 = vpop.permute.xlu0 %4813
        %v4817 = vadd.f32 %v4797, %v4812
        %v4818 = vadd.f32 %v4798, %v4814
        %v4819 = vtanh.pop %v4817
        %v4820 = vtanh.pop %v4818
        %4823 = vrot.lane.b32.xlu0 %v4819, 32
        %v4824 = vpop.permute.xlu0 %4823
        %4825 = vrot.lane.b32.xlu0 %v4820, 32
        %v4826 = vpop.permute.xlu0 %4825
        %v4829 = vmul.f32 %v4769, %v4824
        %v4830 = vmul.f32 %v4784, %v4826
        %4833 = vrot.lane.b32.xlu0 %v4817, 96
        %v4834 = vpop.permute.xlu0 %4833
        %4835 = vrot.lane.b32.xlu0 %v4818, 96
        %v4836 = vpop.permute.xlu0 %4835
        %4839 = vst.msk [vmem:[#allocation3] sm:$0xff] %vm502, %v4834
        %4840 = vst.msk [vmem:[#allocation3 + $0x8] sm:$0xff] %vm502, %v4836
        %4843 = vrot.lane.b32.xlu0 %v4829, 64
        %v4844 = vpop.permute.xlu0 %4843
        %4845 = vrot.lane.b32.xlu0 %v4830, 64
        %v4846 = vpop.permute.xlu0 %4845
        %4849 = vst.msk [vmem:[#allocation2] sm:$0xff] %vm502, %v4844
        %4850 = vst.msk [vmem:[#allocation2 + $0x8] sm:$0xff] %vm502, %v4846
        %v4851 = vld [vmem:[#allocation6 + $0x18] sm:$0xf]
        %v4852 = vld [vmem:[#allocation6 + $0x1c] sm:$0xf]
        %v4853 = vld [vmem:[#allocation6 + $0x20] sm:$0xf]
        %v4854 = vld [vmem:[#allocation6 + $0x24] sm:$0xf]
        %v4855 = vld [vmem:[#allocation6 + $0x28] sm:$0xf]
        %v4856 = vld [vmem:[#allocation6 + $0x2c] sm:$0xf]
        %v4863 = vunpack.c.l.b16 %v4851
        %v4864 = vunpack.c.l.b16 %v4852
        %v4865 = vunpack.c.l.b16 %v4853
        %v4866 = vunpack.c.l.b16 %v4854
        %v4867 = vunpack.c.l.b16 %v4855
        %v4868 = vunpack.c.l.b16 %v4856
        %v4869 = vpack.c.b16 %v4864, %v4863
        %v4870 = vpack.c.b16 %v4866, %v4865
        %v4871 = vpack.c.b16 %v4868, %v4867
        %v4873 = vsel %vm502, %v4869, 0
        %v4876 = vsel %vm502, %v4870, 0
        %v4879 = vsel %vm502, %v4871, 0
        %4881 = vmatpush.bf16.msra.mxu0 0
        %4882 = vmatpush.bf16.msra.mxu0 0
        %4883 = vmatpush.bf16.msra.mxu0 0
        %4884 = vmatpush.bf16.msra.mxu0 0
        %4885 = vmatpush.bf16.msra.mxu0 0
        %4886 = vmatpush.bf16.msra.mxu0 0
        %4887 = vmatpush.bf16.msra.mxu0 %v4413
        %4888 = vmatpush.bf16.msra.mxu0 %v4412
        %4889 = vmatmul.bf16.gmra.mxu0 %v4873
        %v4890 = vpop.f32.mrf.mxu0
        %v4891 = vadd.f32 %v4387, %v4890
        %v4892 = vpop.f32.mrf.mxu0
        %v4893 = vadd.f32 %v4387, %v4892
        %4894 = vmatmul.bf16.gmra.mxu0 %v4876
        %v4895 = vpop.f32.mrf.mxu0
        %v4896 = vadd.f32 %v4387, %v4895
        %v4897 = vpop.f32.mrf.mxu0
        %v4898 = vadd.f32 %v4387, %v4897
        %4899 = vmatmul.bf16.gmra.mxu0 %v4879
        %v4900 = vpop.f32.mrf.mxu0
        %v4901 = vadd.f32 %v4387, %v4900
        %v4902 = vpop.f32.mrf.mxu0
        %v4903 = vadd.f32 %v4387, %v4902
        %4904 = vdwg.mxu0
        %4905 = vst [vmem:[#allocation4] sm:$0xff] %v4891
        %4906 = vst [vmem:[#allocation4 + $0x8] sm:$0xff] %v4893
        %4907 = vst [vmem:[#allocation4 + $0x10] sm:$0xff] %v4896
        %4908 = vst [vmem:[#allocation4 + $0x18] sm:$0xff] %v4898
        %4909 = vst [vmem:[#allocation4 + $0x20] sm:$0xff] %v4901
        %4910 = vst [vmem:[#allocation4 + $0x28] sm:$0xff] %v4903
        %v4911 = vld [vmem:[#allocation4] sm:$0xff]
        %v4912 = vld [vmem:[#allocation4 + $0x8] sm:$0xff]
        %v4913 = vld [vmem:[#allocation2] sm:$0xff]
        %v4914 = vld [vmem:[#allocation2 + $0x8] sm:$0xff]
        %v4915 = vpack.c.bf16 %v4914, %v4913
        %v4917 = vsel %vm502, %v4915, 0
        %4919 = vmatpush.bf16.msra.mxu0 0
        %4920 = vmatpush.bf16.msra.mxu0 0
        %4921 = vmatpush.bf16.msra.mxu0 0
        %4922 = vmatpush.bf16.msra.mxu0 0
        %4923 = vmatpush.bf16.msra.mxu0 0
        %4924 = vmatpush.bf16.msra.mxu0 0
        %4925 = vmatpush.bf16.msra.mxu0 %v4469
        %4926 = vmatpush.bf16.msra.mxu0 %v4468
        %4927 = vmatmul.bf16.gmra.mxu0 %v4917
        %v4928 = vpop.f32.mrf.mxu0
        %v4929 = vadd.f32 0.0, %v4928
        %v4930 = vpop.f32.mrf.mxu0
        %v4931 = vadd.f32 0.0, %v4930
        %4932 = vdwg.mxu0
        %v4933 = vadd.f32 %v4911, %v4929
        %v4934 = vadd.f32 %v4912, %v4931
        %v4935 = vxor.u32 %v4933, 2147483648
        %v4936 = vxor.u32 %v4934, 2147483648
        %v4937 = vmul.f32 %v4935, 1.442695
        %v4938 = vpow.pop %v4937
        %v4939 = vmul.f32 %v4936, 1.442695
        %v4940 = vpow.pop %v4939
        %v4941 = vadd.f32 %v4938, 1.0
        %v4942 = vadd.f32 %v4940, 1.0
        %v4943 = vrcp.pop %v4941
        %v4944 = vmul.f32 %v4941, %v4943
        %v4945 = vsub.f32 1.0, %v4944
        %v4946 = vmul.f32 %v4943, %v4945
        %v4947 = vadd.f32 %v4943, %v4946
        %vm4948 = vweird.f32 %v4941
        %vm4949 = vweird.f32 %v4943
        %vm4950 = vmor %vm4948, %vm4949
        %v4951 = vsel %vm4950, %v4943, %v4947
        %v4952 = vand.u32 2147483647, %v4941
        %vm4953 = vcmp.eq.f32.partialorder %v4952, 8.507059e+37
        %v4954 = vand.u32 %v4941, 2147483648
        %v4955 = vor.u32 1.1754944e-38, %v4954
        %v4956 = vsel %vm4953, %v4955, %v4951
        %v4957 = vmul.f32 1.0, %v4956
        %v4958 = vrcp.pop %v4942
        %v4959 = vmul.f32 %v4942, %v4958
        %v4960 = vsub.f32 1.0, %v4959
        %v4961 = vmul.f32 %v4958, %v4960
        %v4962 = vadd.f32 %v4958, %v4961
        %vm4963 = vweird.f32 %v4942
        %vm4964 = vweird.f32 %v4958
        %vm4965 = vmor %vm4963, %vm4964
        %v4966 = vsel %vm4965, %v4958, %v4962
        %v4967 = vand.u32 2147483647, %v4942
        %vm4968 = vcmp.eq.f32.partialorder %v4967, 8.507059e+37
        %v4969 = vand.u32 %v4942, 2147483648
        %v4970 = vor.u32 1.1754944e-38, %v4969
        %v4971 = vsel %vm4968, %v4970, %v4966
        %v4972 = vmul.f32 1.0, %v4971
        %v4973 = vtanh.pop %v4933
        %v4974 = vtanh.pop %v4934
        %v4975 = vld [vmem:[#allocation3] sm:$0xff]
        %v4976 = vld [vmem:[#allocation3 + $0x8] sm:$0xff]
        %4979 = vrot.lane.b32.xlu0 %v4975, 32
        %v4980 = vpop.permute.xlu0 %4979
        %4981 = vrot.lane.b32.xlu0 %v4976, 32
        %v4982 = vpop.permute.xlu0 %4981
        %v4985 = vmul.f32 %v4957, %v4980
        %v4986 = vmul.f32 %v4972, %v4982
        %4989 = vrot.lane.b32.xlu0 %v4973, 32
        %v4990 = vpop.permute.xlu0 %4989
        %4991 = vrot.lane.b32.xlu0 %v4974, 32
        %v4992 = vpop.permute.xlu0 %4991
        %v4995 = vmul.f32 %v4957, %v4990
        %v4996 = vmul.f32 %v4972, %v4992
        %4999 = vrot.lane.b32.xlu0 %v4995, 32
        %v5000 = vpop.permute.xlu0 %4999
        %5001 = vrot.lane.b32.xlu0 %v4996, 32
        %v5002 = vpop.permute.xlu0 %5001
        %v5005 = vadd.f32 %v4985, %v5000
        %v5006 = vadd.f32 %v4986, %v5002
        %v5007 = vtanh.pop %v5005
        %v5008 = vtanh.pop %v5006
        %5011 = vrot.lane.b32.xlu0 %v5007, 32
        %v5012 = vpop.permute.xlu0 %5011
        %5013 = vrot.lane.b32.xlu0 %v5008, 32
        %v5014 = vpop.permute.xlu0 %5013
        %v5017 = vmul.f32 %v4957, %v5012
        %v5018 = vmul.f32 %v4972, %v5014
        %5021 = vrot.lane.b32.xlu0 %v5005, 96
        %v5022 = vpop.permute.xlu0 %5021
        %5023 = vrot.lane.b32.xlu0 %v5006, 96
        %v5024 = vpop.permute.xlu0 %5023
        %5027 = vst.msk [vmem:[#allocation3] sm:$0xff] %vm502, %v5022
        %5028 = vst.msk [vmem:[#allocation3 + $0x8] sm:$0xff] %vm502, %v5024
        %5031 = vrot.lane.b32.xlu0 %v5017, 64
        %v5032 = vpop.permute.xlu0 %5031
        %5033 = vrot.lane.b32.xlu0 %v5018, 64
        %v5034 = vpop.permute.xlu0 %5033
        %5037 = vst.msk [vmem:[#allocation2] sm:$0xff] %vm502, %v5032
        %5038 = vst.msk [vmem:[#allocation2 + $0x8] sm:$0xff] %vm502, %v5034
        %v5039 = vld [vmem:[%s719] sm:$0xff]
        %v5040 = vld [vmem:[%s719 + $0x8] sm:$0xff]
        %v5041 = vld [vmem:[#allocation2] sm:$0xff]
        %v5042 = vld [vmem:[#allocation2 + $0x8] sm:$0xff]
        %v5043 = vpack.c.bf16 %v5042, %v5041
        %v5045 = vsel %vm502, %v5043, 0
        %5047 = vmatpush.bf16.msra.mxu0 0
        %5048 = vmatpush.bf16.msra.mxu0 0
        %5049 = vmatpush.bf16.msra.mxu0 0
        %5050 = vmatpush.bf16.msra.mxu0 0
        %5051 = vmatpush.bf16.msra.mxu0 0
        %5052 = vmatpush.bf16.msra.mxu0 0
        %5053 = vmatpush.bf16.msra.mxu0 %v4469
        %5054 = vmatpush.bf16.msra.mxu0 %v4468
        %5055 = vmatmul.bf16.gmra.mxu0 %v5045
        %v5056 = vpop.f32.mrf.mxu0
        %v5057 = vadd.f32 0.0, %v5056
        %v5058 = vpop.f32.mrf.mxu0
        %v5059 = vadd.f32 0.0, %v5058
        %5060 = vdwg.mxu0
        %v5061 = vadd.f32 %v5039, %v5057
        %v5062 = vadd.f32 %v5040, %v5059
        %v5063 = vxor.u32 %v5061, 2147483648
        %v5064 = vxor.u32 %v5062, 2147483648
        %v5065 = vmul.f32 %v5063, 1.442695
        %v5066 = vpow.pop %v5065
        %v5067 = vmul.f32 %v5064, 1.442695
        %v5068 = vpow.pop %v5067
        %v5069 = vadd.f32 %v5066, 1.0
        %v5070 = vadd.f32 %v5068, 1.0
        %v5071 = vrcp.pop %v5069
        %v5072 = vmul.f32 %v5069, %v5071
        %v5073 = vsub.f32 1.0, %v5072
        %v5074 = vmul.f32 %v5071, %v5073
        %v5075 = vadd.f32 %v5071, %v5074
        %vm5076 = vweird.f32 %v5069
        %vm5077 = vweird.f32 %v5071
        %vm5078 = vmor %vm5076, %vm5077
        %v5079 = vsel %vm5078, %v5071, %v5075
        %v5080 = vand.u32 2147483647, %v5069
        %vm5081 = vcmp.eq.f32.partialorder %v5080, 8.507059e+37
        %v5082 = vand.u32 %v5069, 2147483648
        %v5083 = vor.u32 1.1754944e-38, %v5082
        %v5084 = vsel %vm5081, %v5083, %v5079
        %v5085 = vmul.f32 1.0, %v5084
        %v5086 = vrcp.pop %v5070
        %v5087 = vmul.f32 %v5070, %v5086
        %v5088 = vsub.f32 1.0, %v5087
        %v5089 = vmul.f32 %v5086, %v5088
        %v5090 = vadd.f32 %v5086, %v5089
        %vm5091 = vweird.f32 %v5070
        %vm5092 = vweird.f32 %v5086
        %vm5093 = vmor %vm5091, %vm5092
        %v5094 = vsel %vm5093, %v5086, %v5090
        %v5095 = vand.u32 2147483647, %v5070
        %vm5096 = vcmp.eq.f32.partialorder %v5095, 8.507059e+37
        %v5097 = vand.u32 %v5070, 2147483648
        %v5098 = vor.u32 1.1754944e-38, %v5097
        %v5099 = vsel %vm5096, %v5098, %v5094
        %v5100 = vmul.f32 1.0, %v5099
        %v5101 = vtanh.pop %v5061
        %v5102 = vtanh.pop %v5062
        %v5103 = vld [vmem:[#allocation3] sm:$0xff]
        %v5104 = vld [vmem:[#allocation3 + $0x8] sm:$0xff]
        %5107 = vrot.lane.b32.xlu0 %v5103, 32
        %v5108 = vpop.permute.xlu0 %5107
        %5109 = vrot.lane.b32.xlu0 %v5104, 32
        %v5110 = vpop.permute.xlu0 %5109
        %v5113 = vmul.f32 %v5085, %v5108
        %v5114 = vmul.f32 %v5100, %v5110
        %5117 = vrot.lane.b32.xlu0 %v5101, 32
        %v5118 = vpop.permute.xlu0 %5117
        %5119 = vrot.lane.b32.xlu0 %v5102, 32
        %v5120 = vpop.permute.xlu0 %5119
        %v5123 = vmul.f32 %v5085, %v5118
        %v5124 = vmul.f32 %v5100, %v5120
        %5127 = vrot.lane.b32.xlu0 %v5123, 32
        %v5128 = vpop.permute.xlu0 %5127
        %5129 = vrot.lane.b32.xlu0 %v5124, 32
        %v5130 = vpop.permute.xlu0 %5129
        %v5133 = vadd.f32 %v5113, %v5128
        %v5134 = vadd.f32 %v5114, %v5130
        %v5135 = vtanh.pop %v5133
        %v5136 = vtanh.pop %v5134
        %5139 = vrot.lane.b32.xlu0 %v5135, 32
        %v5140 = vpop.permute.xlu0 %5139
        %5141 = vrot.lane.b32.xlu0 %v5136, 32
        %v5142 = vpop.permute.xlu0 %5141
        %v5145 = vmul.f32 %v5085, %v5140
        %v5146 = vmul.f32 %v5100, %v5142
        %5149 = vrot.lane.b32.xlu0 %v5133, 96
        %v5150 = vpop.permute.xlu0 %5149
        %5151 = vrot.lane.b32.xlu0 %v5134, 96
        %v5152 = vpop.permute.xlu0 %5151
        %5155 = vst.msk [vmem:[#allocation3] sm:$0xff] %vm502, %v5150
        %5156 = vst.msk [vmem:[#allocation3 + $0x8] sm:$0xff] %vm502, %v5152
        %5159 = vrot.lane.b32.xlu0 %v5145, 64
        %v5160 = vpop.permute.xlu0 %5159
        %5161 = vrot.lane.b32.xlu0 %v5146, 64
        %v5162 = vpop.permute.xlu0 %5161
        %5165 = vst.msk [vmem:[#allocation2] sm:$0xff] %vm502, %v5160
        %5166 = vst.msk [vmem:[#allocation2 + $0x8] sm:$0xff] %vm502, %v5162
        %v5167 = vld [vmem:[%s851] sm:$0xff]
        %v5168 = vld [vmem:[%s851 + $0x8] sm:$0xff]
        %v5169 = vld [vmem:[#allocation2] sm:$0xff]
        %v5170 = vld [vmem:[#allocation2 + $0x8] sm:$0xff]
        %v5171 = vpack.c.bf16 %v5170, %v5169
        %v5173 = vsel %vm502, %v5171, 0
        %5175 = vmatpush.bf16.msra.mxu0 0
        %5176 = vmatpush.bf16.msra.mxu0 0
        %5177 = vmatpush.bf16.msra.mxu0 0
        %5178 = vmatpush.bf16.msra.mxu0 0
        %5179 = vmatpush.bf16.msra.mxu0 0
        %5180 = vmatpush.bf16.msra.mxu0 0
        %5181 = vmatpush.bf16.msra.mxu0 %v4469
        %5182 = vmatpush.bf16.msra.mxu0 %v4468
        %5183 = vmatmul.bf16.gmra.mxu0 %v5173
        %v5184 = vpop.f32.mrf.mxu0
        %v5185 = vadd.f32 0.0, %v5184
        %v5186 = vpop.f32.mrf.mxu0
        %v5187 = vadd.f32 0.0, %v5186
        %5188 = vdwg.mxu0
        %v5189 = vadd.f32 %v5167, %v5185
        %v5190 = vadd.f32 %v5168, %v5187
        %v5191 = vxor.u32 %v5189, 2147483648
        %v5192 = vxor.u32 %v5190, 2147483648
        %v5193 = vmul.f32 %v5191, 1.442695
        %v5194 = vpow.pop %v5193
        %v5195 = vmul.f32 %v5192, 1.442695
        %v5196 = vpow.pop %v5195
        %v5197 = vadd.f32 %v5194, 1.0
        %v5198 = vadd.f32 %v5196, 1.0
        %v5199 = vrcp.pop %v5197
        %v5200 = vmul.f32 %v5197, %v5199
        %v5201 = vsub.f32 1.0, %v5200
        %v5202 = vmul.f32 %v5199, %v5201
        %v5203 = vadd.f32 %v5199, %v5202
        %vm5204 = vweird.f32 %v5197
        %vm5205 = vweird.f32 %v5199
        %vm5206 = vmor %vm5204, %vm5205
        %v5207 = vsel %vm5206, %v5199, %v5203
        %v5208 = vand.u32 2147483647, %v5197
        %vm5209 = vcmp.eq.f32.partialorder %v5208, 8.507059e+37
        %v5210 = vand.u32 %v5197, 2147483648
        %v5211 = vor.u32 1.1754944e-38, %v5210
        %v5212 = vsel %vm5209, %v5211, %v5207
        %v5213 = vmul.f32 1.0, %v5212
        %v5214 = vrcp.pop %v5198
        %v5215 = vmul.f32 %v5198, %v5214
        %v5216 = vsub.f32 1.0, %v5215
        %v5217 = vmul.f32 %v5214, %v5216
        %v5218 = vadd.f32 %v5214, %v5217
        %vm5219 = vweird.f32 %v5198
        %vm5220 = vweird.f32 %v5214
        %vm5221 = vmor %vm5219, %vm5220
        %v5222 = vsel %vm5221, %v5214, %v5218
        %v5223 = vand.u32 2147483647, %v5198
        %vm5224 = vcmp.eq.f32.partialorder %v5223, 8.507059e+37
        %v5225 = vand.u32 %v5198, 2147483648
        %v5226 = vor.u32 1.1754944e-38, %v5225
        %v5227 = vsel %vm5224, %v5226, %v5222
        %v5228 = vmul.f32 1.0, %v5227
        %v5229 = vtanh.pop %v5189
        %v5230 = vtanh.pop %v5190
        %v5231 = vld [vmem:[#allocation3] sm:$0xff]
        %v5232 = vld [vmem:[#allocation3 + $0x8] sm:$0xff]
        %5235 = vrot.lane.b32.xlu0 %v5231, 32
        %v5236 = vpop.permute.xlu0 %5235
        %5237 = vrot.lane.b32.xlu0 %v5232, 32
        %v5238 = vpop.permute.xlu0 %5237
        %v5241 = vmul.f32 %v5213, %v5236
        %v5242 = vmul.f32 %v5228, %v5238
        %5245 = vrot.lane.b32.xlu0 %v5229, 32
        %v5246 = vpop.permute.xlu0 %5245
        %5247 = vrot.lane.b32.xlu0 %v5230, 32
        %v5248 = vpop.permute.xlu0 %5247
        %v5251 = vmul.f32 %v5213, %v5246
        %v5252 = vmul.f32 %v5228, %v5248
        %5255 = vrot.lane.b32.xlu0 %v5251, 32
        %v5256 = vpop.permute.xlu0 %5255
        %5257 = vrot.lane.b32.xlu0 %v5252, 32
        %v5258 = vpop.permute.xlu0 %5257
        %v5261 = vadd.f32 %v5241, %v5256
        %v5262 = vadd.f32 %v5242, %v5258
        %v5263 = vtanh.pop %v5261
        %v5264 = vtanh.pop %v5262
        %5267 = vrot.lane.b32.xlu0 %v5263, 32
        %v5268 = vpop.permute.xlu0 %5267
        %5269 = vrot.lane.b32.xlu0 %v5264, 32
        %v5270 = vpop.permute.xlu0 %5269
        %v5273 = vmul.f32 %v5213, %v5268
        %v5274 = vmul.f32 %v5228, %v5270
        %5277 = vrot.lane.b32.xlu0 %v5261, 96
        %v5278 = vpop.permute.xlu0 %5277
        %5279 = vrot.lane.b32.xlu0 %v5262, 96
        %v5280 = vpop.permute.xlu0 %5279
        %5283 = vst.msk [vmem:[#allocation3] sm:$0xff] %vm502, %v5278
        %5284 = vst.msk [vmem:[#allocation3 + $0x8] sm:$0xff] %vm502, %v5280
        %5287 = vrot.lane.b32.xlu0 %v5273, 64
        %v5288 = vpop.permute.xlu0 %5287
        %5289 = vrot.lane.b32.xlu0 %v5274, 64
        %v5290 = vpop.permute.xlu0 %5289
        %5293 = vst.msk [vmem:[#allocation2] sm:$0xff] %vm502, %v5288
        %5294 = vst.msk [vmem:[#allocation2 + $0x8] sm:$0xff] %vm502, %v5290
        %v5295 = vld [vmem:[#allocation6 + $0x30] sm:$0xf]
        %v5296 = vld [vmem:[#allocation6 + $0x34] sm:$0xf]
        %v5297 = vld [vmem:[#allocation6 + $0x38] sm:$0xf]
        %v5298 = vld [vmem:[#allocation6 + $0x3c] sm:$0xf]
        %v5303 = vunpack.c.l.b16 %v5295
        %v5304 = vunpack.c.l.b16 %v5296
        %v5305 = vunpack.c.l.b16 %v5297
        %v5306 = vunpack.c.l.b16 %v5298
        %v5307 = vpack.c.b16 %v5304, %v5303
        %v5308 = vpack.c.b16 %v5306, %v5305
        %v5310 = vsel %vm502, %v5307, 0
        %v5313 = vsel %vm502, %v5308, 0
        %5315 = vmatpush.bf16.msra.mxu0 0
        %5316 = vmatpush.bf16.msra.mxu0 0
        %5317 = vmatpush.bf16.msra.mxu0 0
        %5318 = vmatpush.bf16.msra.mxu0 0
        %5319 = vmatpush.bf16.msra.mxu0 0
        %5320 = vmatpush.bf16.msra.mxu0 0
        %5321 = vmatpush.bf16.msra.mxu0 %v4413
        %5322 = vmatpush.bf16.msra.mxu0 %v4412
        %5323 = vmatmul.bf16.gmra.mxu0 %v5310
        %v5324 = vpop.f32.mrf.mxu0
        %v5325 = vadd.f32 %v4387, %v5324
        %v5326 = vpop.f32.mrf.mxu0
        %v5327 = vadd.f32 %v4387, %v5326
        %5328 = vmatmul.bf16.gmra.mxu0 %v5313
        %v5329 = vpop.f32.mrf.mxu0
        %v5330 = vadd.f32 %v4387, %v5329
        %v5331 = vpop.f32.mrf.mxu0
        %v5332 = vadd.f32 %v4387, %v5331
        %5333 = vdwg.mxu0
        %5334 = vst [vmem:[#allocation4] sm:$0xff] %v5325
        %5335 = vst [vmem:[#allocation4 + $0x8] sm:$0xff] %v5327
        %5336 = vst [vmem:[#allocation4 + $0x10] sm:$0xff] %v5330
        %5337 = vst [vmem:[#allocation4 + $0x18] sm:$0xff] %v5332
        %v5338 = vld [vmem:[#allocation4] sm:$0xff]
        %v5339 = vld [vmem:[#allocation4 + $0x8] sm:$0xff]
        %v5340 = vld [vmem:[#allocation2] sm:$0xff]
        %v5341 = vld [vmem:[#allocation2 + $0x8] sm:$0xff]
        %v5342 = vpack.c.bf16 %v5341, %v5340
        %v5344 = vsel %vm502, %v5342, 0
        %5346 = vmatpush.bf16.msra.mxu0 0
        %5347 = vmatpush.bf16.msra.mxu0 0
        %5348 = vmatpush.bf16.msra.mxu0 0
        %5349 = vmatpush.bf16.msra.mxu0 0
        %5350 = vmatpush.bf16.msra.mxu0 0
        %5351 = vmatpush.bf16.msra.mxu0 0
        %5352 = vmatpush.bf16.msra.mxu0 %v4469
        %5353 = vmatpush.bf16.msra.mxu0 %v4468
        %5354 = vmatmul.bf16.gmra.mxu0 %v5344
        %v5355 = vpop.f32.mrf.mxu0
        %v5356 = vadd.f32 0.0, %v5355
        %v5357 = vpop.f32.mrf.mxu0
        %v5358 = vadd.f32 0.0, %v5357
        %5359 = vdwg.mxu0
        %v5360 = vadd.f32 %v5338, %v5356
        %v5361 = vadd.f32 %v5339, %v5358
        %v5362 = vxor.u32 %v5360, 2147483648
        %v5363 = vxor.u32 %v5361, 2147483648
        %v5364 = vmul.f32 %v5362, 1.442695
        %v5365 = vpow.pop %v5364
        %v5366 = vmul.f32 %v5363, 1.442695
        %v5367 = vpow.pop %v5366
        %v5368 = vadd.f32 %v5365, 1.0
        %v5369 = vadd.f32 %v5367, 1.0
        %v5370 = vrcp.pop %v5368
        %v5371 = vmul.f32 %v5368, %v5370
        %v5372 = vsub.f32 1.0, %v5371
        %v5373 = vmul.f32 %v5370, %v5372
        %v5374 = vadd.f32 %v5370, %v5373
        %vm5375 = vweird.f32 %v5368
        %vm5376 = vweird.f32 %v5370
        %vm5377 = vmor %vm5375, %vm5376
        %v5378 = vsel %vm5377, %v5370, %v5374
        %v5379 = vand.u32 2147483647, %v5368
        %vm5380 = vcmp.eq.f32.partialorder %v5379, 8.507059e+37
        %v5381 = vand.u32 %v5368, 2147483648
        %v5382 = vor.u32 1.1754944e-38, %v5381
        %v5383 = vsel %vm5380, %v5382, %v5378
        %v5384 = vmul.f32 1.0, %v5383
        %v5385 = vrcp.pop %v5369
        %v5386 = vmul.f32 %v5369, %v5385
        %v5387 = vsub.f32 1.0, %v5386
        %v5388 = vmul.f32 %v5385, %v5387
        %v5389 = vadd.f32 %v5385, %v5388
        %vm5390 = vweird.f32 %v5369
        %vm5391 = vweird.f32 %v5385
        %vm5392 = vmor %vm5390, %vm5391
        %v5393 = vsel %vm5392, %v5385, %v5389
        %v5394 = vand.u32 2147483647, %v5369
        %vm5395 = vcmp.eq.f32.partialorder %v5394, 8.507059e+37
        %v5396 = vand.u32 %v5369, 2147483648
        %v5397 = vor.u32 1.1754944e-38, %v5396
        %v5398 = vsel %vm5395, %v5397, %v5393
        %v5399 = vmul.f32 1.0, %v5398
        %v5400 = vtanh.pop %v5360
        %v5401 = vtanh.pop %v5361
        %v5402 = vld [vmem:[#allocation3] sm:$0xff]
        %v5403 = vld [vmem:[#allocation3 + $0x8] sm:$0xff]
        %5406 = vrot.lane.b32.xlu0 %v5402, 32
        %v5407 = vpop.permute.xlu0 %5406
        %5408 = vrot.lane.b32.xlu0 %v5403, 32
        %v5409 = vpop.permute.xlu0 %5408
        %v5412 = vmul.f32 %v5384, %v5407
        %v5413 = vmul.f32 %v5399, %v5409
        %5416 = vrot.lane.b32.xlu0 %v5400, 32
        %v5417 = vpop.permute.xlu0 %5416
        %5418 = vrot.lane.b32.xlu0 %v5401, 32
        %v5419 = vpop.permute.xlu0 %5418
        %v5422 = vmul.f32 %v5384, %v5417
        %v5423 = vmul.f32 %v5399, %v5419
        %5426 = vrot.lane.b32.xlu0 %v5422, 32
        %v5427 = vpop.permute.xlu0 %5426
        %5428 = vrot.lane.b32.xlu0 %v5423, 32
        %v5429 = vpop.permute.xlu0 %5428
        %v5432 = vadd.f32 %v5412, %v5427
        %v5433 = vadd.f32 %v5413, %v5429
        %v5434 = vtanh.pop %v5432
        %v5435 = vtanh.pop %v5433
        %5438 = vrot.lane.b32.xlu0 %v5434, 32
        %v5439 = vpop.permute.xlu0 %5438
        %5440 = vrot.lane.b32.xlu0 %v5435, 32
        %v5441 = vpop.permute.xlu0 %5440
        %v5444 = vmul.f32 %v5384, %v5439
        %v5445 = vmul.f32 %v5399, %v5441
        %5448 = vrot.lane.b32.xlu0 %v5432, 96
        %v5449 = vpop.permute.xlu0 %5448
        %5450 = vrot.lane.b32.xlu0 %v5433, 96
        %v5451 = vpop.permute.xlu0 %5450
        %5454 = vst.msk [vmem:[#allocation3] sm:$0xff] %vm502, %v5449
        %5455 = vst.msk [vmem:[#allocation3 + $0x8] sm:$0xff] %vm502, %v5451
        %5458 = vrot.lane.b32.xlu0 %v5444, 64
        %v5459 = vpop.permute.xlu0 %5458
        %5460 = vrot.lane.b32.xlu0 %v5445, 64
        %v5461 = vpop.permute.xlu0 %5460
        %5464 = vst.msk [vmem:[#allocation2] sm:$0xff] %vm502, %v5459
        %5465 = vst.msk [vmem:[#allocation2 + $0x8] sm:$0xff] %vm502, %v5461
        %v5466 = vld [vmem:[%s719] sm:$0xff]
        %v5467 = vld [vmem:[%s719 + $0x8] sm:$0xff]
        %v5468 = vld [vmem:[#allocation2] sm:$0xff]
        %v5469 = vld [vmem:[#allocation2 + $0x8] sm:$0xff]
        %v5470 = vpack.c.bf16 %v5469, %v5468
        %v5472 = vsel %vm502, %v5470, 0
        %5474 = vmatpush.bf16.msra.mxu0 0
        %5475 = vmatpush.bf16.msra.mxu0 0
        %5476 = vmatpush.bf16.msra.mxu0 0
        %5477 = vmatpush.bf16.msra.mxu0 0
        %5478 = vmatpush.bf16.msra.mxu0 0
        %5479 = vmatpush.bf16.msra.mxu0 0
        %5480 = vmatpush.bf16.msra.mxu0 %v4469
        %5481 = vmatpush.bf16.msra.mxu0 %v4468
        %5482 = vmatmul.bf16.gmra.mxu0 %v5472
        %v5483 = vpop.f32.mrf.mxu0
        %v5484 = vadd.f32 0.0, %v5483
        %v5485 = vpop.f32.mrf.mxu0
        %v5486 = vadd.f32 0.0, %v5485
        %5487 = vdwg.mxu0
        %v5488 = vadd.f32 %v5466, %v5484
        %v5489 = vadd.f32 %v5467, %v5486
        %v5490 = vxor.u32 %v5488, 2147483648
        %v5491 = vxor.u32 %v5489, 2147483648
        %v5492 = vmul.f32 %v5490, 1.442695
        %v5493 = vpow.pop %v5492
        %v5494 = vmul.f32 %v5491, 1.442695
        %v5495 = vpow.pop %v5494
        %v5496 = vadd.f32 %v5493, 1.0
        %v5497 = vadd.f32 %v5495, 1.0
        %v5498 = vrcp.pop %v5496
        %v5499 = vmul.f32 %v5496, %v5498
        %v5500 = vsub.f32 1.0, %v5499
        %v5501 = vmul.f32 %v5498, %v5500
        %v5502 = vadd.f32 %v5498, %v5501
        %vm5503 = vweird.f32 %v5496
        %vm5504 = vweird.f32 %v5498
        %vm5505 = vmor %vm5503, %vm5504
        %v5506 = vsel %vm5505, %v5498, %v5502
        %v5507 = vand.u32 2147483647, %v5496
        %vm5508 = vcmp.eq.f32.partialorder %v5507, 8.507059e+37
        %v5509 = vand.u32 %v5496, 2147483648
        %v5510 = vor.u32 1.1754944e-38, %v5509
        %v5511 = vsel %vm5508, %v5510, %v5506
        %v5512 = vmul.f32 1.0, %v5511
        %v5513 = vrcp.pop %v5497
        %v5514 = vmul.f32 %v5497, %v5513
        %v5515 = vsub.f32 1.0, %v5514
        %v5516 = vmul.f32 %v5513, %v5515
        %v5517 = vadd.f32 %v5513, %v5516
        %vm5518 = vweird.f32 %v5497
        %vm5519 = vweird.f32 %v5513
        %vm5520 = vmor %vm5518, %vm5519
        %v5521 = vsel %vm5520, %v5513, %v5517
        %v5522 = vand.u32 2147483647, %v5497
        %vm5523 = vcmp.eq.f32.partialorder %v5522, 8.507059e+37
        %v5524 = vand.u32 %v5497, 2147483648
        %v5525 = vor.u32 1.1754944e-38, %v5524
        %v5526 = vsel %vm5523, %v5525, %v5521
        %v5527 = vmul.f32 1.0, %v5526
        %v5528 = vtanh.pop %v5488
        %v5529 = vtanh.pop %v5489
        %v5530 = vld [vmem:[#allocation3] sm:$0xff]
        %v5531 = vld [vmem:[#allocation3 + $0x8] sm:$0xff]
        %5534 = vrot.lane.b32.xlu0 %v5530, 32
        %v5535 = vpop.permute.xlu0 %5534
        %5536 = vrot.lane.b32.xlu0 %v5531, 32
        %v5537 = vpop.permute.xlu0 %5536
        %v5540 = vmul.f32 %v5512, %v5535
        %v5541 = vmul.f32 %v5527, %v5537
        %5544 = vrot.lane.b32.xlu0 %v5528, 32
        %v5545 = vpop.permute.xlu0 %5544
        %5546 = vrot.lane.b32.xlu0 %v5529, 32
        %v5547 = vpop.permute.xlu0 %5546
        %v5550 = vmul.f32 %v5512, %v5545
        %v5551 = vmul.f32 %v5527, %v5547
        %5554 = vrot.lane.b32.xlu0 %v5550, 32
        %v5555 = vpop.permute.xlu0 %5554
        %5556 = vrot.lane.b32.xlu0 %v5551, 32
        %v5557 = vpop.permute.xlu0 %5556
        %v5560 = vadd.f32 %v5540, %v5555
        %v5561 = vadd.f32 %v5541, %v5557
        %v5562 = vtanh.pop %v5560
        %v5563 = vtanh.pop %v5561
        %5566 = vrot.lane.b32.xlu0 %v5562, 32
        %v5567 = vpop.permute.xlu0 %5566
        %5568 = vrot.lane.b32.xlu0 %v5563, 32
        %v5569 = vpop.permute.xlu0 %5568
        %v5572 = vmul.f32 %v5512, %v5567
        %v5573 = vmul.f32 %v5527, %v5569
        %5576 = vrot.lane.b32.xlu0 %v5560, 96
        %v5577 = vpop.permute.xlu0 %5576
        %5578 = vrot.lane.b32.xlu0 %v5561, 96
        %v5579 = vpop.permute.xlu0 %5578
        %5582 = vst.msk [vmem:[#allocation3] sm:$0xff] %vm502, %v5577
        %5583 = vst.msk [vmem:[#allocation3 + $0x8] sm:$0xff] %vm502, %v5579
        %5586 = vrot.lane.b32.xlu0 %v5572, 64
        %v5587 = vpop.permute.xlu0 %5586
        %5588 = vrot.lane.b32.xlu0 %v5573, 64
        %v5589 = vpop.permute.xlu0 %5588
        %5592 = vst.msk [vmem:[#allocation2] sm:$0xff] %vm502, %v5587
        %5593 = vst.msk [vmem:[#allocation2 + $0x8] sm:$0xff] %vm502, %v5589
        %v5594 = vld [vmem:[#allocation2] sm:$0xff]
        %v5595 = vld [vmem:[#allocation2 + $0x8] sm:$0xff]
        %v5596 = vpack.c.bf16 %v5595, %v5594
        %v5597 = vld [vmem:[%s13] sm:$0xf]
        %v5598 = vld [vmem:[%s13 + $0x4] sm:$0xf]
        %v5599 = vld [vmem:[%s13 + $0x8] sm:$0xf]
        %v5600 = vld [vmem:[%s13 + $0xc] sm:$0xf]
        %v5601 = vld [vmem:[%s14] sm:$0x1]
        %v5603 = vperm.slane %v5601, 0
        %v5609 = vunpack.c.l.b16 %v5597
        %v5610 = vunpack.c.l.b16 %v5598
        %v5611 = vunpack.c.l.b16 %v5599
        %v5612 = vunpack.c.l.b16 %v5600
        %v5613 = vpack.c.b16 %v5610, %v5609
        %v5614 = vpack.c.b16 %v5612, %v5611
        %v5618 = vsel %vm502, %v5596, 0
        %5620 = vmatpush.bf16.msra.mxu0 0
        %5621 = vmatpush.bf16.msra.mxu0 0
        %5622 = vmatpush.bf16.msra.mxu0 0
        %5623 = vmatpush.bf16.msra.mxu0 0
        %5624 = vmatpush.bf16.msra.mxu0 0
        %5625 = vmatpush.bf16.msra.mxu0 0
        %5626 = vmatpush.bf16.msra.mxu0 %v5614
        %5627 = vmatpush.bf16.msra.mxu0 %v5613
        %5628 = vmatmul.bf16.gmra.mxu0 %v5618
        %v5629 = vpop.f32.mrf.mxu0
        %v5630 = vadd.f32 %v5603, %v5629
        %v5631 = vpop.f32.mrf.mxu0
        %v5632 = vadd.f32 %v5603, %v5631
        %5633 = vdwg.mxu0
        %5634 = vmax.xlane.f32.xlu0 %v5630
        %v5635 = vpop.xlane.xlu0 %5634
        %5636 = vmax.xlane.f32.xlu0 %v5632
        %v5637 = vpop.xlane.xlu0 %5636
        %v5638 = vsub.f32 %v5630, %v5635
        %v5639 = vsub.f32 %v5632, %v5637
        %v5640 = vmul.f32 %v5638, 1.442695
        %v5641 = vpow.pop %v5640
        %v5642 = vmul.f32 %v5639, 1.442695
        %v5643 = vpow.pop %v5642
        %5644 = vadd.xlane.f32.xlu0 %v5641
        %v5645 = vpop.xlane.xlu0 %5644
        %5646 = vadd.xlane.f32.xlu0 %v5643
        %v5647 = vpop.xlane.xlu0 %5646
        %v5648 = vlog2.pop %v5645
        %v5649 = vmul.f32 %v5648, 0.6931472
        %v5650 = vlog2.pop %v5647
        %v5651 = vmul.f32 %v5650, 0.6931472
        %v5652 = vsub.f32 %v5638, %v5649
        %v5653 = vsub.f32 %v5639, %v5651
        %5654 = vst [vmem:[%s487] sm:$0xff] %v5652
        %5655 = vst [vmem:[%s487 + $0x8] sm:$0xff] %v5653
        %s5656 = sand.u32 %s357, 1
        %s5657 = scalar_lea.sflag [#allocation8], %s5656
        %s5658 = sand.u32 %s357, 1
        %s5659 = smul.addr %s5658, 16
        %s5660 = scalar_lea.vmem [#allocation7], %s5659
        // Predicated region
        $region81: #{tpu_custom_call.1} parent=79 // pred_check
          %p5661 = pneg %p367
        $region82: #{tpu_custom_call.1} parent=79 // pred_check_branch
          %5663 = sbr.rel (%p5661) target = $region84
        $region83: #{tpu_custom_call.1} parent=79 // pred_region
          %s5664 = smul.u32 2, %s29
          %5666 = vsyncadd %s5657, 0
          %s5667 = smul.addr %s5664, 8
          %s5668 = scalar_lea.hbm %s15, %s5667
          %s5669 = sshll.u32 %s5660, 4
          %s5670 = int_to_ptr.vmem [resolvable:$true] %s5669
          %s5671 = sshll.u32 %s5668, 4
          %s5672 = int_to_ptr.hbm [resolvable:$true] %s5671
          %5677 = dma.vmem_to_hbm [thread:$0]  %s5670, 256, %s5672, %s5657, 128, 128, 8
        $region84: #{tpu_custom_call.1} parent=79 // pred_fallthru
          _
      $region80: #{tpu_custom_call.1} parent=5 // pred_fallthru
        _
      %p5678 = scmp.le.s32.totalorder 2, %s24
      // Predicated region
      $region85: #{tpu_custom_call.1} parent=5 // pred_check
        %p5679 = pneg %p5678
      $region86: #{tpu_custom_call.1} parent=5 // pred_check_branch
        %5681 = sbr.rel (%p5679) target = $region88
      $region87: #{tpu_custom_call.1} parent=5 // pred_region
        %s5682 = ssub.s32 %s24, 2
        // Predicated region
        $region89: #{tpu_custom_call.1} parent=87 // pred_check
          %p5683 = pneg %p373
        $region90: #{tpu_custom_call.1} parent=87 // pred_check_branch
          %5685 = sbr.rel (%p5683) target = $region92
        $region91: #{tpu_custom_call.1} parent=87 // pred_region
          %s5686 = sand.u32 %s358, 1
          %s5687 = scalar_lea.sflag [#allocation8], %s5686
          %s5688 = sand.u32 %s358, 1
          %s5689 = smul.addr %s5688, 16
          %s5690 = scalar_lea.vmem [#allocation7], %s5689
          %5692 = dma.done %s5687, 256
        $region92: #{tpu_custom_call.1} parent=87 // pred_fallthru
          _
      $region88: #{tpu_custom_call.1} parent=5 // pred_fallthru
        _
    $region6: #{tpu_custom_call.1} parent=1 // loop_footer
      %s28 = sadd.s32 1, %s24
    $region7: #{tpu_custom_call.1} parent=1 // loop_footer_branch
      %23 = sbr.rel target = $region3
    $region8: #{tpu_custom_call.1} parent=1 // loop_exit
      _
    %5693 = vsyncpa [#allocation8], 1
    %s5694 = scalar_lea.sflag [#allocation8], 1
    %5695 = vsyncpa %s5694, 1

</llo_original>
